<compile_context>
chip_gen: v6e
topology: v6e:2x2x1
jax: 0.10.0
libtpu: 0.0.40
codegen_flags: <defaults>
</compile_context>

<pallas_src>
from functools import partial

import jax
import jax.numpy as jnp
from jax.experimental import pallas as pl
from jax.experimental.pallas import tpu as pltpu

SIMPLE_MOVEMENT = [[], ['RIGHT'], ['RIGHT', 'A'], ['RIGHT', 'B'],
                   ['RIGHT', 'A', 'B'], ['A'], ['LEFT'], ['LEFT', 'A'],
                   ['LEFT', 'B'], ['LEFT', 'A', 'B']]
ACTION_SPACE_N = len(SIMPLE_MOVEMENT)  # 10

_VMEM = pl.BlockSpec(memory_space=pltpu.MemorySpace.VMEM)
_COMPILER_PARAMS = pltpu.CompilerParams(vmem_limit_bytes=32 * 1024 * 1024)


# ----------------------------- Pallas kernels ------------------------------ #

def _gemm_bias_act_kernel(x_ref, w_ref, b_ref, o_ref, *, relu):
    # Fused GEMM + bias (+ ReLU): bf16 MXU inputs, f32 accumulate & epilogue.
    x = x_ref[...].astype(jnp.bfloat16)
    acc = jnp.dot(x, w_ref[...], preferred_element_type=jnp.float32)
    acc = acc + b_ref[...]
    if relu:
        acc = jnp.maximum(acc, 0.0)
    o_ref[...] = acc.astype(o_ref.dtype)


def _fc_head_kernel(x_ref, w1_ref, b1_ref, w2_ref, b2_ref, o_ref):
    # fc1 + ReLU + fc2 fused: the (B, 512) hidden never leaves VMEM.
    x = x_ref[...].astype(jnp.bfloat16)
    h = jnp.dot(x, w1_ref[...], preferred_element_type=jnp.float32)
    h = jnp.maximum(h + b1_ref[...], 0.0)
    out = jnp.dot(h.astype(jnp.bfloat16), w2_ref[...],
                  preferred_element_type=jnp.float32)
    o_ref[...] = (out + b2_ref[...]).astype(o_ref.dtype)


def gemm_bias_act(x, w, b, relu):
    """x: (M,K) f32, w: (K,N) bf16, b: (1,N) f32 -> (M,N) f32."""
    M, K = x.shape
    K2, N = w.shape
    assert K == K2
    return pl.pallas_call(
        partial(_gemm_bias_act_kernel, relu=relu),
        out_shape=jax.ShapeDtypeStruct((M, N), jnp.float32),
        in_specs=[_VMEM] * 3,
        out_specs=_VMEM,
        compiler_params=_COMPILER_PARAMS,
    )(x, w, b)


def fc_head(x, w1, b1, w2, b2):
    """x: (B, 3136) f32 -> (B, action_n) f32; fc1(+ReLU)+fc2 in one kernel."""
    B = x.shape[0]
    N = w2.shape[1]
    return pl.pallas_call(
        _fc_head_kernel,
        out_shape=jax.ShapeDtypeStruct((B, N), jnp.float32),
        in_specs=[_VMEM] * 5,
        out_specs=_VMEM,
        compiler_params=_COMPILER_PARAMS,
    )(x, w1, b1, w2, b2)


# ------------------------------ Conv via im2col ---------------------------- #

def conv2d_relu_nhwc(x, w_packed, b, kh, kw, stride):
    """x: (B,H,W,C) f32; w_packed: (kh*kw*C, OC) bf16; b: (1,OC) f32.
    Valid padding + ReLU.  Returns (B, oh, ow, OC) f32 (NHWC)."""
    B, H, W, C = x.shape
    oh = (H - kh) // stride + 1
    ow = (W - kw) // stride + 1
    # Patches built directly in GEMM layout: feature index = (i*kw + j)*C + c,
    # matching the packed weight layout.  No 5-D transpose is emitted.
    cols = [x[:, i:i + stride * oh:stride, j:j + stride * ow:stride, :]
            for i in range(kh) for j in range(kw)]
    patches = jnp.concatenate(cols, axis=-1).reshape(B * oh * ow, kh * kw * C)
    y = gemm_bias_act(patches, w_packed, b, relu=True)        # (B*oh*ow, OC)
    return y.reshape(B, oh, ow, w_packed.shape[1])


# ------------------------------ Parameters --------------------------------- #

def init_params(key, action_space_n):
    ks = jax.random.split(key, 10)

    def uni(k, shape, fan_in):
        bound = 1.0 / (fan_in ** 0.5)   # PyTorch-style default init bounds
        return jax.random.uniform(k, shape, jnp.float32, -bound, bound)

    def pack_conv(w):  # torch (OC, C, kh, kw) -> (kh*kw*C, OC) bf16, once
        oc, c, kh, kw = w.shape
        return w.transpose(2, 3, 1, 0).reshape(kh * kw * c, oc).astype(jnp.bfloat16)

    conv1 = uni(ks[0], (32, 4, 8, 8), 4 * 8 * 8)
    conv2 = uni(ks[2], (64, 32, 4, 4), 32 * 4 * 4)
    conv3 = uni(ks[4], (64, 64, 3, 3), 64 * 3 * 3)
    fc1 = uni(ks[6], (512, 7 * 7 * 64), 7 * 7 * 64)   # torch layout (N, K_nchw)
    fc2 = uni(ks[8], (action_space_n, 512), 512)

    # fc1: torch K index = c*49 + h*7 + w (NCHW flatten); our flatten is
    # NHWC (h*7*64 + w*64 + c).  Permute the K axis once at init.
    fc1_packed = (fc1.reshape(512, 64, 7, 7)            # (n, c, h, w)
                     .transpose(2, 3, 1, 0)             # (h, w, c, n)
                     .reshape(7 * 7 * 64, 512)
                     .astype(jnp.bfloat16))

    return {
        "conv1_w": pack_conv(conv1), "conv1_b": uni(ks[1], (1, 32), 4 * 8 * 8),
        "conv2_w": pack_conv(conv2), "conv2_b": uni(ks[3], (1, 64), 32 * 4 * 4),
        "conv3_w": pack_conv(conv3), "conv3_b": uni(ks[5], (1, 64), 64 * 3 * 3),
        "fc1_w": fc1_packed,         "fc1_b": uni(ks[7], (1, 512), 7 * 7 * 64),
        "fc2_w": fc2.T.astype(jnp.bfloat16),
        "fc2_b": uni(ks[9], (1, action_space_n), 512),
    }


# ------------------------------ Forward pass ------------------------------- #

@jax.jit
def dqn_cnn_forward(params, x):
    # x: (B, 4, 84, 84) float32 (NCHW, PyTorch convention).
    B = x.shape[0]
    x = jnp.transpose(x, (0, 2, 3, 1))                              # NHWC, once
    x = conv2d_relu_nhwc(x, params["conv1_w"], params["conv1_b"], 8, 8, 4)  # (B,20,20,32)
    x = conv2d_relu_nhwc(x, params["conv2_w"], params["conv2_b"], 4, 4, 2)  # (B,9,9,64)
    x = conv2d_relu_nhwc(x, params["conv3_w"], params["conv3_b"], 3, 3, 1)  # (B,7,7,64)
    x = x.reshape(B, 7 * 7 * 64)   # NHWC flatten; fc1_w's K axis permuted at init
    return fc_head(x, params["fc1_w"], params["fc1_b"],
                   params["fc2_w"], params["fc2_b"])                # (B, 10)


# ---------------------------------- Main ----------------------------------- #

if __name__ == "__main__":
    key = jax.random.PRNGKey(0)
    pkey, xkey = jax.random.split(key)
    params = init_params(pkey, ACTION_SPACE_N)

    # The FC head (7*7*64) pins the spatial size to 84x84; batch kept small.
    x = jax.random.normal(xkey, (2, 4, 84, 84), dtype=jnp.float32)

    out = dqn_cnn_forward(params, x)
    jax.block_until_ready(out)
    assert out.shape == (2, ACTION_SPACE_N) and out.dtype == jnp.float32
    print("KERNEL_OK")
</pallas_src>

<mosaic_0001>
module attributes {stable_mosaic.version = 11 : i64} {
  func.func @_gemm_bias_act_kernel(%arg0: memref<800x256xf32, #tpu.memory_space<vmem>>, %arg1: memref<256x32xbf16, #tpu.memory_space<vmem>>, %arg2: memref<1x32xf32, #tpu.memory_space<vmem>>, %arg3: memref<800x32xf32, #tpu.memory_space<vmem>>) attributes {dimension_semantics = [], scalar_prefetch = 0 : i64, scratch_operands = 0 : i64, tpu.core_type = #tpu.core_type<tc>} {
    %c0 = arith.constant 0 : index
    %c0_0 = arith.constant 0 : index
    %0 = vector.load %arg0[%c0, %c0_0] : memref<800x256xf32, #tpu.memory_space<vmem>>, vector<800x256xf32>
    %1 = arith.truncf %0 : vector<800x256xf32> to vector<800x256xbf16>
    %c0_1 = arith.constant 0 : index
    %c0_2 = arith.constant 0 : index
    %2 = vector.load %arg1[%c0_1, %c0_2] : memref<256x32xbf16, #tpu.memory_space<vmem>>, vector<256x32xbf16>
    %cst = arith.constant dense<0.000000e+00> : vector<800x32xf32>
    %3 = tpu.matmul %1, %2, %cst {dimension_numbers = #tpu.dot_dimension_numbers<[1], [0], [0], [1], [0, 0, 1, 1], [], []>} : vector<800x256xbf16>, vector<256x32xbf16>, vector<800x32xf32> -> vector<800x32xf32>
    %c0_3 = arith.constant 0 : index
    %c0_4 = arith.constant 0 : index
    %4 = vector.load %arg2[%c0_3, %c0_4] : memref<1x32xf32, #tpu.memory_space<vmem>>, vector<1x32xf32>
    %5 = vector.broadcast %4 : vector<1x32xf32> to vector<800x32xf32>
    %6 = arith.addf %3, %5 : vector<800x32xf32>
    %cst_5 = arith.constant 0.000000e+00 : f32
    %7 = vector.broadcast %cst_5 : f32 to vector<800x32xf32>
    %8 = arith.maximumf %6, %7 : vector<800x32xf32>
    %c0_6 = arith.constant 0 : index
    %c0_7 = arith.constant 0 : index
    %9 = vector.load %arg3[%c0_6, %c0_7] : memref<800x32xf32, #tpu.memory_space<vmem>>, vector<800x32xf32>
    tpu.vector_store %arg3[%c0_6, %c0_7], %8 {strides = array<i32>} : memref<800x32xf32, #tpu.memory_space<vmem>>, vector<800x32xf32>,
    return
  }
}

module attributes {stable_mosaic.version = 11 : i64} {
  func.func @_gemm_bias_act_kernel(%arg0: memref<162x512xf32, #tpu.memory_space<vmem>>, %arg1: memref<512x64xbf16, #tpu.memory_space<vmem>>, %arg2: memref<1x64xf32, #tpu.memory_space<vmem>>, %arg3: memref<162x64xf32, #tpu.memory_space<vmem>>) attributes {dimension_semantics = [], scalar_prefetch = 0 : i64, scratch_operands = 0 : i64, tpu.core_type = #tpu.core_type<tc>} {
    %c0 = arith.constant 0 : index
    %c0_0 = arith.constant 0 : index
    %0 = vector.load %arg0[%c0, %c0_0] : memref<162x512xf32, #tpu.memory_space<vmem>>, vector<162x512xf32>
    %1 = arith.truncf %0 : vector<162x512xf32> to vector<162x512xbf16>
    %c0_1 = arith.constant 0 : index
    %c0_2 = arith.constant 0 : index
    %2 = vector.load %arg1[%c0_1, %c0_2] : memref<512x64xbf16, #tpu.memory_space<vmem>>, vector<512x64xbf16>
    %cst = arith.constant dense<0.000000e+00> : vector<162x64xf32>
    %3 = tpu.matmul %1, %2, %cst {dimension_numbers = #tpu.dot_dimension_numbers<[1], [0], [0], [1], [0, 0, 1, 1], [], []>} : vector<162x512xbf16>, vector<512x64xbf16>, vector<162x64xf32> -> vector<162x64xf32>
    %c0_3 = arith.constant 0 : index
    %c0_4 = arith.constant 0 : index
    %4 = vector.load %arg2[%c0_3, %c0_4] : memref<1x64xf32, #tpu.memory_space<vmem>>, vector<1x64xf32>
    %5 = vector.broadcast %4 : vector<1x64xf32> to vector<162x64xf32>
    %6 = arith.addf %3, %5 : vector<162x64xf32>
    %cst_5 = arith.constant 0.000000e+00 : f32
    %7 = vector.broadcast %cst_5 : f32 to vector<162x64xf32>
    %8 = arith.maximumf %6, %7 : vector<162x64xf32>
    %c0_6 = arith.constant 0 : index
    %c0_7 = arith.constant 0 : index
    %9 = vector.load %arg3[%c0_6, %c0_7] : memref<162x64xf32, #tpu.memory_space<vmem>>, vector<162x64xf32>
    tpu.vector_store %arg3[%c0_6, %c0_7], %8 {strides = array<i32>} : memref<162x64xf32, #tpu.memory_space<vmem>>, vector<162x64xf32>,
    return
  }
}

module attributes {stable_mosaic.version = 11 : i64} {
  func.func @_gemm_bias_act_kernel(%arg0: memref<98x576xf32, #tpu.memory_space<vmem>>, %arg1: memref<576x64xbf16, #tpu.memory_space<vmem>>, %arg2: memref<1x64xf32, #tpu.memory_space<vmem>>, %arg3: memref<98x64xf32, #tpu.memory_space<vmem>>) attributes {dimension_semantics = [], scalar_prefetch = 0 : i64, scratch_operands = 0 : i64, tpu.core_type = #tpu.core_type<tc>} {
    %c0 = arith.constant 0 : index
    %c0_0 = arith.constant 0 : index
    %0 = vector.load %arg0[%c0, %c0_0] : memref<98x576xf32, #tpu.memory_space<vmem>>, vector<98x576xf32>
    %1 = arith.truncf %0 : vector<98x576xf32> to vector<98x576xbf16>
    %c0_1 = arith.constant 0 : index
    %c0_2 = arith.constant 0 : index
    %2 = vector.load %arg1[%c0_1, %c0_2] : memref<576x64xbf16, #tpu.memory_space<vmem>>, vector<576x64xbf16>
    %cst = arith.constant dense<0.000000e+00> : vector<98x64xf32>
    %3 = tpu.matmul %1, %2, %cst {dimension_numbers = #tpu.dot_dimension_numbers<[1], [0], [0], [1], [0, 0, 1, 1], [], []>} : vector<98x576xbf16>, vector<576x64xbf16>, vector<98x64xf32> -> vector<98x64xf32>
    %c0_3 = arith.constant 0 : index
    %c0_4 = arith.constant 0 : index
    %4 = vector.load %arg2[%c0_3, %c0_4] : memref<1x64xf32, #tpu.memory_space<vmem>>, vector<1x64xf32>
    %5 = vector.broadcast %4 : vector<1x64xf32> to vector<98x64xf32>
    %6 = arith.addf %3, %5 : vector<98x64xf32>
    %cst_5 = arith.constant 0.000000e+00 : f32
    %7 = vector.broadcast %cst_5 : f32 to vector<98x64xf32>
    %8 = arith.maximumf %6, %7 : vector<98x64xf32>
    %c0_6 = arith.constant 0 : index
    %c0_7 = arith.constant 0 : index
    %9 = vector.load %arg3[%c0_6, %c0_7] : memref<98x64xf32, #tpu.memory_space<vmem>>, vector<98x64xf32>
    tpu.vector_store %arg3[%c0_6, %c0_7], %8 {strides = array<i32>} : memref<98x64xf32, #tpu.memory_space<vmem>>, vector<98x64xf32>,
    return
  }
}

module attributes {stable_mosaic.version = 11 : i64} {
  func.func @_fc_head_kernel(%arg0: memref<2x3136xf32, #tpu.memory_space<vmem>>, %arg1: memref<3136x512xbf16, #tpu.memory_space<vmem>>, %arg2: memref<1x512xf32, #tpu.memory_space<vmem>>, %arg3: memref<512x10xbf16, #tpu.memory_space<vmem>>, %arg4: memref<1x10xf32, #tpu.memory_space<vmem>>, %arg5: memref<2x10xf32, #tpu.memory_space<vmem>>) attributes {dimension_semantics = [], scalar_prefetch = 0 : i64, scratch_operands = 0 : i64, tpu.core_type = #tpu.core_type<tc>} {
    %c0 = arith.constant 0 : index
    %c0_0 = arith.constant 0 : index
    %0 = vector.load %arg0[%c0, %c0_0] : memref<2x3136xf32, #tpu.memory_space<vmem>>, vector<2x3136xf32>
    %1 = arith.truncf %0 : vector<2x3136xf32> to vector<2x3136xbf16>
    %c0_1 = arith.constant 0 : index
    %c0_2 = arith.constant 0 : index
    %2 = vector.load %arg1[%c0_1, %c0_2] : memref<3136x512xbf16, #tpu.memory_space<vmem>>, vector<3136x512xbf16>
    %cst = arith.constant dense<0.000000e+00> : vector<2x512xf32>
    %3 = tpu.matmul %1, %2, %cst {dimension_numbers = #tpu.dot_dimension_numbers<[1], [0], [0], [1], [0, 0, 1, 1], [], []>} : vector<2x3136xbf16>, vector<3136x512xbf16>, vector<2x512xf32> -> vector<2x512xf32>
    %c0_3 = arith.constant 0 : index
    %c0_4 = arith.constant 0 : index
    %4 = vector.load %arg2[%c0_3, %c0_4] : memref<1x512xf32, #tpu.memory_space<vmem>>, vector<1x512xf32>
    %5 = vector.broadcast %4 : vector<1x512xf32> to vector<2x512xf32>
    %6 = arith.addf %3, %5 : vector<2x512xf32>
    %cst_5 = arith.constant 0.000000e+00 : f32
    %7 = vector.broadcast %cst_5 : f32 to vector<2x512xf32>
    %8 = arith.maximumf %6, %7 : vector<2x512xf32>
    %9 = arith.truncf %8 : vector<2x512xf32> to vector<2x512xbf16>
    %c0_6 = arith.constant 0 : index
    %c0_7 = arith.constant 0 : index
    %10 = vector.load %arg3[%c0_6, %c0_7] : memref<512x10xbf16, #tpu.memory_space<vmem>>, vector<512x10xbf16>
    %cst_8 = arith.constant dense<0.000000e+00> : vector<2x10xf32>
    %11 = tpu.matmul %9, %10, %cst_8 {dimension_numbers = #tpu.dot_dimension_numbers<[1], [0], [0], [1], [0, 0, 1, 1], [], []>} : vector<2x512xbf16>, vector<512x10xbf16>, vector<2x10xf32> -> vector<2x10xf32>
    %c0_9 = arith.constant 0 : index
    %c0_10 = arith.constant 0 : index
    %12 = vector.load %arg4[%c0_9, %c0_10] : memref<1x10xf32, #tpu.memory_space<vmem>>, vector<1x10xf32>
    %13 = vector.broadcast %12 : vector<1x10xf32> to vector<2x10xf32>
    %14 = arith.addf %11, %13 : vector<2x10xf32>
    %c0_11 = arith.constant 0 : index
    %c0_12 = arith.constant 0 : index
    %15 = vector.load %arg5[%c0_11, %c0_12] : memref<2x10xf32, #tpu.memory_space<vmem>>, vector<2x10xf32>
    tpu.vector_store %arg5[%c0_11, %c0_12], %14 {strides = array<i32>} : memref<2x10xf32, #tpu.memory_space<vmem>>, vector<2x10xf32>,
    return
  }
}

</mosaic_0001>

<llo_original>
// kernel: dqn_cnn_forward.4
$region0: #{dqn_cnn_forward.4}
  #allocation0 [shape = 'u32[]', space=smem, size = 0x4, offset = 0x4, fixed_abs, tag = 'smem constant byte address 0x4 - core index']
  #allocation1 [shape = 'u32[144,128]{1,0:T(1,128)}', space=vmem, size = 0x12000, scoped, tag = 'internal scratch']
  %s0 = inlined_call_operand.vmem [shape: f32[800,256], index: 0, kind: input, shape index: {}]
  %s1 = inlined_call_operand.vmem [shape: bf16[256,32], index: 1, kind: input, shape index: {}]
  %s2 = inlined_call_operand.vmem [shape: f32[1,32], index: 2, kind: input, shape index: {}]
  %s3 = inlined_call_operand.vmem [shape: f32[800,32], index: 3, kind: output, shape index: {}]
  %s4 = sld [smem:[#allocation0]]
  $region22: #{dqn_cnn_forward.4} parent=0
    _
  %s6 = ssub.s32 1, %s4
  %s7 = scalar_select 0, %s6, %s4
  // Predicated region
  $region2: #{dqn_cnn_forward.4} parent=0 // pred_check
    _
  $region3: #{dqn_cnn_forward.4} parent=0 // pred_check_branch
    %9 = sbr.rel (0) target = $region5
  $region4: #{dqn_cnn_forward.4} parent=0 // pred_region
    _
  $region5: #{dqn_cnn_forward.4} parent=0 // pred_fallthru
    _
  // Predicated region
  $region6: #{dqn_cnn_forward.4} parent=0 // pred_check
    _
  $region7: #{dqn_cnn_forward.4} parent=0 // pred_check_branch
    %11 = sbr.rel (0) target = $region9
  $region8: #{dqn_cnn_forward.4} parent=0 // pred_region
    _
  $region9: #{dqn_cnn_forward.4} parent=0 // pred_fallthru
    _
  // Predicated region
  $region10: #{dqn_cnn_forward.4} parent=0 // pred_check
    _
  $region11: #{dqn_cnn_forward.4} parent=0 // pred_check_branch
    %13 = sbr.rel (0) target = $region13
  $region12: #{dqn_cnn_forward.4} parent=0 // pred_region
    _
  $region13: #{dqn_cnn_forward.4} parent=0 // pred_fallthru
    _
  %v15 = vld [vmem:[%s0] sm:$0xff]
  %v16 = vld [vmem:[%s0 + $0x8] sm:$0xff]
  %v17 = vld [vmem:[%s0 + $0x10] sm:$0xff]
  %v18 = vld [vmem:[%s0 + $0x18] sm:$0xff]
  %v19 = vld [vmem:[%s0 + $0x20] sm:$0xff]
  %v20 = vld [vmem:[%s0 + $0x28] sm:$0xff]
  %v21 = vld [vmem:[%s0 + $0x30] sm:$0xff]
  %v22 = vld [vmem:[%s0 + $0x38] sm:$0xff]
  %v23 = vld [vmem:[%s0 + $0x40] sm:$0xff]
  %v24 = vld [vmem:[%s0 + $0x48] sm:$0xff]
  %v25 = vld [vmem:[%s0 + $0x50] sm:$0xff]
  %v26 = vld [vmem:[%s0 + $0x58] sm:$0xff]
  %v27 = vld [vmem:[%s0 + $0x60] sm:$0xff]
  %v28 = vld [vmem:[%s0 + $0x68] sm:$0xff]
  %v29 = vld [vmem:[%s0 + $0x70] sm:$0xff]
  %v30 = vld [vmem:[%s0 + $0x78] sm:$0xff]
  %v31 = vld [vmem:[%s0 + $0x80] sm:$0xff]
  %v32 = vld [vmem:[%s0 + $0x88] sm:$0xff]
  %v33 = vld [vmem:[%s0 + $0x90] sm:$0xff]
  %v34 = vld [vmem:[%s0 + $0x98] sm:$0xff]
  %v35 = vld [vmem:[%s0 + $0xa0] sm:$0xff]
  %v36 = vld [vmem:[%s0 + $0xa8] sm:$0xff]
  %v37 = vld [vmem:[%s0 + $0xb0] sm:$0xff]
  %v38 = vld [vmem:[%s0 + $0xb8] sm:$0xff]
  %v39 = vld [vmem:[%s0 + $0xc0] sm:$0xff]
  %v40 = vld [vmem:[%s0 + $0xc8] sm:$0xff]
  %v41 = vld [vmem:[%s0 + $0xd0] sm:$0xff]
  %v42 = vld [vmem:[%s0 + $0xd8] sm:$0xff]
  %v43 = vld [vmem:[%s0 + $0xe0] sm:$0xff]
  %v44 = vld [vmem:[%s0 + $0xe8] sm:$0xff]
  %v45 = vld [vmem:[%s0 + $0xf0] sm:$0xff]
  %v46 = vld [vmem:[%s0 + $0xf8] sm:$0xff]
  %v47 = vld [vmem:[%s0 + $0x100] sm:$0xff]
  %v48 = vld [vmem:[%s0 + $0x108] sm:$0xff]
  %v49 = vld [vmem:[%s0 + $0x110] sm:$0xff]
  %v50 = vld [vmem:[%s0 + $0x118] sm:$0xff]
  %v51 = vld [vmem:[%s0 + $0x120] sm:$0xff]
  %v52 = vld [vmem:[%s0 + $0x128] sm:$0xff]
  %v53 = vld [vmem:[%s0 + $0x130] sm:$0xff]
  %v54 = vld [vmem:[%s0 + $0x138] sm:$0xff]
  %v55 = vld [vmem:[%s0 + $0x140] sm:$0xff]
  %v56 = vld [vmem:[%s0 + $0x148] sm:$0xff]
  %v57 = vld [vmem:[%s0 + $0x150] sm:$0xff]
  %v58 = vld [vmem:[%s0 + $0x158] sm:$0xff]
  %v59 = vld [vmem:[%s0 + $0x160] sm:$0xff]
  %v60 = vld [vmem:[%s0 + $0x168] sm:$0xff]
  %v61 = vld [vmem:[%s0 + $0x170] sm:$0xff]
  %v62 = vld [vmem:[%s0 + $0x178] sm:$0xff]
  %v63 = vld [vmem:[%s0 + $0x180] sm:$0xff]
  %v64 = vld [vmem:[%s0 + $0x188] sm:$0xff]
  %v65 = vld [vmem:[%s0 + $0x190] sm:$0xff]
  %v66 = vld [vmem:[%s0 + $0x198] sm:$0xff]
  %v67 = vld [vmem:[%s0 + $0x1a0] sm:$0xff]
  %v68 = vld [vmem:[%s0 + $0x1a8] sm:$0xff]
  %v69 = vld [vmem:[%s0 + $0x1b0] sm:$0xff]
  %v70 = vld [vmem:[%s0 + $0x1b8] sm:$0xff]
  %v71 = vld [vmem:[%s0 + $0x1c0] sm:$0xff]
  %v72 = vld [vmem:[%s0 + $0x1c8] sm:$0xff]
  %v73 = vld [vmem:[%s0 + $0x1d0] sm:$0xff]
  %v74 = vld [vmem:[%s0 + $0x1d8] sm:$0xff]
  %v75 = vld [vmem:[%s0 + $0x1e0] sm:$0xff]
  %v76 = vld [vmem:[%s0 + $0x1e8] sm:$0xff]
  %v77 = vld [vmem:[%s0 + $0x1f0] sm:$0xff]
  %v78 = vld [vmem:[%s0 + $0x1f8] sm:$0xff]
  %v79 = vld [vmem:[%s0 + $0x200] sm:$0xff]
  %v80 = vld [vmem:[%s0 + $0x208] sm:$0xff]
  %v81 = vld [vmem:[%s0 + $0x210] sm:$0xff]
  %v82 = vld [vmem:[%s0 + $0x218] sm:$0xff]
  %v83 = vld [vmem:[%s0 + $0x220] sm:$0xff]
  %v84 = vld [vmem:[%s0 + $0x228] sm:$0xff]
  %v85 = vld [vmem:[%s0 + $0x230] sm:$0xff]
  %v86 = vld [vmem:[%s0 + $0x238] sm:$0xff]
  %v87 = vld [vmem:[%s0 + $0x240] sm:$0xff]
  %v88 = vld [vmem:[%s0 + $0x248] sm:$0xff]
  %v89 = vld [vmem:[%s0 + $0x250] sm:$0xff]
  %v90 = vld [vmem:[%s0 + $0x258] sm:$0xff]
  %v91 = vld [vmem:[%s0 + $0x260] sm:$0xff]
  %v92 = vld [vmem:[%s0 + $0x268] sm:$0xff]
  %v93 = vld [vmem:[%s0 + $0x270] sm:$0xff]
  %v94 = vld [vmem:[%s0 + $0x278] sm:$0xff]
  %v95 = vld [vmem:[%s0 + $0x280] sm:$0xff]
  %v96 = vld [vmem:[%s0 + $0x288] sm:$0xff]
  %v97 = vld [vmem:[%s0 + $0x290] sm:$0xff]
  %v98 = vld [vmem:[%s0 + $0x298] sm:$0xff]
  %v99 = vld [vmem:[%s0 + $0x2a0] sm:$0xff]
  %v100 = vld [vmem:[%s0 + $0x2a8] sm:$0xff]
  %v101 = vld [vmem:[%s0 + $0x2b0] sm:$0xff]
  %v102 = vld [vmem:[%s0 + $0x2b8] sm:$0xff]
  %v103 = vld [vmem:[%s0 + $0x2c0] sm:$0xff]
  %v104 = vld [vmem:[%s0 + $0x2c8] sm:$0xff]
  %v105 = vld [vmem:[%s0 + $0x2d0] sm:$0xff]
  %v106 = vld [vmem:[%s0 + $0x2d8] sm:$0xff]
  %v107 = vld [vmem:[%s0 + $0x2e0] sm:$0xff]
  %v108 = vld [vmem:[%s0 + $0x2e8] sm:$0xff]
  %v109 = vld [vmem:[%s0 + $0x2f0] sm:$0xff]
  %v110 = vld [vmem:[%s0 + $0x2f8] sm:$0xff]
  %v111 = vld [vmem:[%s0 + $0x300] sm:$0xff]
  %v112 = vld [vmem:[%s0 + $0x308] sm:$0xff]
  %v113 = vld [vmem:[%s0 + $0x310] sm:$0xff]
  %v114 = vld [vmem:[%s0 + $0x318] sm:$0xff]
  %v115 = vld [vmem:[%s0 + $0x320] sm:$0xff]
  %v116 = vld [vmem:[%s0 + $0x328] sm:$0xff]
  %v117 = vld [vmem:[%s0 + $0x330] sm:$0xff]
  %v118 = vld [vmem:[%s0 + $0x338] sm:$0xff]
  %v119 = vld [vmem:[%s0 + $0x340] sm:$0xff]
  %v120 = vld [vmem:[%s0 + $0x348] sm:$0xff]
  %v121 = vld [vmem:[%s0 + $0x350] sm:$0xff]
  %v122 = vld [vmem:[%s0 + $0x358] sm:$0xff]
  %v123 = vld [vmem:[%s0 + $0x360] sm:$0xff]
  %v124 = vld [vmem:[%s0 + $0x368] sm:$0xff]
  %v125 = vld [vmem:[%s0 + $0x370] sm:$0xff]
  %v126 = vld [vmem:[%s0 + $0x378] sm:$0xff]
  %v127 = vld [vmem:[%s0 + $0x380] sm:$0xff]
  %v128 = vld [vmem:[%s0 + $0x388] sm:$0xff]
  %v129 = vld [vmem:[%s0 + $0x390] sm:$0xff]
  %v130 = vld [vmem:[%s0 + $0x398] sm:$0xff]
  %v131 = vld [vmem:[%s0 + $0x3a0] sm:$0xff]
  %v132 = vld [vmem:[%s0 + $0x3a8] sm:$0xff]
  %v133 = vld [vmem:[%s0 + $0x3b0] sm:$0xff]
  %v134 = vld [vmem:[%s0 + $0x3b8] sm:$0xff]
  %v135 = vld [vmem:[%s0 + $0x3c0] sm:$0xff]
  %v136 = vld [vmem:[%s0 + $0x3c8] sm:$0xff]
  %v137 = vld [vmem:[%s0 + $0x3d0] sm:$0xff]
  %v138 = vld [vmem:[%s0 + $0x3d8] sm:$0xff]
  %v139 = vld [vmem:[%s0 + $0x3e0] sm:$0xff]
  %v140 = vld [vmem:[%s0 + $0x3e8] sm:$0xff]
  %v141 = vld [vmem:[%s0 + $0x3f0] sm:$0xff]
  %v142 = vld [vmem:[%s0 + $0x3f8] sm:$0xff]
  %v143 = vld [vmem:[%s0 + $0x400] sm:$0xff]
  %v144 = vld [vmem:[%s0 + $0x408] sm:$0xff]
  %v145 = vld [vmem:[%s0 + $0x410] sm:$0xff]
  %v146 = vld [vmem:[%s0 + $0x418] sm:$0xff]
  %v147 = vld [vmem:[%s0 + $0x420] sm:$0xff]
  %v148 = vld [vmem:[%s0 + $0x428] sm:$0xff]
  %v149 = vld [vmem:[%s0 + $0x430] sm:$0xff]
  %v150 = vld [vmem:[%s0 + $0x438] sm:$0xff]
  %v151 = vld [vmem:[%s0 + $0x440] sm:$0xff]
  %v152 = vld [vmem:[%s0 + $0x448] sm:$0xff]
  %v153 = vld [vmem:[%s0 + $0x450] sm:$0xff]
  %v154 = vld [vmem:[%s0 + $0x458] sm:$0xff]
  %v155 = vld [vmem:[%s0 + $0x460] sm:$0xff]
  %v156 = vld [vmem:[%s0 + $0x468] sm:$0xff]
  %v157 = vld [vmem:[%s0 + $0x470] sm:$0xff]
  %v158 = vld [vmem:[%s0 + $0x478] sm:$0xff]
  %v159 = vld [vmem:[%s0 + $0x480] sm:$0xff]
  %v160 = vld [vmem:[%s0 + $0x488] sm:$0xff]
  %v161 = vld [vmem:[%s0 + $0x490] sm:$0xff]
  %v162 = vld [vmem:[%s0 + $0x498] sm:$0xff]
  %v163 = vld [vmem:[%s0 + $0x4a0] sm:$0xff]
  %v164 = vld [vmem:[%s0 + $0x4a8] sm:$0xff]
  %v165 = vld [vmem:[%s0 + $0x4b0] sm:$0xff]
  %v166 = vld [vmem:[%s0 + $0x4b8] sm:$0xff]
  %v167 = vld [vmem:[%s0 + $0x4c0] sm:$0xff]
  %v168 = vld [vmem:[%s0 + $0x4c8] sm:$0xff]
  %v169 = vld [vmem:[%s0 + $0x4d0] sm:$0xff]
  %v170 = vld [vmem:[%s0 + $0x4d8] sm:$0xff]
  %v171 = vld [vmem:[%s0 + $0x4e0] sm:$0xff]
  %v172 = vld [vmem:[%s0 + $0x4e8] sm:$0xff]
  %v173 = vld [vmem:[%s0 + $0x4f0] sm:$0xff]
  %v174 = vld [vmem:[%s0 + $0x4f8] sm:$0xff]
  %v175 = vld [vmem:[%s0 + $0x500] sm:$0xff]
  %v176 = vld [vmem:[%s0 + $0x508] sm:$0xff]
  %v177 = vld [vmem:[%s0 + $0x510] sm:$0xff]
  %v178 = vld [vmem:[%s0 + $0x518] sm:$0xff]
  %v179 = vld [vmem:[%s0 + $0x520] sm:$0xff]
  %v180 = vld [vmem:[%s0 + $0x528] sm:$0xff]
  %v181 = vld [vmem:[%s0 + $0x530] sm:$0xff]
  %v182 = vld [vmem:[%s0 + $0x538] sm:$0xff]
  %v183 = vld [vmem:[%s0 + $0x540] sm:$0xff]
  %v184 = vld [vmem:[%s0 + $0x548] sm:$0xff]
  %v185 = vld [vmem:[%s0 + $0x550] sm:$0xff]
  %v186 = vld [vmem:[%s0 + $0x558] sm:$0xff]
  %v187 = vld [vmem:[%s0 + $0x560] sm:$0xff]
  %v188 = vld [vmem:[%s0 + $0x568] sm:$0xff]
  %v189 = vld [vmem:[%s0 + $0x570] sm:$0xff]
  %v190 = vld [vmem:[%s0 + $0x578] sm:$0xff]
  %v191 = vld [vmem:[%s0 + $0x580] sm:$0xff]
  %v192 = vld [vmem:[%s0 + $0x588] sm:$0xff]
  %v193 = vld [vmem:[%s0 + $0x590] sm:$0xff]
  %v194 = vld [vmem:[%s0 + $0x598] sm:$0xff]
  %v195 = vld [vmem:[%s0 + $0x5a0] sm:$0xff]
  %v196 = vld [vmem:[%s0 + $0x5a8] sm:$0xff]
  %v197 = vld [vmem:[%s0 + $0x5b0] sm:$0xff]
  %v198 = vld [vmem:[%s0 + $0x5b8] sm:$0xff]
  %v199 = vld [vmem:[%s0 + $0x5c0] sm:$0xff]
  %v200 = vld [vmem:[%s0 + $0x5c8] sm:$0xff]
  %v201 = vld [vmem:[%s0 + $0x5d0] sm:$0xff]
  %v202 = vld [vmem:[%s0 + $0x5d8] sm:$0xff]
  %v203 = vld [vmem:[%s0 + $0x5e0] sm:$0xff]
  %v204 = vld [vmem:[%s0 + $0x5e8] sm:$0xff]
  %v205 = vld [vmem:[%s0 + $0x5f0] sm:$0xff]
  %v206 = vld [vmem:[%s0 + $0x5f8] sm:$0xff]
  %v207 = vld [vmem:[%s0 + $0x600] sm:$0xff]
  %v208 = vld [vmem:[%s0 + $0x608] sm:$0xff]
  %v209 = vld [vmem:[%s0 + $0x610] sm:$0xff]
  %v210 = vld [vmem:[%s0 + $0x618] sm:$0xff]
  %v211 = vld [vmem:[%s0 + $0x620] sm:$0xff]
  %v212 = vld [vmem:[%s0 + $0x628] sm:$0xff]
  %v213 = vld [vmem:[%s0 + $0x630] sm:$0xff]
  %v214 = vld [vmem:[%s0 + $0x638] sm:$0xff]
  %v215 = vpack.c.bf16 %v17, %v15
  %v216 = vpack.c.bf16 %v18, %v16
  %v217 = vpack.c.bf16 %v21, %v19
  %v218 = vpack.c.bf16 %v22, %v20
  %v219 = vpack.c.bf16 %v25, %v23
  %v220 = vpack.c.bf16 %v26, %v24
  %v221 = vpack.c.bf16 %v29, %v27
  %v222 = vpack.c.bf16 %v30, %v28
  %v223 = vpack.c.bf16 %v33, %v31
  %v224 = vpack.c.bf16 %v34, %v32
  %v225 = vpack.c.bf16 %v37, %v35
  %v226 = vpack.c.bf16 %v38, %v36
  %v227 = vpack.c.bf16 %v41, %v39
  %v228 = vpack.c.bf16 %v42, %v40
  %v229 = vpack.c.bf16 %v45, %v43
  %v230 = vpack.c.bf16 %v46, %v44
  %v231 = vpack.c.bf16 %v49, %v47
  %v232 = vpack.c.bf16 %v50, %v48
  %v233 = vpack.c.bf16 %v53, %v51
  %v234 = vpack.c.bf16 %v54, %v52
  %v235 = vpack.c.bf16 %v57, %v55
  %v236 = vpack.c.bf16 %v58, %v56
  %v237 = vpack.c.bf16 %v61, %v59
  %v238 = vpack.c.bf16 %v62, %v60
  %v239 = vpack.c.bf16 %v65, %v63
  %v240 = vpack.c.bf16 %v66, %v64
  %v241 = vpack.c.bf16 %v69, %v67
  %v242 = vpack.c.bf16 %v70, %v68
  %v243 = vpack.c.bf16 %v73, %v71
  %v244 = vpack.c.bf16 %v74, %v72
  %v245 = vpack.c.bf16 %v77, %v75
  %v246 = vpack.c.bf16 %v78, %v76
  %v247 = vpack.c.bf16 %v81, %v79
  %v248 = vpack.c.bf16 %v82, %v80
  %v249 = vpack.c.bf16 %v85, %v83
  %v250 = vpack.c.bf16 %v86, %v84
  %v251 = vpack.c.bf16 %v89, %v87
  %v252 = vpack.c.bf16 %v90, %v88
  %v253 = vpack.c.bf16 %v93, %v91
  %v254 = vpack.c.bf16 %v94, %v92
  %v255 = vpack.c.bf16 %v97, %v95
  %v256 = vpack.c.bf16 %v98, %v96
  %v257 = vpack.c.bf16 %v101, %v99
  %v258 = vpack.c.bf16 %v102, %v100
  %v259 = vpack.c.bf16 %v105, %v103
  %v260 = vpack.c.bf16 %v106, %v104
  %v261 = vpack.c.bf16 %v109, %v107
  %v262 = vpack.c.bf16 %v110, %v108
  %v263 = vpack.c.bf16 %v113, %v111
  %v264 = vpack.c.bf16 %v114, %v112
  %v265 = vpack.c.bf16 %v117, %v115
  %v266 = vpack.c.bf16 %v118, %v116
  %v267 = vpack.c.bf16 %v121, %v119
  %v268 = vpack.c.bf16 %v122, %v120
  %v269 = vpack.c.bf16 %v125, %v123
  %v270 = vpack.c.bf16 %v126, %v124
  %v271 = vpack.c.bf16 %v129, %v127
  %v272 = vpack.c.bf16 %v130, %v128
  %v273 = vpack.c.bf16 %v133, %v131
  %v274 = vpack.c.bf16 %v134, %v132
  %v275 = vpack.c.bf16 %v137, %v135
  %v276 = vpack.c.bf16 %v138, %v136
  %v277 = vpack.c.bf16 %v141, %v139
  %v278 = vpack.c.bf16 %v142, %v140
  %v279 = vpack.c.bf16 %v145, %v143
  %v280 = vpack.c.bf16 %v146, %v144
  %v281 = vpack.c.bf16 %v149, %v147
  %v282 = vpack.c.bf16 %v150, %v148
  %v283 = vpack.c.bf16 %v153, %v151
  %v284 = vpack.c.bf16 %v154, %v152
  %v285 = vpack.c.bf16 %v157, %v155
  %v286 = vpack.c.bf16 %v158, %v156
  %v287 = vpack.c.bf16 %v161, %v159
  %v288 = vpack.c.bf16 %v162, %v160
  %v289 = vpack.c.bf16 %v165, %v163
  %v290 = vpack.c.bf16 %v166, %v164
  %v291 = vpack.c.bf16 %v169, %v167
  %v292 = vpack.c.bf16 %v170, %v168
  %v293 = vpack.c.bf16 %v173, %v171
  %v294 = vpack.c.bf16 %v174, %v172
  %v295 = vpack.c.bf16 %v177, %v175
  %v296 = vpack.c.bf16 %v178, %v176
  %v297 = vpack.c.bf16 %v181, %v179
  %v298 = vpack.c.bf16 %v182, %v180
  %v299 = vpack.c.bf16 %v185, %v183
  %v300 = vpack.c.bf16 %v186, %v184
  %v301 = vpack.c.bf16 %v189, %v187
  %v302 = vpack.c.bf16 %v190, %v188
  %v303 = vpack.c.bf16 %v193, %v191
  %v304 = vpack.c.bf16 %v194, %v192
  %v305 = vpack.c.bf16 %v197, %v195
  %v306 = vpack.c.bf16 %v198, %v196
  %v307 = vpack.c.bf16 %v201, %v199
  %v308 = vpack.c.bf16 %v202, %v200
  %v309 = vpack.c.bf16 %v205, %v203
  %v310 = vpack.c.bf16 %v206, %v204
  %v311 = vpack.c.bf16 %v209, %v207
  %v312 = vpack.c.bf16 %v210, %v208
  %v313 = vpack.c.bf16 %v213, %v211
  %v314 = vpack.c.bf16 %v214, %v212
  %v315 = vld [vmem:[%s1] sm:$0xf]
  %v316 = vld [vmem:[%s1 + $0x4] sm:$0xf]
  %v317 = vld [vmem:[%s1 + $0x8] sm:$0xf]
  %v318 = vld [vmem:[%s1 + $0xc] sm:$0xf]
  %v319 = vld [vmem:[%s1 + $0x10] sm:$0xf]
  %v320 = vld [vmem:[%s1 + $0x14] sm:$0xf]
  %v321 = vld [vmem:[%s1 + $0x18] sm:$0xf]
  %v322 = vld [vmem:[%s1 + $0x1c] sm:$0xf]
  %v323 = vld [vmem:[%s1 + $0x20] sm:$0xf]
  %v324 = vld [vmem:[%s1 + $0x24] sm:$0xf]
  %v325 = vld [vmem:[%s1 + $0x28] sm:$0xf]
  %v326 = vld [vmem:[%s1 + $0x2c] sm:$0xf]
  %v327 = vld [vmem:[%s1 + $0x30] sm:$0xf]
  %v328 = vld [vmem:[%s1 + $0x34] sm:$0xf]
  %v329 = vld [vmem:[%s1 + $0x38] sm:$0xf]
  %v330 = vld [vmem:[%s1 + $0x3c] sm:$0xf]
  %v331 = vld [vmem:[%s1 + $0x40] sm:$0xf]
  %v332 = vld [vmem:[%s1 + $0x44] sm:$0xf]
  %v333 = vld [vmem:[%s1 + $0x48] sm:$0xf]
  %v334 = vld [vmem:[%s1 + $0x4c] sm:$0xf]
  %v335 = vld [vmem:[%s1 + $0x50] sm:$0xf]
  %v336 = vld [vmem:[%s1 + $0x54] sm:$0xf]
  %v337 = vld [vmem:[%s1 + $0x58] sm:$0xf]
  %v338 = vld [vmem:[%s1 + $0x5c] sm:$0xf]
  %v339 = vld [vmem:[%s1 + $0x60] sm:$0xf]
  %v340 = vld [vmem:[%s1 + $0x64] sm:$0xf]
  %v341 = vld [vmem:[%s1 + $0x68] sm:$0xf]
  %v342 = vld [vmem:[%s1 + $0x6c] sm:$0xf]
  %v343 = vld [vmem:[%s1 + $0x70] sm:$0xf]
  %v344 = vld [vmem:[%s1 + $0x74] sm:$0xf]
  %v345 = vld [vmem:[%s1 + $0x78] sm:$0xf]
  %v346 = vld [vmem:[%s1 + $0x7c] sm:$0xf]
  %v347 = vld [vmem:[%s2] sm:$0x1]
  %v349 = vlaneseq
  %v350 = vshrl.u32 %v349, 7
  %v351 = vsub.s32 0, %v350
  %v352 = vrot.slane %v347, %v351
  %v386 = vunpack.c.l.b16 %v315
  %v387 = vunpack.c.l.b16 %v316
  %v388 = vunpack.c.l.b16 %v317
  %v389 = vunpack.c.l.b16 %v318
  %v390 = vunpack.c.l.b16 %v319
  %v391 = vunpack.c.l.b16 %v320
  %v392 = vunpack.c.l.b16 %v321
  %v393 = vunpack.c.l.b16 %v322
  %v394 = vunpack.c.l.b16 %v323
  %v395 = vunpack.c.l.b16 %v324
  %v396 = vunpack.c.l.b16 %v325
  %v397 = vunpack.c.l.b16 %v326
  %v398 = vunpack.c.l.b16 %v327
  %v399 = vunpack.c.l.b16 %v328
  %v400 = vunpack.c.l.b16 %v329
  %v401 = vunpack.c.l.b16 %v330
  %v402 = vunpack.c.l.b16 %v331
  %v403 = vunpack.c.l.b16 %v332
  %v404 = vunpack.c.l.b16 %v333
  %v405 = vunpack.c.l.b16 %v334
  %v406 = vunpack.c.l.b16 %v335
  %v407 = vunpack.c.l.b16 %v336
  %v408 = vunpack.c.l.b16 %v337
  %v409 = vunpack.c.l.b16 %v338
  %v410 = vunpack.c.l.b16 %v339
  %v411 = vunpack.c.l.b16 %v340
  %v412 = vunpack.c.l.b16 %v341
  %v413 = vunpack.c.l.b16 %v342
  %v414 = vunpack.c.l.b16 %v343
  %v415 = vunpack.c.l.b16 %v344
  %v416 = vunpack.c.l.b16 %v345
  %v417 = vunpack.c.l.b16 %v346
  %v418 = vpack.c.b16 %v387, %v386
  %v419 = vpack.c.b16 %v389, %v388
  %v420 = vpack.c.b16 %v391, %v390
  %v421 = vpack.c.b16 %v393, %v392
  %v422 = vpack.c.b16 %v395, %v394
  %v423 = vpack.c.b16 %v397, %v396
  %v424 = vpack.c.b16 %v399, %v398
  %v425 = vpack.c.b16 %v401, %v400
  %v426 = vpack.c.b16 %v403, %v402
  %v427 = vpack.c.b16 %v405, %v404
  %v428 = vpack.c.b16 %v407, %v406
  %v429 = vpack.c.b16 %v409, %v408
  %v430 = vpack.c.b16 %v411, %v410
  %v431 = vpack.c.b16 %v413, %v412
  %v432 = vpack.c.b16 %v415, %v414
  %v433 = vpack.c.b16 %v417, %v416
  %450 = vmatprep.subr.bf16.mxu0 0
  %451 = vmatpush1.bf16.msra.mxu0 %v425
  %452 = vmatprep.subr.bf16.mxu0 0
  %453 = vmatpush1.bf16.msra.mxu0 %v424
  %454 = vmatprep.subr.bf16.mxu0 0
  %455 = vmatpush1.bf16.msra.mxu0 %v423
  %456 = vmatprep.subr.bf16.mxu0 0
  %457 = vmatpush1.bf16.msra.mxu0 %v422
  %458 = vmatprep.subr.bf16.mxu0 0
  %459 = vmatpush1.bf16.msra.mxu0 %v421
  %460 = vmatprep.subr.bf16.mxu0 0
  %461 = vmatpush1.bf16.msra.mxu0 %v420
  %462 = vmatprep.subr.bf16.mxu0 0
  %463 = vmatpush1.bf16.msra.mxu0 %v419
  %464 = vmatprep.subr.bf16.mxu0 0
  %465 = vmatpush1.bf16.msra.mxu0 %v418
  %466 = vmatprep.subr.bf16.mxu0 0
  %467 = vmatpush2.bf16.msra.mxu0 %v433
  %468 = vmatprep.subr.bf16.mxu0 0
  %469 = vmatpush2.bf16.msra.mxu0 %v432
  %470 = vmatprep.subr.bf16.mxu0 0
  %471 = vmatpush2.bf16.msra.mxu0 %v431
  %472 = vmatprep.subr.bf16.mxu0 0
  %473 = vmatpush2.bf16.msra.mxu0 %v430
  %474 = vmatprep.subr.bf16.mxu0 0
  %475 = vmatpush2.bf16.msra.mxu0 %v429
  %476 = vmatprep.subr.bf16.mxu0 0
  %477 = vmatpush2.bf16.msra.mxu0 %v428
  %478 = vmatprep.subr.bf16.mxu0 0
  %479 = vmatpush2.bf16.msra.mxu0 %v427
  %480 = vmatprep.subr.bf16.mxu0 0
  %481 = vmatpush2.bf16.msra.mxu0 %v426
  %482 = vmatprep.mubr.bf16.mxu0 %v216
  %483 = vmatmul.mubr.bf16.gmra.mxu0 %v215
  %v484 = vpop.f32.mrf.mxu0
  %v485 = vadd.f32 %v352, %v484
  %v486 = vpop.f32.mrf.mxu0
  %v487 = vpop.f32.mrf.mxu0
  %v488 = vadd.f32 %v352, %v487
  %v489 = vpop.f32.mrf.mxu0
  %490 = vmatprep.mubr.bf16.mxu0 %v218
  %491 = vmatmul.mubr.bf16.gmra.mxu0 %v217
  %v492 = vpop.f32.mrf.mxu0
  %v493 = vadd.f32 %v352, %v492
  %v494 = vpop.f32.mrf.mxu0
  %v495 = vpop.f32.mrf.mxu0
  %v496 = vadd.f32 %v352, %v495
  %v497 = vpop.f32.mrf.mxu0
  %498 = vmatprep.mubr.bf16.mxu0 %v220
  %499 = vmatmul.mubr.bf16.gmra.mxu0 %v219
  %v500 = vpop.f32.mrf.mxu0
  %v501 = vadd.f32 %v352, %v500
  %v502 = vpop.f32.mrf.mxu0
  %v503 = vpop.f32.mrf.mxu0
  %v504 = vadd.f32 %v352, %v503
  %v505 = vpop.f32.mrf.mxu0
  %506 = vmatprep.mubr.bf16.mxu0 %v222
  %507 = vmatmul.mubr.bf16.gmra.mxu0 %v221
  %v508 = vpop.f32.mrf.mxu0
  %v509 = vadd.f32 %v352, %v508
  %v510 = vpop.f32.mrf.mxu0
  %v511 = vpop.f32.mrf.mxu0
  %v512 = vadd.f32 %v352, %v511
  %v513 = vpop.f32.mrf.mxu0
  %514 = vmatprep.mubr.bf16.mxu0 %v224
  %515 = vmatmul.mubr.bf16.gmra.mxu0 %v223
  %v516 = vpop.f32.mrf.mxu0
  %v517 = vadd.f32 %v352, %v516
  %v518 = vpop.f32.mrf.mxu0
  %v519 = vpop.f32.mrf.mxu0
  %v520 = vadd.f32 %v352, %v519
  %v521 = vpop.f32.mrf.mxu0
  %522 = vmatprep.mubr.bf16.mxu0 %v226
  %523 = vmatmul.mubr.bf16.gmra.mxu0 %v225
  %v524 = vpop.f32.mrf.mxu0
  %v525 = vadd.f32 %v352, %v524
  %v526 = vpop.f32.mrf.mxu0
  %v527 = vpop.f32.mrf.mxu0
  %v528 = vadd.f32 %v352, %v527
  %v529 = vpop.f32.mrf.mxu0
  %530 = vmatprep.mubr.bf16.mxu0 %v228
  %531 = vmatmul.mubr.bf16.gmra.mxu0 %v227
  %v532 = vpop.f32.mrf.mxu0
  %v533 = vadd.f32 %v352, %v532
  %v534 = vpop.f32.mrf.mxu0
  %v535 = vpop.f32.mrf.mxu0
  %v536 = vadd.f32 %v352, %v535
  %v537 = vpop.f32.mrf.mxu0
  %538 = vmatprep.mubr.bf16.mxu0 %v230
  %539 = vmatmul.mubr.bf16.gmra.mxu0 %v229
  %v540 = vpop.f32.mrf.mxu0
  %v541 = vadd.f32 %v352, %v540
  %v542 = vpop.f32.mrf.mxu0
  %v543 = vpop.f32.mrf.mxu0
  %v544 = vadd.f32 %v352, %v543
  %v545 = vpop.f32.mrf.mxu0
  %546 = vmatprep.mubr.bf16.mxu0 %v232
  %547 = vmatmul.mubr.bf16.gmra.mxu0 %v231
  %v548 = vpop.f32.mrf.mxu0
  %v549 = vadd.f32 %v352, %v548
  %v550 = vpop.f32.mrf.mxu0
  %v551 = vpop.f32.mrf.mxu0
  %v552 = vadd.f32 %v352, %v551
  %v553 = vpop.f32.mrf.mxu0
  %554 = vmatprep.mubr.bf16.mxu0 %v234
  %555 = vmatmul.mubr.bf16.gmra.mxu0 %v233
  %v556 = vpop.f32.mrf.mxu0
  %v557 = vadd.f32 %v352, %v556
  %v558 = vpop.f32.mrf.mxu0
  %v559 = vpop.f32.mrf.mxu0
  %v560 = vadd.f32 %v352, %v559
  %v561 = vpop.f32.mrf.mxu0
  %562 = vmatprep.mubr.bf16.mxu0 %v236
  %563 = vmatmul.mubr.bf16.gmra.mxu0 %v235
  %v564 = vpop.f32.mrf.mxu0
  %v565 = vadd.f32 %v352, %v564
  %v566 = vpop.f32.mrf.mxu0
  %v567 = vpop.f32.mrf.mxu0
  %v568 = vadd.f32 %v352, %v567
  %v569 = vpop.f32.mrf.mxu0
  %570 = vmatprep.mubr.bf16.mxu0 %v238
  %571 = vmatmul.mubr.bf16.gmra.mxu0 %v237
  %v572 = vpop.f32.mrf.mxu0
  %v573 = vadd.f32 %v352, %v572
  %v574 = vpop.f32.mrf.mxu0
  %v575 = vpop.f32.mrf.mxu0
  %v576 = vadd.f32 %v352, %v575
  %v577 = vpop.f32.mrf.mxu0
  %578 = vmatprep.mubr.bf16.mxu0 %v240
  %579 = vmatmul.mubr.bf16.gmra.mxu0 %v239
  %v580 = vpop.f32.mrf.mxu0
  %v581 = vadd.f32 %v352, %v580
  %v582 = vpop.f32.mrf.mxu0
  %v583 = vpop.f32.mrf.mxu0
  %v584 = vadd.f32 %v352, %v583
  %v585 = vpop.f32.mrf.mxu0
  %586 = vmatprep.mubr.bf16.mxu0 %v242
  %587 = vmatmul.mubr.bf16.gmra.mxu0 %v241
  %v588 = vpop.f32.mrf.mxu0
  %v589 = vadd.f32 %v352, %v588
  %v590 = vpop.f32.mrf.mxu0
  %v591 = vpop.f32.mrf.mxu0
  %v592 = vadd.f32 %v352, %v591
  %v593 = vpop.f32.mrf.mxu0
  %594 = vmatprep.mubr.bf16.mxu0 %v244
  %595 = vmatmul.mubr.bf16.gmra.mxu0 %v243
  %v596 = vpop.f32.mrf.mxu0
  %v597 = vadd.f32 %v352, %v596
  %v598 = vpop.f32.mrf.mxu0
  %v599 = vpop.f32.mrf.mxu0
  %v600 = vadd.f32 %v352, %v599
  %v601 = vpop.f32.mrf.mxu0
  %602 = vmatprep.mubr.bf16.mxu0 %v246
  %603 = vmatmul.mubr.bf16.gmra.mxu0 %v245
  %v604 = vpop.f32.mrf.mxu0
  %v605 = vadd.f32 %v352, %v604
  %v606 = vpop.f32.mrf.mxu0
  %v607 = vpop.f32.mrf.mxu0
  %v608 = vadd.f32 %v352, %v607
  %v609 = vpop.f32.mrf.mxu0
  %610 = vmatprep.mubr.bf16.mxu0 %v248
  %611 = vmatmul.mubr.bf16.gmra.mxu0 %v247
  %v612 = vpop.f32.mrf.mxu0
  %v613 = vadd.f32 %v352, %v612
  %v614 = vpop.f32.mrf.mxu0
  %v615 = vpop.f32.mrf.mxu0
  %v616 = vadd.f32 %v352, %v615
  %v617 = vpop.f32.mrf.mxu0
  %618 = vmatprep.mubr.bf16.mxu0 %v250
  %619 = vmatmul.mubr.bf16.gmra.mxu0 %v249
  %v620 = vpop.f32.mrf.mxu0
  %v621 = vadd.f32 %v352, %v620
  %v622 = vpop.f32.mrf.mxu0
  %v623 = vpop.f32.mrf.mxu0
  %v624 = vadd.f32 %v352, %v623
  %v625 = vpop.f32.mrf.mxu0
  %626 = vmatprep.mubr.bf16.mxu0 %v252
  %627 = vmatmul.mubr.bf16.gmra.mxu0 %v251
  %v628 = vpop.f32.mrf.mxu0
  %v629 = vadd.f32 %v352, %v628
  %v630 = vpop.f32.mrf.mxu0
  %v631 = vpop.f32.mrf.mxu0
  %v632 = vadd.f32 %v352, %v631
  %v633 = vpop.f32.mrf.mxu0
  %634 = vmatprep.mubr.bf16.mxu0 %v254
  %635 = vmatmul.mubr.bf16.gmra.mxu0 %v253
  %v636 = vpop.f32.mrf.mxu0
  %v637 = vadd.f32 %v352, %v636
  %v638 = vpop.f32.mrf.mxu0
  %v639 = vpop.f32.mrf.mxu0
  %v640 = vadd.f32 %v352, %v639
  %v641 = vpop.f32.mrf.mxu0
  %642 = vmatprep.mubr.bf16.mxu0 %v256
  %643 = vmatmul.mubr.bf16.gmra.mxu0 %v255
  %v644 = vpop.f32.mrf.mxu0
  %v645 = vadd.f32 %v352, %v644
  %v646 = vpop.f32.mrf.mxu0
  %v647 = vpop.f32.mrf.mxu0
  %v648 = vadd.f32 %v352, %v647
  %v649 = vpop.f32.mrf.mxu0
  %650 = vmatprep.mubr.bf16.mxu0 %v258
  %651 = vmatmul.mubr.bf16.gmra.mxu0 %v257
  %v652 = vpop.f32.mrf.mxu0
  %v653 = vadd.f32 %v352, %v652
  %v654 = vpop.f32.mrf.mxu0
  %v655 = vpop.f32.mrf.mxu0
  %v656 = vadd.f32 %v352, %v655
  %v657 = vpop.f32.mrf.mxu0
  %658 = vmatprep.mubr.bf16.mxu0 %v260
  %659 = vmatmul.mubr.bf16.gmra.mxu0 %v259
  %v660 = vpop.f32.mrf.mxu0
  %v661 = vadd.f32 %v352, %v660
  %v662 = vpop.f32.mrf.mxu0
  %v663 = vpop.f32.mrf.mxu0
  %v664 = vadd.f32 %v352, %v663
  %v665 = vpop.f32.mrf.mxu0
  %666 = vmatprep.mubr.bf16.mxu0 %v262
  %667 = vmatmul.mubr.bf16.gmra.mxu0 %v261
  %v668 = vpop.f32.mrf.mxu0
  %v669 = vadd.f32 %v352, %v668
  %v670 = vpop.f32.mrf.mxu0
  %v671 = vpop.f32.mrf.mxu0
  %v672 = vadd.f32 %v352, %v671
  %v673 = vpop.f32.mrf.mxu0
  %674 = vmatprep.mubr.bf16.mxu0 %v264
  %675 = vmatmul.mubr.bf16.gmra.mxu0 %v263
  %v676 = vpop.f32.mrf.mxu0
  %v677 = vadd.f32 %v352, %v676
  %v678 = vpop.f32.mrf.mxu0
  %v679 = vpop.f32.mrf.mxu0
  %v680 = vadd.f32 %v352, %v679
  %v681 = vpop.f32.mrf.mxu0
  %682 = vmatprep.mubr.bf16.mxu0 %v266
  %683 = vmatmul.mubr.bf16.gmra.mxu0 %v265
  %v684 = vpop.f32.mrf.mxu0
  %v685 = vadd.f32 %v352, %v684
  %v686 = vpop.f32.mrf.mxu0
  %v687 = vpop.f32.mrf.mxu0
  %v688 = vadd.f32 %v352, %v687
  %v689 = vpop.f32.mrf.mxu0
  %690 = vmatprep.mubr.bf16.mxu0 %v268
  %691 = vmatmul.mubr.bf16.gmra.mxu0 %v267
  %v692 = vpop.f32.mrf.mxu0
  %v693 = vadd.f32 %v352, %v692
  %v694 = vpop.f32.mrf.mxu0
  %v695 = vpop.f32.mrf.mxu0
  %v696 = vadd.f32 %v352, %v695
  %v697 = vpop.f32.mrf.mxu0
  %698 = vmatprep.mubr.bf16.mxu0 %v270
  %699 = vmatmul.mubr.bf16.gmra.mxu0 %v269
  %v700 = vpop.f32.mrf.mxu0
  %v701 = vadd.f32 %v352, %v700
  %v702 = vpop.f32.mrf.mxu0
  %v703 = vpop.f32.mrf.mxu0
  %v704 = vadd.f32 %v352, %v703
  %v705 = vpop.f32.mrf.mxu0
  %706 = vmatprep.mubr.bf16.mxu0 %v272
  %707 = vmatmul.mubr.bf16.gmra.mxu0 %v271
  %v708 = vpop.f32.mrf.mxu0
  %v709 = vadd.f32 %v352, %v708
  %v710 = vpop.f32.mrf.mxu0
  %v711 = vpop.f32.mrf.mxu0
  %v712 = vadd.f32 %v352, %v711
  %v713 = vpop.f32.mrf.mxu0
  %714 = vmatprep.mubr.bf16.mxu0 %v274
  %715 = vmatmul.mubr.bf16.gmra.mxu0 %v273
  %v716 = vpop.f32.mrf.mxu0
  %v717 = vadd.f32 %v352, %v716
  %v718 = vpop.f32.mrf.mxu0
  %v719 = vpop.f32.mrf.mxu0
  %v720 = vadd.f32 %v352, %v719
  %v721 = vpop.f32.mrf.mxu0
  %722 = vmatprep.mubr.bf16.mxu0 %v276
  %723 = vmatmul.mubr.bf16.gmra.mxu0 %v275
  %v724 = vpop.f32.mrf.mxu0
  %v725 = vadd.f32 %v352, %v724
  %v726 = vpop.f32.mrf.mxu0
  %v727 = vpop.f32.mrf.mxu0
  %v728 = vadd.f32 %v352, %v727
  %v729 = vpop.f32.mrf.mxu0
  %730 = vmatprep.mubr.bf16.mxu0 %v278
  %731 = vmatmul.mubr.bf16.gmra.mxu0 %v277
  %v732 = vpop.f32.mrf.mxu0
  %v733 = vadd.f32 %v352, %v732
  %v734 = vpop.f32.mrf.mxu0
  %v735 = vpop.f32.mrf.mxu0
  %v736 = vadd.f32 %v352, %v735
  %v737 = vpop.f32.mrf.mxu0
  %738 = vmatprep.mubr.bf16.mxu0 %v280
  %739 = vmatmul.mubr.bf16.gmra.mxu0 %v279
  %v740 = vpop.f32.mrf.mxu0
  %v741 = vadd.f32 %v352, %v740
  %v742 = vpop.f32.mrf.mxu0
  %v743 = vpop.f32.mrf.mxu0
  %v744 = vadd.f32 %v352, %v743
  %v745 = vpop.f32.mrf.mxu0
  %746 = vmatprep.mubr.bf16.mxu0 %v282
  %747 = vmatmul.mubr.bf16.gmra.mxu0 %v281
  %v748 = vpop.f32.mrf.mxu0
  %v749 = vadd.f32 %v352, %v748
  %v750 = vpop.f32.mrf.mxu0
  %v751 = vpop.f32.mrf.mxu0
  %v752 = vadd.f32 %v352, %v751
  %v753 = vpop.f32.mrf.mxu0
  %754 = vmatprep.mubr.bf16.mxu0 %v284
  %755 = vmatmul.mubr.bf16.gmra.mxu0 %v283
  %v756 = vpop.f32.mrf.mxu0
  %v757 = vadd.f32 %v352, %v756
  %v758 = vpop.f32.mrf.mxu0
  %v759 = vpop.f32.mrf.mxu0
  %v760 = vadd.f32 %v352, %v759
  %v761 = vpop.f32.mrf.mxu0
  %762 = vmatprep.mubr.bf16.mxu0 %v286
  %763 = vmatmul.mubr.bf16.gmra.mxu0 %v285
  %v764 = vpop.f32.mrf.mxu0
  %v765 = vadd.f32 %v352, %v764
  %v766 = vpop.f32.mrf.mxu0
  %v767 = vpop.f32.mrf.mxu0
  %v768 = vadd.f32 %v352, %v767
  %v769 = vpop.f32.mrf.mxu0
  %770 = vmatprep.mubr.bf16.mxu0 %v288
  %771 = vmatmul.mubr.bf16.gmra.mxu0 %v287
  %v772 = vpop.f32.mrf.mxu0
  %v773 = vadd.f32 %v352, %v772
  %v774 = vpop.f32.mrf.mxu0
  %v775 = vpop.f32.mrf.mxu0
  %v776 = vadd.f32 %v352, %v775
  %v777 = vpop.f32.mrf.mxu0
  %778 = vmatprep.mubr.bf16.mxu0 %v290
  %779 = vmatmul.mubr.bf16.gmra.mxu0 %v289
  %v780 = vpop.f32.mrf.mxu0
  %v781 = vadd.f32 %v352, %v780
  %v782 = vpop.f32.mrf.mxu0
  %v783 = vpop.f32.mrf.mxu0
  %v784 = vadd.f32 %v352, %v783
  %v785 = vpop.f32.mrf.mxu0
  %786 = vmatprep.mubr.bf16.mxu0 %v292
  %787 = vmatmul.mubr.bf16.gmra.mxu0 %v291
  %v788 = vpop.f32.mrf.mxu0
  %v789 = vadd.f32 %v352, %v788
  %v790 = vpop.f32.mrf.mxu0
  %v791 = vpop.f32.mrf.mxu0
  %v792 = vadd.f32 %v352, %v791
  %v793 = vpop.f32.mrf.mxu0
  %794 = vmatprep.mubr.bf16.mxu0 %v294
  %795 = vmatmul.mubr.bf16.gmra.mxu0 %v293
  %v796 = vpop.f32.mrf.mxu0
  %v797 = vadd.f32 %v352, %v796
  %v798 = vpop.f32.mrf.mxu0
  %v799 = vpop.f32.mrf.mxu0
  %v800 = vadd.f32 %v352, %v799
  %v801 = vpop.f32.mrf.mxu0
  %802 = vmatprep.mubr.bf16.mxu0 %v296
  %803 = vmatmul.mubr.bf16.gmra.mxu0 %v295
  %v804 = vpop.f32.mrf.mxu0
  %v805 = vadd.f32 %v352, %v804
  %v806 = vpop.f32.mrf.mxu0
  %v807 = vpop.f32.mrf.mxu0
  %v808 = vadd.f32 %v352, %v807
  %v809 = vpop.f32.mrf.mxu0
  %810 = vmatprep.mubr.bf16.mxu0 %v298
  %811 = vmatmul.mubr.bf16.gmra.mxu0 %v297
  %v812 = vpop.f32.mrf.mxu0
  %v813 = vadd.f32 %v352, %v812
  %v814 = vpop.f32.mrf.mxu0
  %v815 = vpop.f32.mrf.mxu0
  %v816 = vadd.f32 %v352, %v815
  %v817 = vpop.f32.mrf.mxu0
  %818 = vmatprep.mubr.bf16.mxu0 %v300
  %819 = vmatmul.mubr.bf16.gmra.mxu0 %v299
  %v820 = vpop.f32.mrf.mxu0
  %v821 = vadd.f32 %v352, %v820
  %v822 = vpop.f32.mrf.mxu0
  %v823 = vpop.f32.mrf.mxu0
  %v824 = vadd.f32 %v352, %v823
  %v825 = vpop.f32.mrf.mxu0
  %826 = vmatprep.mubr.bf16.mxu0 %v302
  %827 = vmatmul.mubr.bf16.gmra.mxu0 %v301
  %v828 = vpop.f32.mrf.mxu0
  %v829 = vadd.f32 %v352, %v828
  %v830 = vpop.f32.mrf.mxu0
  %v831 = vpop.f32.mrf.mxu0
  %v832 = vadd.f32 %v352, %v831
  %v833 = vpop.f32.mrf.mxu0
  %834 = vmatprep.mubr.bf16.mxu0 %v304
  %835 = vmatmul.mubr.bf16.gmra.mxu0 %v303
  %v836 = vpop.f32.mrf.mxu0
  %v837 = vadd.f32 %v352, %v836
  %v838 = vpop.f32.mrf.mxu0
  %v839 = vpop.f32.mrf.mxu0
  %v840 = vadd.f32 %v352, %v839
  %v841 = vpop.f32.mrf.mxu0
  %842 = vmatprep.mubr.bf16.mxu0 %v306
  %843 = vmatmul.mubr.bf16.gmra.mxu0 %v305
  %v844 = vpop.f32.mrf.mxu0
  %v845 = vadd.f32 %v352, %v844
  %v846 = vpop.f32.mrf.mxu0
  %v847 = vpop.f32.mrf.mxu0
  %v848 = vadd.f32 %v352, %v847
  %v849 = vpop.f32.mrf.mxu0
  %850 = vmatprep.mubr.bf16.mxu0 %v308
  %851 = vmatmul.mubr.bf16.gmra.mxu0 %v307
  %v852 = vpop.f32.mrf.mxu0
  %v853 = vadd.f32 %v352, %v852
  %v854 = vpop.f32.mrf.mxu0
  %v855 = vpop.f32.mrf.mxu0
  %v856 = vadd.f32 %v352, %v855
  %v857 = vpop.f32.mrf.mxu0
  %858 = vmatprep.mubr.bf16.mxu0 %v310
  %859 = vmatmul.mubr.bf16.gmra.mxu0 %v309
  %v860 = vpop.f32.mrf.mxu0
  %v861 = vadd.f32 %v352, %v860
  %v862 = vpop.f32.mrf.mxu0
  %v863 = vpop.f32.mrf.mxu0
  %v864 = vadd.f32 %v352, %v863
  %v865 = vpop.f32.mrf.mxu0
  %866 = vmatprep.mubr.bf16.mxu0 %v312
  %867 = vmatmul.mubr.bf16.gmra.mxu0 %v311
  %v868 = vpop.f32.mrf.mxu0
  %v869 = vadd.f32 %v352, %v868
  %v870 = vpop.f32.mrf.mxu0
  %v871 = vpop.f32.mrf.mxu0
  %v872 = vadd.f32 %v352, %v871
  %v873 = vpop.f32.mrf.mxu0
  %874 = vmatprep.mubr.bf16.mxu0 %v314
  %875 = vmatmul.mubr.bf16.gmra.mxu0 %v313
  %v876 = vpop.f32.mrf.mxu0
  %v877 = vadd.f32 %v352, %v876
  %v878 = vpop.f32.mrf.mxu0
  %v879 = vpop.f32.mrf.mxu0
  %v880 = vadd.f32 %v352, %v879
  %v881 = vpop.f32.mrf.mxu0
  %882 = vdwg.mxu0
  %v883 = vmax.f32 %v485, 0.0
  %v884 = vmax.f32 %v488, 0.0
  %v885 = vmax.f32 %v493, 0.0
  %v886 = vmax.f32 %v496, 0.0
  %v887 = vmax.f32 %v501, 0.0
  %v888 = vmax.f32 %v504, 0.0
  %v889 = vmax.f32 %v509, 0.0
  %v890 = vmax.f32 %v512, 0.0
  %v891 = vmax.f32 %v517, 0.0
  %v892 = vmax.f32 %v520, 0.0
  %v893 = vmax.f32 %v525, 0.0
  %v894 = vmax.f32 %v528, 0.0
  %v895 = vmax.f32 %v533, 0.0
  %v896 = vmax.f32 %v536, 0.0
  %v897 = vmax.f32 %v541, 0.0
  %v898 = vmax.f32 %v544, 0.0
  %v899 = vmax.f32 %v549, 0.0
  %v900 = vmax.f32 %v552, 0.0
  %v901 = vmax.f32 %v557, 0.0
  %v902 = vmax.f32 %v560, 0.0
  %v903 = vmax.f32 %v565, 0.0
  %v904 = vmax.f32 %v568, 0.0
  %v905 = vmax.f32 %v573, 0.0
  %v906 = vmax.f32 %v576, 0.0
  %v907 = vmax.f32 %v581, 0.0
  %v908 = vmax.f32 %v584, 0.0
  %v909 = vmax.f32 %v589, 0.0
  %v910 = vmax.f32 %v592, 0.0
  %v911 = vmax.f32 %v597, 0.0
  %v912 = vmax.f32 %v600, 0.0
  %v913 = vmax.f32 %v605, 0.0
  %v914 = vmax.f32 %v608, 0.0
  %v915 = vmax.f32 %v613, 0.0
  %v916 = vmax.f32 %v616, 0.0
  %v917 = vmax.f32 %v621, 0.0
  %v918 = vmax.f32 %v624, 0.0
  %v919 = vmax.f32 %v629, 0.0
  %v920 = vmax.f32 %v632, 0.0
  %v921 = vmax.f32 %v637, 0.0
  %v922 = vmax.f32 %v640, 0.0
  %v923 = vmax.f32 %v645, 0.0
  %v924 = vmax.f32 %v648, 0.0
  %v925 = vmax.f32 %v653, 0.0
  %v926 = vmax.f32 %v656, 0.0
  %v927 = vmax.f32 %v661, 0.0
  %v928 = vmax.f32 %v664, 0.0
  %v929 = vmax.f32 %v669, 0.0
  %v930 = vmax.f32 %v672, 0.0
  %v931 = vmax.f32 %v677, 0.0
  %v932 = vmax.f32 %v680, 0.0
  %v933 = vmax.f32 %v685, 0.0
  %v934 = vmax.f32 %v688, 0.0
  %v935 = vmax.f32 %v693, 0.0
  %v936 = vmax.f32 %v696, 0.0
  %v937 = vmax.f32 %v701, 0.0
  %v938 = vmax.f32 %v704, 0.0
  %v939 = vmax.f32 %v709, 0.0
  %v940 = vmax.f32 %v712, 0.0
  %v941 = vmax.f32 %v717, 0.0
  %v942 = vmax.f32 %v720, 0.0
  %v943 = vmax.f32 %v725, 0.0
  %v944 = vmax.f32 %v728, 0.0
  %v945 = vmax.f32 %v733, 0.0
  %v946 = vmax.f32 %v736, 0.0
  %v947 = vmax.f32 %v741, 0.0
  %v948 = vmax.f32 %v744, 0.0
  %v949 = vmax.f32 %v749, 0.0
  %v950 = vmax.f32 %v752, 0.0
  %v951 = vmax.f32 %v757, 0.0
  %v952 = vmax.f32 %v760, 0.0
  %v953 = vmax.f32 %v765, 0.0
  %v954 = vmax.f32 %v768, 0.0
  %v955 = vmax.f32 %v773, 0.0
  %v956 = vmax.f32 %v776, 0.0
  %v957 = vmax.f32 %v781, 0.0
  %v958 = vmax.f32 %v784, 0.0
  %v959 = vmax.f32 %v789, 0.0
  %v960 = vmax.f32 %v792, 0.0
  %v961 = vmax.f32 %v797, 0.0
  %v962 = vmax.f32 %v800, 0.0
  %v963 = vmax.f32 %v805, 0.0
  %v964 = vmax.f32 %v808, 0.0
  %v965 = vmax.f32 %v813, 0.0
  %v966 = vmax.f32 %v816, 0.0
  %v967 = vmax.f32 %v821, 0.0
  %v968 = vmax.f32 %v824, 0.0
  %v969 = vmax.f32 %v829, 0.0
  %v970 = vmax.f32 %v832, 0.0
  %v971 = vmax.f32 %v837, 0.0
  %v972 = vmax.f32 %v840, 0.0
  %v973 = vmax.f32 %v845, 0.0
  %v974 = vmax.f32 %v848, 0.0
  %v975 = vmax.f32 %v853, 0.0
  %v976 = vmax.f32 %v856, 0.0
  %v977 = vmax.f32 %v861, 0.0
  %v978 = vmax.f32 %v864, 0.0
  %v979 = vmax.f32 %v869, 0.0
  %v980 = vmax.f32 %v872, 0.0
  %v981 = vmax.f32 %v877, 0.0
  %v982 = vmax.f32 %v880, 0.0
  %vm983 = vcmask 261120
  %984 = vst.msk [vmem:[%s3] sm:$0xff] %vm983, %v883
  %985 = vst.msk [vmem:[%s3 + $0x8] sm:$0xff] %vm983, %v884
  %986 = vst.msk [vmem:[%s3 + $0x10] sm:$0xff] %vm983, %v885
  %987 = vst.msk [vmem:[%s3 + $0x18] sm:$0xff] %vm983, %v886
  %988 = vst.msk [vmem:[%s3 + $0x20] sm:$0xff] %vm983, %v887
  %989 = vst.msk [vmem:[%s3 + $0x28] sm:$0xff] %vm983, %v888
  %990 = vst.msk [vmem:[%s3 + $0x30] sm:$0xff] %vm983, %v889
  %991 = vst.msk [vmem:[%s3 + $0x38] sm:$0xff] %vm983, %v890
  %992 = vst.msk [vmem:[%s3 + $0x40] sm:$0xff] %vm983, %v891
  %993 = vst.msk [vmem:[%s3 + $0x48] sm:$0xff] %vm983, %v892
  %994 = vst.msk [vmem:[%s3 + $0x50] sm:$0xff] %vm983, %v893
  %995 = vst.msk [vmem:[%s3 + $0x58] sm:$0xff] %vm983, %v894
  %996 = vst.msk [vmem:[%s3 + $0x60] sm:$0xff] %vm983, %v895
  %997 = vst.msk [vmem:[%s3 + $0x68] sm:$0xff] %vm983, %v896
  %998 = vst.msk [vmem:[%s3 + $0x70] sm:$0xff] %vm983, %v897
  %999 = vst.msk [vmem:[%s3 + $0x78] sm:$0xff] %vm983, %v898
  %1000 = vst.msk [vmem:[%s3 + $0x80] sm:$0xff] %vm983, %v899
  %1001 = vst.msk [vmem:[%s3 + $0x88] sm:$0xff] %vm983, %v900
  %1002 = vst.msk [vmem:[%s3 + $0x90] sm:$0xff] %vm983, %v901
  %1003 = vst.msk [vmem:[%s3 + $0x98] sm:$0xff] %vm983, %v902
  %1004 = vst.msk [vmem:[%s3 + $0xa0] sm:$0xff] %vm983, %v903
  %1005 = vst.msk [vmem:[%s3 + $0xa8] sm:$0xff] %vm983, %v904
  %1006 = vst.msk [vmem:[%s3 + $0xb0] sm:$0xff] %vm983, %v905
  %1007 = vst.msk [vmem:[%s3 + $0xb8] sm:$0xff] %vm983, %v906
  %1008 = vst.msk [vmem:[%s3 + $0xc0] sm:$0xff] %vm983, %v907
  %1009 = vst.msk [vmem:[%s3 + $0xc8] sm:$0xff] %vm983, %v908
  %1010 = vst.msk [vmem:[%s3 + $0xd0] sm:$0xff] %vm983, %v909
  %1011 = vst.msk [vmem:[%s3 + $0xd8] sm:$0xff] %vm983, %v910
  %1012 = vst.msk [vmem:[%s3 + $0xe0] sm:$0xff] %vm983, %v911
  %1013 = vst.msk [vmem:[%s3 + $0xe8] sm:$0xff] %vm983, %v912
  %1014 = vst.msk [vmem:[%s3 + $0xf0] sm:$0xff] %vm983, %v913
  %1015 = vst.msk [vmem:[%s3 + $0xf8] sm:$0xff] %vm983, %v914
  %1016 = vst.msk [vmem:[%s3 + $0x100] sm:$0xff] %vm983, %v915
  %1017 = vst.msk [vmem:[%s3 + $0x108] sm:$0xff] %vm983, %v916
  %1018 = vst.msk [vmem:[%s3 + $0x110] sm:$0xff] %vm983, %v917
  %1019 = vst.msk [vmem:[%s3 + $0x118] sm:$0xff] %vm983, %v918
  %1020 = vst.msk [vmem:[%s3 + $0x120] sm:$0xff] %vm983, %v919
  %1021 = vst.msk [vmem:[%s3 + $0x128] sm:$0xff] %vm983, %v920
  %1022 = vst.msk [vmem:[%s3 + $0x130] sm:$0xff] %vm983, %v921
  %1023 = vst.msk [vmem:[%s3 + $0x138] sm:$0xff] %vm983, %v922
  %1024 = vst.msk [vmem:[%s3 + $0x140] sm:$0xff] %vm983, %v923
  %1025 = vst.msk [vmem:[%s3 + $0x148] sm:$0xff] %vm983, %v924
  %1026 = vst.msk [vmem:[%s3 + $0x150] sm:$0xff] %vm983, %v925
  %1027 = vst.msk [vmem:[%s3 + $0x158] sm:$0xff] %vm983, %v926
  %1028 = vst.msk [vmem:[%s3 + $0x160] sm:$0xff] %vm983, %v927
  %1029 = vst.msk [vmem:[%s3 + $0x168] sm:$0xff] %vm983, %v928
  %1030 = vst.msk [vmem:[%s3 + $0x170] sm:$0xff] %vm983, %v929
  %1031 = vst.msk [vmem:[%s3 + $0x178] sm:$0xff] %vm983, %v930
  %1032 = vst.msk [vmem:[%s3 + $0x180] sm:$0xff] %vm983, %v931
  %1033 = vst.msk [vmem:[%s3 + $0x188] sm:$0xff] %vm983, %v932
  %1034 = vst.msk [vmem:[%s3 + $0x190] sm:$0xff] %vm983, %v933
  %1035 = vst.msk [vmem:[%s3 + $0x198] sm:$0xff] %vm983, %v934
  %1036 = vst.msk [vmem:[%s3 + $0x1a0] sm:$0xff] %vm983, %v935
  %1037 = vst.msk [vmem:[%s3 + $0x1a8] sm:$0xff] %vm983, %v936
  %1038 = vst.msk [vmem:[%s3 + $0x1b0] sm:$0xff] %vm983, %v937
  %1039 = vst.msk [vmem:[%s3 + $0x1b8] sm:$0xff] %vm983, %v938
  %1040 = vst.msk [vmem:[%s3 + $0x1c0] sm:$0xff] %vm983, %v939
  %1041 = vst.msk [vmem:[%s3 + $0x1c8] sm:$0xff] %vm983, %v940
  %1042 = vst.msk [vmem:[%s3 + $0x1d0] sm:$0xff] %vm983, %v941
  %1043 = vst.msk [vmem:[%s3 + $0x1d8] sm:$0xff] %vm983, %v942
  %1044 = vst.msk [vmem:[%s3 + $0x1e0] sm:$0xff] %vm983, %v943
  %1045 = vst.msk [vmem:[%s3 + $0x1e8] sm:$0xff] %vm983, %v944
  %1046 = vst.msk [vmem:[%s3 + $0x1f0] sm:$0xff] %vm983, %v945
  %1047 = vst.msk [vmem:[%s3 + $0x1f8] sm:$0xff] %vm983, %v946
  %1048 = vst.msk [vmem:[%s3 + $0x200] sm:$0xff] %vm983, %v947
  %1049 = vst.msk [vmem:[%s3 + $0x208] sm:$0xff] %vm983, %v948
  %1050 = vst.msk [vmem:[%s3 + $0x210] sm:$0xff] %vm983, %v949
  %1051 = vst.msk [vmem:[%s3 + $0x218] sm:$0xff] %vm983, %v950
  %1052 = vst.msk [vmem:[%s3 + $0x220] sm:$0xff] %vm983, %v951
  %1053 = vst.msk [vmem:[%s3 + $0x228] sm:$0xff] %vm983, %v952
  %1054 = vst.msk [vmem:[%s3 + $0x230] sm:$0xff] %vm983, %v953
  %1055 = vst.msk [vmem:[%s3 + $0x238] sm:$0xff] %vm983, %v954
  %1056 = vst.msk [vmem:[%s3 + $0x240] sm:$0xff] %vm983, %v955
  %1057 = vst.msk [vmem:[%s3 + $0x248] sm:$0xff] %vm983, %v956
  %1058 = vst.msk [vmem:[%s3 + $0x250] sm:$0xff] %vm983, %v957
  %1059 = vst.msk [vmem:[%s3 + $0x258] sm:$0xff] %vm983, %v958
  %1060 = vst.msk [vmem:[%s3 + $0x260] sm:$0xff] %vm983, %v959
  %1061 = vst.msk [vmem:[%s3 + $0x268] sm:$0xff] %vm983, %v960
  %1062 = vst.msk [vmem:[%s3 + $0x270] sm:$0xff] %vm983, %v961
  %1063 = vst.msk [vmem:[%s3 + $0x278] sm:$0xff] %vm983, %v962
  %1064 = vst.msk [vmem:[%s3 + $0x280] sm:$0xff] %vm983, %v963
  %1065 = vst.msk [vmem:[%s3 + $0x288] sm:$0xff] %vm983, %v964
  %1066 = vst.msk [vmem:[%s3 + $0x290] sm:$0xff] %vm983, %v965
  %1067 = vst.msk [vmem:[%s3 + $0x298] sm:$0xff] %vm983, %v966
  %1068 = vst.msk [vmem:[%s3 + $0x2a0] sm:$0xff] %vm983, %v967
  %1069 = vst.msk [vmem:[%s3 + $0x2a8] sm:$0xff] %vm983, %v968
  %1070 = vst.msk [vmem:[%s3 + $0x2b0] sm:$0xff] %vm983, %v969
  %1071 = vst.msk [vmem:[%s3 + $0x2b8] sm:$0xff] %vm983, %v970
  %1072 = vst.msk [vmem:[%s3 + $0x2c0] sm:$0xff] %vm983, %v971
  %1073 = vst.msk [vmem:[%s3 + $0x2c8] sm:$0xff] %vm983, %v972
  %1074 = vst.msk [vmem:[%s3 + $0x2d0] sm:$0xff] %vm983, %v973
  %1075 = vst.msk [vmem:[%s3 + $0x2d8] sm:$0xff] %vm983, %v974
  %1076 = vst.msk [vmem:[%s3 + $0x2e0] sm:$0xff] %vm983, %v975
  %1077 = vst.msk [vmem:[%s3 + $0x2e8] sm:$0xff] %vm983, %v976
  %1078 = vst.msk [vmem:[%s3 + $0x2f0] sm:$0xff] %vm983, %v977
  %1079 = vst.msk [vmem:[%s3 + $0x2f8] sm:$0xff] %vm983, %v978
  %1080 = vst.msk [vmem:[%s3 + $0x300] sm:$0xff] %vm983, %v979
  %1081 = vst.msk [vmem:[%s3 + $0x308] sm:$0xff] %vm983, %v980
  %1082 = vst.msk [vmem:[%s3 + $0x310] sm:$0xff] %vm983, %v981
  %1083 = vst.msk [vmem:[%s3 + $0x318] sm:$0xff] %vm983, %v982
  // Predicated region
  $region14: #{dqn_cnn_forward.4} parent=0 // pred_check
    _
  $region15: #{dqn_cnn_forward.4} parent=0 // pred_check_branch
    %1085 = sbr.rel (0) target = $region17
  $region16: #{dqn_cnn_forward.4} parent=0 // pred_region
    _
  $region17: #{dqn_cnn_forward.4} parent=0 // pred_fallthru
    _
  // Predicated region
  $region18: #{dqn_cnn_forward.4} parent=0 // pred_check
    _
  $region19: #{dqn_cnn_forward.4} parent=0 // pred_check_branch
    %1087 = sbr.rel (0) target = $region21
  $region20: #{dqn_cnn_forward.4} parent=0 // pred_region
    _
  $region21: #{dqn_cnn_forward.4} parent=0 // pred_fallthru
    _

// kernel: dqn_cnn_forward.5
$region0: #{dqn_cnn_forward.5}
  #allocation0 [shape = 'u32[]', space=smem, size = 0x4, offset = 0x4, fixed_abs, tag = 'smem constant byte address 0x4 - core index']
  #allocation1 [shape = 'u32[144,128]{1,0:T(1,128)}', space=vmem, size = 0x12000, scoped, tag = 'internal scratch']
  %s0 = inlined_call_operand.vmem [shape: f32[162,512], index: 0, kind: input, shape index: {}]
  %s1 = inlined_call_operand.vmem [shape: bf16[512,64], index: 1, kind: input, shape index: {}]
  %s2 = inlined_call_operand.vmem [shape: f32[1,64], index: 2, kind: input, shape index: {}]
  %s3 = inlined_call_operand.vmem [shape: f32[162,64], index: 3, kind: output, shape index: {}]
  %s4 = sld [smem:[#allocation0]]
  $region22: #{dqn_cnn_forward.5} parent=0
    _
  %s6 = ssub.s32 1, %s4
  %s7 = scalar_select 0, %s6, %s4
  // Predicated region
  $region2: #{dqn_cnn_forward.5} parent=0 // pred_check
    _
  $region3: #{dqn_cnn_forward.5} parent=0 // pred_check_branch
    %9 = sbr.rel (0) target = $region5
  $region4: #{dqn_cnn_forward.5} parent=0 // pred_region
    _
  $region5: #{dqn_cnn_forward.5} parent=0 // pred_fallthru
    _
  // Predicated region
  $region6: #{dqn_cnn_forward.5} parent=0 // pred_check
    _
  $region7: #{dqn_cnn_forward.5} parent=0 // pred_check_branch
    %11 = sbr.rel (0) target = $region9
  $region8: #{dqn_cnn_forward.5} parent=0 // pred_region
    _
  $region9: #{dqn_cnn_forward.5} parent=0 // pred_fallthru
    _
  // Predicated region
  $region10: #{dqn_cnn_forward.5} parent=0 // pred_check
    _
  $region11: #{dqn_cnn_forward.5} parent=0 // pred_check_branch
    %13 = sbr.rel (0) target = $region13
  $region12: #{dqn_cnn_forward.5} parent=0 // pred_region
    _
  $region13: #{dqn_cnn_forward.5} parent=0 // pred_fallthru
    _
  %v15 = vld [vmem:[%s0] sm:$0xff]
  %v16 = vld [vmem:[%s0 + $0x8] sm:$0xff]
  %v17 = vld [vmem:[%s0 + $0x10] sm:$0xff]
  %v18 = vld [vmem:[%s0 + $0x18] sm:$0xff]
  %v19 = vld [vmem:[%s0 + $0x20] sm:$0xff]
  %v20 = vld [vmem:[%s0 + $0x28] sm:$0xff]
  %v21 = vld [vmem:[%s0 + $0x30] sm:$0xff]
  %v22 = vld [vmem:[%s0 + $0x38] sm:$0xff]
  %v23 = vld [vmem:[%s0 + $0x40] sm:$0xff]
  %v24 = vld [vmem:[%s0 + $0x48] sm:$0xff]
  %v25 = vld [vmem:[%s0 + $0x50] sm:$0xff]
  %v26 = vld [vmem:[%s0 + $0x58] sm:$0xff]
  %v27 = vld [vmem:[%s0 + $0x60] sm:$0xff]
  %v28 = vld [vmem:[%s0 + $0x68] sm:$0xff]
  %v29 = vld [vmem:[%s0 + $0x70] sm:$0xff]
  %v30 = vld [vmem:[%s0 + $0x78] sm:$0xff]
  %v31 = vld [vmem:[%s0 + $0x80] sm:$0xff]
  %v32 = vld [vmem:[%s0 + $0x88] sm:$0xff]
  %v33 = vld [vmem:[%s0 + $0x90] sm:$0xff]
  %v34 = vld [vmem:[%s0 + $0x98] sm:$0xff]
  %v35 = vld [vmem:[%s0 + $0xa0] sm:$0xff]
  %v36 = vld [vmem:[%s0 + $0xa8] sm:$0xff]
  %v37 = vld [vmem:[%s0 + $0xb0] sm:$0xff]
  %v38 = vld [vmem:[%s0 + $0xb8] sm:$0xff]
  %v39 = vld [vmem:[%s0 + $0xc0] sm:$0xff]
  %v40 = vld [vmem:[%s0 + $0xc8] sm:$0xff]
  %v41 = vld [vmem:[%s0 + $0xd0] sm:$0xff]
  %v42 = vld [vmem:[%s0 + $0xd8] sm:$0xff]
  %v43 = vld [vmem:[%s0 + $0xe0] sm:$0xff]
  %v44 = vld [vmem:[%s0 + $0xe8] sm:$0xff]
  %v45 = vld [vmem:[%s0 + $0xf0] sm:$0xff]
  %v46 = vld [vmem:[%s0 + $0xf8] sm:$0xff]
  %v47 = vld [vmem:[%s0 + $0x100] sm:$0xff]
  %v48 = vld [vmem:[%s0 + $0x108] sm:$0xff]
  %v49 = vld [vmem:[%s0 + $0x110] sm:$0xff]
  %v50 = vld [vmem:[%s0 + $0x118] sm:$0xff]
  %v51 = vld [vmem:[%s0 + $0x120] sm:$0xff]
  %v52 = vld [vmem:[%s0 + $0x128] sm:$0xff]
  %v53 = vld [vmem:[%s0 + $0x130] sm:$0xff]
  %v54 = vld [vmem:[%s0 + $0x138] sm:$0xff]
  %v55 = vld [vmem:[%s0 + $0x140] sm:$0xff]
  %v56 = vld [vmem:[%s0 + $0x148] sm:$0xff]
  %v57 = vld [vmem:[%s0 + $0x150] sm:$0xff]
  %v58 = vld [vmem:[%s0 + $0x158] sm:$0xff]
  %v59 = vld [vmem:[%s0 + $0x160] sm:$0xff]
  %v60 = vld [vmem:[%s0 + $0x168] sm:$0xff]
  %v61 = vld [vmem:[%s0 + $0x170] sm:$0xff]
  %v62 = vld [vmem:[%s0 + $0x178] sm:$0xff]
  %v63 = vld [vmem:[%s0 + $0x180] sm:$0xff]
  %v64 = vld [vmem:[%s0 + $0x188] sm:$0xff]
  %v65 = vld [vmem:[%s0 + $0x190] sm:$0xff]
  %v66 = vld [vmem:[%s0 + $0x198] sm:$0xff]
  %v67 = vld [vmem:[%s0 + $0x1a0] sm:$0xff]
  %v68 = vld [vmem:[%s0 + $0x1a8] sm:$0xff]
  %v69 = vld [vmem:[%s0 + $0x1b0] sm:$0xff]
  %v70 = vld [vmem:[%s0 + $0x1b8] sm:$0xff]
  %v71 = vld [vmem:[%s0 + $0x1c0] sm:$0xff]
  %v72 = vld [vmem:[%s0 + $0x1c8] sm:$0xff]
  %v73 = vld [vmem:[%s0 + $0x1d0] sm:$0xff]
  %v74 = vld [vmem:[%s0 + $0x1d8] sm:$0xff]
  %v75 = vld [vmem:[%s0 + $0x1e0] sm:$0xff]
  %v76 = vld [vmem:[%s0 + $0x1e8] sm:$0xff]
  %v77 = vld [vmem:[%s0 + $0x1f0] sm:$0xff]
  %v78 = vld [vmem:[%s0 + $0x1f8] sm:$0xff]
  %v79 = vld [vmem:[%s0 + $0x200] sm:$0xff]
  %v80 = vld [vmem:[%s0 + $0x208] sm:$0xff]
  %v81 = vld [vmem:[%s0 + $0x210] sm:$0xff]
  %v82 = vld [vmem:[%s0 + $0x218] sm:$0xff]
  %v83 = vld [vmem:[%s0 + $0x220] sm:$0xff]
  %v84 = vld [vmem:[%s0 + $0x228] sm:$0xff]
  %v85 = vld [vmem:[%s0 + $0x230] sm:$0xff]
  %v86 = vld [vmem:[%s0 + $0x238] sm:$0xff]
  %v87 = vld [vmem:[%s0 + $0x240] sm:$0xff]
  %v88 = vld [vmem:[%s0 + $0x248] sm:$0xff]
  %v89 = vld [vmem:[%s0 + $0x250] sm:$0xff]
  %v90 = vld [vmem:[%s0 + $0x258] sm:$0xff]
  %v91 = vld [vmem:[%s0 + $0x260] sm:$0xff]
  %v92 = vld [vmem:[%s0 + $0x268] sm:$0xff]
  %v93 = vld [vmem:[%s0 + $0x270] sm:$0xff]
  %v94 = vld [vmem:[%s0 + $0x278] sm:$0xff]
  %v95 = vld [vmem:[%s0 + $0x280] sm:$0x3]
  %v96 = vld [vmem:[%s0 + $0x288] sm:$0x3]
  %v97 = vld [vmem:[%s0 + $0x290] sm:$0x3]
  %v98 = vld [vmem:[%s0 + $0x298] sm:$0x3]
  %v99 = vpack.c.bf16 %v19, %v15
  %v100 = vpack.c.bf16 %v20, %v16
  %v101 = vpack.c.bf16 %v21, %v17
  %v102 = vpack.c.bf16 %v22, %v18
  %v103 = vpack.c.bf16 %v27, %v23
  %v104 = vpack.c.bf16 %v28, %v24
  %v105 = vpack.c.bf16 %v29, %v25
  %v106 = vpack.c.bf16 %v30, %v26
  %v107 = vpack.c.bf16 %v35, %v31
  %v108 = vpack.c.bf16 %v36, %v32
  %v109 = vpack.c.bf16 %v37, %v33
  %v110 = vpack.c.bf16 %v38, %v34
  %v111 = vpack.c.bf16 %v43, %v39
  %v112 = vpack.c.bf16 %v44, %v40
  %v113 = vpack.c.bf16 %v45, %v41
  %v114 = vpack.c.bf16 %v46, %v42
  %v115 = vpack.c.bf16 %v51, %v47
  %v116 = vpack.c.bf16 %v52, %v48
  %v117 = vpack.c.bf16 %v53, %v49
  %v118 = vpack.c.bf16 %v54, %v50
  %v119 = vpack.c.bf16 %v59, %v55
  %v120 = vpack.c.bf16 %v60, %v56
  %v121 = vpack.c.bf16 %v61, %v57
  %v122 = vpack.c.bf16 %v62, %v58
  %v123 = vpack.c.bf16 %v67, %v63
  %v124 = vpack.c.bf16 %v68, %v64
  %v125 = vpack.c.bf16 %v69, %v65
  %v126 = vpack.c.bf16 %v70, %v66
  %v127 = vpack.c.bf16 %v75, %v71
  %v128 = vpack.c.bf16 %v76, %v72
  %v129 = vpack.c.bf16 %v77, %v73
  %v130 = vpack.c.bf16 %v78, %v74
  %v131 = vpack.c.bf16 %v83, %v79
  %v132 = vpack.c.bf16 %v84, %v80
  %v133 = vpack.c.bf16 %v85, %v81
  %v134 = vpack.c.bf16 %v86, %v82
  %v135 = vpack.c.bf16 %v91, %v87
  %v136 = vpack.c.bf16 %v92, %v88
  %v137 = vpack.c.bf16 %v93, %v89
  %v138 = vpack.c.bf16 %v94, %v90
  %v139 = vpack.c.bf16 %v95, %v95
  %v140 = vpack.c.bf16 %v96, %v96
  %v141 = vpack.c.bf16 %v97, %v97
  %v142 = vpack.c.bf16 %v98, %v98
  %v143 = vld [vmem:[%s1] sm:$0xf]
  %v144 = vld [vmem:[%s1 + $0x4] sm:$0xf]
  %v145 = vld [vmem:[%s1 + $0x8] sm:$0xf]
  %v146 = vld [vmem:[%s1 + $0xc] sm:$0xf]
  %v147 = vld [vmem:[%s1 + $0x10] sm:$0xf]
  %v148 = vld [vmem:[%s1 + $0x14] sm:$0xf]
  %v149 = vld [vmem:[%s1 + $0x18] sm:$0xf]
  %v150 = vld [vmem:[%s1 + $0x1c] sm:$0xf]
  %v151 = vld [vmem:[%s1 + $0x20] sm:$0xf]
  %v152 = vld [vmem:[%s1 + $0x24] sm:$0xf]
  %v153 = vld [vmem:[%s1 + $0x28] sm:$0xf]
  %v154 = vld [vmem:[%s1 + $0x2c] sm:$0xf]
  %v155 = vld [vmem:[%s1 + $0x30] sm:$0xf]
  %v156 = vld [vmem:[%s1 + $0x34] sm:$0xf]
  %v157 = vld [vmem:[%s1 + $0x38] sm:$0xf]
  %v158 = vld [vmem:[%s1 + $0x3c] sm:$0xf]
  %v159 = vld [vmem:[%s1 + $0x40] sm:$0xf]
  %v160 = vld [vmem:[%s1 + $0x44] sm:$0xf]
  %v161 = vld [vmem:[%s1 + $0x48] sm:$0xf]
  %v162 = vld [vmem:[%s1 + $0x4c] sm:$0xf]
  %v163 = vld [vmem:[%s1 + $0x50] sm:$0xf]
  %v164 = vld [vmem:[%s1 + $0x54] sm:$0xf]
  %v165 = vld [vmem:[%s1 + $0x58] sm:$0xf]
  %v166 = vld [vmem:[%s1 + $0x5c] sm:$0xf]
  %v167 = vld [vmem:[%s1 + $0x60] sm:$0xf]
  %v168 = vld [vmem:[%s1 + $0x64] sm:$0xf]
  %v169 = vld [vmem:[%s1 + $0x68] sm:$0xf]
  %v170 = vld [vmem:[%s1 + $0x6c] sm:$0xf]
  %v171 = vld [vmem:[%s1 + $0x70] sm:$0xf]
  %v172 = vld [vmem:[%s1 + $0x74] sm:$0xf]
  %v173 = vld [vmem:[%s1 + $0x78] sm:$0xf]
  %v174 = vld [vmem:[%s1 + $0x7c] sm:$0xf]
  %v175 = vld [vmem:[%s1 + $0x80] sm:$0xf]
  %v176 = vld [vmem:[%s1 + $0x84] sm:$0xf]
  %v177 = vld [vmem:[%s1 + $0x88] sm:$0xf]
  %v178 = vld [vmem:[%s1 + $0x8c] sm:$0xf]
  %v179 = vld [vmem:[%s1 + $0x90] sm:$0xf]
  %v180 = vld [vmem:[%s1 + $0x94] sm:$0xf]
  %v181 = vld [vmem:[%s1 + $0x98] sm:$0xf]
  %v182 = vld [vmem:[%s1 + $0x9c] sm:$0xf]
  %v183 = vld [vmem:[%s1 + $0xa0] sm:$0xf]
  %v184 = vld [vmem:[%s1 + $0xa4] sm:$0xf]
  %v185 = vld [vmem:[%s1 + $0xa8] sm:$0xf]
  %v186 = vld [vmem:[%s1 + $0xac] sm:$0xf]
  %v187 = vld [vmem:[%s1 + $0xb0] sm:$0xf]
  %v188 = vld [vmem:[%s1 + $0xb4] sm:$0xf]
  %v189 = vld [vmem:[%s1 + $0xb8] sm:$0xf]
  %v190 = vld [vmem:[%s1 + $0xbc] sm:$0xf]
  %v191 = vld [vmem:[%s1 + $0xc0] sm:$0xf]
  %v192 = vld [vmem:[%s1 + $0xc4] sm:$0xf]
  %v193 = vld [vmem:[%s1 + $0xc8] sm:$0xf]
  %v194 = vld [vmem:[%s1 + $0xcc] sm:$0xf]
  %v195 = vld [vmem:[%s1 + $0xd0] sm:$0xf]
  %v196 = vld [vmem:[%s1 + $0xd4] sm:$0xf]
  %v197 = vld [vmem:[%s1 + $0xd8] sm:$0xf]
  %v198 = vld [vmem:[%s1 + $0xdc] sm:$0xf]
  %v199 = vld [vmem:[%s1 + $0xe0] sm:$0xf]
  %v200 = vld [vmem:[%s1 + $0xe4] sm:$0xf]
  %v201 = vld [vmem:[%s1 + $0xe8] sm:$0xf]
  %v202 = vld [vmem:[%s1 + $0xec] sm:$0xf]
  %v203 = vld [vmem:[%s1 + $0xf0] sm:$0xf]
  %v204 = vld [vmem:[%s1 + $0xf4] sm:$0xf]
  %v205 = vld [vmem:[%s1 + $0xf8] sm:$0xf]
  %v206 = vld [vmem:[%s1 + $0xfc] sm:$0xf]
  %v207 = vld [vmem:[%s2] sm:$0x1]
  %v209 = vlaneseq
  %v210 = vshrl.u32 %v209, 7
  %v211 = vsub.s32 0, %v210
  %v212 = vrot.slane %v207, %v211
  %v278 = vunpack.c.l.b16 %v143
  %v279 = vunpack.c.l.b16 %v144
  %v280 = vunpack.c.l.b16 %v145
  %v281 = vunpack.c.l.b16 %v146
  %v282 = vunpack.c.l.b16 %v147
  %v283 = vunpack.c.l.b16 %v148
  %v284 = vunpack.c.l.b16 %v149
  %v285 = vunpack.c.l.b16 %v150
  %v286 = vunpack.c.l.b16 %v151
  %v287 = vunpack.c.l.b16 %v152
  %v288 = vunpack.c.l.b16 %v153
  %v289 = vunpack.c.l.b16 %v154
  %v290 = vunpack.c.l.b16 %v155
  %v291 = vunpack.c.l.b16 %v156
  %v292 = vunpack.c.l.b16 %v157
  %v293 = vunpack.c.l.b16 %v158
  %v294 = vunpack.c.l.b16 %v159
  %v295 = vunpack.c.l.b16 %v160
  %v296 = vunpack.c.l.b16 %v161
  %v297 = vunpack.c.l.b16 %v162
  %v298 = vunpack.c.l.b16 %v163
  %v299 = vunpack.c.l.b16 %v164
  %v300 = vunpack.c.l.b16 %v165
  %v301 = vunpack.c.l.b16 %v166
  %v302 = vunpack.c.l.b16 %v167
  %v303 = vunpack.c.l.b16 %v168
  %v304 = vunpack.c.l.b16 %v169
  %v305 = vunpack.c.l.b16 %v170
  %v306 = vunpack.c.l.b16 %v171
  %v307 = vunpack.c.l.b16 %v172
  %v308 = vunpack.c.l.b16 %v173
  %v309 = vunpack.c.l.b16 %v174
  %v310 = vunpack.c.l.b16 %v175
  %v311 = vunpack.c.l.b16 %v176
  %v312 = vunpack.c.l.b16 %v177
  %v313 = vunpack.c.l.b16 %v178
  %v314 = vunpack.c.l.b16 %v179
  %v315 = vunpack.c.l.b16 %v180
  %v316 = vunpack.c.l.b16 %v181
  %v317 = vunpack.c.l.b16 %v182
  %v318 = vunpack.c.l.b16 %v183
  %v319 = vunpack.c.l.b16 %v184
  %v320 = vunpack.c.l.b16 %v185
  %v321 = vunpack.c.l.b16 %v186
  %v322 = vunpack.c.l.b16 %v187
  %v323 = vunpack.c.l.b16 %v188
  %v324 = vunpack.c.l.b16 %v189
  %v325 = vunpack.c.l.b16 %v190
  %v326 = vunpack.c.l.b16 %v191
  %v327 = vunpack.c.l.b16 %v192
  %v328 = vunpack.c.l.b16 %v193
  %v329 = vunpack.c.l.b16 %v194
  %v330 = vunpack.c.l.b16 %v195
  %v331 = vunpack.c.l.b16 %v196
  %v332 = vunpack.c.l.b16 %v197
  %v333 = vunpack.c.l.b16 %v198
  %v334 = vunpack.c.l.b16 %v199
  %v335 = vunpack.c.l.b16 %v200
  %v336 = vunpack.c.l.b16 %v201
  %v337 = vunpack.c.l.b16 %v202
  %v338 = vunpack.c.l.b16 %v203
  %v339 = vunpack.c.l.b16 %v204
  %v340 = vunpack.c.l.b16 %v205
  %v341 = vunpack.c.l.b16 %v206
  %v342 = vpack.c.b16 %v279, %v278
  %v343 = vpack.c.b16 %v281, %v280
  %v344 = vpack.c.b16 %v283, %v282
  %v345 = vpack.c.b16 %v285, %v284
  %v346 = vpack.c.b16 %v287, %v286
  %v347 = vpack.c.b16 %v289, %v288
  %v348 = vpack.c.b16 %v291, %v290
  %v349 = vpack.c.b16 %v293, %v292
  %v350 = vpack.c.b16 %v295, %v294
  %v351 = vpack.c.b16 %v297, %v296
  %v352 = vpack.c.b16 %v299, %v298
  %v353 = vpack.c.b16 %v301, %v300
  %v354 = vpack.c.b16 %v303, %v302
  %v355 = vpack.c.b16 %v305, %v304
  %v356 = vpack.c.b16 %v307, %v306
  %v357 = vpack.c.b16 %v309, %v308
  %v358 = vpack.c.b16 %v311, %v310
  %v359 = vpack.c.b16 %v313, %v312
  %v360 = vpack.c.b16 %v315, %v314
  %v361 = vpack.c.b16 %v317, %v316
  %v362 = vpack.c.b16 %v319, %v318
  %v363 = vpack.c.b16 %v321, %v320
  %v364 = vpack.c.b16 %v323, %v322
  %v365 = vpack.c.b16 %v325, %v324
  %v366 = vpack.c.b16 %v327, %v326
  %v367 = vpack.c.b16 %v329, %v328
  %v368 = vpack.c.b16 %v331, %v330
  %v369 = vpack.c.b16 %v333, %v332
  %v370 = vpack.c.b16 %v335, %v334
  %v371 = vpack.c.b16 %v337, %v336
  %v372 = vpack.c.b16 %v339, %v338
  %v373 = vpack.c.b16 %v341, %v340
  %406 = vmatprep.subr.bf16.mxu0 0
  %407 = vmatpush1.bf16.msra.mxu0 %v349
  %408 = vmatprep.subr.bf16.mxu0 0
  %409 = vmatpush1.bf16.msra.mxu0 %v348
  %410 = vmatprep.subr.bf16.mxu0 0
  %411 = vmatpush1.bf16.msra.mxu0 %v347
  %412 = vmatprep.subr.bf16.mxu0 0
  %413 = vmatpush1.bf16.msra.mxu0 %v346
  %414 = vmatprep.subr.bf16.mxu0 0
  %415 = vmatpush1.bf16.msra.mxu0 %v345
  %416 = vmatprep.subr.bf16.mxu0 0
  %417 = vmatpush1.bf16.msra.mxu0 %v344
  %418 = vmatprep.subr.bf16.mxu0 0
  %419 = vmatpush1.bf16.msra.mxu0 %v343
  %420 = vmatprep.subr.bf16.mxu0 0
  %421 = vmatpush1.bf16.msra.mxu0 %v342
  %422 = vmatprep.subr.bf16.mxu0 0
  %423 = vmatpush2.bf16.msra.mxu0 %v357
  %424 = vmatprep.subr.bf16.mxu0 0
  %425 = vmatpush2.bf16.msra.mxu0 %v356
  %426 = vmatprep.subr.bf16.mxu0 0
  %427 = vmatpush2.bf16.msra.mxu0 %v355
  %428 = vmatprep.subr.bf16.mxu0 0
  %429 = vmatpush2.bf16.msra.mxu0 %v354
  %430 = vmatprep.subr.bf16.mxu0 0
  %431 = vmatpush2.bf16.msra.mxu0 %v353
  %432 = vmatprep.subr.bf16.mxu0 0
  %433 = vmatpush2.bf16.msra.mxu0 %v352
  %434 = vmatprep.subr.bf16.mxu0 0
  %435 = vmatpush2.bf16.msra.mxu0 %v351
  %436 = vmatprep.subr.bf16.mxu0 0
  %437 = vmatpush2.bf16.msra.mxu0 %v350
  %438 = vmatprep.mubr.bf16.mxu0 %v100
  %439 = vmatmul.mubr.bf16.gmra.mxu0 %v99
  %v440 = vpop.f32.mrf.mxu0
  %v441 = vadd.f32 %v212, %v440
  %v442 = vpop.f32.mrf.mxu0
  %v443 = vpop.f32.mrf.mxu0
  %v444 = vadd.f32 %v212, %v443
  %v445 = vpop.f32.mrf.mxu0
  %446 = vmatprep.mubr.bf16.mxu0 %v104
  %447 = vmatmul.mubr.bf16.gmra.mxu0 %v103
  %v448 = vpop.f32.mrf.mxu0
  %v449 = vadd.f32 %v212, %v448
  %v450 = vpop.f32.mrf.mxu0
  %v451 = vpop.f32.mrf.mxu0
  %v452 = vadd.f32 %v212, %v451
  %v453 = vpop.f32.mrf.mxu0
  %454 = vmatprep.mubr.bf16.mxu0 %v108
  %455 = vmatmul.mubr.bf16.gmra.mxu0 %v107
  %v456 = vpop.f32.mrf.mxu0
  %v457 = vadd.f32 %v212, %v456
  %v458 = vpop.f32.mrf.mxu0
  %v459 = vpop.f32.mrf.mxu0
  %v460 = vadd.f32 %v212, %v459
  %v461 = vpop.f32.mrf.mxu0
  %462 = vmatprep.mubr.bf16.mxu0 %v112
  %463 = vmatmul.mubr.bf16.gmra.mxu0 %v111
  %v464 = vpop.f32.mrf.mxu0
  %v465 = vadd.f32 %v212, %v464
  %v466 = vpop.f32.mrf.mxu0
  %v467 = vpop.f32.mrf.mxu0
  %v468 = vadd.f32 %v212, %v467
  %v469 = vpop.f32.mrf.mxu0
  %470 = vmatprep.mubr.bf16.mxu0 %v116
  %471 = vmatmul.mubr.bf16.gmra.mxu0 %v115
  %v472 = vpop.f32.mrf.mxu0
  %v473 = vadd.f32 %v212, %v472
  %v474 = vpop.f32.mrf.mxu0
  %v475 = vpop.f32.mrf.mxu0
  %v476 = vadd.f32 %v212, %v475
  %v477 = vpop.f32.mrf.mxu0
  %478 = vmatprep.mubr.bf16.mxu0 %v120
  %479 = vmatmul.mubr.bf16.gmra.mxu0 %v119
  %v480 = vpop.f32.mrf.mxu0
  %v481 = vadd.f32 %v212, %v480
  %v482 = vpop.f32.mrf.mxu0
  %v483 = vpop.f32.mrf.mxu0
  %v484 = vadd.f32 %v212, %v483
  %v485 = vpop.f32.mrf.mxu0
  %486 = vmatprep.mubr.bf16.mxu0 %v124
  %487 = vmatmul.mubr.bf16.gmra.mxu0 %v123
  %v488 = vpop.f32.mrf.mxu0
  %v489 = vadd.f32 %v212, %v488
  %v490 = vpop.f32.mrf.mxu0
  %v491 = vpop.f32.mrf.mxu0
  %v492 = vadd.f32 %v212, %v491
  %v493 = vpop.f32.mrf.mxu0
  %494 = vmatprep.mubr.bf16.mxu0 %v128
  %495 = vmatmul.mubr.bf16.gmra.mxu0 %v127
  %v496 = vpop.f32.mrf.mxu0
  %v497 = vadd.f32 %v212, %v496
  %v498 = vpop.f32.mrf.mxu0
  %v499 = vpop.f32.mrf.mxu0
  %v500 = vadd.f32 %v212, %v499
  %v501 = vpop.f32.mrf.mxu0
  %502 = vmatprep.mubr.bf16.mxu0 %v132
  %503 = vmatmul.mubr.bf16.gmra.mxu0 %v131
  %v504 = vpop.f32.mrf.mxu0
  %v505 = vadd.f32 %v212, %v504
  %v506 = vpop.f32.mrf.mxu0
  %v507 = vpop.f32.mrf.mxu0
  %v508 = vadd.f32 %v212, %v507
  %v509 = vpop.f32.mrf.mxu0
  %510 = vmatprep.mubr.bf16.mxu0 %v136
  %511 = vmatmul.mubr.bf16.gmra.mxu0 %v135
  %v512 = vpop.f32.mrf.mxu0
  %v513 = vadd.f32 %v212, %v512
  %v514 = vpop.f32.mrf.mxu0
  %v515 = vpop.f32.mrf.mxu0
  %v516 = vadd.f32 %v212, %v515
  %v517 = vpop.f32.mrf.mxu0
  %518 = vmatprep.mubr.bf16.mxu0 %v140
  %519 = vmatmul.mubr.bf16.gmra.mxu0 %v139
  %v520 = vpop.f32.mrf.mxu0
  %v521 = vadd.f32 %v212, %v520
  %v522 = vpop.f32.mrf.mxu0
  %v523 = vpop.f32.mrf.mxu0
  %v524 = vpop.f32.mrf.mxu0
  %525 = vdwg.mxu0
  %526 = vmatprep.subr.bf16.mxu0 0
  %527 = vmatpush1.bf16.msra.mxu0 %v365
  %528 = vmatprep.subr.bf16.mxu0 0
  %529 = vmatpush1.bf16.msra.mxu0 %v364
  %530 = vmatprep.subr.bf16.mxu0 0
  %531 = vmatpush1.bf16.msra.mxu0 %v363
  %532 = vmatprep.subr.bf16.mxu0 0
  %533 = vmatpush1.bf16.msra.mxu0 %v362
  %534 = vmatprep.subr.bf16.mxu0 0
  %535 = vmatpush1.bf16.msra.mxu0 %v361
  %536 = vmatprep.subr.bf16.mxu0 0
  %537 = vmatpush1.bf16.msra.mxu0 %v360
  %538 = vmatprep.subr.bf16.mxu0 0
  %539 = vmatpush1.bf16.msra.mxu0 %v359
  %540 = vmatprep.subr.bf16.mxu0 0
  %541 = vmatpush1.bf16.msra.mxu0 %v358
  %542 = vmatprep.subr.bf16.mxu0 0
  %543 = vmatpush2.bf16.msra.mxu0 %v373
  %544 = vmatprep.subr.bf16.mxu0 0
  %545 = vmatpush2.bf16.msra.mxu0 %v372
  %546 = vmatprep.subr.bf16.mxu0 0
  %547 = vmatpush2.bf16.msra.mxu0 %v371
  %548 = vmatprep.subr.bf16.mxu0 0
  %549 = vmatpush2.bf16.msra.mxu0 %v370
  %550 = vmatprep.subr.bf16.mxu0 0
  %551 = vmatpush2.bf16.msra.mxu0 %v369
  %552 = vmatprep.subr.bf16.mxu0 0
  %553 = vmatpush2.bf16.msra.mxu0 %v368
  %554 = vmatprep.subr.bf16.mxu0 0
  %555 = vmatpush2.bf16.msra.mxu0 %v367
  %556 = vmatprep.subr.bf16.mxu0 0
  %557 = vmatpush2.bf16.msra.mxu0 %v366
  %558 = vmatprep.mubr.bf16.mxu0 %v102
  %559 = vmatmul.mubr.bf16.gmra.mxu0 %v101
  %v560 = vpop.f32.mrf.mxu0
  %v561 = vadd.f32 %v441, %v560
  %v562 = vpop.f32.mrf.mxu0
  %v563 = vpop.f32.mrf.mxu0
  %v564 = vadd.f32 %v444, %v563
  %v565 = vpop.f32.mrf.mxu0
  %566 = vmatprep.mubr.bf16.mxu0 %v106
  %567 = vmatmul.mubr.bf16.gmra.mxu0 %v105
  %v568 = vpop.f32.mrf.mxu0
  %v569 = vadd.f32 %v449, %v568
  %v570 = vpop.f32.mrf.mxu0
  %v571 = vpop.f32.mrf.mxu0
  %v572 = vadd.f32 %v452, %v571
  %v573 = vpop.f32.mrf.mxu0
  %574 = vmatprep.mubr.bf16.mxu0 %v110
  %575 = vmatmul.mubr.bf16.gmra.mxu0 %v109
  %v576 = vpop.f32.mrf.mxu0
  %v577 = vadd.f32 %v457, %v576
  %v578 = vpop.f32.mrf.mxu0
  %v579 = vpop.f32.mrf.mxu0
  %v580 = vadd.f32 %v460, %v579
  %v581 = vpop.f32.mrf.mxu0
  %582 = vmatprep.mubr.bf16.mxu0 %v114
  %583 = vmatmul.mubr.bf16.gmra.mxu0 %v113
  %v584 = vpop.f32.mrf.mxu0
  %v585 = vadd.f32 %v465, %v584
  %v586 = vpop.f32.mrf.mxu0
  %v587 = vpop.f32.mrf.mxu0
  %v588 = vadd.f32 %v468, %v587
  %v589 = vpop.f32.mrf.mxu0
  %590 = vmatprep.mubr.bf16.mxu0 %v118
  %591 = vmatmul.mubr.bf16.gmra.mxu0 %v117
  %v592 = vpop.f32.mrf.mxu0
  %v593 = vadd.f32 %v473, %v592
  %v594 = vpop.f32.mrf.mxu0
  %v595 = vpop.f32.mrf.mxu0
  %v596 = vadd.f32 %v476, %v595
  %v597 = vpop.f32.mrf.mxu0
  %598 = vmatprep.mubr.bf16.mxu0 %v122
  %599 = vmatmul.mubr.bf16.gmra.mxu0 %v121
  %v600 = vpop.f32.mrf.mxu0
  %v601 = vadd.f32 %v481, %v600
  %v602 = vpop.f32.mrf.mxu0
  %v603 = vpop.f32.mrf.mxu0
  %v604 = vadd.f32 %v484, %v603
  %v605 = vpop.f32.mrf.mxu0
  %606 = vmatprep.mubr.bf16.mxu0 %v126
  %607 = vmatmul.mubr.bf16.gmra.mxu0 %v125
  %v608 = vpop.f32.mrf.mxu0
  %v609 = vadd.f32 %v489, %v608
  %v610 = vpop.f32.mrf.mxu0
  %v611 = vpop.f32.mrf.mxu0
  %v612 = vadd.f32 %v492, %v611
  %v613 = vpop.f32.mrf.mxu0
  %614 = vmatprep.mubr.bf16.mxu0 %v130
  %615 = vmatmul.mubr.bf16.gmra.mxu0 %v129
  %v616 = vpop.f32.mrf.mxu0
  %v617 = vadd.f32 %v497, %v616
  %v618 = vpop.f32.mrf.mxu0
  %v619 = vpop.f32.mrf.mxu0
  %v620 = vadd.f32 %v500, %v619
  %v621 = vpop.f32.mrf.mxu0
  %622 = vmatprep.mubr.bf16.mxu0 %v134
  %623 = vmatmul.mubr.bf16.gmra.mxu0 %v133
  %v624 = vpop.f32.mrf.mxu0
  %v625 = vadd.f32 %v505, %v624
  %v626 = vpop.f32.mrf.mxu0
  %v627 = vpop.f32.mrf.mxu0
  %v628 = vadd.f32 %v508, %v627
  %v629 = vpop.f32.mrf.mxu0
  %630 = vmatprep.mubr.bf16.mxu0 %v138
  %631 = vmatmul.mubr.bf16.gmra.mxu0 %v137
  %v632 = vpop.f32.mrf.mxu0
  %v633 = vadd.f32 %v513, %v632
  %v634 = vpop.f32.mrf.mxu0
  %v635 = vpop.f32.mrf.mxu0
  %v636 = vadd.f32 %v516, %v635
  %v637 = vpop.f32.mrf.mxu0
  %638 = vmatprep.mubr.bf16.mxu0 %v142
  %639 = vmatmul.mubr.bf16.gmra.mxu0 %v141
  %v640 = vpop.f32.mrf.mxu0
  %v641 = vadd.f32 %v521, %v640
  %v642 = vpop.f32.mrf.mxu0
  %v643 = vpop.f32.mrf.mxu0
  %v644 = vpop.f32.mrf.mxu0
  %645 = vdwg.mxu0
  %v646 = vmax.f32 %v561, 0.0
  %v647 = vmax.f32 %v564, 0.0
  %v648 = vmax.f32 %v569, 0.0
  %v649 = vmax.f32 %v572, 0.0
  %v650 = vmax.f32 %v577, 0.0
  %v651 = vmax.f32 %v580, 0.0
  %v652 = vmax.f32 %v585, 0.0
  %v653 = vmax.f32 %v588, 0.0
  %v654 = vmax.f32 %v593, 0.0
  %v655 = vmax.f32 %v596, 0.0
  %v656 = vmax.f32 %v601, 0.0
  %v657 = vmax.f32 %v604, 0.0
  %v658 = vmax.f32 %v609, 0.0
  %v659 = vmax.f32 %v612, 0.0
  %v660 = vmax.f32 %v617, 0.0
  %v661 = vmax.f32 %v620, 0.0
  %v662 = vmax.f32 %v625, 0.0
  %v663 = vmax.f32 %v628, 0.0
  %v664 = vmax.f32 %v633, 0.0
  %v665 = vmax.f32 %v636, 0.0
  %v666 = vmax.f32 %v641, 0.0
  %vm667 = vcmask 523264
  %668 = vst.msk [vmem:[%s3] sm:$0xff] %vm667, %v646
  %669 = vst.msk [vmem:[%s3 + $0x8] sm:$0xff] %vm667, %v647
  %670 = vst.msk [vmem:[%s3 + $0x10] sm:$0xff] %vm667, %v648
  %671 = vst.msk [vmem:[%s3 + $0x18] sm:$0xff] %vm667, %v649
  %672 = vst.msk [vmem:[%s3 + $0x20] sm:$0xff] %vm667, %v650
  %673 = vst.msk [vmem:[%s3 + $0x28] sm:$0xff] %vm667, %v651
  %674 = vst.msk [vmem:[%s3 + $0x30] sm:$0xff] %vm667, %v652
  %675 = vst.msk [vmem:[%s3 + $0x38] sm:$0xff] %vm667, %v653
  %676 = vst.msk [vmem:[%s3 + $0x40] sm:$0xff] %vm667, %v654
  %677 = vst.msk [vmem:[%s3 + $0x48] sm:$0xff] %vm667, %v655
  %678 = vst.msk [vmem:[%s3 + $0x50] sm:$0xff] %vm667, %v656
  %679 = vst.msk [vmem:[%s3 + $0x58] sm:$0xff] %vm667, %v657
  %680 = vst.msk [vmem:[%s3 + $0x60] sm:$0xff] %vm667, %v658
  %681 = vst.msk [vmem:[%s3 + $0x68] sm:$0xff] %vm667, %v659
  %682 = vst.msk [vmem:[%s3 + $0x70] sm:$0xff] %vm667, %v660
  %683 = vst.msk [vmem:[%s3 + $0x78] sm:$0xff] %vm667, %v661
  %684 = vst.msk [vmem:[%s3 + $0x80] sm:$0xff] %vm667, %v662
  %685 = vst.msk [vmem:[%s3 + $0x88] sm:$0xff] %vm667, %v663
  %686 = vst.msk [vmem:[%s3 + $0x90] sm:$0xff] %vm667, %v664
  %687 = vst.msk [vmem:[%s3 + $0x98] sm:$0xff] %vm667, %v665
  %vm688 = vcmask 517120
  %689 = vst.msk [vmem:[%s3 + $0xa0] sm:$0x3] %vm688, %v666
  // Predicated region
  $region14: #{dqn_cnn_forward.5} parent=0 // pred_check
    _
  $region15: #{dqn_cnn_forward.5} parent=0 // pred_check_branch
    %691 = sbr.rel (0) target = $region17
  $region16: #{dqn_cnn_forward.5} parent=0 // pred_region
    _
  $region17: #{dqn_cnn_forward.5} parent=0 // pred_fallthru
    _
  // Predicated region
  $region18: #{dqn_cnn_forward.5} parent=0 // pred_check
    _
  $region19: #{dqn_cnn_forward.5} parent=0 // pred_check_branch
    %693 = sbr.rel (0) target = $region21
  $region20: #{dqn_cnn_forward.5} parent=0 // pred_region
    _
  $region21: #{dqn_cnn_forward.5} parent=0 // pred_fallthru
    _

// kernel: dqn_cnn_forward.6
$region0: #{dqn_cnn_forward.6}
  #allocation0 [shape = 'u32[]', space=smem, size = 0x4, offset = 0x4, fixed_abs, tag = 'smem constant byte address 0x4 - core index']
  #allocation1 [shape = 'u32[144,128]{1,0:T(1,128)}', space=vmem, size = 0x12000, scoped, tag = 'internal scratch']
  %s0 = inlined_call_operand.vmem [shape: f32[98,576], index: 0, kind: input, shape index: {}]
  %s1 = inlined_call_operand.vmem [shape: bf16[576,64], index: 1, kind: input, shape index: {}]
  %s2 = inlined_call_operand.vmem [shape: f32[1,64], index: 2, kind: input, shape index: {}]
  %s3 = inlined_call_operand.vmem [shape: f32[98,64], index: 3, kind: output, shape index: {}]
  %s4 = sld [smem:[#allocation0]]
  $region22: #{dqn_cnn_forward.6} parent=0
    _
  %s6 = ssub.s32 1, %s4
  %s7 = scalar_select 0, %s6, %s4
  // Predicated region
  $region2: #{dqn_cnn_forward.6} parent=0 // pred_check
    _
  $region3: #{dqn_cnn_forward.6} parent=0 // pred_check_branch
    %9 = sbr.rel (0) target = $region5
  $region4: #{dqn_cnn_forward.6} parent=0 // pred_region
    _
  $region5: #{dqn_cnn_forward.6} parent=0 // pred_fallthru
    _
  // Predicated region
  $region6: #{dqn_cnn_forward.6} parent=0 // pred_check
    _
  $region7: #{dqn_cnn_forward.6} parent=0 // pred_check_branch
    %11 = sbr.rel (0) target = $region9
  $region8: #{dqn_cnn_forward.6} parent=0 // pred_region
    _
  $region9: #{dqn_cnn_forward.6} parent=0 // pred_fallthru
    _
  // Predicated region
  $region10: #{dqn_cnn_forward.6} parent=0 // pred_check
    _
  $region11: #{dqn_cnn_forward.6} parent=0 // pred_check_branch
    %13 = sbr.rel (0) target = $region13
  $region12: #{dqn_cnn_forward.6} parent=0 // pred_region
    _
  $region13: #{dqn_cnn_forward.6} parent=0 // pred_fallthru
    _
  %v15 = vld [vmem:[%s0] sm:$0xff]
  %v16 = vld [vmem:[%s0 + $0x8] sm:$0xff]
  %v17 = vld [vmem:[%s0 + $0x10] sm:$0xff]
  %v18 = vld [vmem:[%s0 + $0x18] sm:$0xff]
  %v19 = vld [vmem:[%s0 + $0x20] sm:$0xff]
  %v20 = vld [vmem:[%s0 + $0x28] sm:$0xff]
  %v21 = vld [vmem:[%s0 + $0x30] sm:$0xff]
  %v22 = vld [vmem:[%s0 + $0x38] sm:$0xff]
  %v23 = vld [vmem:[%s0 + $0x40] sm:$0xff]
  %v24 = vld [vmem:[%s0 + $0x48] sm:$0xff]
  %v25 = vld [vmem:[%s0 + $0x50] sm:$0xff]
  %v26 = vld [vmem:[%s0 + $0x58] sm:$0xff]
  %v27 = vld [vmem:[%s0 + $0x60] sm:$0xff]
  %v28 = vld [vmem:[%s0 + $0x68] sm:$0xff]
  %v29 = vld [vmem:[%s0 + $0x70] sm:$0xff]
  %v30 = vld [vmem:[%s0 + $0x78] sm:$0xff]
  %v31 = vld [vmem:[%s0 + $0x80] sm:$0xff]
  %v32 = vld [vmem:[%s0 + $0x88] sm:$0xff]
  %v33 = vld [vmem:[%s0 + $0x90] sm:$0xff]
  %v34 = vld [vmem:[%s0 + $0x98] sm:$0xff]
  %v35 = vld [vmem:[%s0 + $0xa0] sm:$0xff]
  %v36 = vld [vmem:[%s0 + $0xa8] sm:$0xff]
  %v37 = vld [vmem:[%s0 + $0xb0] sm:$0xff]
  %v38 = vld [vmem:[%s0 + $0xb8] sm:$0xff]
  %v39 = vld [vmem:[%s0 + $0xc0] sm:$0xff]
  %v40 = vld [vmem:[%s0 + $0xc8] sm:$0xff]
  %v41 = vld [vmem:[%s0 + $0xd0] sm:$0xff]
  %v42 = vld [vmem:[%s0 + $0xd8] sm:$0xff]
  %v43 = vld [vmem:[%s0 + $0xe0] sm:$0xff]
  %v44 = vld [vmem:[%s0 + $0xe8] sm:$0xff]
  %v45 = vld [vmem:[%s0 + $0xf0] sm:$0xff]
  %v46 = vld [vmem:[%s0 + $0xf8] sm:$0xff]
  %v47 = vld [vmem:[%s0 + $0x100] sm:$0xff]
  %v48 = vld [vmem:[%s0 + $0x108] sm:$0xff]
  %v49 = vld [vmem:[%s0 + $0x110] sm:$0xff]
  %v50 = vld [vmem:[%s0 + $0x118] sm:$0xff]
  %v51 = vld [vmem:[%s0 + $0x120] sm:$0xff]
  %v52 = vld [vmem:[%s0 + $0x128] sm:$0xff]
  %v53 = vld [vmem:[%s0 + $0x130] sm:$0xff]
  %v54 = vld [vmem:[%s0 + $0x138] sm:$0xff]
  %v55 = vld [vmem:[%s0 + $0x140] sm:$0xff]
  %v56 = vld [vmem:[%s0 + $0x148] sm:$0xff]
  %v57 = vld [vmem:[%s0 + $0x150] sm:$0xff]
  %v58 = vld [vmem:[%s0 + $0x158] sm:$0xff]
  %v59 = vld [vmem:[%s0 + $0x160] sm:$0xff]
  %v60 = vld [vmem:[%s0 + $0x168] sm:$0xff]
  %v61 = vld [vmem:[%s0 + $0x170] sm:$0xff]
  %v62 = vld [vmem:[%s0 + $0x178] sm:$0xff]
  %v63 = vld [vmem:[%s0 + $0x180] sm:$0xff]
  %v64 = vld [vmem:[%s0 + $0x188] sm:$0xff]
  %v65 = vld [vmem:[%s0 + $0x190] sm:$0xff]
  %v66 = vld [vmem:[%s0 + $0x198] sm:$0xff]
  %v67 = vld [vmem:[%s0 + $0x1a0] sm:$0xff]
  %v68 = vld [vmem:[%s0 + $0x1a8] sm:$0xff]
  %v69 = vld [vmem:[%s0 + $0x1b0] sm:$0xff]
  %v70 = vld [vmem:[%s0 + $0x1b8] sm:$0xff]
  %v71 = vld [vmem:[%s0 + $0x1c0] sm:$0xff]
  %v72 = vld [vmem:[%s0 + $0x1c8] sm:$0xff]
  %v73 = vld [vmem:[%s0 + $0x1d0] sm:$0xff]
  %v74 = vld [vmem:[%s0 + $0x1d8] sm:$0xff]
  %v75 = vld [vmem:[%s0 + $0x1e0] sm:$0x3]
  %v76 = vld [vmem:[%s0 + $0x1e8] sm:$0x3]
  %v77 = vld [vmem:[%s0 + $0x1f0] sm:$0x3]
  %v78 = vld [vmem:[%s0 + $0x1f8] sm:$0x3]
  %v79 = vld [vmem:[%s0 + $0x200] sm:$0x3]
  %v80 = vpack.c.bf16 %v20, %v15
  %v81 = vpack.c.bf16 %v21, %v16
  %v82 = vpack.c.bf16 %v22, %v17
  %v83 = vpack.c.bf16 %v23, %v18
  %v84 = vpack.c.bf16 %v24, %v19
  %v85 = vpack.c.bf16 %v30, %v25
  %v86 = vpack.c.bf16 %v31, %v26
  %v87 = vpack.c.bf16 %v32, %v27
  %v88 = vpack.c.bf16 %v33, %v28
  %v89 = vpack.c.bf16 %v34, %v29
  %v90 = vpack.c.bf16 %v40, %v35
  %v91 = vpack.c.bf16 %v41, %v36
  %v92 = vpack.c.bf16 %v42, %v37
  %v93 = vpack.c.bf16 %v43, %v38
  %v94 = vpack.c.bf16 %v44, %v39
  %v95 = vpack.c.bf16 %v50, %v45
  %v96 = vpack.c.bf16 %v51, %v46
  %v97 = vpack.c.bf16 %v52, %v47
  %v98 = vpack.c.bf16 %v53, %v48
  %v99 = vpack.c.bf16 %v54, %v49
  %v100 = vpack.c.bf16 %v60, %v55
  %v101 = vpack.c.bf16 %v61, %v56
  %v102 = vpack.c.bf16 %v62, %v57
  %v103 = vpack.c.bf16 %v63, %v58
  %v104 = vpack.c.bf16 %v64, %v59
  %v105 = vpack.c.bf16 %v70, %v65
  %v106 = vpack.c.bf16 %v71, %v66
  %v107 = vpack.c.bf16 %v72, %v67
  %v108 = vpack.c.bf16 %v73, %v68
  %v109 = vpack.c.bf16 %v74, %v69
  %v110 = vpack.c.bf16 %v75, %v75
  %v111 = vpack.c.bf16 %v76, %v76
  %v112 = vpack.c.bf16 %v77, %v77
  %v113 = vpack.c.bf16 %v78, %v78
  %v114 = vpack.c.bf16 %v79, %v79
  %v115 = vld [vmem:[%s1] sm:$0xf]
  %v116 = vld [vmem:[%s1 + $0x4] sm:$0xf]
  %v117 = vld [vmem:[%s1 + $0x8] sm:$0xf]
  %v118 = vld [vmem:[%s1 + $0xc] sm:$0xf]
  %v119 = vld [vmem:[%s1 + $0x10] sm:$0xf]
  %v120 = vld [vmem:[%s1 + $0x14] sm:$0xf]
  %v121 = vld [vmem:[%s1 + $0x18] sm:$0xf]
  %v122 = vld [vmem:[%s1 + $0x1c] sm:$0xf]
  %v123 = vld [vmem:[%s1 + $0x20] sm:$0xf]
  %v124 = vld [vmem:[%s1 + $0x24] sm:$0xf]
  %v125 = vld [vmem:[%s1 + $0x28] sm:$0xf]
  %v126 = vld [vmem:[%s1 + $0x2c] sm:$0xf]
  %v127 = vld [vmem:[%s1 + $0x30] sm:$0xf]
  %v128 = vld [vmem:[%s1 + $0x34] sm:$0xf]
  %v129 = vld [vmem:[%s1 + $0x38] sm:$0xf]
  %v130 = vld [vmem:[%s1 + $0x3c] sm:$0xf]
  %v131 = vld [vmem:[%s1 + $0x40] sm:$0xf]
  %v132 = vld [vmem:[%s1 + $0x44] sm:$0xf]
  %v133 = vld [vmem:[%s1 + $0x48] sm:$0xf]
  %v134 = vld [vmem:[%s1 + $0x4c] sm:$0xf]
  %v135 = vld [vmem:[%s1 + $0x50] sm:$0xf]
  %v136 = vld [vmem:[%s1 + $0x54] sm:$0xf]
  %v137 = vld [vmem:[%s1 + $0x58] sm:$0xf]
  %v138 = vld [vmem:[%s1 + $0x5c] sm:$0xf]
  %v139 = vld [vmem:[%s1 + $0x60] sm:$0xf]
  %v140 = vld [vmem:[%s1 + $0x64] sm:$0xf]
  %v141 = vld [vmem:[%s1 + $0x68] sm:$0xf]
  %v142 = vld [vmem:[%s1 + $0x6c] sm:$0xf]
  %v143 = vld [vmem:[%s1 + $0x70] sm:$0xf]
  %v144 = vld [vmem:[%s1 + $0x74] sm:$0xf]
  %v145 = vld [vmem:[%s1 + $0x78] sm:$0xf]
  %v146 = vld [vmem:[%s1 + $0x7c] sm:$0xf]
  %v147 = vld [vmem:[%s1 + $0x80] sm:$0xf]
  %v148 = vld [vmem:[%s1 + $0x84] sm:$0xf]
  %v149 = vld [vmem:[%s1 + $0x88] sm:$0xf]
  %v150 = vld [vmem:[%s1 + $0x8c] sm:$0xf]
  %v151 = vld [vmem:[%s1 + $0x90] sm:$0xf]
  %v152 = vld [vmem:[%s1 + $0x94] sm:$0xf]
  %v153 = vld [vmem:[%s1 + $0x98] sm:$0xf]
  %v154 = vld [vmem:[%s1 + $0x9c] sm:$0xf]
  %v155 = vld [vmem:[%s1 + $0xa0] sm:$0xf]
  %v156 = vld [vmem:[%s1 + $0xa4] sm:$0xf]
  %v157 = vld [vmem:[%s1 + $0xa8] sm:$0xf]
  %v158 = vld [vmem:[%s1 + $0xac] sm:$0xf]
  %v159 = vld [vmem:[%s1 + $0xb0] sm:$0xf]
  %v160 = vld [vmem:[%s1 + $0xb4] sm:$0xf]
  %v161 = vld [vmem:[%s1 + $0xb8] sm:$0xf]
  %v162 = vld [vmem:[%s1 + $0xbc] sm:$0xf]
  %v163 = vld [vmem:[%s1 + $0xc0] sm:$0xf]
  %v164 = vld [vmem:[%s1 + $0xc4] sm:$0xf]
  %v165 = vld [vmem:[%s1 + $0xc8] sm:$0xf]
  %v166 = vld [vmem:[%s1 + $0xcc] sm:$0xf]
  %v167 = vld [vmem:[%s1 + $0xd0] sm:$0xf]
  %v168 = vld [vmem:[%s1 + $0xd4] sm:$0xf]
  %v169 = vld [vmem:[%s1 + $0xd8] sm:$0xf]
  %v170 = vld [vmem:[%s1 + $0xdc] sm:$0xf]
  %v171 = vld [vmem:[%s1 + $0xe0] sm:$0xf]
  %v172 = vld [vmem:[%s1 + $0xe4] sm:$0xf]
  %v173 = vld [vmem:[%s1 + $0xe8] sm:$0xf]
  %v174 = vld [vmem:[%s1 + $0xec] sm:$0xf]
  %v175 = vld [vmem:[%s1 + $0xf0] sm:$0xf]
  %v176 = vld [vmem:[%s1 + $0xf4] sm:$0xf]
  %v177 = vld [vmem:[%s1 + $0xf8] sm:$0xf]
  %v178 = vld [vmem:[%s1 + $0xfc] sm:$0xf]
  %v179 = vld [vmem:[%s1 + $0x100] sm:$0xf]
  %v180 = vld [vmem:[%s1 + $0x104] sm:$0xf]
  %v181 = vld [vmem:[%s1 + $0x108] sm:$0xf]
  %v182 = vld [vmem:[%s1 + $0x10c] sm:$0xf]
  %v183 = vld [vmem:[%s1 + $0x110] sm:$0xf]
  %v184 = vld [vmem:[%s1 + $0x114] sm:$0xf]
  %v185 = vld [vmem:[%s1 + $0x118] sm:$0xf]
  %v186 = vld [vmem:[%s1 + $0x11c] sm:$0xf]
  %v187 = vld [vmem:[%s2] sm:$0x1]
  %v189 = vlaneseq
  %v190 = vshrl.u32 %v189, 7
  %v191 = vsub.s32 0, %v190
  %v192 = vrot.slane %v187, %v191
  %v266 = vunpack.c.l.b16 %v115
  %v267 = vunpack.c.l.b16 %v116
  %v268 = vunpack.c.l.b16 %v117
  %v269 = vunpack.c.l.b16 %v118
  %v270 = vunpack.c.l.b16 %v119
  %v271 = vunpack.c.l.b16 %v120
  %v272 = vunpack.c.l.b16 %v121
  %v273 = vunpack.c.l.b16 %v122
  %v274 = vunpack.c.l.b16 %v123
  %v275 = vunpack.c.l.b16 %v124
  %v276 = vunpack.c.l.b16 %v125
  %v277 = vunpack.c.l.b16 %v126
  %v278 = vunpack.c.l.b16 %v127
  %v279 = vunpack.c.l.b16 %v128
  %v280 = vunpack.c.l.b16 %v129
  %v281 = vunpack.c.l.b16 %v130
  %v282 = vunpack.c.l.b16 %v131
  %v283 = vunpack.c.l.b16 %v132
  %v284 = vunpack.c.l.b16 %v133
  %v285 = vunpack.c.l.b16 %v134
  %v286 = vunpack.c.l.b16 %v135
  %v287 = vunpack.c.l.b16 %v136
  %v288 = vunpack.c.l.b16 %v137
  %v289 = vunpack.c.l.b16 %v138
  %v290 = vunpack.c.l.b16 %v139
  %v291 = vunpack.c.l.b16 %v140
  %v292 = vunpack.c.l.b16 %v141
  %v293 = vunpack.c.l.b16 %v142
  %v294 = vunpack.c.l.b16 %v143
  %v295 = vunpack.c.l.b16 %v144
  %v296 = vunpack.c.l.b16 %v145
  %v297 = vunpack.c.l.b16 %v146
  %v298 = vunpack.c.l.b16 %v147
  %v299 = vunpack.c.l.b16 %v148
  %v300 = vunpack.c.l.b16 %v149
  %v301 = vunpack.c.l.b16 %v150
  %v302 = vunpack.c.l.b16 %v151
  %v303 = vunpack.c.l.b16 %v152
  %v304 = vunpack.c.l.b16 %v153
  %v305 = vunpack.c.l.b16 %v154
  %v306 = vunpack.c.l.b16 %v155
  %v307 = vunpack.c.l.b16 %v156
  %v308 = vunpack.c.l.b16 %v157
  %v309 = vunpack.c.l.b16 %v158
  %v310 = vunpack.c.l.b16 %v159
  %v311 = vunpack.c.l.b16 %v160
  %v312 = vunpack.c.l.b16 %v161
  %v313 = vunpack.c.l.b16 %v162
  %v314 = vunpack.c.l.b16 %v163
  %v315 = vunpack.c.l.b16 %v164
  %v316 = vunpack.c.l.b16 %v165
  %v317 = vunpack.c.l.b16 %v166
  %v318 = vunpack.c.l.b16 %v167
  %v319 = vunpack.c.l.b16 %v168
  %v320 = vunpack.c.l.b16 %v169
  %v321 = vunpack.c.l.b16 %v170
  %v322 = vunpack.c.l.b16 %v171
  %v323 = vunpack.c.l.b16 %v172
  %v324 = vunpack.c.l.b16 %v173
  %v325 = vunpack.c.l.b16 %v174
  %v326 = vunpack.c.l.b16 %v175
  %v327 = vunpack.c.l.b16 %v176
  %v328 = vunpack.c.l.b16 %v177
  %v329 = vunpack.c.l.b16 %v178
  %v330 = vunpack.c.l.b16 %v179
  %v331 = vunpack.c.l.b16 %v180
  %v332 = vunpack.c.l.b16 %v181
  %v333 = vunpack.c.l.b16 %v182
  %v334 = vunpack.c.l.b16 %v183
  %v335 = vunpack.c.l.b16 %v184
  %v336 = vunpack.c.l.b16 %v185
  %v337 = vunpack.c.l.b16 %v186
  %v338 = vpack.c.b16 %v267, %v266
  %v339 = vpack.c.b16 %v269, %v268
  %v340 = vpack.c.b16 %v271, %v270
  %v341 = vpack.c.b16 %v273, %v272
  %v342 = vpack.c.b16 %v275, %v274
  %v343 = vpack.c.b16 %v277, %v276
  %v344 = vpack.c.b16 %v279, %v278
  %v345 = vpack.c.b16 %v281, %v280
  %v346 = vpack.c.b16 %v283, %v282
  %v347 = vpack.c.b16 %v285, %v284
  %v348 = vpack.c.b16 %v287, %v286
  %v349 = vpack.c.b16 %v289, %v288
  %v350 = vpack.c.b16 %v291, %v290
  %v351 = vpack.c.b16 %v293, %v292
  %v352 = vpack.c.b16 %v295, %v294
  %v353 = vpack.c.b16 %v297, %v296
  %v354 = vpack.c.b16 %v299, %v298
  %v355 = vpack.c.b16 %v301, %v300
  %v356 = vpack.c.b16 %v303, %v302
  %v357 = vpack.c.b16 %v305, %v304
  %v358 = vpack.c.b16 %v307, %v306
  %v359 = vpack.c.b16 %v309, %v308
  %v360 = vpack.c.b16 %v311, %v310
  %v361 = vpack.c.b16 %v313, %v312
  %v362 = vpack.c.b16 %v315, %v314
  %v363 = vpack.c.b16 %v317, %v316
  %v364 = vpack.c.b16 %v319, %v318
  %v365 = vpack.c.b16 %v321, %v320
  %v366 = vpack.c.b16 %v323, %v322
  %v367 = vpack.c.b16 %v325, %v324
  %v368 = vpack.c.b16 %v327, %v326
  %v369 = vpack.c.b16 %v329, %v328
  %v370 = vpack.c.b16 %v331, %v330
  %v371 = vpack.c.b16 %v333, %v332
  %v372 = vpack.c.b16 %v335, %v334
  %v373 = vpack.c.b16 %v337, %v336
  %vm410 = vcmask 523264
  %v412 = vsel %vm410, %v84, 0
  %v415 = vsel %vm410, %v89, 0
  %v418 = vsel %vm410, %v94, 0
  %v421 = vsel %vm410, %v99, 0
  %v424 = vsel %vm410, %v104, 0
  %v427 = vsel %vm410, %v109, 0
  %v430 = vsel %vm410, %v114, 0
  %432 = vmatprep.subr.bf16.mxu0 0
  %433 = vmatpush1.bf16.msra.mxu0 %v345
  %434 = vmatprep.subr.bf16.mxu0 0
  %435 = vmatpush1.bf16.msra.mxu0 %v344
  %436 = vmatprep.subr.bf16.mxu0 0
  %437 = vmatpush1.bf16.msra.mxu0 %v343
  %438 = vmatprep.subr.bf16.mxu0 0
  %439 = vmatpush1.bf16.msra.mxu0 %v342
  %440 = vmatprep.subr.bf16.mxu0 0
  %441 = vmatpush1.bf16.msra.mxu0 %v341
  %442 = vmatprep.subr.bf16.mxu0 0
  %443 = vmatpush1.bf16.msra.mxu0 %v340
  %444 = vmatprep.subr.bf16.mxu0 0
  %445 = vmatpush1.bf16.msra.mxu0 %v339
  %446 = vmatprep.subr.bf16.mxu0 0
  %447 = vmatpush1.bf16.msra.mxu0 %v338
  %448 = vmatprep.subr.bf16.mxu0 0
  %449 = vmatpush2.bf16.msra.mxu0 %v353
  %450 = vmatprep.subr.bf16.mxu0 0
  %451 = vmatpush2.bf16.msra.mxu0 %v352
  %452 = vmatprep.subr.bf16.mxu0 0
  %453 = vmatpush2.bf16.msra.mxu0 %v351
  %454 = vmatprep.subr.bf16.mxu0 0
  %455 = vmatpush2.bf16.msra.mxu0 %v350
  %456 = vmatprep.subr.bf16.mxu0 0
  %457 = vmatpush2.bf16.msra.mxu0 %v349
  %458 = vmatprep.subr.bf16.mxu0 0
  %459 = vmatpush2.bf16.msra.mxu0 %v348
  %460 = vmatprep.subr.bf16.mxu0 0
  %461 = vmatpush2.bf16.msra.mxu0 %v347
  %462 = vmatprep.subr.bf16.mxu0 0
  %463 = vmatpush2.bf16.msra.mxu0 %v346
  %464 = vmatprep.mubr.bf16.mxu0 %v81
  %465 = vmatmul.mubr.bf16.gmra.mxu0 %v80
  %v466 = vpop.f32.mrf.mxu0
  %v467 = vadd.f32 %v192, %v466
  %v468 = vpop.f32.mrf.mxu0
  %v469 = vpop.f32.mrf.mxu0
  %v470 = vadd.f32 %v192, %v469
  %v471 = vpop.f32.mrf.mxu0
  %472 = vmatprep.mubr.bf16.mxu0 %v86
  %473 = vmatmul.mubr.bf16.gmra.mxu0 %v85
  %v474 = vpop.f32.mrf.mxu0
  %v475 = vadd.f32 %v192, %v474
  %v476 = vpop.f32.mrf.mxu0
  %v477 = vpop.f32.mrf.mxu0
  %v478 = vadd.f32 %v192, %v477
  %v479 = vpop.f32.mrf.mxu0
  %480 = vmatprep.mubr.bf16.mxu0 %v91
  %481 = vmatmul.mubr.bf16.gmra.mxu0 %v90
  %v482 = vpop.f32.mrf.mxu0
  %v483 = vadd.f32 %v192, %v482
  %v484 = vpop.f32.mrf.mxu0
  %v485 = vpop.f32.mrf.mxu0
  %v486 = vadd.f32 %v192, %v485
  %v487 = vpop.f32.mrf.mxu0
  %488 = vmatprep.mubr.bf16.mxu0 %v96
  %489 = vmatmul.mubr.bf16.gmra.mxu0 %v95
  %v490 = vpop.f32.mrf.mxu0
  %v491 = vadd.f32 %v192, %v490
  %v492 = vpop.f32.mrf.mxu0
  %v493 = vpop.f32.mrf.mxu0
  %v494 = vadd.f32 %v192, %v493
  %v495 = vpop.f32.mrf.mxu0
  %496 = vmatprep.mubr.bf16.mxu0 %v101
  %497 = vmatmul.mubr.bf16.gmra.mxu0 %v100
  %v498 = vpop.f32.mrf.mxu0
  %v499 = vadd.f32 %v192, %v498
  %v500 = vpop.f32.mrf.mxu0
  %v501 = vpop.f32.mrf.mxu0
  %v502 = vadd.f32 %v192, %v501
  %v503 = vpop.f32.mrf.mxu0
  %504 = vmatprep.mubr.bf16.mxu0 %v106
  %505 = vmatmul.mubr.bf16.gmra.mxu0 %v105
  %v506 = vpop.f32.mrf.mxu0
  %v507 = vadd.f32 %v192, %v506
  %v508 = vpop.f32.mrf.mxu0
  %v509 = vpop.f32.mrf.mxu0
  %v510 = vadd.f32 %v192, %v509
  %v511 = vpop.f32.mrf.mxu0
  %512 = vmatprep.mubr.bf16.mxu0 %v111
  %513 = vmatmul.mubr.bf16.gmra.mxu0 %v110
  %v514 = vpop.f32.mrf.mxu0
  %v515 = vadd.f32 %v192, %v514
  %v516 = vpop.f32.mrf.mxu0
  %v517 = vpop.f32.mrf.mxu0
  %v518 = vpop.f32.mrf.mxu0
  %519 = vdwg.mxu0
  %520 = vmatprep.subr.bf16.mxu0 0
  %521 = vmatpush1.bf16.msra.mxu0 %v361
  %522 = vmatprep.subr.bf16.mxu0 0
  %523 = vmatpush1.bf16.msra.mxu0 %v360
  %524 = vmatprep.subr.bf16.mxu0 0
  %525 = vmatpush1.bf16.msra.mxu0 %v359
  %526 = vmatprep.subr.bf16.mxu0 0
  %527 = vmatpush1.bf16.msra.mxu0 %v358
  %528 = vmatprep.subr.bf16.mxu0 0
  %529 = vmatpush1.bf16.msra.mxu0 %v357
  %530 = vmatprep.subr.bf16.mxu0 0
  %531 = vmatpush1.bf16.msra.mxu0 %v356
  %532 = vmatprep.subr.bf16.mxu0 0
  %533 = vmatpush1.bf16.msra.mxu0 %v355
  %534 = vmatprep.subr.bf16.mxu0 0
  %535 = vmatpush1.bf16.msra.mxu0 %v354
  %536 = vmatprep.subr.bf16.mxu0 0
  %537 = vmatpush2.bf16.msra.mxu0 %v369
  %538 = vmatprep.subr.bf16.mxu0 0
  %539 = vmatpush2.bf16.msra.mxu0 %v368
  %540 = vmatprep.subr.bf16.mxu0 0
  %541 = vmatpush2.bf16.msra.mxu0 %v367
  %542 = vmatprep.subr.bf16.mxu0 0
  %543 = vmatpush2.bf16.msra.mxu0 %v366
  %544 = vmatprep.subr.bf16.mxu0 0
  %545 = vmatpush2.bf16.msra.mxu0 %v365
  %546 = vmatprep.subr.bf16.mxu0 0
  %547 = vmatpush2.bf16.msra.mxu0 %v364
  %548 = vmatprep.subr.bf16.mxu0 0
  %549 = vmatpush2.bf16.msra.mxu0 %v363
  %550 = vmatprep.subr.bf16.mxu0 0
  %551 = vmatpush2.bf16.msra.mxu0 %v362
  %552 = vmatprep.mubr.bf16.mxu0 %v83
  %553 = vmatmul.mubr.bf16.gmra.mxu0 %v82
  %v554 = vpop.f32.mrf.mxu0
  %v555 = vadd.f32 %v467, %v554
  %v556 = vpop.f32.mrf.mxu0
  %v557 = vpop.f32.mrf.mxu0
  %v558 = vadd.f32 %v470, %v557
  %v559 = vpop.f32.mrf.mxu0
  %560 = vmatprep.mubr.bf16.mxu0 %v88
  %561 = vmatmul.mubr.bf16.gmra.mxu0 %v87
  %v562 = vpop.f32.mrf.mxu0
  %v563 = vadd.f32 %v475, %v562
  %v564 = vpop.f32.mrf.mxu0
  %v565 = vpop.f32.mrf.mxu0
  %v566 = vadd.f32 %v478, %v565
  %v567 = vpop.f32.mrf.mxu0
  %568 = vmatprep.mubr.bf16.mxu0 %v93
  %569 = vmatmul.mubr.bf16.gmra.mxu0 %v92
  %v570 = vpop.f32.mrf.mxu0
  %v571 = vadd.f32 %v483, %v570
  %v572 = vpop.f32.mrf.mxu0
  %v573 = vpop.f32.mrf.mxu0
  %v574 = vadd.f32 %v486, %v573
  %v575 = vpop.f32.mrf.mxu0
  %576 = vmatprep.mubr.bf16.mxu0 %v98
  %577 = vmatmul.mubr.bf16.gmra.mxu0 %v97
  %v578 = vpop.f32.mrf.mxu0
  %v579 = vadd.f32 %v491, %v578
  %v580 = vpop.f32.mrf.mxu0
  %v581 = vpop.f32.mrf.mxu0
  %v582 = vadd.f32 %v494, %v581
  %v583 = vpop.f32.mrf.mxu0
  %584 = vmatprep.mubr.bf16.mxu0 %v103
  %585 = vmatmul.mubr.bf16.gmra.mxu0 %v102
  %v586 = vpop.f32.mrf.mxu0
  %v587 = vadd.f32 %v499, %v586
  %v588 = vpop.f32.mrf.mxu0
  %v589 = vpop.f32.mrf.mxu0
  %v590 = vadd.f32 %v502, %v589
  %v591 = vpop.f32.mrf.mxu0
  %592 = vmatprep.mubr.bf16.mxu0 %v108
  %593 = vmatmul.mubr.bf16.gmra.mxu0 %v107
  %v594 = vpop.f32.mrf.mxu0
  %v595 = vadd.f32 %v507, %v594
  %v596 = vpop.f32.mrf.mxu0
  %v597 = vpop.f32.mrf.mxu0
  %v598 = vadd.f32 %v510, %v597
  %v599 = vpop.f32.mrf.mxu0
  %600 = vmatprep.mubr.bf16.mxu0 %v113
  %601 = vmatmul.mubr.bf16.gmra.mxu0 %v112
  %v602 = vpop.f32.mrf.mxu0
  %v603 = vadd.f32 %v515, %v602
  %v604 = vpop.f32.mrf.mxu0
  %v605 = vpop.f32.mrf.mxu0
  %v606 = vpop.f32.mrf.mxu0
  %607 = vdwg.mxu0
  %608 = vmatprep.subr.bf16.mxu0 0
  %609 = vmatpush1.bf16.msra.mxu0 0
  %610 = vmatprep.subr.bf16.mxu0 0
  %611 = vmatpush1.bf16.msra.mxu0 0
  %612 = vmatprep.subr.bf16.mxu0 0
  %613 = vmatpush1.bf16.msra.mxu0 0
  %614 = vmatprep.subr.bf16.mxu0 0
  %615 = vmatpush1.bf16.msra.mxu0 0
  %616 = vmatprep.subr.bf16.mxu0 0
  %617 = vmatpush1.bf16.msra.mxu0 %v373
  %618 = vmatprep.subr.bf16.mxu0 0
  %619 = vmatpush1.bf16.msra.mxu0 %v372
  %620 = vmatprep.subr.bf16.mxu0 0
  %621 = vmatpush1.bf16.msra.mxu0 %v371
  %622 = vmatprep.subr.bf16.mxu0 0
  %623 = vmatpush1.bf16.msra.mxu0 %v370
  %624 = vmatprep.subr.bf16.mxu0 0
  %625 = vmatpush2.bf16.msra.mxu0 0
  %626 = vmatprep.subr.bf16.mxu0 0
  %627 = vmatpush2.bf16.msra.mxu0 0
  %628 = vmatprep.subr.bf16.mxu0 0
  %629 = vmatpush2.bf16.msra.mxu0 0
  %630 = vmatprep.subr.bf16.mxu0 0
  %631 = vmatpush2.bf16.msra.mxu0 0
  %632 = vmatprep.subr.bf16.mxu0 0
  %633 = vmatpush2.bf16.msra.mxu0 0
  %634 = vmatprep.subr.bf16.mxu0 0
  %635 = vmatpush2.bf16.msra.mxu0 0
  %636 = vmatprep.subr.bf16.mxu0 0
  %637 = vmatpush2.bf16.msra.mxu0 0
  %638 = vmatprep.subr.bf16.mxu0 0
  %639 = vmatpush2.bf16.msra.mxu0 0
  %640 = vmatprep.mubr.bf16.mxu0 0
  %641 = vmatmul.mubr.bf16.gmra.mxu0 %v412
  %v642 = vpop.f32.mrf.mxu0
  %v643 = vadd.f32 %v555, %v642
  %v644 = vpop.f32.mrf.mxu0
  %v645 = vpop.f32.mrf.mxu0
  %v646 = vadd.f32 %v558, %v645
  %v647 = vpop.f32.mrf.mxu0
  %648 = vmatprep.mubr.bf16.mxu0 0
  %649 = vmatmul.mubr.bf16.gmra.mxu0 %v415
  %v650 = vpop.f32.mrf.mxu0
  %v651 = vadd.f32 %v563, %v650
  %v652 = vpop.f32.mrf.mxu0
  %v653 = vpop.f32.mrf.mxu0
  %v654 = vadd.f32 %v566, %v653
  %v655 = vpop.f32.mrf.mxu0
  %656 = vmatprep.mubr.bf16.mxu0 0
  %657 = vmatmul.mubr.bf16.gmra.mxu0 %v418
  %v658 = vpop.f32.mrf.mxu0
  %v659 = vadd.f32 %v571, %v658
  %v660 = vpop.f32.mrf.mxu0
  %v661 = vpop.f32.mrf.mxu0
  %v662 = vadd.f32 %v574, %v661
  %v663 = vpop.f32.mrf.mxu0
  %664 = vmatprep.mubr.bf16.mxu0 0
  %665 = vmatmul.mubr.bf16.gmra.mxu0 %v421
  %v666 = vpop.f32.mrf.mxu0
  %v667 = vadd.f32 %v579, %v666
  %v668 = vpop.f32.mrf.mxu0
  %v669 = vpop.f32.mrf.mxu0
  %v670 = vadd.f32 %v582, %v669
  %v671 = vpop.f32.mrf.mxu0
  %672 = vmatprep.mubr.bf16.mxu0 0
  %673 = vmatmul.mubr.bf16.gmra.mxu0 %v424
  %v674 = vpop.f32.mrf.mxu0
  %v675 = vadd.f32 %v587, %v674
  %v676 = vpop.f32.mrf.mxu0
  %v677 = vpop.f32.mrf.mxu0
  %v678 = vadd.f32 %v590, %v677
  %v679 = vpop.f32.mrf.mxu0
  %680 = vmatprep.mubr.bf16.mxu0 0
  %681 = vmatmul.mubr.bf16.gmra.mxu0 %v427
  %v682 = vpop.f32.mrf.mxu0
  %v683 = vadd.f32 %v595, %v682
  %v684 = vpop.f32.mrf.mxu0
  %v685 = vpop.f32.mrf.mxu0
  %v686 = vadd.f32 %v598, %v685
  %v687 = vpop.f32.mrf.mxu0
  %688 = vmatprep.mubr.bf16.mxu0 0
  %689 = vmatmul.mubr.bf16.gmra.mxu0 %v430
  %v690 = vpop.f32.mrf.mxu0
  %v691 = vadd.f32 %v603, %v690
  %v692 = vpop.f32.mrf.mxu0
  %v693 = vpop.f32.mrf.mxu0
  %v694 = vpop.f32.mrf.mxu0
  %695 = vdwg.mxu0
  %v696 = vmax.f32 %v643, 0.0
  %v697 = vmax.f32 %v646, 0.0
  %v698 = vmax.f32 %v651, 0.0
  %v699 = vmax.f32 %v654, 0.0
  %v700 = vmax.f32 %v659, 0.0
  %v701 = vmax.f32 %v662, 0.0
  %v702 = vmax.f32 %v667, 0.0
  %v703 = vmax.f32 %v670, 0.0
  %v704 = vmax.f32 %v675, 0.0
  %v705 = vmax.f32 %v678, 0.0
  %v706 = vmax.f32 %v683, 0.0
  %v707 = vmax.f32 %v686, 0.0
  %v708 = vmax.f32 %v691, 0.0
  %709 = vst.msk [vmem:[%s3] sm:$0xff] %vm410, %v696
  %710 = vst.msk [vmem:[%s3 + $0x8] sm:$0xff] %vm410, %v697
  %711 = vst.msk [vmem:[%s3 + $0x10] sm:$0xff] %vm410, %v698
  %712 = vst.msk [vmem:[%s3 + $0x18] sm:$0xff] %vm410, %v699
  %713 = vst.msk [vmem:[%s3 + $0x20] sm:$0xff] %vm410, %v700
  %714 = vst.msk [vmem:[%s3 + $0x28] sm:$0xff] %vm410, %v701
  %715 = vst.msk [vmem:[%s3 + $0x30] sm:$0xff] %vm410, %v702
  %716 = vst.msk [vmem:[%s3 + $0x38] sm:$0xff] %vm410, %v703
  %717 = vst.msk [vmem:[%s3 + $0x40] sm:$0xff] %vm410, %v704
  %718 = vst.msk [vmem:[%s3 + $0x48] sm:$0xff] %vm410, %v705
  %719 = vst.msk [vmem:[%s3 + $0x50] sm:$0xff] %vm410, %v706
  %720 = vst.msk [vmem:[%s3 + $0x58] sm:$0xff] %vm410, %v707
  %vm721 = vcmask 517120
  %722 = vst.msk [vmem:[%s3 + $0x60] sm:$0x3] %vm721, %v708
  // Predicated region
  $region14: #{dqn_cnn_forward.6} parent=0 // pred_check
    _
  $region15: #{dqn_cnn_forward.6} parent=0 // pred_check_branch
    %724 = sbr.rel (0) target = $region17
  $region16: #{dqn_cnn_forward.6} parent=0 // pred_region
    _
  $region17: #{dqn_cnn_forward.6} parent=0 // pred_fallthru
    _
  // Predicated region
  $region18: #{dqn_cnn_forward.6} parent=0 // pred_check
    _
  $region19: #{dqn_cnn_forward.6} parent=0 // pred_check_branch
    %726 = sbr.rel (0) target = $region21
  $region20: #{dqn_cnn_forward.6} parent=0 // pred_region
    _
  $region21: #{dqn_cnn_forward.6} parent=0 // pred_fallthru
    _

// kernel: dqn_cnn_forward.7
$region0: #{dqn_cnn_forward.7}
  #allocation0 [shape = 'u32[]', space=smem, size = 0x4, offset = 0x4, fixed_abs, tag = 'smem constant byte address 0x4 - core index']
  #allocation1 [shape = 'u32[144,128]{1,0:T(1,128)}', space=vmem, size = 0x12000, scoped, tag = 'internal scratch']
  %s0 = inlined_call_operand.vmem [shape: f32[2,3136], index: 0, kind: input, shape index: {}]
  %s1 = inlined_call_operand.vmem [shape: bf16[3136,512], index: 1, kind: input, shape index: {}]
  %s2 = inlined_call_operand.vmem [shape: f32[1,512], index: 2, kind: input, shape index: {}]
  %s3 = inlined_call_operand.vmem [shape: bf16[512,10], index: 3, kind: input, shape index: {}]
  %s4 = inlined_call_operand.vmem [shape: f32[1,10], index: 4, kind: input, shape index: {}]
  %s5 = inlined_call_operand.hbm [shape: f32[2,10], index: 5, kind: output, shape index: {}]
  %s6 = sld [smem:[#allocation0]]
  $region30: #{dqn_cnn_forward.7} parent=0
    _
  %s8 = ssub.s32 1, %s6
  %s9 = scalar_select 0, %s8, %s6
  $region1: #{dqn_cnn_forward.7} parent=0
    #allocation2 [shape = 'u8[1024]{0}', space=vmem, size = 0x400, scoped, tag = 'output window, operand 0, single buffered']
    #allocation3 [shape = 's32[1]{0}', space=sflag, size = 0x4, scoped, tag = 'scoped memory for dqn_cnn_forward.7']
    %10 = vsyncpa [#allocation3], 0
    // Predicated region
    $region2: #{dqn_cnn_forward.7} parent=1 // pred_check
      _
    $region3: #{dqn_cnn_forward.7} parent=1 // pred_check_branch
      %12 = sbr.rel (0) target = $region5
    $region4: #{dqn_cnn_forward.7} parent=1 // pred_region
      _
    $region5: #{dqn_cnn_forward.7} parent=1 // pred_fallthru
      _
    // Predicated region
    $region6: #{dqn_cnn_forward.7} parent=1 // pred_check
      _
    $region7: #{dqn_cnn_forward.7} parent=1 // pred_check_branch
      %14 = sbr.rel (0) target = $region9
    $region8: #{dqn_cnn_forward.7} parent=1 // pred_region
      _
    $region9: #{dqn_cnn_forward.7} parent=1 // pred_fallthru
      _
    // Predicated region
    $region10: #{dqn_cnn_forward.7} parent=1 // pred_check
      _
    $region11: #{dqn_cnn_forward.7} parent=1 // pred_check_branch
      %16 = sbr.rel (0) target = $region13
    $region12: #{dqn_cnn_forward.7} parent=1 // pred_region
      _
    $region13: #{dqn_cnn_forward.7} parent=1 // pred_fallthru
      _
    // Predicated region
    $region14: #{dqn_cnn_forward.7} parent=1 // pred_check
      _
    $region15: #{dqn_cnn_forward.7} parent=1 // pred_check_branch
      %18 = sbr.rel (0) target = $region17
    $region16: #{dqn_cnn_forward.7} parent=1 // pred_region
      _
    $region17: #{dqn_cnn_forward.7} parent=1 // pred_fallthru
      _
    // Predicated region
    $region18: #{dqn_cnn_forward.7} parent=1 // pred_check
      _
    $region19: #{dqn_cnn_forward.7} parent=1 // pred_check_branch
      %20 = sbr.rel (0) target = $region21
    $region20: #{dqn_cnn_forward.7} parent=1 // pred_region
      _
    $region21: #{dqn_cnn_forward.7} parent=1 // pred_fallthru
      _
    %v22 = vld [vmem:[%s0] sm:$0xff]
    %v23 = vld [vmem:[%s0 + $0x8] sm:$0xff]
    %v24 = vld [vmem:[%s0 + $0x10] sm:$0xff]
    %v25 = vld [vmem:[%s0 + $0x18] sm:$0xff]
    %v26 = vld [vmem:[%s0 + $0x20] sm:$0xff]
    %v27 = vld [vmem:[%s0 + $0x28] sm:$0xff]
    %v28 = vld [vmem:[%s0 + $0x30] sm:$0x3]
    %v36 = vcombine.high %v22, %v22
    %v38 = vunpack.c.l.s4 1983009808
    %v39 = vunpack.c.0.s8 %v38
    %v40 = vlaneseq
    %v41 = vshrl.u32 %v40, 7
    %v42 = vsub.s32 %v39, %v41
    %v43 = vrot.slane %v22, %v42
    %v45 = vunpack.c.l.s4 1983009808
    %v46 = vunpack.c.0.s8 %v45
    %v47 = vlaneseq
    %v48 = vshrl.u32 %v47, 7
    %v49 = vsub.s32 %v46, %v48
    %v50 = vrot.slane %v36, %v49
    %v51 = vcombine.high %v43, %v43
    %v52 = vcombine.high %v50, %v50
    %v53 = vcombine.high %v23, %v23
    %v55 = vunpack.c.l.s4 1983009808
    %v56 = vunpack.c.0.s8 %v55
    %v57 = vlaneseq
    %v58 = vshrl.u32 %v57, 7
    %v59 = vsub.s32 %v56, %v58
    %v60 = vrot.slane %v23, %v59
    %v62 = vunpack.c.l.s4 1983009808
    %v63 = vunpack.c.0.s8 %v62
    %v64 = vlaneseq
    %v65 = vshrl.u32 %v64, 7
    %v66 = vsub.s32 %v63, %v65
    %v67 = vrot.slane %v53, %v66
    %v68 = vcombine.high %v60, %v60
    %v69 = vcombine.high %v67, %v67
    %v70 = vcombine.high %v24, %v24
    %v72 = vunpack.c.l.s4 1983009808
    %v73 = vunpack.c.0.s8 %v72
    %v74 = vlaneseq
    %v75 = vshrl.u32 %v74, 7
    %v76 = vsub.s32 %v73, %v75
    %v77 = vrot.slane %v24, %v76
    %v79 = vunpack.c.l.s4 1983009808
    %v80 = vunpack.c.0.s8 %v79
    %v81 = vlaneseq
    %v82 = vshrl.u32 %v81, 7
    %v83 = vsub.s32 %v80, %v82
    %v84 = vrot.slane %v70, %v83
    %v85 = vcombine.high %v77, %v77
    %v86 = vcombine.high %v84, %v84
    %v87 = vcombine.high %v25, %v25
    %v89 = vunpack.c.l.s4 1983009808
    %v90 = vunpack.c.0.s8 %v89
    %v91 = vlaneseq
    %v92 = vshrl.u32 %v91, 7
    %v93 = vsub.s32 %v90, %v92
    %v94 = vrot.slane %v25, %v93
    %v96 = vunpack.c.l.s4 1983009808
    %v97 = vunpack.c.0.s8 %v96
    %v98 = vlaneseq
    %v99 = vshrl.u32 %v98, 7
    %v100 = vsub.s32 %v97, %v99
    %v101 = vrot.slane %v87, %v100
    %v102 = vcombine.high %v94, %v94
    %v103 = vcombine.high %v101, %v101
    %v104 = vcombine.high %v26, %v26
    %v106 = vunpack.c.l.s4 1983009808
    %v107 = vunpack.c.0.s8 %v106
    %v108 = vlaneseq
    %v109 = vshrl.u32 %v108, 7
    %v110 = vsub.s32 %v107, %v109
    %v111 = vrot.slane %v26, %v110
    %v113 = vunpack.c.l.s4 1983009808
    %v114 = vunpack.c.0.s8 %v113
    %v115 = vlaneseq
    %v116 = vshrl.u32 %v115, 7
    %v117 = vsub.s32 %v114, %v116
    %v118 = vrot.slane %v104, %v117
    %v119 = vcombine.high %v111, %v111
    %v120 = vcombine.high %v118, %v118
    %v121 = vcombine.high %v27, %v27
    %v123 = vunpack.c.l.s4 1983009808
    %v124 = vunpack.c.0.s8 %v123
    %v125 = vlaneseq
    %v126 = vshrl.u32 %v125, 7
    %v127 = vsub.s32 %v124, %v126
    %v128 = vrot.slane %v27, %v127
    %v130 = vunpack.c.l.s4 1983009808
    %v131 = vunpack.c.0.s8 %v130
    %v132 = vlaneseq
    %v133 = vshrl.u32 %v132, 7
    %v134 = vsub.s32 %v131, %v133
    %v135 = vrot.slane %v121, %v134
    %v136 = vcombine.high %v128, %v128
    %v137 = vcombine.high %v135, %v135
    %v139 = vunpack.c.l.s4 1983009808
    %v140 = vunpack.c.0.s8 %v139
    %v141 = vlaneseq
    %v142 = vshrl.u32 %v141, 7
    %v143 = vsub.s32 %v140, %v142
    %v144 = vrot.slane %v28, %v143
    %v170 = vpack.c.bf16 %v43, %v43
    %v171 = vpack.c.bf16 %v51, %v51
    %v172 = vpack.c.bf16 %v50, %v50
    %v173 = vpack.c.bf16 %v52, %v52
    %v174 = vpack.c.bf16 %v60, %v60
    %v175 = vpack.c.bf16 %v68, %v68
    %v176 = vpack.c.bf16 %v67, %v67
    %v177 = vpack.c.bf16 %v69, %v69
    %v178 = vpack.c.bf16 %v77, %v77
    %v179 = vpack.c.bf16 %v85, %v85
    %v180 = vpack.c.bf16 %v84, %v84
    %v181 = vpack.c.bf16 %v86, %v86
    %v182 = vpack.c.bf16 %v94, %v94
    %v183 = vpack.c.bf16 %v102, %v102
    %v184 = vpack.c.bf16 %v101, %v101
    %v185 = vpack.c.bf16 %v103, %v103
    %v186 = vpack.c.bf16 %v111, %v111
    %v187 = vpack.c.bf16 %v119, %v119
    %v188 = vpack.c.bf16 %v118, %v118
    %v189 = vpack.c.bf16 %v120, %v120
    %v190 = vpack.c.bf16 %v128, %v128
    %v191 = vpack.c.bf16 %v136, %v136
    %v192 = vpack.c.bf16 %v135, %v135
    %v193 = vpack.c.bf16 %v137, %v137
    %v194 = vpack.c.bf16 %v144, %v144
    %v195 = vld [vmem:[%s1] sm:$0xff]
    %v196 = vld [vmem:[%s1 + $0x8] sm:$0xff]
    %v197 = vld [vmem:[%s1 + $0x10] sm:$0xff]
    %v198 = vld [vmem:[%s1 + $0x18] sm:$0xff]
    %v199 = vld [vmem:[%s1 + $0x20] sm:$0xff]
    %v200 = vld [vmem:[%s1 + $0x28] sm:$0xff]
    %v201 = vld [vmem:[%s1 + $0x30] sm:$0xff]
    %v202 = vld [vmem:[%s1 + $0x38] sm:$0xff]
    %v203 = vld [vmem:[%s1 + $0x40] sm:$0xff]
    %v204 = vld [vmem:[%s1 + $0x48] sm:$0xff]
    %v205 = vld [vmem:[%s1 + $0x50] sm:$0xff]
    %v206 = vld [vmem:[%s1 + $0x58] sm:$0xff]
    %v207 = vld [vmem:[%s1 + $0x60] sm:$0xff]
    %v208 = vld [vmem:[%s1 + $0x68] sm:$0xff]
    %v209 = vld [vmem:[%s1 + $0x70] sm:$0xff]
    %v210 = vld [vmem:[%s1 + $0x78] sm:$0xff]
    %v211 = vld [vmem:[%s1 + $0x80] sm:$0xff]
    %v212 = vld [vmem:[%s1 + $0x88] sm:$0xff]
    %v213 = vld [vmem:[%s1 + $0x90] sm:$0xff]
    %v214 = vld [vmem:[%s1 + $0x98] sm:$0xff]
    %v215 = vld [vmem:[%s1 + $0xa0] sm:$0xff]
    %v216 = vld [vmem:[%s1 + $0xa8] sm:$0xff]
    %v217 = vld [vmem:[%s1 + $0xb0] sm:$0xff]
    %v218 = vld [vmem:[%s1 + $0xb8] sm:$0xff]
    %v219 = vld [vmem:[%s1 + $0xc0] sm:$0xff]
    %v220 = vld [vmem:[%s1 + $0xc8] sm:$0xff]
    %v221 = vld [vmem:[%s1 + $0xd0] sm:$0xff]
    %v222 = vld [vmem:[%s1 + $0xd8] sm:$0xff]
    %v223 = vld [vmem:[%s1 + $0xe0] sm:$0xff]
    %v224 = vld [vmem:[%s1 + $0xe8] sm:$0xff]
    %v225 = vld [vmem:[%s1 + $0xf0] sm:$0xff]
    %v226 = vld [vmem:[%s1 + $0xf8] sm:$0xff]
    %v227 = vld [vmem:[%s1 + $0x100] sm:$0xff]
    %v228 = vld [vmem:[%s1 + $0x108] sm:$0xff]
    %v229 = vld [vmem:[%s1 + $0x110] sm:$0xff]
    %v230 = vld [vmem:[%s1 + $0x118] sm:$0xff]
    %v231 = vld [vmem:[%s1 + $0x120] sm:$0xff]
    %v232 = vld [vmem:[%s1 + $0x128] sm:$0xff]
    %v233 = vld [vmem:[%s1 + $0x130] sm:$0xff]
    %v234 = vld [vmem:[%s1 + $0x138] sm:$0xff]
    %v235 = vld [vmem:[%s1 + $0x140] sm:$0xff]
    %v236 = vld [vmem:[%s1 + $0x148] sm:$0xff]
    %v237 = vld [vmem:[%s1 + $0x150] sm:$0xff]
    %v238 = vld [vmem:[%s1 + $0x158] sm:$0xff]
    %v239 = vld [vmem:[%s1 + $0x160] sm:$0xff]
    %v240 = vld [vmem:[%s1 + $0x168] sm:$0xff]
    %v241 = vld [vmem:[%s1 + $0x170] sm:$0xff]
    %v242 = vld [vmem:[%s1 + $0x178] sm:$0xff]
    %v243 = vld [vmem:[%s1 + $0x180] sm:$0xff]
    %v244 = vld [vmem:[%s1 + $0x188] sm:$0xff]
    %v245 = vld [vmem:[%s1 + $0x190] sm:$0xff]
    %v246 = vld [vmem:[%s1 + $0x198] sm:$0xff]
    %v247 = vld [vmem:[%s1 + $0x1a0] sm:$0xff]
    %v248 = vld [vmem:[%s1 + $0x1a8] sm:$0xff]
    %v249 = vld [vmem:[%s1 + $0x1b0] sm:$0xff]
    %v250 = vld [vmem:[%s1 + $0x1b8] sm:$0xff]
    %v251 = vld [vmem:[%s1 + $0x1c0] sm:$0xff]
    %v252 = vld [vmem:[%s1 + $0x1c8] sm:$0xff]
    %v253 = vld [vmem:[%s1 + $0x1d0] sm:$0xff]
    %v254 = vld [vmem:[%s1 + $0x1d8] sm:$0xff]
    %v255 = vld [vmem:[%s1 + $0x1e0] sm:$0xff]
    %v256 = vld [vmem:[%s1 + $0x1e8] sm:$0xff]
    %v257 = vld [vmem:[%s1 + $0x1f0] sm:$0xff]
    %v258 = vld [vmem:[%s1 + $0x1f8] sm:$0xff]
    %v259 = vld [vmem:[%s1 + $0x200] sm:$0xff]
    %v260 = vld [vmem:[%s1 + $0x208] sm:$0xff]
    %v261 = vld [vmem:[%s1 + $0x210] sm:$0xff]
    %v262 = vld [vmem:[%s1 + $0x218] sm:$0xff]
    %v263 = vld [vmem:[%s1 + $0x220] sm:$0xff]
    %v264 = vld [vmem:[%s1 + $0x228] sm:$0xff]
    %v265 = vld [vmem:[%s1 + $0x230] sm:$0xff]
    %v266 = vld [vmem:[%s1 + $0x238] sm:$0xff]
    %v267 = vld [vmem:[%s1 + $0x240] sm:$0xff]
    %v268 = vld [vmem:[%s1 + $0x248] sm:$0xff]
    %v269 = vld [vmem:[%s1 + $0x250] sm:$0xff]
    %v270 = vld [vmem:[%s1 + $0x258] sm:$0xff]
    %v271 = vld [vmem:[%s1 + $0x260] sm:$0xff]
    %v272 = vld [vmem:[%s1 + $0x268] sm:$0xff]
    %v273 = vld [vmem:[%s1 + $0x270] sm:$0xff]
    %v274 = vld [vmem:[%s1 + $0x278] sm:$0xff]
    %v275 = vld [vmem:[%s1 + $0x280] sm:$0xff]
    %v276 = vld [vmem:[%s1 + $0x288] sm:$0xff]
    %v277 = vld [vmem:[%s1 + $0x290] sm:$0xff]
    %v278 = vld [vmem:[%s1 + $0x298] sm:$0xff]
    %v279 = vld [vmem:[%s1 + $0x2a0] sm:$0xff]
    %v280 = vld [vmem:[%s1 + $0x2a8] sm:$0xff]
    %v281 = vld [vmem:[%s1 + $0x2b0] sm:$0xff]
    %v282 = vld [vmem:[%s1 + $0x2b8] sm:$0xff]
    %v283 = vld [vmem:[%s1 + $0x2c0] sm:$0xff]
    %v284 = vld [vmem:[%s1 + $0x2c8] sm:$0xff]
    %v285 = vld [vmem:[%s1 + $0x2d0] sm:$0xff]
    %v286 = vld [vmem:[%s1 + $0x2d8] sm:$0xff]
    %v287 = vld [vmem:[%s1 + $0x2e0] sm:$0xff]
    %v288 = vld [vmem:[%s1 + $0x2e8] sm:$0xff]
    %v289 = vld [vmem:[%s1 + $0x2f0] sm:$0xff]
    %v290 = vld [vmem:[%s1 + $0x2f8] sm:$0xff]
    %v291 = vld [vmem:[%s1 + $0x300] sm:$0xff]
    %v292 = vld [vmem:[%s1 + $0x308] sm:$0xff]
    %v293 = vld [vmem:[%s1 + $0x310] sm:$0xff]
    %v294 = vld [vmem:[%s1 + $0x318] sm:$0xff]
    %v295 = vld [vmem:[%s1 + $0x320] sm:$0xff]
    %v296 = vld [vmem:[%s1 + $0x328] sm:$0xff]
    %v297 = vld [vmem:[%s1 + $0x330] sm:$0xff]
    %v298 = vld [vmem:[%s1 + $0x338] sm:$0xff]
    %v299 = vld [vmem:[%s1 + $0x340] sm:$0xff]
    %v300 = vld [vmem:[%s1 + $0x348] sm:$0xff]
    %v301 = vld [vmem:[%s1 + $0x350] sm:$0xff]
    %v302 = vld [vmem:[%s1 + $0x358] sm:$0xff]
    %v303 = vld [vmem:[%s1 + $0x360] sm:$0xff]
    %v304 = vld [vmem:[%s1 + $0x368] sm:$0xff]
    %v305 = vld [vmem:[%s1 + $0x370] sm:$0xff]
    %v306 = vld [vmem:[%s1 + $0x378] sm:$0xff]
    %v307 = vld [vmem:[%s1 + $0x380] sm:$0xff]
    %v308 = vld [vmem:[%s1 + $0x388] sm:$0xff]
    %v309 = vld [vmem:[%s1 + $0x390] sm:$0xff]
    %v310 = vld [vmem:[%s1 + $0x398] sm:$0xff]
    %v311 = vld [vmem:[%s1 + $0x3a0] sm:$0xff]
    %v312 = vld [vmem:[%s1 + $0x3a8] sm:$0xff]
    %v313 = vld [vmem:[%s1 + $0x3b0] sm:$0xff]
    %v314 = vld [vmem:[%s1 + $0x3b8] sm:$0xff]
    %v315 = vld [vmem:[%s1 + $0x3c0] sm:$0xff]
    %v316 = vld [vmem:[%s1 + $0x3c8] sm:$0xff]
    %v317 = vld [vmem:[%s1 + $0x3d0] sm:$0xff]
    %v318 = vld [vmem:[%s1 + $0x3d8] sm:$0xff]
    %v319 = vld [vmem:[%s1 + $0x3e0] sm:$0xff]
    %v320 = vld [vmem:[%s1 + $0x3e8] sm:$0xff]
    %v321 = vld [vmem:[%s1 + $0x3f0] sm:$0xff]
    %v322 = vld [vmem:[%s1 + $0x3f8] sm:$0xff]
    %v323 = vld [vmem:[%s1 + $0x400] sm:$0xff]
    %v324 = vld [vmem:[%s1 + $0x408] sm:$0xff]
    %v325 = vld [vmem:[%s1 + $0x410] sm:$0xff]
    %v326 = vld [vmem:[%s1 + $0x418] sm:$0xff]
    %v327 = vld [vmem:[%s1 + $0x420] sm:$0xff]
    %v328 = vld [vmem:[%s1 + $0x428] sm:$0xff]
    %v329 = vld [vmem:[%s1 + $0x430] sm:$0xff]
    %v330 = vld [vmem:[%s1 + $0x438] sm:$0xff]
    %v331 = vld [vmem:[%s1 + $0x440] sm:$0xff]
    %v332 = vld [vmem:[%s1 + $0x448] sm:$0xff]
    %v333 = vld [vmem:[%s1 + $0x450] sm:$0xff]
    %v334 = vld [vmem:[%s1 + $0x458] sm:$0xff]
    %v335 = vld [vmem:[%s1 + $0x460] sm:$0xff]
    %v336 = vld [vmem:[%s1 + $0x468] sm:$0xff]
    %v337 = vld [vmem:[%s1 + $0x470] sm:$0xff]
    %v338 = vld [vmem:[%s1 + $0x478] sm:$0xff]
    %v339 = vld [vmem:[%s1 + $0x480] sm:$0xff]
    %v340 = vld [vmem:[%s1 + $0x488] sm:$0xff]
    %v341 = vld [vmem:[%s1 + $0x490] sm:$0xff]
    %v342 = vld [vmem:[%s1 + $0x498] sm:$0xff]
    %v343 = vld [vmem:[%s1 + $0x4a0] sm:$0xff]
    %v344 = vld [vmem:[%s1 + $0x4a8] sm:$0xff]
    %v345 = vld [vmem:[%s1 + $0x4b0] sm:$0xff]
    %v346 = vld [vmem:[%s1 + $0x4b8] sm:$0xff]
    %v347 = vld [vmem:[%s1 + $0x4c0] sm:$0xff]
    %v348 = vld [vmem:[%s1 + $0x4c8] sm:$0xff]
    %v349 = vld [vmem:[%s1 + $0x4d0] sm:$0xff]
    %v350 = vld [vmem:[%s1 + $0x4d8] sm:$0xff]
    %v351 = vld [vmem:[%s1 + $0x4e0] sm:$0xff]
    %v352 = vld [vmem:[%s1 + $0x4e8] sm:$0xff]
    %v353 = vld [vmem:[%s1 + $0x4f0] sm:$0xff]
    %v354 = vld [vmem:[%s1 + $0x4f8] sm:$0xff]
    %v355 = vld [vmem:[%s1 + $0x500] sm:$0xff]
    %v356 = vld [vmem:[%s1 + $0x508] sm:$0xff]
    %v357 = vld [vmem:[%s1 + $0x510] sm:$0xff]
    %v358 = vld [vmem:[%s1 + $0x518] sm:$0xff]
    %v359 = vld [vmem:[%s1 + $0x520] sm:$0xff]
    %v360 = vld [vmem:[%s1 + $0x528] sm:$0xff]
    %v361 = vld [vmem:[%s1 + $0x530] sm:$0xff]
    %v362 = vld [vmem:[%s1 + $0x538] sm:$0xff]
    %v363 = vld [vmem:[%s1 + $0x540] sm:$0xff]
    %v364 = vld [vmem:[%s1 + $0x548] sm:$0xff]
    %v365 = vld [vmem:[%s1 + $0x550] sm:$0xff]
    %v366 = vld [vmem:[%s1 + $0x558] sm:$0xff]
    %v367 = vld [vmem:[%s1 + $0x560] sm:$0xff]
    %v368 = vld [vmem:[%s1 + $0x568] sm:$0xff]
    %v369 = vld [vmem:[%s1 + $0x570] sm:$0xff]
    %v370 = vld [vmem:[%s1 + $0x578] sm:$0xff]
    %v371 = vld [vmem:[%s1 + $0x580] sm:$0xff]
    %v372 = vld [vmem:[%s1 + $0x588] sm:$0xff]
    %v373 = vld [vmem:[%s1 + $0x590] sm:$0xff]
    %v374 = vld [vmem:[%s1 + $0x598] sm:$0xff]
    %v375 = vld [vmem:[%s1 + $0x5a0] sm:$0xff]
    %v376 = vld [vmem:[%s1 + $0x5a8] sm:$0xff]
    %v377 = vld [vmem:[%s1 + $0x5b0] sm:$0xff]
    %v378 = vld [vmem:[%s1 + $0x5b8] sm:$0xff]
    %v379 = vld [vmem:[%s1 + $0x5c0] sm:$0xff]
    %v380 = vld [vmem:[%s1 + $0x5c8] sm:$0xff]
    %v381 = vld [vmem:[%s1 + $0x5d0] sm:$0xff]
    %v382 = vld [vmem:[%s1 + $0x5d8] sm:$0xff]
    %v383 = vld [vmem:[%s1 + $0x5e0] sm:$0xff]
    %v384 = vld [vmem:[%s1 + $0x5e8] sm:$0xff]
    %v385 = vld [vmem:[%s1 + $0x5f0] sm:$0xff]
    %v386 = vld [vmem:[%s1 + $0x5f8] sm:$0xff]
    %v387 = vld [vmem:[%s1 + $0x600] sm:$0xff]
    %v388 = vld [vmem:[%s1 + $0x608] sm:$0xff]
    %v389 = vld [vmem:[%s1 + $0x610] sm:$0xff]
    %v390 = vld [vmem:[%s1 + $0x618] sm:$0xff]
    %v391 = vld [vmem:[%s1 + $0x620] sm:$0xff]
    %v392 = vld [vmem:[%s1 + $0x628] sm:$0xff]
    %v393 = vld [vmem:[%s1 + $0x630] sm:$0xff]
    %v394 = vld [vmem:[%s1 + $0x638] sm:$0xff]
    %v395 = vld [vmem:[%s1 + $0x640] sm:$0xff]
    %v396 = vld [vmem:[%s1 + $0x648] sm:$0xff]
    %v397 = vld [vmem:[%s1 + $0x650] sm:$0xff]
    %v398 = vld [vmem:[%s1 + $0x658] sm:$0xff]
    %v399 = vld [vmem:[%s1 + $0x660] sm:$0xff]
    %v400 = vld [vmem:[%s1 + $0x668] sm:$0xff]
    %v401 = vld [vmem:[%s1 + $0x670] sm:$0xff]
    %v402 = vld [vmem:[%s1 + $0x678] sm:$0xff]
    %v403 = vld [vmem:[%s1 + $0x680] sm:$0xff]
    %v404 = vld [vmem:[%s1 + $0x688] sm:$0xff]
    %v405 = vld [vmem:[%s1 + $0x690] sm:$0xff]
    %v406 = vld [vmem:[%s1 + $0x698] sm:$0xff]
    %v407 = vld [vmem:[%s1 + $0x6a0] sm:$0xff]
    %v408 = vld [vmem:[%s1 + $0x6a8] sm:$0xff]
    %v409 = vld [vmem:[%s1 + $0x6b0] sm:$0xff]
    %v410 = vld [vmem:[%s1 + $0x6b8] sm:$0xff]
    %v411 = vld [vmem:[%s1 + $0x6c0] sm:$0xff]
    %v412 = vld [vmem:[%s1 + $0x6c8] sm:$0xff]
    %v413 = vld [vmem:[%s1 + $0x6d0] sm:$0xff]
    %v414 = vld [vmem:[%s1 + $0x6d8] sm:$0xff]
    %v415 = vld [vmem:[%s1 + $0x6e0] sm:$0xff]
    %v416 = vld [vmem:[%s1 + $0x6e8] sm:$0xff]
    %v417 = vld [vmem:[%s1 + $0x6f0] sm:$0xff]
    %v418 = vld [vmem:[%s1 + $0x6f8] sm:$0xff]
    %v419 = vld [vmem:[%s1 + $0x700] sm:$0xff]
    %v420 = vld [vmem:[%s1 + $0x708] sm:$0xff]
    %v421 = vld [vmem:[%s1 + $0x710] sm:$0xff]
    %v422 = vld [vmem:[%s1 + $0x718] sm:$0xff]
    %v423 = vld [vmem:[%s1 + $0x720] sm:$0xff]
    %v424 = vld [vmem:[%s1 + $0x728] sm:$0xff]
    %v425 = vld [vmem:[%s1 + $0x730] sm:$0xff]
    %v426 = vld [vmem:[%s1 + $0x738] sm:$0xff]
    %v427 = vld [vmem:[%s1 + $0x740] sm:$0xff]
    %v428 = vld [vmem:[%s1 + $0x748] sm:$0xff]
    %v429 = vld [vmem:[%s1 + $0x750] sm:$0xff]
    %v430 = vld [vmem:[%s1 + $0x758] sm:$0xff]
    %v431 = vld [vmem:[%s1 + $0x760] sm:$0xff]
    %v432 = vld [vmem:[%s1 + $0x768] sm:$0xff]
    %v433 = vld [vmem:[%s1 + $0x770] sm:$0xff]
    %v434 = vld [vmem:[%s1 + $0x778] sm:$0xff]
    %v435 = vld [vmem:[%s1 + $0x780] sm:$0xff]
    %v436 = vld [vmem:[%s1 + $0x788] sm:$0xff]
    %v437 = vld [vmem:[%s1 + $0x790] sm:$0xff]
    %v438 = vld [vmem:[%s1 + $0x798] sm:$0xff]
    %v439 = vld [vmem:[%s1 + $0x7a0] sm:$0xff]
    %v440 = vld [vmem:[%s1 + $0x7a8] sm:$0xff]
    %v441 = vld [vmem:[%s1 + $0x7b0] sm:$0xff]
    %v442 = vld [vmem:[%s1 + $0x7b8] sm:$0xff]
    %v443 = vld [vmem:[%s1 + $0x7c0] sm:$0xff]
    %v444 = vld [vmem:[%s1 + $0x7c8] sm:$0xff]
    %v445 = vld [vmem:[%s1 + $0x7d0] sm:$0xff]
    %v446 = vld [vmem:[%s1 + $0x7d8] sm:$0xff]
    %v447 = vld [vmem:[%s1 + $0x7e0] sm:$0xff]
    %v448 = vld [vmem:[%s1 + $0x7e8] sm:$0xff]
    %v449 = vld [vmem:[%s1 + $0x7f0] sm:$0xff]
    %v450 = vld [vmem:[%s1 + $0x7f8] sm:$0xff]
    %v451 = vld [vmem:[%s1 + $0x800] sm:$0xff]
    %v452 = vld [vmem:[%s1 + $0x808] sm:$0xff]
    %v453 = vld [vmem:[%s1 + $0x810] sm:$0xff]
    %v454 = vld [vmem:[%s1 + $0x818] sm:$0xff]
    %v455 = vld [vmem:[%s1 + $0x820] sm:$0xff]
    %v456 = vld [vmem:[%s1 + $0x828] sm:$0xff]
    %v457 = vld [vmem:[%s1 + $0x830] sm:$0xff]
    %v458 = vld [vmem:[%s1 + $0x838] sm:$0xff]
    %v459 = vld [vmem:[%s1 + $0x840] sm:$0xff]
    %v460 = vld [vmem:[%s1 + $0x848] sm:$0xff]
    %v461 = vld [vmem:[%s1 + $0x850] sm:$0xff]
    %v462 = vld [vmem:[%s1 + $0x858] sm:$0xff]
    %v463 = vld [vmem:[%s1 + $0x860] sm:$0xff]
    %v464 = vld [vmem:[%s1 + $0x868] sm:$0xff]
    %v465 = vld [vmem:[%s1 + $0x870] sm:$0xff]
    %v466 = vld [vmem:[%s1 + $0x878] sm:$0xff]
    %v467 = vld [vmem:[%s1 + $0x880] sm:$0xff]
    %v468 = vld [vmem:[%s1 + $0x888] sm:$0xff]
    %v469 = vld [vmem:[%s1 + $0x890] sm:$0xff]
    %v470 = vld [vmem:[%s1 + $0x898] sm:$0xff]
    %v471 = vld [vmem:[%s1 + $0x8a0] sm:$0xff]
    %v472 = vld [vmem:[%s1 + $0x8a8] sm:$0xff]
    %v473 = vld [vmem:[%s1 + $0x8b0] sm:$0xff]
    %v474 = vld [vmem:[%s1 + $0x8b8] sm:$0xff]
    %v475 = vld [vmem:[%s1 + $0x8c0] sm:$0xff]
    %v476 = vld [vmem:[%s1 + $0x8c8] sm:$0xff]
    %v477 = vld [vmem:[%s1 + $0x8d0] sm:$0xff]
    %v478 = vld [vmem:[%s1 + $0x8d8] sm:$0xff]
    %v479 = vld [vmem:[%s1 + $0x8e0] sm:$0xff]
    %v480 = vld [vmem:[%s1 + $0x8e8] sm:$0xff]
    %v481 = vld [vmem:[%s1 + $0x8f0] sm:$0xff]
    %v482 = vld [vmem:[%s1 + $0x8f8] sm:$0xff]
    %v483 = vld [vmem:[%s1 + $0x900] sm:$0xff]
    %v484 = vld [vmem:[%s1 + $0x908] sm:$0xff]
    %v485 = vld [vmem:[%s1 + $0x910] sm:$0xff]
    %v486 = vld [vmem:[%s1 + $0x918] sm:$0xff]
    %v487 = vld [vmem:[%s1 + $0x920] sm:$0xff]
    %v488 = vld [vmem:[%s1 + $0x928] sm:$0xff]
    %v489 = vld [vmem:[%s1 + $0x930] sm:$0xff]
    %v490 = vld [vmem:[%s1 + $0x938] sm:$0xff]
    %v491 = vld [vmem:[%s1 + $0x940] sm:$0xff]
    %v492 = vld [vmem:[%s1 + $0x948] sm:$0xff]
    %v493 = vld [vmem:[%s1 + $0x950] sm:$0xff]
    %v494 = vld [vmem:[%s1 + $0x958] sm:$0xff]
    %v495 = vld [vmem:[%s1 + $0x960] sm:$0xff]
    %v496 = vld [vmem:[%s1 + $0x968] sm:$0xff]
    %v497 = vld [vmem:[%s1 + $0x970] sm:$0xff]
    %v498 = vld [vmem:[%s1 + $0x978] sm:$0xff]
    %v499 = vld [vmem:[%s1 + $0x980] sm:$0xff]
    %v500 = vld [vmem:[%s1 + $0x988] sm:$0xff]
    %v501 = vld [vmem:[%s1 + $0x990] sm:$0xff]
    %v502 = vld [vmem:[%s1 + $0x998] sm:$0xff]
    %v503 = vld [vmem:[%s1 + $0x9a0] sm:$0xff]
    %v504 = vld [vmem:[%s1 + $0x9a8] sm:$0xff]
    %v505 = vld [vmem:[%s1 + $0x9b0] sm:$0xff]
    %v506 = vld [vmem:[%s1 + $0x9b8] sm:$0xff]
    %v507 = vld [vmem:[%s1 + $0x9c0] sm:$0xff]
    %v508 = vld [vmem:[%s1 + $0x9c8] sm:$0xff]
    %v509 = vld [vmem:[%s1 + $0x9d0] sm:$0xff]
    %v510 = vld [vmem:[%s1 + $0x9d8] sm:$0xff]
    %v511 = vld [vmem:[%s1 + $0x9e0] sm:$0xff]
    %v512 = vld [vmem:[%s1 + $0x9e8] sm:$0xff]
    %v513 = vld [vmem:[%s1 + $0x9f0] sm:$0xff]
    %v514 = vld [vmem:[%s1 + $0x9f8] sm:$0xff]
    %v515 = vld [vmem:[%s1 + $0xa00] sm:$0xff]
    %v516 = vld [vmem:[%s1 + $0xa08] sm:$0xff]
    %v517 = vld [vmem:[%s1 + $0xa10] sm:$0xff]
    %v518 = vld [vmem:[%s1 + $0xa18] sm:$0xff]
    %v519 = vld [vmem:[%s1 + $0xa20] sm:$0xff]
    %v520 = vld [vmem:[%s1 + $0xa28] sm:$0xff]
    %v521 = vld [vmem:[%s1 + $0xa30] sm:$0xff]
    %v522 = vld [vmem:[%s1 + $0xa38] sm:$0xff]
    %v523 = vld [vmem:[%s1 + $0xa40] sm:$0xff]
    %v524 = vld [vmem:[%s1 + $0xa48] sm:$0xff]
    %v525 = vld [vmem:[%s1 + $0xa50] sm:$0xff]
    %v526 = vld [vmem:[%s1 + $0xa58] sm:$0xff]
    %v527 = vld [vmem:[%s1 + $0xa60] sm:$0xff]
    %v528 = vld [vmem:[%s1 + $0xa68] sm:$0xff]
    %v529 = vld [vmem:[%s1 + $0xa70] sm:$0xff]
    %v530 = vld [vmem:[%s1 + $0xa78] sm:$0xff]
    %v531 = vld [vmem:[%s1 + $0xa80] sm:$0xff]
    %v532 = vld [vmem:[%s1 + $0xa88] sm:$0xff]
    %v533 = vld [vmem:[%s1 + $0xa90] sm:$0xff]
    %v534 = vld [vmem:[%s1 + $0xa98] sm:$0xff]
    %v535 = vld [vmem:[%s1 + $0xaa0] sm:$0xff]
    %v536 = vld [vmem:[%s1 + $0xaa8] sm:$0xff]
    %v537 = vld [vmem:[%s1 + $0xab0] sm:$0xff]
    %v538 = vld [vmem:[%s1 + $0xab8] sm:$0xff]
    %v539 = vld [vmem:[%s1 + $0xac0] sm:$0xff]
    %v540 = vld [vmem:[%s1 + $0xac8] sm:$0xff]
    %v541 = vld [vmem:[%s1 + $0xad0] sm:$0xff]
    %v542 = vld [vmem:[%s1 + $0xad8] sm:$0xff]
    %v543 = vld [vmem:[%s1 + $0xae0] sm:$0xff]
    %v544 = vld [vmem:[%s1 + $0xae8] sm:$0xff]
    %v545 = vld [vmem:[%s1 + $0xaf0] sm:$0xff]
    %v546 = vld [vmem:[%s1 + $0xaf8] sm:$0xff]
    %v547 = vld [vmem:[%s1 + $0xb00] sm:$0xff]
    %v548 = vld [vmem:[%s1 + $0xb08] sm:$0xff]
    %v549 = vld [vmem:[%s1 + $0xb10] sm:$0xff]
    %v550 = vld [vmem:[%s1 + $0xb18] sm:$0xff]
    %v551 = vld [vmem:[%s1 + $0xb20] sm:$0xff]
    %v552 = vld [vmem:[%s1 + $0xb28] sm:$0xff]
    %v553 = vld [vmem:[%s1 + $0xb30] sm:$0xff]
    %v554 = vld [vmem:[%s1 + $0xb38] sm:$0xff]
    %v555 = vld [vmem:[%s1 + $0xb40] sm:$0xff]
    %v556 = vld [vmem:[%s1 + $0xb48] sm:$0xff]
    %v557 = vld [vmem:[%s1 + $0xb50] sm:$0xff]
    %v558 = vld [vmem:[%s1 + $0xb58] sm:$0xff]
    %v559 = vld [vmem:[%s1 + $0xb60] sm:$0xff]
    %v560 = vld [vmem:[%s1 + $0xb68] sm:$0xff]
    %v561 = vld [vmem:[%s1 + $0xb70] sm:$0xff]
    %v562 = vld [vmem:[%s1 + $0xb78] sm:$0xff]
    %v563 = vld [vmem:[%s1 + $0xb80] sm:$0xff]
    %v564 = vld [vmem:[%s1 + $0xb88] sm:$0xff]
    %v565 = vld [vmem:[%s1 + $0xb90] sm:$0xff]
    %v566 = vld [vmem:[%s1 + $0xb98] sm:$0xff]
    %v567 = vld [vmem:[%s1 + $0xba0] sm:$0xff]
    %v568 = vld [vmem:[%s1 + $0xba8] sm:$0xff]
    %v569 = vld [vmem:[%s1 + $0xbb0] sm:$0xff]
    %v570 = vld [vmem:[%s1 + $0xbb8] sm:$0xff]
    %v571 = vld [vmem:[%s1 + $0xbc0] sm:$0xff]
    %v572 = vld [vmem:[%s1 + $0xbc8] sm:$0xff]
    %v573 = vld [vmem:[%s1 + $0xbd0] sm:$0xff]
    %v574 = vld [vmem:[%s1 + $0xbd8] sm:$0xff]
    %v575 = vld [vmem:[%s1 + $0xbe0] sm:$0xff]
    %v576 = vld [vmem:[%s1 + $0xbe8] sm:$0xff]
    %v577 = vld [vmem:[%s1 + $0xbf0] sm:$0xff]
    %v578 = vld [vmem:[%s1 + $0xbf8] sm:$0xff]
    %v579 = vld [vmem:[%s1 + $0xc00] sm:$0xff]
    %v580 = vld [vmem:[%s1 + $0xc08] sm:$0xff]
    %v581 = vld [vmem:[%s1 + $0xc10] sm:$0xff]
    %v582 = vld [vmem:[%s1 + $0xc18] sm:$0xff]
    %v583 = vld [vmem:[%s1 + $0xc20] sm:$0xff]
    %v584 = vld [vmem:[%s1 + $0xc28] sm:$0xff]
    %v585 = vld [vmem:[%s1 + $0xc30] sm:$0xff]
    %v586 = vld [vmem:[%s1 + $0xc38] sm:$0xff]
    %v587 = vld [vmem:[%s1 + $0xc40] sm:$0xff]
    %v588 = vld [vmem:[%s1 + $0xc48] sm:$0xff]
    %v589 = vld [vmem:[%s1 + $0xc50] sm:$0xff]
    %v590 = vld [vmem:[%s1 + $0xc58] sm:$0xff]
    %v591 = vld [vmem:[%s1 + $0xc60] sm:$0xff]
    %v592 = vld [vmem:[%s1 + $0xc68] sm:$0xff]
    %v593 = vld [vmem:[%s1 + $0xc70] sm:$0xff]
    %v594 = vld [vmem:[%s1 + $0xc78] sm:$0xff]
    %v595 = vld [vmem:[%s1 + $0xc80] sm:$0xff]
    %v596 = vld [vmem:[%s1 + $0xc88] sm:$0xff]
    %v597 = vld [vmem:[%s1 + $0xc90] sm:$0xff]
    %v598 = vld [vmem:[%s1 + $0xc98] sm:$0xff]
    %v599 = vld [vmem:[%s1 + $0xca0] sm:$0xff]
    %v600 = vld [vmem:[%s1 + $0xca8] sm:$0xff]
    %v601 = vld [vmem:[%s1 + $0xcb0] sm:$0xff]
    %v602 = vld [vmem:[%s1 + $0xcb8] sm:$0xff]
    %v603 = vld [vmem:[%s1 + $0xcc0] sm:$0xff]
    %v604 = vld [vmem:[%s1 + $0xcc8] sm:$0xff]
    %v605 = vld [vmem:[%s1 + $0xcd0] sm:$0xff]
    %v606 = vld [vmem:[%s1 + $0xcd8] sm:$0xff]
    %v607 = vld [vmem:[%s1 + $0xce0] sm:$0xff]
    %v608 = vld [vmem:[%s1 + $0xce8] sm:$0xff]
    %v609 = vld [vmem:[%s1 + $0xcf0] sm:$0xff]
    %v610 = vld [vmem:[%s1 + $0xcf8] sm:$0xff]
    %v611 = vld [vmem:[%s1 + $0xd00] sm:$0xff]
    %v612 = vld [vmem:[%s1 + $0xd08] sm:$0xff]
    %v613 = vld [vmem:[%s1 + $0xd10] sm:$0xff]
    %v614 = vld [vmem:[%s1 + $0xd18] sm:$0xff]
    %v615 = vld [vmem:[%s1 + $0xd20] sm:$0xff]
    %v616 = vld [vmem:[%s1 + $0xd28] sm:$0xff]
    %v617 = vld [vmem:[%s1 + $0xd30] sm:$0xff]
    %v618 = vld [vmem:[%s1 + $0xd38] sm:$0xff]
    %v619 = vld [vmem:[%s1 + $0xd40] sm:$0xff]
    %v620 = vld [vmem:[%s1 + $0xd48] sm:$0xff]
    %v621 = vld [vmem:[%s1 + $0xd50] sm:$0xff]
    %v622 = vld [vmem:[%s1 + $0xd58] sm:$0xff]
    %v623 = vld [vmem:[%s1 + $0xd60] sm:$0xff]
    %v624 = vld [vmem:[%s1 + $0xd68] sm:$0xff]
    %v625 = vld [vmem:[%s1 + $0xd70] sm:$0xff]
    %v626 = vld [vmem:[%s1 + $0xd78] sm:$0xff]
    %v627 = vld [vmem:[%s1 + $0xd80] sm:$0xff]
    %v628 = vld [vmem:[%s1 + $0xd88] sm:$0xff]
    %v629 = vld [vmem:[%s1 + $0xd90] sm:$0xff]
    %v630 = vld [vmem:[%s1 + $0xd98] sm:$0xff]
    %v631 = vld [vmem:[%s1 + $0xda0] sm:$0xff]
    %v632 = vld [vmem:[%s1 + $0xda8] sm:$0xff]
    %v633 = vld [vmem:[%s1 + $0xdb0] sm:$0xff]
    %v634 = vld [vmem:[%s1 + $0xdb8] sm:$0xff]
    %v635 = vld [vmem:[%s1 + $0xdc0] sm:$0xff]
    %v636 = vld [vmem:[%s1 + $0xdc8] sm:$0xff]
    %v637 = vld [vmem:[%s1 + $0xdd0] sm:$0xff]
    %v638 = vld [vmem:[%s1 + $0xdd8] sm:$0xff]
    %v639 = vld [vmem:[%s1 + $0xde0] sm:$0xff]
    %v640 = vld [vmem:[%s1 + $0xde8] sm:$0xff]
    %v641 = vld [vmem:[%s1 + $0xdf0] sm:$0xff]
    %v642 = vld [vmem:[%s1 + $0xdf8] sm:$0xff]
    %v643 = vld [vmem:[%s1 + $0xe00] sm:$0xff]
    %v644 = vld [vmem:[%s1 + $0xe08] sm:$0xff]
    %v645 = vld [vmem:[%s1 + $0xe10] sm:$0xff]
    %v646 = vld [vmem:[%s1 + $0xe18] sm:$0xff]
    %v647 = vld [vmem:[%s1 + $0xe20] sm:$0xff]
    %v648 = vld [vmem:[%s1 + $0xe28] sm:$0xff]
    %v649 = vld [vmem:[%s1 + $0xe30] sm:$0xff]
    %v650 = vld [vmem:[%s1 + $0xe38] sm:$0xff]
    %v651 = vld [vmem:[%s1 + $0xe40] sm:$0xff]
    %v652 = vld [vmem:[%s1 + $0xe48] sm:$0xff]
    %v653 = vld [vmem:[%s1 + $0xe50] sm:$0xff]
    %v654 = vld [vmem:[%s1 + $0xe58] sm:$0xff]
    %v655 = vld [vmem:[%s1 + $0xe60] sm:$0xff]
    %v656 = vld [vmem:[%s1 + $0xe68] sm:$0xff]
    %v657 = vld [vmem:[%s1 + $0xe70] sm:$0xff]
    %v658 = vld [vmem:[%s1 + $0xe78] sm:$0xff]
    %v659 = vld [vmem:[%s1 + $0xe80] sm:$0xff]
    %v660 = vld [vmem:[%s1 + $0xe88] sm:$0xff]
    %v661 = vld [vmem:[%s1 + $0xe90] sm:$0xff]
    %v662 = vld [vmem:[%s1 + $0xe98] sm:$0xff]
    %v663 = vld [vmem:[%s1 + $0xea0] sm:$0xff]
    %v664 = vld [vmem:[%s1 + $0xea8] sm:$0xff]
    %v665 = vld [vmem:[%s1 + $0xeb0] sm:$0xff]
    %v666 = vld [vmem:[%s1 + $0xeb8] sm:$0xff]
    %v667 = vld [vmem:[%s1 + $0xec0] sm:$0xff]
    %v668 = vld [vmem:[%s1 + $0xec8] sm:$0xff]
    %v669 = vld [vmem:[%s1 + $0xed0] sm:$0xff]
    %v670 = vld [vmem:[%s1 + $0xed8] sm:$0xff]
    %v671 = vld [vmem:[%s1 + $0xee0] sm:$0xff]
    %v672 = vld [vmem:[%s1 + $0xee8] sm:$0xff]
    %v673 = vld [vmem:[%s1 + $0xef0] sm:$0xff]
    %v674 = vld [vmem:[%s1 + $0xef8] sm:$0xff]
    %v675 = vld [vmem:[%s1 + $0xf00] sm:$0xff]
    %v676 = vld [vmem:[%s1 + $0xf08] sm:$0xff]
    %v677 = vld [vmem:[%s1 + $0xf10] sm:$0xff]
    %v678 = vld [vmem:[%s1 + $0xf18] sm:$0xff]
    %v679 = vld [vmem:[%s1 + $0xf20] sm:$0xff]
    %v680 = vld [vmem:[%s1 + $0xf28] sm:$0xff]
    %v681 = vld [vmem:[%s1 + $0xf30] sm:$0xff]
    %v682 = vld [vmem:[%s1 + $0xf38] sm:$0xff]
    %v683 = vld [vmem:[%s1 + $0xf40] sm:$0xff]
    %v684 = vld [vmem:[%s1 + $0xf48] sm:$0xff]
    %v685 = vld [vmem:[%s1 + $0xf50] sm:$0xff]
    %v686 = vld [vmem:[%s1 + $0xf58] sm:$0xff]
    %v687 = vld [vmem:[%s1 + $0xf60] sm:$0xff]
    %v688 = vld [vmem:[%s1 + $0xf68] sm:$0xff]
    %v689 = vld [vmem:[%s1 + $0xf70] sm:$0xff]
    %v690 = vld [vmem:[%s1 + $0xf78] sm:$0xff]
    %v691 = vld [vmem:[%s1 + $0xf80] sm:$0xff]
    %v692 = vld [vmem:[%s1 + $0xf88] sm:$0xff]
    %v693 = vld [vmem:[%s1 + $0xf90] sm:$0xff]
    %v694 = vld [vmem:[%s1 + $0xf98] sm:$0xff]
    %v695 = vld [vmem:[%s1 + $0xfa0] sm:$0xff]
    %v696 = vld [vmem:[%s1 + $0xfa8] sm:$0xff]
    %v697 = vld [vmem:[%s1 + $0xfb0] sm:$0xff]
    %v698 = vld [vmem:[%s1 + $0xfb8] sm:$0xff]
    %v699 = vld [vmem:[%s1 + $0xfc0] sm:$0xff]
    %v700 = vld [vmem:[%s1 + $0xfc8] sm:$0xff]
    %v701 = vld [vmem:[%s1 + $0xfd0] sm:$0xff]
    %v702 = vld [vmem:[%s1 + $0xfd8] sm:$0xff]
    %v703 = vld [vmem:[%s1 + $0xfe0] sm:$0xff]
    %v704 = vld [vmem:[%s1 + $0xfe8] sm:$0xff]
    %v705 = vld [vmem:[%s1 + $0xff0] sm:$0xff]
    %v706 = vld [vmem:[%s1 + $0xff8] sm:$0xff]
    %v707 = vld [vmem:[%s1 + $0x1000] sm:$0xff]
    %v708 = vld [vmem:[%s1 + $0x1008] sm:$0xff]
    %v709 = vld [vmem:[%s1 + $0x1010] sm:$0xff]
    %v710 = vld [vmem:[%s1 + $0x1018] sm:$0xff]
    %v711 = vld [vmem:[%s1 + $0x1020] sm:$0xff]
    %v712 = vld [vmem:[%s1 + $0x1028] sm:$0xff]
    %v713 = vld [vmem:[%s1 + $0x1030] sm:$0xff]
    %v714 = vld [vmem:[%s1 + $0x1038] sm:$0xff]
    %v715 = vld [vmem:[%s1 + $0x1040] sm:$0xff]
    %v716 = vld [vmem:[%s1 + $0x1048] sm:$0xff]
    %v717 = vld [vmem:[%s1 + $0x1050] sm:$0xff]
    %v718 = vld [vmem:[%s1 + $0x1058] sm:$0xff]
    %v719 = vld [vmem:[%s1 + $0x1060] sm:$0xff]
    %v720 = vld [vmem:[%s1 + $0x1068] sm:$0xff]
    %v721 = vld [vmem:[%s1 + $0x1070] sm:$0xff]
    %v722 = vld [vmem:[%s1 + $0x1078] sm:$0xff]
    %v723 = vld [vmem:[%s1 + $0x1080] sm:$0xff]
    %v724 = vld [vmem:[%s1 + $0x1088] sm:$0xff]
    %v725 = vld [vmem:[%s1 + $0x1090] sm:$0xff]
    %v726 = vld [vmem:[%s1 + $0x1098] sm:$0xff]
    %v727 = vld [vmem:[%s1 + $0x10a0] sm:$0xff]
    %v728 = vld [vmem:[%s1 + $0x10a8] sm:$0xff]
    %v729 = vld [vmem:[%s1 + $0x10b0] sm:$0xff]
    %v730 = vld [vmem:[%s1 + $0x10b8] sm:$0xff]
    %v731 = vld [vmem:[%s1 + $0x10c0] sm:$0xff]
    %v732 = vld [vmem:[%s1 + $0x10c8] sm:$0xff]
    %v733 = vld [vmem:[%s1 + $0x10d0] sm:$0xff]
    %v734 = vld [vmem:[%s1 + $0x10d8] sm:$0xff]
    %v735 = vld [vmem:[%s1 + $0x10e0] sm:$0xff]
    %v736 = vld [vmem:[%s1 + $0x10e8] sm:$0xff]
    %v737 = vld [vmem:[%s1 + $0x10f0] sm:$0xff]
    %v738 = vld [vmem:[%s1 + $0x10f8] sm:$0xff]
    %v739 = vld [vmem:[%s1 + $0x1100] sm:$0xff]
    %v740 = vld [vmem:[%s1 + $0x1108] sm:$0xff]
    %v741 = vld [vmem:[%s1 + $0x1110] sm:$0xff]
    %v742 = vld [vmem:[%s1 + $0x1118] sm:$0xff]
    %v743 = vld [vmem:[%s1 + $0x1120] sm:$0xff]
    %v744 = vld [vmem:[%s1 + $0x1128] sm:$0xff]
    %v745 = vld [vmem:[%s1 + $0x1130] sm:$0xff]
    %v746 = vld [vmem:[%s1 + $0x1138] sm:$0xff]
    %v747 = vld [vmem:[%s1 + $0x1140] sm:$0xff]
    %v748 = vld [vmem:[%s1 + $0x1148] sm:$0xff]
    %v749 = vld [vmem:[%s1 + $0x1150] sm:$0xff]
    %v750 = vld [vmem:[%s1 + $0x1158] sm:$0xff]
    %v751 = vld [vmem:[%s1 + $0x1160] sm:$0xff]
    %v752 = vld [vmem:[%s1 + $0x1168] sm:$0xff]
    %v753 = vld [vmem:[%s1 + $0x1170] sm:$0xff]
    %v754 = vld [vmem:[%s1 + $0x1178] sm:$0xff]
    %v755 = vld [vmem:[%s1 + $0x1180] sm:$0xff]
    %v756 = vld [vmem:[%s1 + $0x1188] sm:$0xff]
    %v757 = vld [vmem:[%s1 + $0x1190] sm:$0xff]
    %v758 = vld [vmem:[%s1 + $0x1198] sm:$0xff]
    %v759 = vld [vmem:[%s1 + $0x11a0] sm:$0xff]
    %v760 = vld [vmem:[%s1 + $0x11a8] sm:$0xff]
    %v761 = vld [vmem:[%s1 + $0x11b0] sm:$0xff]
    %v762 = vld [vmem:[%s1 + $0x11b8] sm:$0xff]
    %v763 = vld [vmem:[%s1 + $0x11c0] sm:$0xff]
    %v764 = vld [vmem:[%s1 + $0x11c8] sm:$0xff]
    %v765 = vld [vmem:[%s1 + $0x11d0] sm:$0xff]
    %v766 = vld [vmem:[%s1 + $0x11d8] sm:$0xff]
    %v767 = vld [vmem:[%s1 + $0x11e0] sm:$0xff]
    %v768 = vld [vmem:[%s1 + $0x11e8] sm:$0xff]
    %v769 = vld [vmem:[%s1 + $0x11f0] sm:$0xff]
    %v770 = vld [vmem:[%s1 + $0x11f8] sm:$0xff]
    %v771 = vld [vmem:[%s1 + $0x1200] sm:$0xff]
    %v772 = vld [vmem:[%s1 + $0x1208] sm:$0xff]
    %v773 = vld [vmem:[%s1 + $0x1210] sm:$0xff]
    %v774 = vld [vmem:[%s1 + $0x1218] sm:$0xff]
    %v775 = vld [vmem:[%s1 + $0x1220] sm:$0xff]
    %v776 = vld [vmem:[%s1 + $0x1228] sm:$0xff]
    %v777 = vld [vmem:[%s1 + $0x1230] sm:$0xff]
    %v778 = vld [vmem:[%s1 + $0x1238] sm:$0xff]
    %v779 = vld [vmem:[%s1 + $0x1240] sm:$0xff]
    %v780 = vld [vmem:[%s1 + $0x1248] sm:$0xff]
    %v781 = vld [vmem:[%s1 + $0x1250] sm:$0xff]
    %v782 = vld [vmem:[%s1 + $0x1258] sm:$0xff]
    %v783 = vld [vmem:[%s1 + $0x1260] sm:$0xff]
    %v784 = vld [vmem:[%s1 + $0x1268] sm:$0xff]
    %v785 = vld [vmem:[%s1 + $0x1270] sm:$0xff]
    %v786 = vld [vmem:[%s1 + $0x1278] sm:$0xff]
    %v787 = vld [vmem:[%s1 + $0x1280] sm:$0xff]
    %v788 = vld [vmem:[%s1 + $0x1288] sm:$0xff]
    %v789 = vld [vmem:[%s1 + $0x1290] sm:$0xff]
    %v790 = vld [vmem:[%s1 + $0x1298] sm:$0xff]
    %v791 = vld [vmem:[%s1 + $0x12a0] sm:$0xff]
    %v792 = vld [vmem:[%s1 + $0x12a8] sm:$0xff]
    %v793 = vld [vmem:[%s1 + $0x12b0] sm:$0xff]
    %v794 = vld [vmem:[%s1 + $0x12b8] sm:$0xff]
    %v795 = vld [vmem:[%s1 + $0x12c0] sm:$0xff]
    %v796 = vld [vmem:[%s1 + $0x12c8] sm:$0xff]
    %v797 = vld [vmem:[%s1 + $0x12d0] sm:$0xff]
    %v798 = vld [vmem:[%s1 + $0x12d8] sm:$0xff]
    %v799 = vld [vmem:[%s1 + $0x12e0] sm:$0xff]
    %v800 = vld [vmem:[%s1 + $0x12e8] sm:$0xff]
    %v801 = vld [vmem:[%s1 + $0x12f0] sm:$0xff]
    %v802 = vld [vmem:[%s1 + $0x12f8] sm:$0xff]
    %v803 = vld [vmem:[%s1 + $0x1300] sm:$0xff]
    %v804 = vld [vmem:[%s1 + $0x1308] sm:$0xff]
    %v805 = vld [vmem:[%s1 + $0x1310] sm:$0xff]
    %v806 = vld [vmem:[%s1 + $0x1318] sm:$0xff]
    %v807 = vld [vmem:[%s1 + $0x1320] sm:$0xff]
    %v808 = vld [vmem:[%s1 + $0x1328] sm:$0xff]
    %v809 = vld [vmem:[%s1 + $0x1330] sm:$0xff]
    %v810 = vld [vmem:[%s1 + $0x1338] sm:$0xff]
    %v811 = vld [vmem:[%s1 + $0x1340] sm:$0xff]
    %v812 = vld [vmem:[%s1 + $0x1348] sm:$0xff]
    %v813 = vld [vmem:[%s1 + $0x1350] sm:$0xff]
    %v814 = vld [vmem:[%s1 + $0x1358] sm:$0xff]
    %v815 = vld [vmem:[%s1 + $0x1360] sm:$0xff]
    %v816 = vld [vmem:[%s1 + $0x1368] sm:$0xff]
    %v817 = vld [vmem:[%s1 + $0x1370] sm:$0xff]
    %v818 = vld [vmem:[%s1 + $0x1378] sm:$0xff]
    %v819 = vld [vmem:[%s1 + $0x1380] sm:$0xff]
    %v820 = vld [vmem:[%s1 + $0x1388] sm:$0xff]
    %v821 = vld [vmem:[%s1 + $0x1390] sm:$0xff]
    %v822 = vld [vmem:[%s1 + $0x1398] sm:$0xff]
    %v823 = vld [vmem:[%s1 + $0x13a0] sm:$0xff]
    %v824 = vld [vmem:[%s1 + $0x13a8] sm:$0xff]
    %v825 = vld [vmem:[%s1 + $0x13b0] sm:$0xff]
    %v826 = vld [vmem:[%s1 + $0x13b8] sm:$0xff]
    %v827 = vld [vmem:[%s1 + $0x13c0] sm:$0xff]
    %v828 = vld [vmem:[%s1 + $0x13c8] sm:$0xff]
    %v829 = vld [vmem:[%s1 + $0x13d0] sm:$0xff]
    %v830 = vld [vmem:[%s1 + $0x13d8] sm:$0xff]
    %v831 = vld [vmem:[%s1 + $0x13e0] sm:$0xff]
    %v832 = vld [vmem:[%s1 + $0x13e8] sm:$0xff]
    %v833 = vld [vmem:[%s1 + $0x13f0] sm:$0xff]
    %v834 = vld [vmem:[%s1 + $0x13f8] sm:$0xff]
    %v835 = vld [vmem:[%s1 + $0x1400] sm:$0xff]
    %v836 = vld [vmem:[%s1 + $0x1408] sm:$0xff]
    %v837 = vld [vmem:[%s1 + $0x1410] sm:$0xff]
    %v838 = vld [vmem:[%s1 + $0x1418] sm:$0xff]
    %v839 = vld [vmem:[%s1 + $0x1420] sm:$0xff]
    %v840 = vld [vmem:[%s1 + $0x1428] sm:$0xff]
    %v841 = vld [vmem:[%s1 + $0x1430] sm:$0xff]
    %v842 = vld [vmem:[%s1 + $0x1438] sm:$0xff]
    %v843 = vld [vmem:[%s1 + $0x1440] sm:$0xff]
    %v844 = vld [vmem:[%s1 + $0x1448] sm:$0xff]
    %v845 = vld [vmem:[%s1 + $0x1450] sm:$0xff]
    %v846 = vld [vmem:[%s1 + $0x1458] sm:$0xff]
    %v847 = vld [vmem:[%s1 + $0x1460] sm:$0xff]
    %v848 = vld [vmem:[%s1 + $0x1468] sm:$0xff]
    %v849 = vld [vmem:[%s1 + $0x1470] sm:$0xff]
    %v850 = vld [vmem:[%s1 + $0x1478] sm:$0xff]
    %v851 = vld [vmem:[%s1 + $0x1480] sm:$0xff]
    %v852 = vld [vmem:[%s1 + $0x1488] sm:$0xff]
    %v853 = vld [vmem:[%s1 + $0x1490] sm:$0xff]
    %v854 = vld [vmem:[%s1 + $0x1498] sm:$0xff]
    %v855 = vld [vmem:[%s1 + $0x14a0] sm:$0xff]
    %v856 = vld [vmem:[%s1 + $0x14a8] sm:$0xff]
    %v857 = vld [vmem:[%s1 + $0x14b0] sm:$0xff]
    %v858 = vld [vmem:[%s1 + $0x14b8] sm:$0xff]
    %v859 = vld [vmem:[%s1 + $0x14c0] sm:$0xff]
    %v860 = vld [vmem:[%s1 + $0x14c8] sm:$0xff]
    %v861 = vld [vmem:[%s1 + $0x14d0] sm:$0xff]
    %v862 = vld [vmem:[%s1 + $0x14d8] sm:$0xff]
    %v863 = vld [vmem:[%s1 + $0x14e0] sm:$0xff]
    %v864 = vld [vmem:[%s1 + $0x14e8] sm:$0xff]
    %v865 = vld [vmem:[%s1 + $0x14f0] sm:$0xff]
    %v866 = vld [vmem:[%s1 + $0x14f8] sm:$0xff]
    %v867 = vld [vmem:[%s1 + $0x1500] sm:$0xff]
    %v868 = vld [vmem:[%s1 + $0x1508] sm:$0xff]
    %v869 = vld [vmem:[%s1 + $0x1510] sm:$0xff]
    %v870 = vld [vmem:[%s1 + $0x1518] sm:$0xff]
    %v871 = vld [vmem:[%s1 + $0x1520] sm:$0xff]
    %v872 = vld [vmem:[%s1 + $0x1528] sm:$0xff]
    %v873 = vld [vmem:[%s1 + $0x1530] sm:$0xff]
    %v874 = vld [vmem:[%s1 + $0x1538] sm:$0xff]
    %v875 = vld [vmem:[%s1 + $0x1540] sm:$0xff]
    %v876 = vld [vmem:[%s1 + $0x1548] sm:$0xff]
    %v877 = vld [vmem:[%s1 + $0x1550] sm:$0xff]
    %v878 = vld [vmem:[%s1 + $0x1558] sm:$0xff]
    %v879 = vld [vmem:[%s1 + $0x1560] sm:$0xff]
    %v880 = vld [vmem:[%s1 + $0x1568] sm:$0xff]
    %v881 = vld [vmem:[%s1 + $0x1570] sm:$0xff]
    %v882 = vld [vmem:[%s1 + $0x1578] sm:$0xff]
    %v883 = vld [vmem:[%s1 + $0x1580] sm:$0xff]
    %v884 = vld [vmem:[%s1 + $0x1588] sm:$0xff]
    %v885 = vld [vmem:[%s1 + $0x1590] sm:$0xff]
    %v886 = vld [vmem:[%s1 + $0x1598] sm:$0xff]
    %v887 = vld [vmem:[%s1 + $0x15a0] sm:$0xff]
    %v888 = vld [vmem:[%s1 + $0x15a8] sm:$0xff]
    %v889 = vld [vmem:[%s1 + $0x15b0] sm:$0xff]
    %v890 = vld [vmem:[%s1 + $0x15b8] sm:$0xff]
    %v891 = vld [vmem:[%s1 + $0x15c0] sm:$0xff]
    %v892 = vld [vmem:[%s1 + $0x15c8] sm:$0xff]
    %v893 = vld [vmem:[%s1 + $0x15d0] sm:$0xff]
    %v894 = vld [vmem:[%s1 + $0x15d8] sm:$0xff]
    %v895 = vld [vmem:[%s1 + $0x15e0] sm:$0xff]
    %v896 = vld [vmem:[%s1 + $0x15e8] sm:$0xff]
    %v897 = vld [vmem:[%s1 + $0x15f0] sm:$0xff]
    %v898 = vld [vmem:[%s1 + $0x15f8] sm:$0xff]
    %v899 = vld [vmem:[%s1 + $0x1600] sm:$0xff]
    %v900 = vld [vmem:[%s1 + $0x1608] sm:$0xff]
    %v901 = vld [vmem:[%s1 + $0x1610] sm:$0xff]
    %v902 = vld [vmem:[%s1 + $0x1618] sm:$0xff]
    %v903 = vld [vmem:[%s1 + $0x1620] sm:$0xff]
    %v904 = vld [vmem:[%s1 + $0x1628] sm:$0xff]
    %v905 = vld [vmem:[%s1 + $0x1630] sm:$0xff]
    %v906 = vld [vmem:[%s1 + $0x1638] sm:$0xff]
    %v907 = vld [vmem:[%s1 + $0x1640] sm:$0xff]
    %v908 = vld [vmem:[%s1 + $0x1648] sm:$0xff]
    %v909 = vld [vmem:[%s1 + $0x1650] sm:$0xff]
    %v910 = vld [vmem:[%s1 + $0x1658] sm:$0xff]
    %v911 = vld [vmem:[%s1 + $0x1660] sm:$0xff]
    %v912 = vld [vmem:[%s1 + $0x1668] sm:$0xff]
    %v913 = vld [vmem:[%s1 + $0x1670] sm:$0xff]
    %v914 = vld [vmem:[%s1 + $0x1678] sm:$0xff]
    %v915 = vld [vmem:[%s1 + $0x1680] sm:$0xff]
    %v916 = vld [vmem:[%s1 + $0x1688] sm:$0xff]
    %v917 = vld [vmem:[%s1 + $0x1690] sm:$0xff]
    %v918 = vld [vmem:[%s1 + $0x1698] sm:$0xff]
    %v919 = vld [vmem:[%s1 + $0x16a0] sm:$0xff]
    %v920 = vld [vmem:[%s1 + $0x16a8] sm:$0xff]
    %v921 = vld [vmem:[%s1 + $0x16b0] sm:$0xff]
    %v922 = vld [vmem:[%s1 + $0x16b8] sm:$0xff]
    %v923 = vld [vmem:[%s1 + $0x16c0] sm:$0xff]
    %v924 = vld [vmem:[%s1 + $0x16c8] sm:$0xff]
    %v925 = vld [vmem:[%s1 + $0x16d0] sm:$0xff]
    %v926 = vld [vmem:[%s1 + $0x16d8] sm:$0xff]
    %v927 = vld [vmem:[%s1 + $0x16e0] sm:$0xff]
    %v928 = vld [vmem:[%s1 + $0x16e8] sm:$0xff]
    %v929 = vld [vmem:[%s1 + $0x16f0] sm:$0xff]
    %v930 = vld [vmem:[%s1 + $0x16f8] sm:$0xff]
    %v931 = vld [vmem:[%s1 + $0x1700] sm:$0xff]
    %v932 = vld [vmem:[%s1 + $0x1708] sm:$0xff]
    %v933 = vld [vmem:[%s1 + $0x1710] sm:$0xff]
    %v934 = vld [vmem:[%s1 + $0x1718] sm:$0xff]
    %v935 = vld [vmem:[%s1 + $0x1720] sm:$0xff]
    %v936 = vld [vmem:[%s1 + $0x1728] sm:$0xff]
    %v937 = vld [vmem:[%s1 + $0x1730] sm:$0xff]
    %v938 = vld [vmem:[%s1 + $0x1738] sm:$0xff]
    %v939 = vld [vmem:[%s1 + $0x1740] sm:$0xff]
    %v940 = vld [vmem:[%s1 + $0x1748] sm:$0xff]
    %v941 = vld [vmem:[%s1 + $0x1750] sm:$0xff]
    %v942 = vld [vmem:[%s1 + $0x1758] sm:$0xff]
    %v943 = vld [vmem:[%s1 + $0x1760] sm:$0xff]
    %v944 = vld [vmem:[%s1 + $0x1768] sm:$0xff]
    %v945 = vld [vmem:[%s1 + $0x1770] sm:$0xff]
    %v946 = vld [vmem:[%s1 + $0x1778] sm:$0xff]
    %v947 = vld [vmem:[%s1 + $0x1780] sm:$0xff]
    %v948 = vld [vmem:[%s1 + $0x1788] sm:$0xff]
    %v949 = vld [vmem:[%s1 + $0x1790] sm:$0xff]
    %v950 = vld [vmem:[%s1 + $0x1798] sm:$0xff]
    %v951 = vld [vmem:[%s1 + $0x17a0] sm:$0xff]
    %v952 = vld [vmem:[%s1 + $0x17a8] sm:$0xff]
    %v953 = vld [vmem:[%s1 + $0x17b0] sm:$0xff]
    %v954 = vld [vmem:[%s1 + $0x17b8] sm:$0xff]
    %v955 = vld [vmem:[%s1 + $0x17c0] sm:$0xff]
    %v956 = vld [vmem:[%s1 + $0x17c8] sm:$0xff]
    %v957 = vld [vmem:[%s1 + $0x17d0] sm:$0xff]
    %v958 = vld [vmem:[%s1 + $0x17d8] sm:$0xff]
    %v959 = vld [vmem:[%s1 + $0x17e0] sm:$0xff]
    %v960 = vld [vmem:[%s1 + $0x17e8] sm:$0xff]
    %v961 = vld [vmem:[%s1 + $0x17f0] sm:$0xff]
    %v962 = vld [vmem:[%s1 + $0x17f8] sm:$0xff]
    %v963 = vld [vmem:[%s1 + $0x1800] sm:$0xff]
    %v964 = vld [vmem:[%s1 + $0x1808] sm:$0xff]
    %v965 = vld [vmem:[%s1 + $0x1810] sm:$0xff]
    %v966 = vld [vmem:[%s1 + $0x1818] sm:$0xff]
    %v967 = vld [vmem:[%s1 + $0x1820] sm:$0xff]
    %v968 = vld [vmem:[%s1 + $0x1828] sm:$0xff]
    %v969 = vld [vmem:[%s1 + $0x1830] sm:$0xff]
    %v970 = vld [vmem:[%s1 + $0x1838] sm:$0xff]
    %v971 = vld [vmem:[%s1 + $0x1840] sm:$0xff]
    %v972 = vld [vmem:[%s1 + $0x1848] sm:$0xff]
    %v973 = vld [vmem:[%s1 + $0x1850] sm:$0xff]
    %v974 = vld [vmem:[%s1 + $0x1858] sm:$0xff]
    %v975 = vld [vmem:[%s1 + $0x1860] sm:$0xff]
    %v976 = vld [vmem:[%s1 + $0x1868] sm:$0xff]
    %v977 = vld [vmem:[%s1 + $0x1870] sm:$0xff]
    %v978 = vld [vmem:[%s1 + $0x1878] sm:$0xff]
    %v979 = vld [vmem:[%s2] sm:$0xf]
    %v981 = vlaneseq
    %v982 = vshrl.u32 %v981, 7
    %v983 = vsub.s32 0, %v982
    %v984 = vrot.slane %v979, %v983
    %v985 = vlaneseq
    %v986 = vshrl.u32 %v985, 7
    %v987 = vsub.s32 1, %v986
    %v988 = vrot.slane %v979, %v987
    %v989 = vlaneseq
    %v990 = vshrl.u32 %v989, 7
    %v991 = vsub.s32 2, %v990
    %v992 = vrot.slane %v979, %v991
    %v993 = vlaneseq
    %v994 = vshrl.u32 %v993, 7
    %v995 = vsub.s32 3, %v994
    %v996 = vrot.slane %v979, %v995
    %v1785 = vunpack.c.l.b16 %v195
    %v1786 = vunpack.c.h.b16 %v195
    %v1787 = vunpack.c.l.b16 %v196
    %v1788 = vunpack.c.h.b16 %v196
    %v1789 = vunpack.c.l.b16 %v197
    %v1790 = vunpack.c.h.b16 %v197
    %v1791 = vunpack.c.l.b16 %v198
    %v1792 = vunpack.c.h.b16 %v198
    %v1793 = vunpack.c.l.b16 %v199
    %v1794 = vunpack.c.h.b16 %v199
    %v1795 = vunpack.c.l.b16 %v200
    %v1796 = vunpack.c.h.b16 %v200
    %v1797 = vunpack.c.l.b16 %v201
    %v1798 = vunpack.c.h.b16 %v201
    %v1799 = vunpack.c.l.b16 %v202
    %v1800 = vunpack.c.h.b16 %v202
    %v1801 = vunpack.c.l.b16 %v203
    %v1802 = vunpack.c.h.b16 %v203
    %v1803 = vunpack.c.l.b16 %v204
    %v1804 = vunpack.c.h.b16 %v204
    %v1805 = vunpack.c.l.b16 %v205
    %v1806 = vunpack.c.h.b16 %v205
    %v1807 = vunpack.c.l.b16 %v206
    %v1808 = vunpack.c.h.b16 %v206
    %v1809 = vunpack.c.l.b16 %v207
    %v1810 = vunpack.c.h.b16 %v207
    %v1811 = vunpack.c.l.b16 %v208
    %v1812 = vunpack.c.h.b16 %v208
    %v1813 = vunpack.c.l.b16 %v209
    %v1814 = vunpack.c.h.b16 %v209
    %v1815 = vunpack.c.l.b16 %v210
    %v1816 = vunpack.c.h.b16 %v210
    %v1817 = vunpack.c.l.b16 %v211
    %v1818 = vunpack.c.h.b16 %v211
    %v1819 = vunpack.c.l.b16 %v212
    %v1820 = vunpack.c.h.b16 %v212
    %v1821 = vunpack.c.l.b16 %v213
    %v1822 = vunpack.c.h.b16 %v213
    %v1823 = vunpack.c.l.b16 %v214
    %v1824 = vunpack.c.h.b16 %v214
    %v1825 = vunpack.c.l.b16 %v215
    %v1826 = vunpack.c.h.b16 %v215
    %v1827 = vunpack.c.l.b16 %v216
    %v1828 = vunpack.c.h.b16 %v216
    %v1829 = vunpack.c.l.b16 %v217
    %v1830 = vunpack.c.h.b16 %v217
    %v1831 = vunpack.c.l.b16 %v218
    %v1832 = vunpack.c.h.b16 %v218
    %v1833 = vunpack.c.l.b16 %v219
    %v1834 = vunpack.c.h.b16 %v219
    %v1835 = vunpack.c.l.b16 %v220
    %v1836 = vunpack.c.h.b16 %v220
    %v1837 = vunpack.c.l.b16 %v221
    %v1838 = vunpack.c.h.b16 %v221
    %v1839 = vunpack.c.l.b16 %v222
    %v1840 = vunpack.c.h.b16 %v222
    %v1841 = vunpack.c.l.b16 %v223
    %v1842 = vunpack.c.h.b16 %v223
    %v1843 = vunpack.c.l.b16 %v224
    %v1844 = vunpack.c.h.b16 %v224
    %v1845 = vunpack.c.l.b16 %v225
    %v1846 = vunpack.c.h.b16 %v225
    %v1847 = vunpack.c.l.b16 %v226
    %v1848 = vunpack.c.h.b16 %v226
    %v1849 = vunpack.c.l.b16 %v227
    %v1850 = vunpack.c.h.b16 %v227
    %v1851 = vunpack.c.l.b16 %v228
    %v1852 = vunpack.c.h.b16 %v228
    %v1853 = vunpack.c.l.b16 %v229
    %v1854 = vunpack.c.h.b16 %v229
    %v1855 = vunpack.c.l.b16 %v230
    %v1856 = vunpack.c.h.b16 %v230
    %v1857 = vunpack.c.l.b16 %v231
    %v1858 = vunpack.c.h.b16 %v231
    %v1859 = vunpack.c.l.b16 %v232
    %v1860 = vunpack.c.h.b16 %v232
    %v1861 = vunpack.c.l.b16 %v233
    %v1862 = vunpack.c.h.b16 %v233
    %v1863 = vunpack.c.l.b16 %v234
    %v1864 = vunpack.c.h.b16 %v234
    %v1865 = vunpack.c.l.b16 %v235
    %v1866 = vunpack.c.h.b16 %v235
    %v1867 = vunpack.c.l.b16 %v236
    %v1868 = vunpack.c.h.b16 %v236
    %v1869 = vunpack.c.l.b16 %v237
    %v1870 = vunpack.c.h.b16 %v237
    %v1871 = vunpack.c.l.b16 %v238
    %v1872 = vunpack.c.h.b16 %v238
    %v1873 = vunpack.c.l.b16 %v239
    %v1874 = vunpack.c.h.b16 %v239
    %v1875 = vunpack.c.l.b16 %v240
    %v1876 = vunpack.c.h.b16 %v240
    %v1877 = vunpack.c.l.b16 %v241
    %v1878 = vunpack.c.h.b16 %v241
    %v1879 = vunpack.c.l.b16 %v242
    %v1880 = vunpack.c.h.b16 %v242
    %v1881 = vunpack.c.l.b16 %v243
    %v1882 = vunpack.c.h.b16 %v243
    %v1883 = vunpack.c.l.b16 %v244
    %v1884 = vunpack.c.h.b16 %v244
    %v1885 = vunpack.c.l.b16 %v245
    %v1886 = vunpack.c.h.b16 %v245
    %v1887 = vunpack.c.l.b16 %v246
    %v1888 = vunpack.c.h.b16 %v246
    %v1889 = vunpack.c.l.b16 %v247
    %v1890 = vunpack.c.h.b16 %v247
    %v1891 = vunpack.c.l.b16 %v248
    %v1892 = vunpack.c.h.b16 %v248
    %v1893 = vunpack.c.l.b16 %v249
    %v1894 = vunpack.c.h.b16 %v249
    %v1895 = vunpack.c.l.b16 %v250
    %v1896 = vunpack.c.h.b16 %v250
    %v1897 = vunpack.c.l.b16 %v251
    %v1898 = vunpack.c.h.b16 %v251
    %v1899 = vunpack.c.l.b16 %v252
    %v1900 = vunpack.c.h.b16 %v252
    %v1901 = vunpack.c.l.b16 %v253
    %v1902 = vunpack.c.h.b16 %v253
    %v1903 = vunpack.c.l.b16 %v254
    %v1904 = vunpack.c.h.b16 %v254
    %v1905 = vunpack.c.l.b16 %v255
    %v1906 = vunpack.c.h.b16 %v255
    %v1907 = vunpack.c.l.b16 %v256
    %v1908 = vunpack.c.h.b16 %v256
    %v1909 = vunpack.c.l.b16 %v257
    %v1910 = vunpack.c.h.b16 %v257
    %v1911 = vunpack.c.l.b16 %v258
    %v1912 = vunpack.c.h.b16 %v258
    %v1913 = vunpack.c.l.b16 %v259
    %v1914 = vunpack.c.h.b16 %v259
    %v1915 = vunpack.c.l.b16 %v260
    %v1916 = vunpack.c.h.b16 %v260
    %v1917 = vunpack.c.l.b16 %v261
    %v1918 = vunpack.c.h.b16 %v261
    %v1919 = vunpack.c.l.b16 %v262
    %v1920 = vunpack.c.h.b16 %v262
    %v1921 = vunpack.c.l.b16 %v263
    %v1922 = vunpack.c.h.b16 %v263
    %v1923 = vunpack.c.l.b16 %v264
    %v1924 = vunpack.c.h.b16 %v264
    %v1925 = vunpack.c.l.b16 %v265
    %v1926 = vunpack.c.h.b16 %v265
    %v1927 = vunpack.c.l.b16 %v266
    %v1928 = vunpack.c.h.b16 %v266
    %v1929 = vunpack.c.l.b16 %v267
    %v1930 = vunpack.c.h.b16 %v267
    %v1931 = vunpack.c.l.b16 %v268
    %v1932 = vunpack.c.h.b16 %v268
    %v1933 = vunpack.c.l.b16 %v269
    %v1934 = vunpack.c.h.b16 %v269
    %v1935 = vunpack.c.l.b16 %v270
    %v1936 = vunpack.c.h.b16 %v270
    %v1937 = vunpack.c.l.b16 %v271
    %v1938 = vunpack.c.h.b16 %v271
    %v1939 = vunpack.c.l.b16 %v272
    %v1940 = vunpack.c.h.b16 %v272
    %v1941 = vunpack.c.l.b16 %v273
    %v1942 = vunpack.c.h.b16 %v273
    %v1943 = vunpack.c.l.b16 %v274
    %v1944 = vunpack.c.h.b16 %v274
    %v1945 = vunpack.c.l.b16 %v275
    %v1946 = vunpack.c.h.b16 %v275
    %v1947 = vunpack.c.l.b16 %v276
    %v1948 = vunpack.c.h.b16 %v276
    %v1949 = vunpack.c.l.b16 %v277
    %v1950 = vunpack.c.h.b16 %v277
    %v1951 = vunpack.c.l.b16 %v278
    %v1952 = vunpack.c.h.b16 %v278
    %v1953 = vunpack.c.l.b16 %v279
    %v1954 = vunpack.c.h.b16 %v279
    %v1955 = vunpack.c.l.b16 %v280
    %v1956 = vunpack.c.h.b16 %v280
    %v1957 = vunpack.c.l.b16 %v281
    %v1958 = vunpack.c.h.b16 %v281
    %v1959 = vunpack.c.l.b16 %v282
    %v1960 = vunpack.c.h.b16 %v282
    %v1961 = vunpack.c.l.b16 %v283
    %v1962 = vunpack.c.h.b16 %v283
    %v1963 = vunpack.c.l.b16 %v284
    %v1964 = vunpack.c.h.b16 %v284
    %v1965 = vunpack.c.l.b16 %v285
    %v1966 = vunpack.c.h.b16 %v285
    %v1967 = vunpack.c.l.b16 %v286
    %v1968 = vunpack.c.h.b16 %v286
    %v1969 = vunpack.c.l.b16 %v287
    %v1970 = vunpack.c.h.b16 %v287
    %v1971 = vunpack.c.l.b16 %v288
    %v1972 = vunpack.c.h.b16 %v288
    %v1973 = vunpack.c.l.b16 %v289
    %v1974 = vunpack.c.h.b16 %v289
    %v1975 = vunpack.c.l.b16 %v290
    %v1976 = vunpack.c.h.b16 %v290
    %v1977 = vunpack.c.l.b16 %v291
    %v1978 = vunpack.c.h.b16 %v291
    %v1979 = vunpack.c.l.b16 %v292
    %v1980 = vunpack.c.h.b16 %v292
    %v1981 = vunpack.c.l.b16 %v293
    %v1982 = vunpack.c.h.b16 %v293
    %v1983 = vunpack.c.l.b16 %v294
    %v1984 = vunpack.c.h.b16 %v294
    %v1985 = vunpack.c.l.b16 %v295
    %v1986 = vunpack.c.h.b16 %v295
    %v1987 = vunpack.c.l.b16 %v296
    %v1988 = vunpack.c.h.b16 %v296
    %v1989 = vunpack.c.l.b16 %v297
    %v1990 = vunpack.c.h.b16 %v297
    %v1991 = vunpack.c.l.b16 %v298
    %v1992 = vunpack.c.h.b16 %v298
    %v1993 = vunpack.c.l.b16 %v299
    %v1994 = vunpack.c.h.b16 %v299
    %v1995 = vunpack.c.l.b16 %v300
    %v1996 = vunpack.c.h.b16 %v300
    %v1997 = vunpack.c.l.b16 %v301
    %v1998 = vunpack.c.h.b16 %v301
    %v1999 = vunpack.c.l.b16 %v302
    %v2000 = vunpack.c.h.b16 %v302
    %v2001 = vunpack.c.l.b16 %v303
    %v2002 = vunpack.c.h.b16 %v303
    %v2003 = vunpack.c.l.b16 %v304
    %v2004 = vunpack.c.h.b16 %v304
    %v2005 = vunpack.c.l.b16 %v305
    %v2006 = vunpack.c.h.b16 %v305
    %v2007 = vunpack.c.l.b16 %v306
    %v2008 = vunpack.c.h.b16 %v306
    %v2009 = vunpack.c.l.b16 %v307
    %v2010 = vunpack.c.h.b16 %v307
    %v2011 = vunpack.c.l.b16 %v308
    %v2012 = vunpack.c.h.b16 %v308
    %v2013 = vunpack.c.l.b16 %v309
    %v2014 = vunpack.c.h.b16 %v309
    %v2015 = vunpack.c.l.b16 %v310
    %v2016 = vunpack.c.h.b16 %v310
    %v2017 = vunpack.c.l.b16 %v311
    %v2018 = vunpack.c.h.b16 %v311
    %v2019 = vunpack.c.l.b16 %v312
    %v2020 = vunpack.c.h.b16 %v312
    %v2021 = vunpack.c.l.b16 %v313
    %v2022 = vunpack.c.h.b16 %v313
    %v2023 = vunpack.c.l.b16 %v314
    %v2024 = vunpack.c.h.b16 %v314
    %v2025 = vunpack.c.l.b16 %v315
    %v2026 = vunpack.c.h.b16 %v315
    %v2027 = vunpack.c.l.b16 %v316
    %v2028 = vunpack.c.h.b16 %v316
    %v2029 = vunpack.c.l.b16 %v317
    %v2030 = vunpack.c.h.b16 %v317
    %v2031 = vunpack.c.l.b16 %v318
    %v2032 = vunpack.c.h.b16 %v318
    %v2033 = vunpack.c.l.b16 %v319
    %v2034 = vunpack.c.h.b16 %v319
    %v2035 = vunpack.c.l.b16 %v320
    %v2036 = vunpack.c.h.b16 %v320
    %v2037 = vunpack.c.l.b16 %v321
    %v2038 = vunpack.c.h.b16 %v321
    %v2039 = vunpack.c.l.b16 %v322
    %v2040 = vunpack.c.h.b16 %v322
    %v2041 = vunpack.c.l.b16 %v323
    %v2042 = vunpack.c.h.b16 %v323
    %v2043 = vunpack.c.l.b16 %v324
    %v2044 = vunpack.c.h.b16 %v324
    %v2045 = vunpack.c.l.b16 %v325
    %v2046 = vunpack.c.h.b16 %v325
    %v2047 = vunpack.c.l.b16 %v326
    %v2048 = vunpack.c.h.b16 %v326
    %v2049 = vunpack.c.l.b16 %v327
    %v2050 = vunpack.c.h.b16 %v327
    %v2051 = vunpack.c.l.b16 %v328
    %v2052 = vunpack.c.h.b16 %v328
    %v2053 = vunpack.c.l.b16 %v329
    %v2054 = vunpack.c.h.b16 %v329
    %v2055 = vunpack.c.l.b16 %v330
    %v2056 = vunpack.c.h.b16 %v330
    %v2057 = vunpack.c.l.b16 %v331
    %v2058 = vunpack.c.h.b16 %v331
    %v2059 = vunpack.c.l.b16 %v332
    %v2060 = vunpack.c.h.b16 %v332
    %v2061 = vunpack.c.l.b16 %v333
    %v2062 = vunpack.c.h.b16 %v333
    %v2063 = vunpack.c.l.b16 %v334
    %v2064 = vunpack.c.h.b16 %v334
    %v2065 = vunpack.c.l.b16 %v335
    %v2066 = vunpack.c.h.b16 %v335
    %v2067 = vunpack.c.l.b16 %v336
    %v2068 = vunpack.c.h.b16 %v336
    %v2069 = vunpack.c.l.b16 %v337
    %v2070 = vunpack.c.h.b16 %v337
    %v2071 = vunpack.c.l.b16 %v338
    %v2072 = vunpack.c.h.b16 %v338
    %v2073 = vunpack.c.l.b16 %v339
    %v2074 = vunpack.c.h.b16 %v339
    %v2075 = vunpack.c.l.b16 %v340
    %v2076 = vunpack.c.h.b16 %v340
    %v2077 = vunpack.c.l.b16 %v341
    %v2078 = vunpack.c.h.b16 %v341
    %v2079 = vunpack.c.l.b16 %v342
    %v2080 = vunpack.c.h.b16 %v342
    %v2081 = vunpack.c.l.b16 %v343
    %v2082 = vunpack.c.h.b16 %v343
    %v2083 = vunpack.c.l.b16 %v344
    %v2084 = vunpack.c.h.b16 %v344
    %v2085 = vunpack.c.l.b16 %v345
    %v2086 = vunpack.c.h.b16 %v345
    %v2087 = vunpack.c.l.b16 %v346
    %v2088 = vunpack.c.h.b16 %v346
    %v2089 = vunpack.c.l.b16 %v347
    %v2090 = vunpack.c.h.b16 %v347
    %v2091 = vunpack.c.l.b16 %v348
    %v2092 = vunpack.c.h.b16 %v348
    %v2093 = vunpack.c.l.b16 %v349
    %v2094 = vunpack.c.h.b16 %v349
    %v2095 = vunpack.c.l.b16 %v350
    %v2096 = vunpack.c.h.b16 %v350
    %v2097 = vunpack.c.l.b16 %v351
    %v2098 = vunpack.c.h.b16 %v351
    %v2099 = vunpack.c.l.b16 %v352
    %v2100 = vunpack.c.h.b16 %v352
    %v2101 = vunpack.c.l.b16 %v353
    %v2102 = vunpack.c.h.b16 %v353
    %v2103 = vunpack.c.l.b16 %v354
    %v2104 = vunpack.c.h.b16 %v354
    %v2105 = vunpack.c.l.b16 %v355
    %v2106 = vunpack.c.h.b16 %v355
    %v2107 = vunpack.c.l.b16 %v356
    %v2108 = vunpack.c.h.b16 %v356
    %v2109 = vunpack.c.l.b16 %v357
    %v2110 = vunpack.c.h.b16 %v357
    %v2111 = vunpack.c.l.b16 %v358
    %v2112 = vunpack.c.h.b16 %v358
    %v2113 = vunpack.c.l.b16 %v359
    %v2114 = vunpack.c.h.b16 %v359
    %v2115 = vunpack.c.l.b16 %v360
    %v2116 = vunpack.c.h.b16 %v360
    %v2117 = vunpack.c.l.b16 %v361
    %v2118 = vunpack.c.h.b16 %v361
    %v2119 = vunpack.c.l.b16 %v362
    %v2120 = vunpack.c.h.b16 %v362
    %v2121 = vunpack.c.l.b16 %v363
    %v2122 = vunpack.c.h.b16 %v363
    %v2123 = vunpack.c.l.b16 %v364
    %v2124 = vunpack.c.h.b16 %v364
    %v2125 = vunpack.c.l.b16 %v365
    %v2126 = vunpack.c.h.b16 %v365
    %v2127 = vunpack.c.l.b16 %v366
    %v2128 = vunpack.c.h.b16 %v366
    %v2129 = vunpack.c.l.b16 %v367
    %v2130 = vunpack.c.h.b16 %v367
    %v2131 = vunpack.c.l.b16 %v368
    %v2132 = vunpack.c.h.b16 %v368
    %v2133 = vunpack.c.l.b16 %v369
    %v2134 = vunpack.c.h.b16 %v369
    %v2135 = vunpack.c.l.b16 %v370
    %v2136 = vunpack.c.h.b16 %v370
    %v2137 = vunpack.c.l.b16 %v371
    %v2138 = vunpack.c.h.b16 %v371
    %v2139 = vunpack.c.l.b16 %v372
    %v2140 = vunpack.c.h.b16 %v372
    %v2141 = vunpack.c.l.b16 %v373
    %v2142 = vunpack.c.h.b16 %v373
    %v2143 = vunpack.c.l.b16 %v374
    %v2144 = vunpack.c.h.b16 %v374
    %v2145 = vunpack.c.l.b16 %v375
    %v2146 = vunpack.c.h.b16 %v375
    %v2147 = vunpack.c.l.b16 %v376
    %v2148 = vunpack.c.h.b16 %v376
    %v2149 = vunpack.c.l.b16 %v377
    %v2150 = vunpack.c.h.b16 %v377
    %v2151 = vunpack.c.l.b16 %v378
    %v2152 = vunpack.c.h.b16 %v378
    %v2153 = vunpack.c.l.b16 %v379
    %v2154 = vunpack.c.h.b16 %v379
    %v2155 = vunpack.c.l.b16 %v380
    %v2156 = vunpack.c.h.b16 %v380
    %v2157 = vunpack.c.l.b16 %v381
    %v2158 = vunpack.c.h.b16 %v381
    %v2159 = vunpack.c.l.b16 %v382
    %v2160 = vunpack.c.h.b16 %v382
    %v2161 = vunpack.c.l.b16 %v383
    %v2162 = vunpack.c.h.b16 %v383
    %v2163 = vunpack.c.l.b16 %v384
    %v2164 = vunpack.c.h.b16 %v384
    %v2165 = vunpack.c.l.b16 %v385
    %v2166 = vunpack.c.h.b16 %v385
    %v2167 = vunpack.c.l.b16 %v386
    %v2168 = vunpack.c.h.b16 %v386
    %v2169 = vunpack.c.l.b16 %v387
    %v2170 = vunpack.c.h.b16 %v387
    %v2171 = vunpack.c.l.b16 %v388
    %v2172 = vunpack.c.h.b16 %v388
    %v2173 = vunpack.c.l.b16 %v389
    %v2174 = vunpack.c.h.b16 %v389
    %v2175 = vunpack.c.l.b16 %v390
    %v2176 = vunpack.c.h.b16 %v390
    %v2177 = vunpack.c.l.b16 %v391
    %v2178 = vunpack.c.h.b16 %v391
    %v2179 = vunpack.c.l.b16 %v392
    %v2180 = vunpack.c.h.b16 %v392
    %v2181 = vunpack.c.l.b16 %v393
    %v2182 = vunpack.c.h.b16 %v393
    %v2183 = vunpack.c.l.b16 %v394
    %v2184 = vunpack.c.h.b16 %v394
    %v2185 = vunpack.c.l.b16 %v395
    %v2186 = vunpack.c.h.b16 %v395
    %v2187 = vunpack.c.l.b16 %v396
    %v2188 = vunpack.c.h.b16 %v396
    %v2189 = vunpack.c.l.b16 %v397
    %v2190 = vunpack.c.h.b16 %v397
    %v2191 = vunpack.c.l.b16 %v398
    %v2192 = vunpack.c.h.b16 %v398
    %v2193 = vunpack.c.l.b16 %v399
    %v2194 = vunpack.c.h.b16 %v399
    %v2195 = vunpack.c.l.b16 %v400
    %v2196 = vunpack.c.h.b16 %v400
    %v2197 = vunpack.c.l.b16 %v401
    %v2198 = vunpack.c.h.b16 %v401
    %v2199 = vunpack.c.l.b16 %v402
    %v2200 = vunpack.c.h.b16 %v402
    %v2201 = vunpack.c.l.b16 %v403
    %v2202 = vunpack.c.h.b16 %v403
    %v2203 = vunpack.c.l.b16 %v404
    %v2204 = vunpack.c.h.b16 %v404
    %v2205 = vunpack.c.l.b16 %v405
    %v2206 = vunpack.c.h.b16 %v405
    %v2207 = vunpack.c.l.b16 %v406
    %v2208 = vunpack.c.h.b16 %v406
    %v2209 = vunpack.c.l.b16 %v407
    %v2210 = vunpack.c.h.b16 %v407
    %v2211 = vunpack.c.l.b16 %v408
    %v2212 = vunpack.c.h.b16 %v408
    %v2213 = vunpack.c.l.b16 %v409
    %v2214 = vunpack.c.h.b16 %v409
    %v2215 = vunpack.c.l.b16 %v410
    %v2216 = vunpack.c.h.b16 %v410
    %v2217 = vunpack.c.l.b16 %v411
    %v2218 = vunpack.c.h.b16 %v411
    %v2219 = vunpack.c.l.b16 %v412
    %v2220 = vunpack.c.h.b16 %v412
    %v2221 = vunpack.c.l.b16 %v413
    %v2222 = vunpack.c.h.b16 %v413
    %v2223 = vunpack.c.l.b16 %v414
    %v2224 = vunpack.c.h.b16 %v414
    %v2225 = vunpack.c.l.b16 %v415
    %v2226 = vunpack.c.h.b16 %v415
    %v2227 = vunpack.c.l.b16 %v416
    %v2228 = vunpack.c.h.b16 %v416
    %v2229 = vunpack.c.l.b16 %v417
    %v2230 = vunpack.c.h.b16 %v417
    %v2231 = vunpack.c.l.b16 %v418
    %v2232 = vunpack.c.h.b16 %v418
    %v2233 = vunpack.c.l.b16 %v419
    %v2234 = vunpack.c.h.b16 %v419
    %v2235 = vunpack.c.l.b16 %v420
    %v2236 = vunpack.c.h.b16 %v420
    %v2237 = vunpack.c.l.b16 %v421
    %v2238 = vunpack.c.h.b16 %v421
    %v2239 = vunpack.c.l.b16 %v422
    %v2240 = vunpack.c.h.b16 %v422
    %v2241 = vunpack.c.l.b16 %v423
    %v2242 = vunpack.c.h.b16 %v423
    %v2243 = vunpack.c.l.b16 %v424
    %v2244 = vunpack.c.h.b16 %v424
    %v2245 = vunpack.c.l.b16 %v425
    %v2246 = vunpack.c.h.b16 %v425
    %v2247 = vunpack.c.l.b16 %v426
    %v2248 = vunpack.c.h.b16 %v426
    %v2249 = vunpack.c.l.b16 %v427
    %v2250 = vunpack.c.h.b16 %v427
    %v2251 = vunpack.c.l.b16 %v428
    %v2252 = vunpack.c.h.b16 %v428
    %v2253 = vunpack.c.l.b16 %v429
    %v2254 = vunpack.c.h.b16 %v429
    %v2255 = vunpack.c.l.b16 %v430
    %v2256 = vunpack.c.h.b16 %v430
    %v2257 = vunpack.c.l.b16 %v431
    %v2258 = vunpack.c.h.b16 %v431
    %v2259 = vunpack.c.l.b16 %v432
    %v2260 = vunpack.c.h.b16 %v432
    %v2261 = vunpack.c.l.b16 %v433
    %v2262 = vunpack.c.h.b16 %v433
    %v2263 = vunpack.c.l.b16 %v434
    %v2264 = vunpack.c.h.b16 %v434
    %v2265 = vunpack.c.l.b16 %v435
    %v2266 = vunpack.c.h.b16 %v435
    %v2267 = vunpack.c.l.b16 %v436
    %v2268 = vunpack.c.h.b16 %v436
    %v2269 = vunpack.c.l.b16 %v437
    %v2270 = vunpack.c.h.b16 %v437
    %v2271 = vunpack.c.l.b16 %v438
    %v2272 = vunpack.c.h.b16 %v438
    %v2273 = vunpack.c.l.b16 %v439
    %v2274 = vunpack.c.h.b16 %v439
    %v2275 = vunpack.c.l.b16 %v440
    %v2276 = vunpack.c.h.b16 %v440
    %v2277 = vunpack.c.l.b16 %v441
    %v2278 = vunpack.c.h.b16 %v441
    %v2279 = vunpack.c.l.b16 %v442
    %v2280 = vunpack.c.h.b16 %v442
    %v2281 = vunpack.c.l.b16 %v443
    %v2282 = vunpack.c.h.b16 %v443
    %v2283 = vunpack.c.l.b16 %v444
    %v2284 = vunpack.c.h.b16 %v444
    %v2285 = vunpack.c.l.b16 %v445
    %v2286 = vunpack.c.h.b16 %v445
    %v2287 = vunpack.c.l.b16 %v446
    %v2288 = vunpack.c.h.b16 %v446
    %v2289 = vunpack.c.l.b16 %v447
    %v2290 = vunpack.c.h.b16 %v447
    %v2291 = vunpack.c.l.b16 %v448
    %v2292 = vunpack.c.h.b16 %v448
    %v2293 = vunpack.c.l.b16 %v449
    %v2294 = vunpack.c.h.b16 %v449
    %v2295 = vunpack.c.l.b16 %v450
    %v2296 = vunpack.c.h.b16 %v450
    %v2297 = vunpack.c.l.b16 %v451
    %v2298 = vunpack.c.h.b16 %v451
    %v2299 = vunpack.c.l.b16 %v452
    %v2300 = vunpack.c.h.b16 %v452
    %v2301 = vunpack.c.l.b16 %v453
    %v2302 = vunpack.c.h.b16 %v453
    %v2303 = vunpack.c.l.b16 %v454
    %v2304 = vunpack.c.h.b16 %v454
    %v2305 = vunpack.c.l.b16 %v455
    %v2306 = vunpack.c.h.b16 %v455
    %v2307 = vunpack.c.l.b16 %v456
    %v2308 = vunpack.c.h.b16 %v456
    %v2309 = vunpack.c.l.b16 %v457
    %v2310 = vunpack.c.h.b16 %v457
    %v2311 = vunpack.c.l.b16 %v458
    %v2312 = vunpack.c.h.b16 %v458
    %v2313 = vunpack.c.l.b16 %v459
    %v2314 = vunpack.c.h.b16 %v459
    %v2315 = vunpack.c.l.b16 %v460
    %v2316 = vunpack.c.h.b16 %v460
    %v2317 = vunpack.c.l.b16 %v461
    %v2318 = vunpack.c.h.b16 %v461
    %v2319 = vunpack.c.l.b16 %v462
    %v2320 = vunpack.c.h.b16 %v462
    %v2321 = vunpack.c.l.b16 %v463
    %v2322 = vunpack.c.h.b16 %v463
    %v2323 = vunpack.c.l.b16 %v464
    %v2324 = vunpack.c.h.b16 %v464
    %v2325 = vunpack.c.l.b16 %v465
    %v2326 = vunpack.c.h.b16 %v465
    %v2327 = vunpack.c.l.b16 %v466
    %v2328 = vunpack.c.h.b16 %v466
    %v2329 = vunpack.c.l.b16 %v467
    %v2330 = vunpack.c.h.b16 %v467
    %v2331 = vunpack.c.l.b16 %v468
    %v2332 = vunpack.c.h.b16 %v468
    %v2333 = vunpack.c.l.b16 %v469
    %v2334 = vunpack.c.h.b16 %v469
    %v2335 = vunpack.c.l.b16 %v470
    %v2336 = vunpack.c.h.b16 %v470
    %v2337 = vunpack.c.l.b16 %v471
    %v2338 = vunpack.c.h.b16 %v471
    %v2339 = vunpack.c.l.b16 %v472
    %v2340 = vunpack.c.h.b16 %v472
    %v2341 = vunpack.c.l.b16 %v473
    %v2342 = vunpack.c.h.b16 %v473
    %v2343 = vunpack.c.l.b16 %v474
    %v2344 = vunpack.c.h.b16 %v474
    %v2345 = vunpack.c.l.b16 %v475
    %v2346 = vunpack.c.h.b16 %v475
    %v2347 = vunpack.c.l.b16 %v476
    %v2348 = vunpack.c.h.b16 %v476
    %v2349 = vunpack.c.l.b16 %v477
    %v2350 = vunpack.c.h.b16 %v477
    %v2351 = vunpack.c.l.b16 %v478
    %v2352 = vunpack.c.h.b16 %v478
    %v2353 = vunpack.c.l.b16 %v479
    %v2354 = vunpack.c.h.b16 %v479
    %v2355 = vunpack.c.l.b16 %v480
    %v2356 = vunpack.c.h.b16 %v480
    %v2357 = vunpack.c.l.b16 %v481
    %v2358 = vunpack.c.h.b16 %v481
    %v2359 = vunpack.c.l.b16 %v482
    %v2360 = vunpack.c.h.b16 %v482
    %v2361 = vunpack.c.l.b16 %v483
    %v2362 = vunpack.c.h.b16 %v483
    %v2363 = vunpack.c.l.b16 %v484
    %v2364 = vunpack.c.h.b16 %v484
    %v2365 = vunpack.c.l.b16 %v485
    %v2366 = vunpack.c.h.b16 %v485
    %v2367 = vunpack.c.l.b16 %v486
    %v2368 = vunpack.c.h.b16 %v486
    %v2369 = vunpack.c.l.b16 %v487
    %v2370 = vunpack.c.h.b16 %v487
    %v2371 = vunpack.c.l.b16 %v488
    %v2372 = vunpack.c.h.b16 %v488
    %v2373 = vunpack.c.l.b16 %v489
    %v2374 = vunpack.c.h.b16 %v489
    %v2375 = vunpack.c.l.b16 %v490
    %v2376 = vunpack.c.h.b16 %v490
    %v2377 = vunpack.c.l.b16 %v491
    %v2378 = vunpack.c.h.b16 %v491
    %v2379 = vunpack.c.l.b16 %v492
    %v2380 = vunpack.c.h.b16 %v492
    %v2381 = vunpack.c.l.b16 %v493
    %v2382 = vunpack.c.h.b16 %v493
    %v2383 = vunpack.c.l.b16 %v494
    %v2384 = vunpack.c.h.b16 %v494
    %v2385 = vunpack.c.l.b16 %v495
    %v2386 = vunpack.c.h.b16 %v495
    %v2387 = vunpack.c.l.b16 %v496
    %v2388 = vunpack.c.h.b16 %v496
    %v2389 = vunpack.c.l.b16 %v497
    %v2390 = vunpack.c.h.b16 %v497
    %v2391 = vunpack.c.l.b16 %v498
    %v2392 = vunpack.c.h.b16 %v498
    %v2393 = vunpack.c.l.b16 %v499
    %v2394 = vunpack.c.h.b16 %v499
    %v2395 = vunpack.c.l.b16 %v500
    %v2396 = vunpack.c.h.b16 %v500
    %v2397 = vunpack.c.l.b16 %v501
    %v2398 = vunpack.c.h.b16 %v501
    %v2399 = vunpack.c.l.b16 %v502
    %v2400 = vunpack.c.h.b16 %v502
    %v2401 = vunpack.c.l.b16 %v503
    %v2402 = vunpack.c.h.b16 %v503
    %v2403 = vunpack.c.l.b16 %v504
    %v2404 = vunpack.c.h.b16 %v504
    %v2405 = vunpack.c.l.b16 %v505
    %v2406 = vunpack.c.h.b16 %v505
    %v2407 = vunpack.c.l.b16 %v506
    %v2408 = vunpack.c.h.b16 %v506
    %v2409 = vunpack.c.l.b16 %v507
    %v2410 = vunpack.c.h.b16 %v507
    %v2411 = vunpack.c.l.b16 %v508
    %v2412 = vunpack.c.h.b16 %v508
    %v2413 = vunpack.c.l.b16 %v509
    %v2414 = vunpack.c.h.b16 %v509
    %v2415 = vunpack.c.l.b16 %v510
    %v2416 = vunpack.c.h.b16 %v510
    %v2417 = vunpack.c.l.b16 %v511
    %v2418 = vunpack.c.h.b16 %v511
    %v2419 = vunpack.c.l.b16 %v512
    %v2420 = vunpack.c.h.b16 %v512
    %v2421 = vunpack.c.l.b16 %v513
    %v2422 = vunpack.c.h.b16 %v513
    %v2423 = vunpack.c.l.b16 %v514
    %v2424 = vunpack.c.h.b16 %v514
    %v2425 = vunpack.c.l.b16 %v515
    %v2426 = vunpack.c.h.b16 %v515
    %v2427 = vunpack.c.l.b16 %v516
    %v2428 = vunpack.c.h.b16 %v516
    %v2429 = vunpack.c.l.b16 %v517
    %v2430 = vunpack.c.h.b16 %v517
    %v2431 = vunpack.c.l.b16 %v518
    %v2432 = vunpack.c.h.b16 %v518
    %v2433 = vunpack.c.l.b16 %v519
    %v2434 = vunpack.c.h.b16 %v519
    %v2435 = vunpack.c.l.b16 %v520
    %v2436 = vunpack.c.h.b16 %v520
    %v2437 = vunpack.c.l.b16 %v521
    %v2438 = vunpack.c.h.b16 %v521
    %v2439 = vunpack.c.l.b16 %v522
    %v2440 = vunpack.c.h.b16 %v522
    %v2441 = vunpack.c.l.b16 %v523
    %v2442 = vunpack.c.h.b16 %v523
    %v2443 = vunpack.c.l.b16 %v524
    %v2444 = vunpack.c.h.b16 %v524
    %v2445 = vunpack.c.l.b16 %v525
    %v2446 = vunpack.c.h.b16 %v525
    %v2447 = vunpack.c.l.b16 %v526
    %v2448 = vunpack.c.h.b16 %v526
    %v2449 = vunpack.c.l.b16 %v527
    %v2450 = vunpack.c.h.b16 %v527
    %v2451 = vunpack.c.l.b16 %v528
    %v2452 = vunpack.c.h.b16 %v528
    %v2453 = vunpack.c.l.b16 %v529
    %v2454 = vunpack.c.h.b16 %v529
    %v2455 = vunpack.c.l.b16 %v530
    %v2456 = vunpack.c.h.b16 %v530
    %v2457 = vunpack.c.l.b16 %v531
    %v2458 = vunpack.c.h.b16 %v531
    %v2459 = vunpack.c.l.b16 %v532
    %v2460 = vunpack.c.h.b16 %v532
    %v2461 = vunpack.c.l.b16 %v533
    %v2462 = vunpack.c.h.b16 %v533
    %v2463 = vunpack.c.l.b16 %v534
    %v2464 = vunpack.c.h.b16 %v534
    %v2465 = vunpack.c.l.b16 %v535
    %v2466 = vunpack.c.h.b16 %v535
    %v2467 = vunpack.c.l.b16 %v536
    %v2468 = vunpack.c.h.b16 %v536
    %v2469 = vunpack.c.l.b16 %v537
    %v2470 = vunpack.c.h.b16 %v537
    %v2471 = vunpack.c.l.b16 %v538
    %v2472 = vunpack.c.h.b16 %v538
    %v2473 = vunpack.c.l.b16 %v539
    %v2474 = vunpack.c.h.b16 %v539
    %v2475 = vunpack.c.l.b16 %v540
    %v2476 = vunpack.c.h.b16 %v540
    %v2477 = vunpack.c.l.b16 %v541
    %v2478 = vunpack.c.h.b16 %v541
    %v2479 = vunpack.c.l.b16 %v542
    %v2480 = vunpack.c.h.b16 %v542
    %v2481 = vunpack.c.l.b16 %v543
    %v2482 = vunpack.c.h.b16 %v543
    %v2483 = vunpack.c.l.b16 %v544
    %v2484 = vunpack.c.h.b16 %v544
    %v2485 = vunpack.c.l.b16 %v545
    %v2486 = vunpack.c.h.b16 %v545
    %v2487 = vunpack.c.l.b16 %v546
    %v2488 = vunpack.c.h.b16 %v546
    %v2489 = vunpack.c.l.b16 %v547
    %v2490 = vunpack.c.h.b16 %v547
    %v2491 = vunpack.c.l.b16 %v548
    %v2492 = vunpack.c.h.b16 %v548
    %v2493 = vunpack.c.l.b16 %v549
    %v2494 = vunpack.c.h.b16 %v549
    %v2495 = vunpack.c.l.b16 %v550
    %v2496 = vunpack.c.h.b16 %v550
    %v2497 = vunpack.c.l.b16 %v551
    %v2498 = vunpack.c.h.b16 %v551
    %v2499 = vunpack.c.l.b16 %v552
    %v2500 = vunpack.c.h.b16 %v552
    %v2501 = vunpack.c.l.b16 %v553
    %v2502 = vunpack.c.h.b16 %v553
    %v2503 = vunpack.c.l.b16 %v554
    %v2504 = vunpack.c.h.b16 %v554
    %v2505 = vunpack.c.l.b16 %v555
    %v2506 = vunpack.c.h.b16 %v555
    %v2507 = vunpack.c.l.b16 %v556
    %v2508 = vunpack.c.h.b16 %v556
    %v2509 = vunpack.c.l.b16 %v557
    %v2510 = vunpack.c.h.b16 %v557
    %v2511 = vunpack.c.l.b16 %v558
    %v2512 = vunpack.c.h.b16 %v558
    %v2513 = vunpack.c.l.b16 %v559
    %v2514 = vunpack.c.h.b16 %v559
    %v2515 = vunpack.c.l.b16 %v560
    %v2516 = vunpack.c.h.b16 %v560
    %v2517 = vunpack.c.l.b16 %v561
    %v2518 = vunpack.c.h.b16 %v561
    %v2519 = vunpack.c.l.b16 %v562
    %v2520 = vunpack.c.h.b16 %v562
    %v2521 = vunpack.c.l.b16 %v563
    %v2522 = vunpack.c.h.b16 %v563
    %v2523 = vunpack.c.l.b16 %v564
    %v2524 = vunpack.c.h.b16 %v564
    %v2525 = vunpack.c.l.b16 %v565
    %v2526 = vunpack.c.h.b16 %v565
    %v2527 = vunpack.c.l.b16 %v566
    %v2528 = vunpack.c.h.b16 %v566
    %v2529 = vunpack.c.l.b16 %v567
    %v2530 = vunpack.c.h.b16 %v567
    %v2531 = vunpack.c.l.b16 %v568
    %v2532 = vunpack.c.h.b16 %v568
    %v2533 = vunpack.c.l.b16 %v569
    %v2534 = vunpack.c.h.b16 %v569
    %v2535 = vunpack.c.l.b16 %v570
    %v2536 = vunpack.c.h.b16 %v570
    %v2537 = vunpack.c.l.b16 %v571
    %v2538 = vunpack.c.h.b16 %v571
    %v2539 = vunpack.c.l.b16 %v572
    %v2540 = vunpack.c.h.b16 %v572
    %v2541 = vunpack.c.l.b16 %v573
    %v2542 = vunpack.c.h.b16 %v573
    %v2543 = vunpack.c.l.b16 %v574
    %v2544 = vunpack.c.h.b16 %v574
    %v2545 = vunpack.c.l.b16 %v575
    %v2546 = vunpack.c.h.b16 %v575
    %v2547 = vunpack.c.l.b16 %v576
    %v2548 = vunpack.c.h.b16 %v576
    %v2549 = vunpack.c.l.b16 %v577
    %v2550 = vunpack.c.h.b16 %v577
    %v2551 = vunpack.c.l.b16 %v578
    %v2552 = vunpack.c.h.b16 %v578
    %v2553 = vunpack.c.l.b16 %v579
    %v2554 = vunpack.c.h.b16 %v579
    %v2555 = vunpack.c.l.b16 %v580
    %v2556 = vunpack.c.h.b16 %v580
    %v2557 = vunpack.c.l.b16 %v581
    %v2558 = vunpack.c.h.b16 %v581
    %v2559 = vunpack.c.l.b16 %v582
    %v2560 = vunpack.c.h.b16 %v582
    %v2561 = vunpack.c.l.b16 %v583
    %v2562 = vunpack.c.h.b16 %v583
    %v2563 = vunpack.c.l.b16 %v584
    %v2564 = vunpack.c.h.b16 %v584
    %v2565 = vunpack.c.l.b16 %v585
    %v2566 = vunpack.c.h.b16 %v585
    %v2567 = vunpack.c.l.b16 %v586
    %v2568 = vunpack.c.h.b16 %v586
    %v2569 = vunpack.c.l.b16 %v587
    %v2570 = vunpack.c.h.b16 %v587
    %v2571 = vunpack.c.l.b16 %v588
    %v2572 = vunpack.c.h.b16 %v588
    %v2573 = vunpack.c.l.b16 %v589
    %v2574 = vunpack.c.h.b16 %v589
    %v2575 = vunpack.c.l.b16 %v590
    %v2576 = vunpack.c.h.b16 %v590
    %v2577 = vunpack.c.l.b16 %v591
    %v2578 = vunpack.c.h.b16 %v591
    %v2579 = vunpack.c.l.b16 %v592
    %v2580 = vunpack.c.h.b16 %v592
    %v2581 = vunpack.c.l.b16 %v593
    %v2582 = vunpack.c.h.b16 %v593
    %v2583 = vunpack.c.l.b16 %v594
    %v2584 = vunpack.c.h.b16 %v594
    %v2585 = vunpack.c.l.b16 %v595
    %v2586 = vunpack.c.h.b16 %v595
    %v2587 = vunpack.c.l.b16 %v596
    %v2588 = vunpack.c.h.b16 %v596
    %v2589 = vunpack.c.l.b16 %v597
    %v2590 = vunpack.c.h.b16 %v597
    %v2591 = vunpack.c.l.b16 %v598
    %v2592 = vunpack.c.h.b16 %v598
    %v2593 = vunpack.c.l.b16 %v599
    %v2594 = vunpack.c.h.b16 %v599
    %v2595 = vunpack.c.l.b16 %v600
    %v2596 = vunpack.c.h.b16 %v600
    %v2597 = vunpack.c.l.b16 %v601
    %v2598 = vunpack.c.h.b16 %v601
    %v2599 = vunpack.c.l.b16 %v602
    %v2600 = vunpack.c.h.b16 %v602
    %v2601 = vunpack.c.l.b16 %v603
    %v2602 = vunpack.c.h.b16 %v603
    %v2603 = vunpack.c.l.b16 %v604
    %v2604 = vunpack.c.h.b16 %v604
    %v2605 = vunpack.c.l.b16 %v605
    %v2606 = vunpack.c.h.b16 %v605
    %v2607 = vunpack.c.l.b16 %v606
    %v2608 = vunpack.c.h.b16 %v606
    %v2609 = vunpack.c.l.b16 %v607
    %v2610 = vunpack.c.h.b16 %v607
    %v2611 = vunpack.c.l.b16 %v608
    %v2612 = vunpack.c.h.b16 %v608
    %v2613 = vunpack.c.l.b16 %v609
    %v2614 = vunpack.c.h.b16 %v609
    %v2615 = vunpack.c.l.b16 %v610
    %v2616 = vunpack.c.h.b16 %v610
    %v2617 = vunpack.c.l.b16 %v611
    %v2618 = vunpack.c.h.b16 %v611
    %v2619 = vunpack.c.l.b16 %v612
    %v2620 = vunpack.c.h.b16 %v612
    %v2621 = vunpack.c.l.b16 %v613
    %v2622 = vunpack.c.h.b16 %v613
    %v2623 = vunpack.c.l.b16 %v614
    %v2624 = vunpack.c.h.b16 %v614
    %v2625 = vunpack.c.l.b16 %v615
    %v2626 = vunpack.c.h.b16 %v615
    %v2627 = vunpack.c.l.b16 %v616
    %v2628 = vunpack.c.h.b16 %v616
    %v2629 = vunpack.c.l.b16 %v617
    %v2630 = vunpack.c.h.b16 %v617
    %v2631 = vunpack.c.l.b16 %v618
    %v2632 = vunpack.c.h.b16 %v618
    %v2633 = vunpack.c.l.b16 %v619
    %v2634 = vunpack.c.h.b16 %v619
    %v2635 = vunpack.c.l.b16 %v620
    %v2636 = vunpack.c.h.b16 %v620
    %v2637 = vunpack.c.l.b16 %v621
    %v2638 = vunpack.c.h.b16 %v621
    %v2639 = vunpack.c.l.b16 %v622
    %v2640 = vunpack.c.h.b16 %v622
    %v2641 = vunpack.c.l.b16 %v623
    %v2642 = vunpack.c.h.b16 %v623
    %v2643 = vunpack.c.l.b16 %v624
    %v2644 = vunpack.c.h.b16 %v624
    %v2645 = vunpack.c.l.b16 %v625
    %v2646 = vunpack.c.h.b16 %v625
    %v2647 = vunpack.c.l.b16 %v626
    %v2648 = vunpack.c.h.b16 %v626
    %v2649 = vunpack.c.l.b16 %v627
    %v2650 = vunpack.c.h.b16 %v627
    %v2651 = vunpack.c.l.b16 %v628
    %v2652 = vunpack.c.h.b16 %v628
    %v2653 = vunpack.c.l.b16 %v629
    %v2654 = vunpack.c.h.b16 %v629
    %v2655 = vunpack.c.l.b16 %v630
    %v2656 = vunpack.c.h.b16 %v630
    %v2657 = vunpack.c.l.b16 %v631
    %v2658 = vunpack.c.h.b16 %v631
    %v2659 = vunpack.c.l.b16 %v632
    %v2660 = vunpack.c.h.b16 %v632
    %v2661 = vunpack.c.l.b16 %v633
    %v2662 = vunpack.c.h.b16 %v633
    %v2663 = vunpack.c.l.b16 %v634
    %v2664 = vunpack.c.h.b16 %v634
    %v2665 = vunpack.c.l.b16 %v635
    %v2666 = vunpack.c.h.b16 %v635
    %v2667 = vunpack.c.l.b16 %v636
    %v2668 = vunpack.c.h.b16 %v636
    %v2669 = vunpack.c.l.b16 %v637
    %v2670 = vunpack.c.h.b16 %v637
    %v2671 = vunpack.c.l.b16 %v638
    %v2672 = vunpack.c.h.b16 %v638
    %v2673 = vunpack.c.l.b16 %v639
    %v2674 = vunpack.c.h.b16 %v639
    %v2675 = vunpack.c.l.b16 %v640
    %v2676 = vunpack.c.h.b16 %v640
    %v2677 = vunpack.c.l.b16 %v641
    %v2678 = vunpack.c.h.b16 %v641
    %v2679 = vunpack.c.l.b16 %v642
    %v2680 = vunpack.c.h.b16 %v642
    %v2681 = vunpack.c.l.b16 %v643
    %v2682 = vunpack.c.h.b16 %v643
    %v2683 = vunpack.c.l.b16 %v644
    %v2684 = vunpack.c.h.b16 %v644
    %v2685 = vunpack.c.l.b16 %v645
    %v2686 = vunpack.c.h.b16 %v645
    %v2687 = vunpack.c.l.b16 %v646
    %v2688 = vunpack.c.h.b16 %v646
    %v2689 = vunpack.c.l.b16 %v647
    %v2690 = vunpack.c.h.b16 %v647
    %v2691 = vunpack.c.l.b16 %v648
    %v2692 = vunpack.c.h.b16 %v648
    %v2693 = vunpack.c.l.b16 %v649
    %v2694 = vunpack.c.h.b16 %v649
    %v2695 = vunpack.c.l.b16 %v650
    %v2696 = vunpack.c.h.b16 %v650
    %v2697 = vunpack.c.l.b16 %v651
    %v2698 = vunpack.c.h.b16 %v651
    %v2699 = vunpack.c.l.b16 %v652
    %v2700 = vunpack.c.h.b16 %v652
    %v2701 = vunpack.c.l.b16 %v653
    %v2702 = vunpack.c.h.b16 %v653
    %v2703 = vunpack.c.l.b16 %v654
    %v2704 = vunpack.c.h.b16 %v654
    %v2705 = vunpack.c.l.b16 %v655
    %v2706 = vunpack.c.h.b16 %v655
    %v2707 = vunpack.c.l.b16 %v656
    %v2708 = vunpack.c.h.b16 %v656
    %v2709 = vunpack.c.l.b16 %v657
    %v2710 = vunpack.c.h.b16 %v657
    %v2711 = vunpack.c.l.b16 %v658
    %v2712 = vunpack.c.h.b16 %v658
    %v2713 = vunpack.c.l.b16 %v659
    %v2714 = vunpack.c.h.b16 %v659
    %v2715 = vunpack.c.l.b16 %v660
    %v2716 = vunpack.c.h.b16 %v660
    %v2717 = vunpack.c.l.b16 %v661
    %v2718 = vunpack.c.h.b16 %v661
    %v2719 = vunpack.c.l.b16 %v662
    %v2720 = vunpack.c.h.b16 %v662
    %v2721 = vunpack.c.l.b16 %v663
    %v2722 = vunpack.c.h.b16 %v663
    %v2723 = vunpack.c.l.b16 %v664
    %v2724 = vunpack.c.h.b16 %v664
    %v2725 = vunpack.c.l.b16 %v665
    %v2726 = vunpack.c.h.b16 %v665
    %v2727 = vunpack.c.l.b16 %v666
    %v2728 = vunpack.c.h.b16 %v666
    %v2729 = vunpack.c.l.b16 %v667
    %v2730 = vunpack.c.h.b16 %v667
    %v2731 = vunpack.c.l.b16 %v668
    %v2732 = vunpack.c.h.b16 %v668
    %v2733 = vunpack.c.l.b16 %v669
    %v2734 = vunpack.c.h.b16 %v669
    %v2735 = vunpack.c.l.b16 %v670
    %v2736 = vunpack.c.h.b16 %v670
    %v2737 = vunpack.c.l.b16 %v671
    %v2738 = vunpack.c.h.b16 %v671
    %v2739 = vunpack.c.l.b16 %v672
    %v2740 = vunpack.c.h.b16 %v672
    %v2741 = vunpack.c.l.b16 %v673
    %v2742 = vunpack.c.h.b16 %v673
    %v2743 = vunpack.c.l.b16 %v674
    %v2744 = vunpack.c.h.b16 %v674
    %v2745 = vunpack.c.l.b16 %v675
    %v2746 = vunpack.c.h.b16 %v675
    %v2747 = vunpack.c.l.b16 %v676
    %v2748 = vunpack.c.h.b16 %v676
    %v2749 = vunpack.c.l.b16 %v677
    %v2750 = vunpack.c.h.b16 %v677
    %v2751 = vunpack.c.l.b16 %v678
    %v2752 = vunpack.c.h.b16 %v678
    %v2753 = vunpack.c.l.b16 %v679
    %v2754 = vunpack.c.h.b16 %v679
    %v2755 = vunpack.c.l.b16 %v680
    %v2756 = vunpack.c.h.b16 %v680
    %v2757 = vunpack.c.l.b16 %v681
    %v2758 = vunpack.c.h.b16 %v681
    %v2759 = vunpack.c.l.b16 %v682
    %v2760 = vunpack.c.h.b16 %v682
    %v2761 = vunpack.c.l.b16 %v683
    %v2762 = vunpack.c.h.b16 %v683
    %v2763 = vunpack.c.l.b16 %v684
    %v2764 = vunpack.c.h.b16 %v684
    %v2765 = vunpack.c.l.b16 %v685
    %v2766 = vunpack.c.h.b16 %v685
    %v2767 = vunpack.c.l.b16 %v686
    %v2768 = vunpack.c.h.b16 %v686
    %v2769 = vunpack.c.l.b16 %v687
    %v2770 = vunpack.c.h.b16 %v687
    %v2771 = vunpack.c.l.b16 %v688
    %v2772 = vunpack.c.h.b16 %v688
    %v2773 = vunpack.c.l.b16 %v689
    %v2774 = vunpack.c.h.b16 %v689
    %v2775 = vunpack.c.l.b16 %v690
    %v2776 = vunpack.c.h.b16 %v690
    %v2777 = vunpack.c.l.b16 %v691
    %v2778 = vunpack.c.h.b16 %v691
    %v2779 = vunpack.c.l.b16 %v692
    %v2780 = vunpack.c.h.b16 %v692
    %v2781 = vunpack.c.l.b16 %v693
    %v2782 = vunpack.c.h.b16 %v693
    %v2783 = vunpack.c.l.b16 %v694
    %v2784 = vunpack.c.h.b16 %v694
    %v2785 = vunpack.c.l.b16 %v695
    %v2786 = vunpack.c.h.b16 %v695
    %v2787 = vunpack.c.l.b16 %v696
    %v2788 = vunpack.c.h.b16 %v696
    %v2789 = vunpack.c.l.b16 %v697
    %v2790 = vunpack.c.h.b16 %v697
    %v2791 = vunpack.c.l.b16 %v698
    %v2792 = vunpack.c.h.b16 %v698
    %v2793 = vunpack.c.l.b16 %v699
    %v2794 = vunpack.c.h.b16 %v699
    %v2795 = vunpack.c.l.b16 %v700
    %v2796 = vunpack.c.h.b16 %v700
    %v2797 = vunpack.c.l.b16 %v701
    %v2798 = vunpack.c.h.b16 %v701
    %v2799 = vunpack.c.l.b16 %v702
    %v2800 = vunpack.c.h.b16 %v702
    %v2801 = vunpack.c.l.b16 %v703
    %v2802 = vunpack.c.h.b16 %v703
    %v2803 = vunpack.c.l.b16 %v704
    %v2804 = vunpack.c.h.b16 %v704
    %v2805 = vunpack.c.l.b16 %v705
    %v2806 = vunpack.c.h.b16 %v705
    %v2807 = vunpack.c.l.b16 %v706
    %v2808 = vunpack.c.h.b16 %v706
    %v2809 = vunpack.c.l.b16 %v707
    %v2810 = vunpack.c.h.b16 %v707
    %v2811 = vunpack.c.l.b16 %v708
    %v2812 = vunpack.c.h.b16 %v708
    %v2813 = vunpack.c.l.b16 %v709
    %v2814 = vunpack.c.h.b16 %v709
    %v2815 = vunpack.c.l.b16 %v710
    %v2816 = vunpack.c.h.b16 %v710
    %v2817 = vunpack.c.l.b16 %v711
    %v2818 = vunpack.c.h.b16 %v711
    %v2819 = vunpack.c.l.b16 %v712
    %v2820 = vunpack.c.h.b16 %v712
    %v2821 = vunpack.c.l.b16 %v713
    %v2822 = vunpack.c.h.b16 %v713
    %v2823 = vunpack.c.l.b16 %v714
    %v2824 = vunpack.c.h.b16 %v714
    %v2825 = vunpack.c.l.b16 %v715
    %v2826 = vunpack.c.h.b16 %v715
    %v2827 = vunpack.c.l.b16 %v716
    %v2828 = vunpack.c.h.b16 %v716
    %v2829 = vunpack.c.l.b16 %v717
    %v2830 = vunpack.c.h.b16 %v717
    %v2831 = vunpack.c.l.b16 %v718
    %v2832 = vunpack.c.h.b16 %v718
    %v2833 = vunpack.c.l.b16 %v719
    %v2834 = vunpack.c.h.b16 %v719
    %v2835 = vunpack.c.l.b16 %v720
    %v2836 = vunpack.c.h.b16 %v720
    %v2837 = vunpack.c.l.b16 %v721
    %v2838 = vunpack.c.h.b16 %v721
    %v2839 = vunpack.c.l.b16 %v722
    %v2840 = vunpack.c.h.b16 %v722
    %v2841 = vunpack.c.l.b16 %v723
    %v2842 = vunpack.c.h.b16 %v723
    %v2843 = vunpack.c.l.b16 %v724
    %v2844 = vunpack.c.h.b16 %v724
    %v2845 = vunpack.c.l.b16 %v725
    %v2846 = vunpack.c.h.b16 %v725
    %v2847 = vunpack.c.l.b16 %v726
    %v2848 = vunpack.c.h.b16 %v726
    %v2849 = vunpack.c.l.b16 %v727
    %v2850 = vunpack.c.h.b16 %v727
    %v2851 = vunpack.c.l.b16 %v728
    %v2852 = vunpack.c.h.b16 %v728
    %v2853 = vunpack.c.l.b16 %v729
    %v2854 = vunpack.c.h.b16 %v729
    %v2855 = vunpack.c.l.b16 %v730
    %v2856 = vunpack.c.h.b16 %v730
    %v2857 = vunpack.c.l.b16 %v731
    %v2858 = vunpack.c.h.b16 %v731
    %v2859 = vunpack.c.l.b16 %v732
    %v2860 = vunpack.c.h.b16 %v732
    %v2861 = vunpack.c.l.b16 %v733
    %v2862 = vunpack.c.h.b16 %v733
    %v2863 = vunpack.c.l.b16 %v734
    %v2864 = vunpack.c.h.b16 %v734
    %v2865 = vunpack.c.l.b16 %v735
    %v2866 = vunpack.c.h.b16 %v735
    %v2867 = vunpack.c.l.b16 %v736
    %v2868 = vunpack.c.h.b16 %v736
    %v2869 = vunpack.c.l.b16 %v737
    %v2870 = vunpack.c.h.b16 %v737
    %v2871 = vunpack.c.l.b16 %v738
    %v2872 = vunpack.c.h.b16 %v738
    %v2873 = vunpack.c.l.b16 %v739
    %v2874 = vunpack.c.h.b16 %v739
    %v2875 = vunpack.c.l.b16 %v740
    %v2876 = vunpack.c.h.b16 %v740
    %v2877 = vunpack.c.l.b16 %v741
    %v2878 = vunpack.c.h.b16 %v741
    %v2879 = vunpack.c.l.b16 %v742
    %v2880 = vunpack.c.h.b16 %v742
    %v2881 = vunpack.c.l.b16 %v743
    %v2882 = vunpack.c.h.b16 %v743
    %v2883 = vunpack.c.l.b16 %v744
    %v2884 = vunpack.c.h.b16 %v744
    %v2885 = vunpack.c.l.b16 %v745
    %v2886 = vunpack.c.h.b16 %v745
    %v2887 = vunpack.c.l.b16 %v746
    %v2888 = vunpack.c.h.b16 %v746
    %v2889 = vunpack.c.l.b16 %v747
    %v2890 = vunpack.c.h.b16 %v747
    %v2891 = vunpack.c.l.b16 %v748
    %v2892 = vunpack.c.h.b16 %v748
    %v2893 = vunpack.c.l.b16 %v749
    %v2894 = vunpack.c.h.b16 %v749
    %v2895 = vunpack.c.l.b16 %v750
    %v2896 = vunpack.c.h.b16 %v750
    %v2897 = vunpack.c.l.b16 %v751
    %v2898 = vunpack.c.h.b16 %v751
    %v2899 = vunpack.c.l.b16 %v752
    %v2900 = vunpack.c.h.b16 %v752
    %v2901 = vunpack.c.l.b16 %v753
    %v2902 = vunpack.c.h.b16 %v753
    %v2903 = vunpack.c.l.b16 %v754
    %v2904 = vunpack.c.h.b16 %v754
    %v2905 = vunpack.c.l.b16 %v755
    %v2906 = vunpack.c.h.b16 %v755
    %v2907 = vunpack.c.l.b16 %v756
    %v2908 = vunpack.c.h.b16 %v756
    %v2909 = vunpack.c.l.b16 %v757
    %v2910 = vunpack.c.h.b16 %v757
    %v2911 = vunpack.c.l.b16 %v758
    %v2912 = vunpack.c.h.b16 %v758
    %v2913 = vunpack.c.l.b16 %v759
    %v2914 = vunpack.c.h.b16 %v759
    %v2915 = vunpack.c.l.b16 %v760
    %v2916 = vunpack.c.h.b16 %v760
    %v2917 = vunpack.c.l.b16 %v761
    %v2918 = vunpack.c.h.b16 %v761
    %v2919 = vunpack.c.l.b16 %v762
    %v2920 = vunpack.c.h.b16 %v762
    %v2921 = vunpack.c.l.b16 %v763
    %v2922 = vunpack.c.h.b16 %v763
    %v2923 = vunpack.c.l.b16 %v764
    %v2924 = vunpack.c.h.b16 %v764
    %v2925 = vunpack.c.l.b16 %v765
    %v2926 = vunpack.c.h.b16 %v765
    %v2927 = vunpack.c.l.b16 %v766
    %v2928 = vunpack.c.h.b16 %v766
    %v2929 = vunpack.c.l.b16 %v767
    %v2930 = vunpack.c.h.b16 %v767
    %v2931 = vunpack.c.l.b16 %v768
    %v2932 = vunpack.c.h.b16 %v768
    %v2933 = vunpack.c.l.b16 %v769
    %v2934 = vunpack.c.h.b16 %v769
    %v2935 = vunpack.c.l.b16 %v770
    %v2936 = vunpack.c.h.b16 %v770
    %v2937 = vunpack.c.l.b16 %v771
    %v2938 = vunpack.c.h.b16 %v771
    %v2939 = vunpack.c.l.b16 %v772
    %v2940 = vunpack.c.h.b16 %v772
    %v2941 = vunpack.c.l.b16 %v773
    %v2942 = vunpack.c.h.b16 %v773
    %v2943 = vunpack.c.l.b16 %v774
    %v2944 = vunpack.c.h.b16 %v774
    %v2945 = vunpack.c.l.b16 %v775
    %v2946 = vunpack.c.h.b16 %v775
    %v2947 = vunpack.c.l.b16 %v776
    %v2948 = vunpack.c.h.b16 %v776
    %v2949 = vunpack.c.l.b16 %v777
    %v2950 = vunpack.c.h.b16 %v777
    %v2951 = vunpack.c.l.b16 %v778
    %v2952 = vunpack.c.h.b16 %v778
    %v2953 = vunpack.c.l.b16 %v779
    %v2954 = vunpack.c.h.b16 %v779
    %v2955 = vunpack.c.l.b16 %v780
    %v2956 = vunpack.c.h.b16 %v780
    %v2957 = vunpack.c.l.b16 %v781
    %v2958 = vunpack.c.h.b16 %v781
    %v2959 = vunpack.c.l.b16 %v782
    %v2960 = vunpack.c.h.b16 %v782
    %v2961 = vunpack.c.l.b16 %v783
    %v2962 = vunpack.c.h.b16 %v783
    %v2963 = vunpack.c.l.b16 %v784
    %v2964 = vunpack.c.h.b16 %v784
    %v2965 = vunpack.c.l.b16 %v785
    %v2966 = vunpack.c.h.b16 %v785
    %v2967 = vunpack.c.l.b16 %v786
    %v2968 = vunpack.c.h.b16 %v786
    %v2969 = vunpack.c.l.b16 %v787
    %v2970 = vunpack.c.h.b16 %v787
    %v2971 = vunpack.c.l.b16 %v788
    %v2972 = vunpack.c.h.b16 %v788
    %v2973 = vunpack.c.l.b16 %v789
    %v2974 = vunpack.c.h.b16 %v789
    %v2975 = vunpack.c.l.b16 %v790
    %v2976 = vunpack.c.h.b16 %v790
    %v2977 = vunpack.c.l.b16 %v791
    %v2978 = vunpack.c.h.b16 %v791
    %v2979 = vunpack.c.l.b16 %v792
    %v2980 = vunpack.c.h.b16 %v792
    %v2981 = vunpack.c.l.b16 %v793
    %v2982 = vunpack.c.h.b16 %v793
    %v2983 = vunpack.c.l.b16 %v794
    %v2984 = vunpack.c.h.b16 %v794
    %v2985 = vunpack.c.l.b16 %v795
    %v2986 = vunpack.c.h.b16 %v795
    %v2987 = vunpack.c.l.b16 %v796
    %v2988 = vunpack.c.h.b16 %v796
    %v2989 = vunpack.c.l.b16 %v797
    %v2990 = vunpack.c.h.b16 %v797
    %v2991 = vunpack.c.l.b16 %v798
    %v2992 = vunpack.c.h.b16 %v798
    %v2993 = vunpack.c.l.b16 %v799
    %v2994 = vunpack.c.h.b16 %v799
    %v2995 = vunpack.c.l.b16 %v800
    %v2996 = vunpack.c.h.b16 %v800
    %v2997 = vunpack.c.l.b16 %v801
    %v2998 = vunpack.c.h.b16 %v801
    %v2999 = vunpack.c.l.b16 %v802
    %v3000 = vunpack.c.h.b16 %v802
    %v3001 = vunpack.c.l.b16 %v803
    %v3002 = vunpack.c.h.b16 %v803
    %v3003 = vunpack.c.l.b16 %v804
    %v3004 = vunpack.c.h.b16 %v804
    %v3005 = vunpack.c.l.b16 %v805
    %v3006 = vunpack.c.h.b16 %v805
    %v3007 = vunpack.c.l.b16 %v806
    %v3008 = vunpack.c.h.b16 %v806
    %v3009 = vunpack.c.l.b16 %v807
    %v3010 = vunpack.c.h.b16 %v807
    %v3011 = vunpack.c.l.b16 %v808
    %v3012 = vunpack.c.h.b16 %v808
    %v3013 = vunpack.c.l.b16 %v809
    %v3014 = vunpack.c.h.b16 %v809
    %v3015 = vunpack.c.l.b16 %v810
    %v3016 = vunpack.c.h.b16 %v810
    %v3017 = vunpack.c.l.b16 %v811
    %v3018 = vunpack.c.h.b16 %v811
    %v3019 = vunpack.c.l.b16 %v812
    %v3020 = vunpack.c.h.b16 %v812
    %v3021 = vunpack.c.l.b16 %v813
    %v3022 = vunpack.c.h.b16 %v813
    %v3023 = vunpack.c.l.b16 %v814
    %v3024 = vunpack.c.h.b16 %v814
    %v3025 = vunpack.c.l.b16 %v815
    %v3026 = vunpack.c.h.b16 %v815
    %v3027 = vunpack.c.l.b16 %v816
    %v3028 = vunpack.c.h.b16 %v816
    %v3029 = vunpack.c.l.b16 %v817
    %v3030 = vunpack.c.h.b16 %v817
    %v3031 = vunpack.c.l.b16 %v818
    %v3032 = vunpack.c.h.b16 %v818
    %v3033 = vunpack.c.l.b16 %v819
    %v3034 = vunpack.c.h.b16 %v819
    %v3035 = vunpack.c.l.b16 %v820
    %v3036 = vunpack.c.h.b16 %v820
    %v3037 = vunpack.c.l.b16 %v821
    %v3038 = vunpack.c.h.b16 %v821
    %v3039 = vunpack.c.l.b16 %v822
    %v3040 = vunpack.c.h.b16 %v822
    %v3041 = vunpack.c.l.b16 %v823
    %v3042 = vunpack.c.h.b16 %v823
    %v3043 = vunpack.c.l.b16 %v824
    %v3044 = vunpack.c.h.b16 %v824
    %v3045 = vunpack.c.l.b16 %v825
    %v3046 = vunpack.c.h.b16 %v825
    %v3047 = vunpack.c.l.b16 %v826
    %v3048 = vunpack.c.h.b16 %v826
    %v3049 = vunpack.c.l.b16 %v827
    %v3050 = vunpack.c.h.b16 %v827
    %v3051 = vunpack.c.l.b16 %v828
    %v3052 = vunpack.c.h.b16 %v828
    %v3053 = vunpack.c.l.b16 %v829
    %v3054 = vunpack.c.h.b16 %v829
    %v3055 = vunpack.c.l.b16 %v830
    %v3056 = vunpack.c.h.b16 %v830
    %v3057 = vunpack.c.l.b16 %v831
    %v3058 = vunpack.c.h.b16 %v831
    %v3059 = vunpack.c.l.b16 %v832
    %v3060 = vunpack.c.h.b16 %v832
    %v3061 = vunpack.c.l.b16 %v833
    %v3062 = vunpack.c.h.b16 %v833
    %v3063 = vunpack.c.l.b16 %v834
    %v3064 = vunpack.c.h.b16 %v834
    %v3065 = vunpack.c.l.b16 %v835
    %v3066 = vunpack.c.h.b16 %v835
    %v3067 = vunpack.c.l.b16 %v836
    %v3068 = vunpack.c.h.b16 %v836
    %v3069 = vunpack.c.l.b16 %v837
    %v3070 = vunpack.c.h.b16 %v837
    %v3071 = vunpack.c.l.b16 %v838
    %v3072 = vunpack.c.h.b16 %v838
    %v3073 = vunpack.c.l.b16 %v839
    %v3074 = vunpack.c.h.b16 %v839
    %v3075 = vunpack.c.l.b16 %v840
    %v3076 = vunpack.c.h.b16 %v840
    %v3077 = vunpack.c.l.b16 %v841
    %v3078 = vunpack.c.h.b16 %v841
    %v3079 = vunpack.c.l.b16 %v842
    %v3080 = vunpack.c.h.b16 %v842
    %v3081 = vunpack.c.l.b16 %v843
    %v3082 = vunpack.c.h.b16 %v843
    %v3083 = vunpack.c.l.b16 %v844
    %v3084 = vunpack.c.h.b16 %v844
    %v3085 = vunpack.c.l.b16 %v845
    %v3086 = vunpack.c.h.b16 %v845
    %v3087 = vunpack.c.l.b16 %v846
    %v3088 = vunpack.c.h.b16 %v846
    %v3089 = vunpack.c.l.b16 %v847
    %v3090 = vunpack.c.h.b16 %v847
    %v3091 = vunpack.c.l.b16 %v848
    %v3092 = vunpack.c.h.b16 %v848
    %v3093 = vunpack.c.l.b16 %v849
    %v3094 = vunpack.c.h.b16 %v849
    %v3095 = vunpack.c.l.b16 %v850
    %v3096 = vunpack.c.h.b16 %v850
    %v3097 = vunpack.c.l.b16 %v851
    %v3098 = vunpack.c.h.b16 %v851
    %v3099 = vunpack.c.l.b16 %v852
    %v3100 = vunpack.c.h.b16 %v852
    %v3101 = vunpack.c.l.b16 %v853
    %v3102 = vunpack.c.h.b16 %v853
    %v3103 = vunpack.c.l.b16 %v854
    %v3104 = vunpack.c.h.b16 %v854
    %v3105 = vunpack.c.l.b16 %v855
    %v3106 = vunpack.c.h.b16 %v855
    %v3107 = vunpack.c.l.b16 %v856
    %v3108 = vunpack.c.h.b16 %v856
    %v3109 = vunpack.c.l.b16 %v857
    %v3110 = vunpack.c.h.b16 %v857
    %v3111 = vunpack.c.l.b16 %v858
    %v3112 = vunpack.c.h.b16 %v858
    %v3113 = vunpack.c.l.b16 %v859
    %v3114 = vunpack.c.h.b16 %v859
    %v3115 = vunpack.c.l.b16 %v860
    %v3116 = vunpack.c.h.b16 %v860
    %v3117 = vunpack.c.l.b16 %v861
    %v3118 = vunpack.c.h.b16 %v861
    %v3119 = vunpack.c.l.b16 %v862
    %v3120 = vunpack.c.h.b16 %v862
    %v3121 = vunpack.c.l.b16 %v863
    %v3122 = vunpack.c.h.b16 %v863
    %v3123 = vunpack.c.l.b16 %v864
    %v3124 = vunpack.c.h.b16 %v864
    %v3125 = vunpack.c.l.b16 %v865
    %v3126 = vunpack.c.h.b16 %v865
    %v3127 = vunpack.c.l.b16 %v866
    %v3128 = vunpack.c.h.b16 %v866
    %v3129 = vunpack.c.l.b16 %v867
    %v3130 = vunpack.c.h.b16 %v867
    %v3131 = vunpack.c.l.b16 %v868
    %v3132 = vunpack.c.h.b16 %v868
    %v3133 = vunpack.c.l.b16 %v869
    %v3134 = vunpack.c.h.b16 %v869
    %v3135 = vunpack.c.l.b16 %v870
    %v3136 = vunpack.c.h.b16 %v870
    %v3137 = vunpack.c.l.b16 %v871
    %v3138 = vunpack.c.h.b16 %v871
    %v3139 = vunpack.c.l.b16 %v872
    %v3140 = vunpack.c.h.b16 %v872
    %v3141 = vunpack.c.l.b16 %v873
    %v3142 = vunpack.c.h.b16 %v873
    %v3143 = vunpack.c.l.b16 %v874
    %v3144 = vunpack.c.h.b16 %v874
    %v3145 = vunpack.c.l.b16 %v875
    %v3146 = vunpack.c.h.b16 %v875
    %v3147 = vunpack.c.l.b16 %v876
    %v3148 = vunpack.c.h.b16 %v876
    %v3149 = vunpack.c.l.b16 %v877
    %v3150 = vunpack.c.h.b16 %v877
    %v3151 = vunpack.c.l.b16 %v878
    %v3152 = vunpack.c.h.b16 %v878
    %v3153 = vunpack.c.l.b16 %v879
    %v3154 = vunpack.c.h.b16 %v879
    %v3155 = vunpack.c.l.b16 %v880
    %v3156 = vunpack.c.h.b16 %v880
    %v3157 = vunpack.c.l.b16 %v881
    %v3158 = vunpack.c.h.b16 %v881
    %v3159 = vunpack.c.l.b16 %v882
    %v3160 = vunpack.c.h.b16 %v882
    %v3161 = vunpack.c.l.b16 %v883
    %v3162 = vunpack.c.h.b16 %v883
    %v3163 = vunpack.c.l.b16 %v884
    %v3164 = vunpack.c.h.b16 %v884
    %v3165 = vunpack.c.l.b16 %v885
    %v3166 = vunpack.c.h.b16 %v885
    %v3167 = vunpack.c.l.b16 %v886
    %v3168 = vunpack.c.h.b16 %v886
    %v3169 = vunpack.c.l.b16 %v887
    %v3170 = vunpack.c.h.b16 %v887
    %v3171 = vunpack.c.l.b16 %v888
    %v3172 = vunpack.c.h.b16 %v888
    %v3173 = vunpack.c.l.b16 %v889
    %v3174 = vunpack.c.h.b16 %v889
    %v3175 = vunpack.c.l.b16 %v890
    %v3176 = vunpack.c.h.b16 %v890
    %v3177 = vunpack.c.l.b16 %v891
    %v3178 = vunpack.c.h.b16 %v891
    %v3179 = vunpack.c.l.b16 %v892
    %v3180 = vunpack.c.h.b16 %v892
    %v3181 = vunpack.c.l.b16 %v893
    %v3182 = vunpack.c.h.b16 %v893
    %v3183 = vunpack.c.l.b16 %v894
    %v3184 = vunpack.c.h.b16 %v894
    %v3185 = vunpack.c.l.b16 %v895
    %v3186 = vunpack.c.h.b16 %v895
    %v3187 = vunpack.c.l.b16 %v896
    %v3188 = vunpack.c.h.b16 %v896
    %v3189 = vunpack.c.l.b16 %v897
    %v3190 = vunpack.c.h.b16 %v897
    %v3191 = vunpack.c.l.b16 %v898
    %v3192 = vunpack.c.h.b16 %v898
    %v3193 = vunpack.c.l.b16 %v899
    %v3194 = vunpack.c.h.b16 %v899
    %v3195 = vunpack.c.l.b16 %v900
    %v3196 = vunpack.c.h.b16 %v900
    %v3197 = vunpack.c.l.b16 %v901
    %v3198 = vunpack.c.h.b16 %v901
    %v3199 = vunpack.c.l.b16 %v902
    %v3200 = vunpack.c.h.b16 %v902
    %v3201 = vunpack.c.l.b16 %v903
    %v3202 = vunpack.c.h.b16 %v903
    %v3203 = vunpack.c.l.b16 %v904
    %v3204 = vunpack.c.h.b16 %v904
    %v3205 = vunpack.c.l.b16 %v905
    %v3206 = vunpack.c.h.b16 %v905
    %v3207 = vunpack.c.l.b16 %v906
    %v3208 = vunpack.c.h.b16 %v906
    %v3209 = vunpack.c.l.b16 %v907
    %v3210 = vunpack.c.h.b16 %v907
    %v3211 = vunpack.c.l.b16 %v908
    %v3212 = vunpack.c.h.b16 %v908
    %v3213 = vunpack.c.l.b16 %v909
    %v3214 = vunpack.c.h.b16 %v909
    %v3215 = vunpack.c.l.b16 %v910
    %v3216 = vunpack.c.h.b16 %v910
    %v3217 = vunpack.c.l.b16 %v911
    %v3218 = vunpack.c.h.b16 %v911
    %v3219 = vunpack.c.l.b16 %v912
    %v3220 = vunpack.c.h.b16 %v912
    %v3221 = vunpack.c.l.b16 %v913
    %v3222 = vunpack.c.h.b16 %v913
    %v3223 = vunpack.c.l.b16 %v914
    %v3224 = vunpack.c.h.b16 %v914
    %v3225 = vunpack.c.l.b16 %v915
    %v3226 = vunpack.c.h.b16 %v915
    %v3227 = vunpack.c.l.b16 %v916
    %v3228 = vunpack.c.h.b16 %v916
    %v3229 = vunpack.c.l.b16 %v917
    %v3230 = vunpack.c.h.b16 %v917
    %v3231 = vunpack.c.l.b16 %v918
    %v3232 = vunpack.c.h.b16 %v918
    %v3233 = vunpack.c.l.b16 %v919
    %v3234 = vunpack.c.h.b16 %v919
    %v3235 = vunpack.c.l.b16 %v920
    %v3236 = vunpack.c.h.b16 %v920
    %v3237 = vunpack.c.l.b16 %v921
    %v3238 = vunpack.c.h.b16 %v921
    %v3239 = vunpack.c.l.b16 %v922
    %v3240 = vunpack.c.h.b16 %v922
    %v3241 = vunpack.c.l.b16 %v923
    %v3242 = vunpack.c.h.b16 %v923
    %v3243 = vunpack.c.l.b16 %v924
    %v3244 = vunpack.c.h.b16 %v924
    %v3245 = vunpack.c.l.b16 %v925
    %v3246 = vunpack.c.h.b16 %v925
    %v3247 = vunpack.c.l.b16 %v926
    %v3248 = vunpack.c.h.b16 %v926
    %v3249 = vunpack.c.l.b16 %v927
    %v3250 = vunpack.c.h.b16 %v927
    %v3251 = vunpack.c.l.b16 %v928
    %v3252 = vunpack.c.h.b16 %v928
    %v3253 = vunpack.c.l.b16 %v929
    %v3254 = vunpack.c.h.b16 %v929
    %v3255 = vunpack.c.l.b16 %v930
    %v3256 = vunpack.c.h.b16 %v930
    %v3257 = vunpack.c.l.b16 %v931
    %v3258 = vunpack.c.h.b16 %v931
    %v3259 = vunpack.c.l.b16 %v932
    %v3260 = vunpack.c.h.b16 %v932
    %v3261 = vunpack.c.l.b16 %v933
    %v3262 = vunpack.c.h.b16 %v933
    %v3263 = vunpack.c.l.b16 %v934
    %v3264 = vunpack.c.h.b16 %v934
    %v3265 = vunpack.c.l.b16 %v935
    %v3266 = vunpack.c.h.b16 %v935
    %v3267 = vunpack.c.l.b16 %v936
    %v3268 = vunpack.c.h.b16 %v936
    %v3269 = vunpack.c.l.b16 %v937
    %v3270 = vunpack.c.h.b16 %v937
    %v3271 = vunpack.c.l.b16 %v938
    %v3272 = vunpack.c.h.b16 %v938
    %v3273 = vunpack.c.l.b16 %v939
    %v3274 = vunpack.c.h.b16 %v939
    %v3275 = vunpack.c.l.b16 %v940
    %v3276 = vunpack.c.h.b16 %v940
    %v3277 = vunpack.c.l.b16 %v941
    %v3278 = vunpack.c.h.b16 %v941
    %v3279 = vunpack.c.l.b16 %v942
    %v3280 = vunpack.c.h.b16 %v942
    %v3281 = vunpack.c.l.b16 %v943
    %v3282 = vunpack.c.h.b16 %v943
    %v3283 = vunpack.c.l.b16 %v944
    %v3284 = vunpack.c.h.b16 %v944
    %v3285 = vunpack.c.l.b16 %v945
    %v3286 = vunpack.c.h.b16 %v945
    %v3287 = vunpack.c.l.b16 %v946
    %v3288 = vunpack.c.h.b16 %v946
    %v3289 = vunpack.c.l.b16 %v947
    %v3290 = vunpack.c.h.b16 %v947
    %v3291 = vunpack.c.l.b16 %v948
    %v3292 = vunpack.c.h.b16 %v948
    %v3293 = vunpack.c.l.b16 %v949
    %v3294 = vunpack.c.h.b16 %v949
    %v3295 = vunpack.c.l.b16 %v950
    %v3296 = vunpack.c.h.b16 %v950
    %v3297 = vunpack.c.l.b16 %v951
    %v3298 = vunpack.c.h.b16 %v951
    %v3299 = vunpack.c.l.b16 %v952
    %v3300 = vunpack.c.h.b16 %v952
    %v3301 = vunpack.c.l.b16 %v953
    %v3302 = vunpack.c.h.b16 %v953
    %v3303 = vunpack.c.l.b16 %v954
    %v3304 = vunpack.c.h.b16 %v954
    %v3305 = vunpack.c.l.b16 %v955
    %v3306 = vunpack.c.h.b16 %v955
    %v3307 = vunpack.c.l.b16 %v956
    %v3308 = vunpack.c.h.b16 %v956
    %v3309 = vunpack.c.l.b16 %v957
    %v3310 = vunpack.c.h.b16 %v957
    %v3311 = vunpack.c.l.b16 %v958
    %v3312 = vunpack.c.h.b16 %v958
    %v3313 = vunpack.c.l.b16 %v959
    %v3314 = vunpack.c.h.b16 %v959
    %v3315 = vunpack.c.l.b16 %v960
    %v3316 = vunpack.c.h.b16 %v960
    %v3317 = vunpack.c.l.b16 %v961
    %v3318 = vunpack.c.h.b16 %v961
    %v3319 = vunpack.c.l.b16 %v962
    %v3320 = vunpack.c.h.b16 %v962
    %v3321 = vunpack.c.l.b16 %v963
    %v3322 = vunpack.c.h.b16 %v963
    %v3323 = vunpack.c.l.b16 %v964
    %v3324 = vunpack.c.h.b16 %v964
    %v3325 = vunpack.c.l.b16 %v965
    %v3326 = vunpack.c.h.b16 %v965
    %v3327 = vunpack.c.l.b16 %v966
    %v3328 = vunpack.c.h.b16 %v966
    %v3329 = vunpack.c.l.b16 %v967
    %v3330 = vunpack.c.h.b16 %v967
    %v3331 = vunpack.c.l.b16 %v968
    %v3332 = vunpack.c.h.b16 %v968
    %v3333 = vunpack.c.l.b16 %v969
    %v3334 = vunpack.c.h.b16 %v969
    %v3335 = vunpack.c.l.b16 %v970
    %v3336 = vunpack.c.h.b16 %v970
    %v3337 = vunpack.c.l.b16 %v971
    %v3338 = vunpack.c.h.b16 %v971
    %v3339 = vunpack.c.l.b16 %v972
    %v3340 = vunpack.c.h.b16 %v972
    %v3341 = vunpack.c.l.b16 %v973
    %v3342 = vunpack.c.h.b16 %v973
    %v3343 = vunpack.c.l.b16 %v974
    %v3344 = vunpack.c.h.b16 %v974
    %v3345 = vunpack.c.l.b16 %v975
    %v3346 = vunpack.c.h.b16 %v975
    %v3347 = vunpack.c.l.b16 %v976
    %v3348 = vunpack.c.h.b16 %v976
    %v3349 = vunpack.c.l.b16 %v977
    %v3350 = vunpack.c.h.b16 %v977
    %v3351 = vunpack.c.l.b16 %v978
    %v3352 = vunpack.c.h.b16 %v978
    %v3353 = vpack.c.b16 %v1789, %v1785
    %v3354 = vpack.c.b16 %v1790, %v1786
    %v3355 = vpack.c.b16 %v1791, %v1787
    %v3356 = vpack.c.b16 %v1792, %v1788
    %v3357 = vpack.c.b16 %v1797, %v1793
    %v3358 = vpack.c.b16 %v1798, %v1794
    %v3359 = vpack.c.b16 %v1799, %v1795
    %v3360 = vpack.c.b16 %v1800, %v1796
    %v3361 = vpack.c.b16 %v1805, %v1801
    %v3362 = vpack.c.b16 %v1806, %v1802
    %v3363 = vpack.c.b16 %v1807, %v1803
    %v3364 = vpack.c.b16 %v1808, %v1804
    %v3365 = vpack.c.b16 %v1813, %v1809
    %v3366 = vpack.c.b16 %v1814, %v1810
    %v3367 = vpack.c.b16 %v1815, %v1811
    %v3368 = vpack.c.b16 %v1816, %v1812
    %v3369 = vpack.c.b16 %v1821, %v1817
    %v3370 = vpack.c.b16 %v1822, %v1818
    %v3371 = vpack.c.b16 %v1823, %v1819
    %v3372 = vpack.c.b16 %v1824, %v1820
    %v3373 = vpack.c.b16 %v1829, %v1825
    %v3374 = vpack.c.b16 %v1830, %v1826
    %v3375 = vpack.c.b16 %v1831, %v1827
    %v3376 = vpack.c.b16 %v1832, %v1828
    %v3377 = vpack.c.b16 %v1837, %v1833
    %v3378 = vpack.c.b16 %v1838, %v1834
    %v3379 = vpack.c.b16 %v1839, %v1835
    %v3380 = vpack.c.b16 %v1840, %v1836
    %v3381 = vpack.c.b16 %v1845, %v1841
    %v3382 = vpack.c.b16 %v1846, %v1842
    %v3383 = vpack.c.b16 %v1847, %v1843
    %v3384 = vpack.c.b16 %v1848, %v1844
    %v3385 = vpack.c.b16 %v1853, %v1849
    %v3386 = vpack.c.b16 %v1854, %v1850
    %v3387 = vpack.c.b16 %v1855, %v1851
    %v3388 = vpack.c.b16 %v1856, %v1852
    %v3389 = vpack.c.b16 %v1861, %v1857
    %v3390 = vpack.c.b16 %v1862, %v1858
    %v3391 = vpack.c.b16 %v1863, %v1859
    %v3392 = vpack.c.b16 %v1864, %v1860
    %v3393 = vpack.c.b16 %v1869, %v1865
    %v3394 = vpack.c.b16 %v1870, %v1866
    %v3395 = vpack.c.b16 %v1871, %v1867
    %v3396 = vpack.c.b16 %v1872, %v1868
    %v3397 = vpack.c.b16 %v1877, %v1873
    %v3398 = vpack.c.b16 %v1878, %v1874
    %v3399 = vpack.c.b16 %v1879, %v1875
    %v3400 = vpack.c.b16 %v1880, %v1876
    %v3401 = vpack.c.b16 %v1885, %v1881
    %v3402 = vpack.c.b16 %v1886, %v1882
    %v3403 = vpack.c.b16 %v1887, %v1883
    %v3404 = vpack.c.b16 %v1888, %v1884
    %v3405 = vpack.c.b16 %v1893, %v1889
    %v3406 = vpack.c.b16 %v1894, %v1890
    %v3407 = vpack.c.b16 %v1895, %v1891
    %v3408 = vpack.c.b16 %v1896, %v1892
    %v3409 = vpack.c.b16 %v1901, %v1897
    %v3410 = vpack.c.b16 %v1902, %v1898
    %v3411 = vpack.c.b16 %v1903, %v1899
    %v3412 = vpack.c.b16 %v1904, %v1900
    %v3413 = vpack.c.b16 %v1909, %v1905
    %v3414 = vpack.c.b16 %v1910, %v1906
    %v3415 = vpack.c.b16 %v1911, %v1907
    %v3416 = vpack.c.b16 %v1912, %v1908
    %v3417 = vpack.c.b16 %v1917, %v1913
    %v3418 = vpack.c.b16 %v1918, %v1914
    %v3419 = vpack.c.b16 %v1919, %v1915
    %v3420 = vpack.c.b16 %v1920, %v1916
    %v3421 = vpack.c.b16 %v1925, %v1921
    %v3422 = vpack.c.b16 %v1926, %v1922
    %v3423 = vpack.c.b16 %v1927, %v1923
    %v3424 = vpack.c.b16 %v1928, %v1924
    %v3425 = vpack.c.b16 %v1933, %v1929
    %v3426 = vpack.c.b16 %v1934, %v1930
    %v3427 = vpack.c.b16 %v1935, %v1931
    %v3428 = vpack.c.b16 %v1936, %v1932
    %v3429 = vpack.c.b16 %v1941, %v1937
    %v3430 = vpack.c.b16 %v1942, %v1938
    %v3431 = vpack.c.b16 %v1943, %v1939
    %v3432 = vpack.c.b16 %v1944, %v1940
    %v3433 = vpack.c.b16 %v1949, %v1945
    %v3434 = vpack.c.b16 %v1950, %v1946
    %v3435 = vpack.c.b16 %v1951, %v1947
    %v3436 = vpack.c.b16 %v1952, %v1948
    %v3437 = vpack.c.b16 %v1957, %v1953
    %v3438 = vpack.c.b16 %v1958, %v1954
    %v3439 = vpack.c.b16 %v1959, %v1955
    %v3440 = vpack.c.b16 %v1960, %v1956
    %v3441 = vpack.c.b16 %v1965, %v1961
    %v3442 = vpack.c.b16 %v1966, %v1962
    %v3443 = vpack.c.b16 %v1967, %v1963
    %v3444 = vpack.c.b16 %v1968, %v1964
    %v3445 = vpack.c.b16 %v1973, %v1969
    %v3446 = vpack.c.b16 %v1974, %v1970
    %v3447 = vpack.c.b16 %v1975, %v1971
    %v3448 = vpack.c.b16 %v1976, %v1972
    %v3449 = vpack.c.b16 %v1981, %v1977
    %v3450 = vpack.c.b16 %v1982, %v1978
    %v3451 = vpack.c.b16 %v1983, %v1979
    %v3452 = vpack.c.b16 %v1984, %v1980
    %v3453 = vpack.c.b16 %v1989, %v1985
    %v3454 = vpack.c.b16 %v1990, %v1986
    %v3455 = vpack.c.b16 %v1991, %v1987
    %v3456 = vpack.c.b16 %v1992, %v1988
    %v3457 = vpack.c.b16 %v1997, %v1993
    %v3458 = vpack.c.b16 %v1998, %v1994
    %v3459 = vpack.c.b16 %v1999, %v1995
    %v3460 = vpack.c.b16 %v2000, %v1996
    %v3461 = vpack.c.b16 %v2005, %v2001
    %v3462 = vpack.c.b16 %v2006, %v2002
    %v3463 = vpack.c.b16 %v2007, %v2003
    %v3464 = vpack.c.b16 %v2008, %v2004
    %v3465 = vpack.c.b16 %v2013, %v2009
    %v3466 = vpack.c.b16 %v2014, %v2010
    %v3467 = vpack.c.b16 %v2015, %v2011
    %v3468 = vpack.c.b16 %v2016, %v2012
    %v3469 = vpack.c.b16 %v2021, %v2017
    %v3470 = vpack.c.b16 %v2022, %v2018
    %v3471 = vpack.c.b16 %v2023, %v2019
    %v3472 = vpack.c.b16 %v2024, %v2020
    %v3473 = vpack.c.b16 %v2029, %v2025
    %v3474 = vpack.c.b16 %v2030, %v2026
    %v3475 = vpack.c.b16 %v2031, %v2027
    %v3476 = vpack.c.b16 %v2032, %v2028
    %v3477 = vpack.c.b16 %v2037, %v2033
    %v3478 = vpack.c.b16 %v2038, %v2034
    %v3479 = vpack.c.b16 %v2039, %v2035
    %v3480 = vpack.c.b16 %v2040, %v2036
    %v3481 = vpack.c.b16 %v2045, %v2041
    %v3482 = vpack.c.b16 %v2046, %v2042
    %v3483 = vpack.c.b16 %v2047, %v2043
    %v3484 = vpack.c.b16 %v2048, %v2044
    %v3485 = vpack.c.b16 %v2053, %v2049
    %v3486 = vpack.c.b16 %v2054, %v2050
    %v3487 = vpack.c.b16 %v2055, %v2051
    %v3488 = vpack.c.b16 %v2056, %v2052
    %v3489 = vpack.c.b16 %v2061, %v2057
    %v3490 = vpack.c.b16 %v2062, %v2058
    %v3491 = vpack.c.b16 %v2063, %v2059
    %v3492 = vpack.c.b16 %v2064, %v2060
    %v3493 = vpack.c.b16 %v2069, %v2065
    %v3494 = vpack.c.b16 %v2070, %v2066
    %v3495 = vpack.c.b16 %v2071, %v2067
    %v3496 = vpack.c.b16 %v2072, %v2068
    %v3497 = vpack.c.b16 %v2077, %v2073
    %v3498 = vpack.c.b16 %v2078, %v2074
    %v3499 = vpack.c.b16 %v2079, %v2075
    %v3500 = vpack.c.b16 %v2080, %v2076
    %v3501 = vpack.c.b16 %v2085, %v2081
    %v3502 = vpack.c.b16 %v2086, %v2082
    %v3503 = vpack.c.b16 %v2087, %v2083
    %v3504 = vpack.c.b16 %v2088, %v2084
    %v3505 = vpack.c.b16 %v2093, %v2089
    %v3506 = vpack.c.b16 %v2094, %v2090
    %v3507 = vpack.c.b16 %v2095, %v2091
    %v3508 = vpack.c.b16 %v2096, %v2092
    %v3509 = vpack.c.b16 %v2101, %v2097
    %v3510 = vpack.c.b16 %v2102, %v2098
    %v3511 = vpack.c.b16 %v2103, %v2099
    %v3512 = vpack.c.b16 %v2104, %v2100
    %v3513 = vpack.c.b16 %v2109, %v2105
    %v3514 = vpack.c.b16 %v2110, %v2106
    %v3515 = vpack.c.b16 %v2111, %v2107
    %v3516 = vpack.c.b16 %v2112, %v2108
    %v3517 = vpack.c.b16 %v2117, %v2113
    %v3518 = vpack.c.b16 %v2118, %v2114
    %v3519 = vpack.c.b16 %v2119, %v2115
    %v3520 = vpack.c.b16 %v2120, %v2116
    %v3521 = vpack.c.b16 %v2125, %v2121
    %v3522 = vpack.c.b16 %v2126, %v2122
    %v3523 = vpack.c.b16 %v2127, %v2123
    %v3524 = vpack.c.b16 %v2128, %v2124
    %v3525 = vpack.c.b16 %v2133, %v2129
    %v3526 = vpack.c.b16 %v2134, %v2130
    %v3527 = vpack.c.b16 %v2135, %v2131
    %v3528 = vpack.c.b16 %v2136, %v2132
    %v3529 = vpack.c.b16 %v2141, %v2137
    %v3530 = vpack.c.b16 %v2142, %v2138
    %v3531 = vpack.c.b16 %v2143, %v2139
    %v3532 = vpack.c.b16 %v2144, %v2140
    %v3533 = vpack.c.b16 %v2149, %v2145
    %v3534 = vpack.c.b16 %v2150, %v2146
    %v3535 = vpack.c.b16 %v2151, %v2147
    %v3536 = vpack.c.b16 %v2152, %v2148
    %v3537 = vpack.c.b16 %v2157, %v2153
    %v3538 = vpack.c.b16 %v2158, %v2154
    %v3539 = vpack.c.b16 %v2159, %v2155
    %v3540 = vpack.c.b16 %v2160, %v2156
    %v3541 = vpack.c.b16 %v2165, %v2161
    %v3542 = vpack.c.b16 %v2166, %v2162
    %v3543 = vpack.c.b16 %v2167, %v2163
    %v3544 = vpack.c.b16 %v2168, %v2164
    %v3545 = vpack.c.b16 %v2173, %v2169
    %v3546 = vpack.c.b16 %v2174, %v2170
    %v3547 = vpack.c.b16 %v2175, %v2171
    %v3548 = vpack.c.b16 %v2176, %v2172
    %v3549 = vpack.c.b16 %v2181, %v2177
    %v3550 = vpack.c.b16 %v2182, %v2178
    %v3551 = vpack.c.b16 %v2183, %v2179
    %v3552 = vpack.c.b16 %v2184, %v2180
    %v3553 = vpack.c.b16 %v2189, %v2185
    %v3554 = vpack.c.b16 %v2190, %v2186
    %v3555 = vpack.c.b16 %v2191, %v2187
    %v3556 = vpack.c.b16 %v2192, %v2188
    %v3557 = vpack.c.b16 %v2197, %v2193
    %v3558 = vpack.c.b16 %v2198, %v2194
    %v3559 = vpack.c.b16 %v2199, %v2195
    %v3560 = vpack.c.b16 %v2200, %v2196
    %v3561 = vpack.c.b16 %v2205, %v2201
    %v3562 = vpack.c.b16 %v2206, %v2202
    %v3563 = vpack.c.b16 %v2207, %v2203
    %v3564 = vpack.c.b16 %v2208, %v2204
    %v3565 = vpack.c.b16 %v2213, %v2209
    %v3566 = vpack.c.b16 %v2214, %v2210
    %v3567 = vpack.c.b16 %v2215, %v2211
    %v3568 = vpack.c.b16 %v2216, %v2212
    %v3569 = vpack.c.b16 %v2221, %v2217
    %v3570 = vpack.c.b16 %v2222, %v2218
    %v3571 = vpack.c.b16 %v2223, %v2219
    %v3572 = vpack.c.b16 %v2224, %v2220
    %v3573 = vpack.c.b16 %v2229, %v2225
    %v3574 = vpack.c.b16 %v2230, %v2226
    %v3575 = vpack.c.b16 %v2231, %v2227
    %v3576 = vpack.c.b16 %v2232, %v2228
    %v3577 = vpack.c.b16 %v2237, %v2233
    %v3578 = vpack.c.b16 %v2238, %v2234
    %v3579 = vpack.c.b16 %v2239, %v2235
    %v3580 = vpack.c.b16 %v2240, %v2236
    %v3581 = vpack.c.b16 %v2245, %v2241
    %v3582 = vpack.c.b16 %v2246, %v2242
    %v3583 = vpack.c.b16 %v2247, %v2243
    %v3584 = vpack.c.b16 %v2248, %v2244
    %v3585 = vpack.c.b16 %v2253, %v2249
    %v3586 = vpack.c.b16 %v2254, %v2250
    %v3587 = vpack.c.b16 %v2255, %v2251
    %v3588 = vpack.c.b16 %v2256, %v2252
    %v3589 = vpack.c.b16 %v2261, %v2257
    %v3590 = vpack.c.b16 %v2262, %v2258
    %v3591 = vpack.c.b16 %v2263, %v2259
    %v3592 = vpack.c.b16 %v2264, %v2260
    %v3593 = vpack.c.b16 %v2269, %v2265
    %v3594 = vpack.c.b16 %v2270, %v2266
    %v3595 = vpack.c.b16 %v2271, %v2267
    %v3596 = vpack.c.b16 %v2272, %v2268
    %v3597 = vpack.c.b16 %v2277, %v2273
    %v3598 = vpack.c.b16 %v2278, %v2274
    %v3599 = vpack.c.b16 %v2279, %v2275
    %v3600 = vpack.c.b16 %v2280, %v2276
    %v3601 = vpack.c.b16 %v2285, %v2281
    %v3602 = vpack.c.b16 %v2286, %v2282
    %v3603 = vpack.c.b16 %v2287, %v2283
    %v3604 = vpack.c.b16 %v2288, %v2284
    %v3605 = vpack.c.b16 %v2293, %v2289
    %v3606 = vpack.c.b16 %v2294, %v2290
    %v3607 = vpack.c.b16 %v2295, %v2291
    %v3608 = vpack.c.b16 %v2296, %v2292
    %v3609 = vpack.c.b16 %v2301, %v2297
    %v3610 = vpack.c.b16 %v2302, %v2298
    %v3611 = vpack.c.b16 %v2303, %v2299
    %v3612 = vpack.c.b16 %v2304, %v2300
    %v3613 = vpack.c.b16 %v2309, %v2305
    %v3614 = vpack.c.b16 %v2310, %v2306
    %v3615 = vpack.c.b16 %v2311, %v2307
    %v3616 = vpack.c.b16 %v2312, %v2308
    %v3617 = vpack.c.b16 %v2317, %v2313
    %v3618 = vpack.c.b16 %v2318, %v2314
    %v3619 = vpack.c.b16 %v2319, %v2315
    %v3620 = vpack.c.b16 %v2320, %v2316
    %v3621 = vpack.c.b16 %v2325, %v2321
    %v3622 = vpack.c.b16 %v2326, %v2322
    %v3623 = vpack.c.b16 %v2327, %v2323
    %v3624 = vpack.c.b16 %v2328, %v2324
    %v3625 = vpack.c.b16 %v2333, %v2329
    %v3626 = vpack.c.b16 %v2334, %v2330
    %v3627 = vpack.c.b16 %v2335, %v2331
    %v3628 = vpack.c.b16 %v2336, %v2332
    %v3629 = vpack.c.b16 %v2341, %v2337
    %v3630 = vpack.c.b16 %v2342, %v2338
    %v3631 = vpack.c.b16 %v2343, %v2339
    %v3632 = vpack.c.b16 %v2344, %v2340
    %v3633 = vpack.c.b16 %v2349, %v2345
    %v3634 = vpack.c.b16 %v2350, %v2346
    %v3635 = vpack.c.b16 %v2351, %v2347
    %v3636 = vpack.c.b16 %v2352, %v2348
    %v3637 = vpack.c.b16 %v2357, %v2353
    %v3638 = vpack.c.b16 %v2358, %v2354
    %v3639 = vpack.c.b16 %v2359, %v2355
    %v3640 = vpack.c.b16 %v2360, %v2356
    %v3641 = vpack.c.b16 %v2365, %v2361
    %v3642 = vpack.c.b16 %v2366, %v2362
    %v3643 = vpack.c.b16 %v2367, %v2363
    %v3644 = vpack.c.b16 %v2368, %v2364
    %v3645 = vpack.c.b16 %v2373, %v2369
    %v3646 = vpack.c.b16 %v2374, %v2370
    %v3647 = vpack.c.b16 %v2375, %v2371
    %v3648 = vpack.c.b16 %v2376, %v2372
    %v3649 = vpack.c.b16 %v2381, %v2377
    %v3650 = vpack.c.b16 %v2382, %v2378
    %v3651 = vpack.c.b16 %v2383, %v2379
    %v3652 = vpack.c.b16 %v2384, %v2380
    %v3653 = vpack.c.b16 %v2389, %v2385
    %v3654 = vpack.c.b16 %v2390, %v2386
    %v3655 = vpack.c.b16 %v2391, %v2387
    %v3656 = vpack.c.b16 %v2392, %v2388
    %v3657 = vpack.c.b16 %v2397, %v2393
    %v3658 = vpack.c.b16 %v2398, %v2394
    %v3659 = vpack.c.b16 %v2399, %v2395
    %v3660 = vpack.c.b16 %v2400, %v2396
    %v3661 = vpack.c.b16 %v2405, %v2401
    %v3662 = vpack.c.b16 %v2406, %v2402
    %v3663 = vpack.c.b16 %v2407, %v2403
    %v3664 = vpack.c.b16 %v2408, %v2404
    %v3665 = vpack.c.b16 %v2413, %v2409
    %v3666 = vpack.c.b16 %v2414, %v2410
    %v3667 = vpack.c.b16 %v2415, %v2411
    %v3668 = vpack.c.b16 %v2416, %v2412
    %v3669 = vpack.c.b16 %v2421, %v2417
    %v3670 = vpack.c.b16 %v2422, %v2418
    %v3671 = vpack.c.b16 %v2423, %v2419
    %v3672 = vpack.c.b16 %v2424, %v2420
    %v3673 = vpack.c.b16 %v2429, %v2425
    %v3674 = vpack.c.b16 %v2430, %v2426
    %v3675 = vpack.c.b16 %v2431, %v2427
    %v3676 = vpack.c.b16 %v2432, %v2428
    %v3677 = vpack.c.b16 %v2437, %v2433
    %v3678 = vpack.c.b16 %v2438, %v2434
    %v3679 = vpack.c.b16 %v2439, %v2435
    %v3680 = vpack.c.b16 %v2440, %v2436
    %v3681 = vpack.c.b16 %v2445, %v2441
    %v3682 = vpack.c.b16 %v2446, %v2442
    %v3683 = vpack.c.b16 %v2447, %v2443
    %v3684 = vpack.c.b16 %v2448, %v2444
    %v3685 = vpack.c.b16 %v2453, %v2449
    %v3686 = vpack.c.b16 %v2454, %v2450
    %v3687 = vpack.c.b16 %v2455, %v2451
    %v3688 = vpack.c.b16 %v2456, %v2452
    %v3689 = vpack.c.b16 %v2461, %v2457
    %v3690 = vpack.c.b16 %v2462, %v2458
    %v3691 = vpack.c.b16 %v2463, %v2459
    %v3692 = vpack.c.b16 %v2464, %v2460
    %v3693 = vpack.c.b16 %v2469, %v2465
    %v3694 = vpack.c.b16 %v2470, %v2466
    %v3695 = vpack.c.b16 %v2471, %v2467
    %v3696 = vpack.c.b16 %v2472, %v2468
    %v3697 = vpack.c.b16 %v2477, %v2473
    %v3698 = vpack.c.b16 %v2478, %v2474
    %v3699 = vpack.c.b16 %v2479, %v2475
    %v3700 = vpack.c.b16 %v2480, %v2476
    %v3701 = vpack.c.b16 %v2485, %v2481
    %v3702 = vpack.c.b16 %v2486, %v2482
    %v3703 = vpack.c.b16 %v2487, %v2483
    %v3704 = vpack.c.b16 %v2488, %v2484
    %v3705 = vpack.c.b16 %v2493, %v2489
    %v3706 = vpack.c.b16 %v2494, %v2490
    %v3707 = vpack.c.b16 %v2495, %v2491
    %v3708 = vpack.c.b16 %v2496, %v2492
    %v3709 = vpack.c.b16 %v2501, %v2497
    %v3710 = vpack.c.b16 %v2502, %v2498
    %v3711 = vpack.c.b16 %v2503, %v2499
    %v3712 = vpack.c.b16 %v2504, %v2500
    %v3713 = vpack.c.b16 %v2509, %v2505
    %v3714 = vpack.c.b16 %v2510, %v2506
    %v3715 = vpack.c.b16 %v2511, %v2507
    %v3716 = vpack.c.b16 %v2512, %v2508
    %v3717 = vpack.c.b16 %v2517, %v2513
    %v3718 = vpack.c.b16 %v2518, %v2514
    %v3719 = vpack.c.b16 %v2519, %v2515
    %v3720 = vpack.c.b16 %v2520, %v2516
    %v3721 = vpack.c.b16 %v2525, %v2521
    %v3722 = vpack.c.b16 %v2526, %v2522
    %v3723 = vpack.c.b16 %v2527, %v2523
    %v3724 = vpack.c.b16 %v2528, %v2524
    %v3725 = vpack.c.b16 %v2533, %v2529
    %v3726 = vpack.c.b16 %v2534, %v2530
    %v3727 = vpack.c.b16 %v2535, %v2531
    %v3728 = vpack.c.b16 %v2536, %v2532
    %v3729 = vpack.c.b16 %v2541, %v2537
    %v3730 = vpack.c.b16 %v2542, %v2538
    %v3731 = vpack.c.b16 %v2543, %v2539
    %v3732 = vpack.c.b16 %v2544, %v2540
    %v3733 = vpack.c.b16 %v2549, %v2545
    %v3734 = vpack.c.b16 %v2550, %v2546
    %v3735 = vpack.c.b16 %v2551, %v2547
    %v3736 = vpack.c.b16 %v2552, %v2548
    %v3737 = vpack.c.b16 %v2557, %v2553
    %v3738 = vpack.c.b16 %v2558, %v2554
    %v3739 = vpack.c.b16 %v2559, %v2555
    %v3740 = vpack.c.b16 %v2560, %v2556
    %v3741 = vpack.c.b16 %v2565, %v2561
    %v3742 = vpack.c.b16 %v2566, %v2562
    %v3743 = vpack.c.b16 %v2567, %v2563
    %v3744 = vpack.c.b16 %v2568, %v2564
    %v3745 = vpack.c.b16 %v2573, %v2569
    %v3746 = vpack.c.b16 %v2574, %v2570
    %v3747 = vpack.c.b16 %v2575, %v2571
    %v3748 = vpack.c.b16 %v2576, %v2572
    %v3749 = vpack.c.b16 %v2581, %v2577
    %v3750 = vpack.c.b16 %v2582, %v2578
    %v3751 = vpack.c.b16 %v2583, %v2579
    %v3752 = vpack.c.b16 %v2584, %v2580
    %v3753 = vpack.c.b16 %v2589, %v2585
    %v3754 = vpack.c.b16 %v2590, %v2586
    %v3755 = vpack.c.b16 %v2591, %v2587
    %v3756 = vpack.c.b16 %v2592, %v2588
    %v3757 = vpack.c.b16 %v2597, %v2593
    %v3758 = vpack.c.b16 %v2598, %v2594
    %v3759 = vpack.c.b16 %v2599, %v2595
    %v3760 = vpack.c.b16 %v2600, %v2596
    %v3761 = vpack.c.b16 %v2605, %v2601
    %v3762 = vpack.c.b16 %v2606, %v2602
    %v3763 = vpack.c.b16 %v2607, %v2603
    %v3764 = vpack.c.b16 %v2608, %v2604
    %v3765 = vpack.c.b16 %v2613, %v2609
    %v3766 = vpack.c.b16 %v2614, %v2610
    %v3767 = vpack.c.b16 %v2615, %v2611
    %v3768 = vpack.c.b16 %v2616, %v2612
    %v3769 = vpack.c.b16 %v2621, %v2617
    %v3770 = vpack.c.b16 %v2622, %v2618
    %v3771 = vpack.c.b16 %v2623, %v2619
    %v3772 = vpack.c.b16 %v2624, %v2620
    %v3773 = vpack.c.b16 %v2629, %v2625
    %v3774 = vpack.c.b16 %v2630, %v2626
    %v3775 = vpack.c.b16 %v2631, %v2627
    %v3776 = vpack.c.b16 %v2632, %v2628
    %v3777 = vpack.c.b16 %v2637, %v2633
    %v3778 = vpack.c.b16 %v2638, %v2634
    %v3779 = vpack.c.b16 %v2639, %v2635
    %v3780 = vpack.c.b16 %v2640, %v2636
    %v3781 = vpack.c.b16 %v2645, %v2641
    %v3782 = vpack.c.b16 %v2646, %v2642
    %v3783 = vpack.c.b16 %v2647, %v2643
    %v3784 = vpack.c.b16 %v2648, %v2644
    %v3785 = vpack.c.b16 %v2653, %v2649
    %v3786 = vpack.c.b16 %v2654, %v2650
    %v3787 = vpack.c.b16 %v2655, %v2651
    %v3788 = vpack.c.b16 %v2656, %v2652
    %v3789 = vpack.c.b16 %v2661, %v2657
    %v3790 = vpack.c.b16 %v2662, %v2658
    %v3791 = vpack.c.b16 %v2663, %v2659
    %v3792 = vpack.c.b16 %v2664, %v2660
    %v3793 = vpack.c.b16 %v2669, %v2665
    %v3794 = vpack.c.b16 %v2670, %v2666
    %v3795 = vpack.c.b16 %v2671, %v2667
    %v3796 = vpack.c.b16 %v2672, %v2668
    %v3797 = vpack.c.b16 %v2677, %v2673
    %v3798 = vpack.c.b16 %v2678, %v2674
    %v3799 = vpack.c.b16 %v2679, %v2675
    %v3800 = vpack.c.b16 %v2680, %v2676
    %v3801 = vpack.c.b16 %v2685, %v2681
    %v3802 = vpack.c.b16 %v2686, %v2682
    %v3803 = vpack.c.b16 %v2687, %v2683
    %v3804 = vpack.c.b16 %v2688, %v2684
    %v3805 = vpack.c.b16 %v2693, %v2689
    %v3806 = vpack.c.b16 %v2694, %v2690
    %v3807 = vpack.c.b16 %v2695, %v2691
    %v3808 = vpack.c.b16 %v2696, %v2692
    %v3809 = vpack.c.b16 %v2701, %v2697
    %v3810 = vpack.c.b16 %v2702, %v2698
    %v3811 = vpack.c.b16 %v2703, %v2699
    %v3812 = vpack.c.b16 %v2704, %v2700
    %v3813 = vpack.c.b16 %v2709, %v2705
    %v3814 = vpack.c.b16 %v2710, %v2706
    %v3815 = vpack.c.b16 %v2711, %v2707
    %v3816 = vpack.c.b16 %v2712, %v2708
    %v3817 = vpack.c.b16 %v2717, %v2713
    %v3818 = vpack.c.b16 %v2718, %v2714
    %v3819 = vpack.c.b16 %v2719, %v2715
    %v3820 = vpack.c.b16 %v2720, %v2716
    %v3821 = vpack.c.b16 %v2725, %v2721
    %v3822 = vpack.c.b16 %v2726, %v2722
    %v3823 = vpack.c.b16 %v2727, %v2723
    %v3824 = vpack.c.b16 %v2728, %v2724
    %v3825 = vpack.c.b16 %v2733, %v2729
    %v3826 = vpack.c.b16 %v2734, %v2730
    %v3827 = vpack.c.b16 %v2735, %v2731
    %v3828 = vpack.c.b16 %v2736, %v2732
    %v3829 = vpack.c.b16 %v2741, %v2737
    %v3830 = vpack.c.b16 %v2742, %v2738
    %v3831 = vpack.c.b16 %v2743, %v2739
    %v3832 = vpack.c.b16 %v2744, %v2740
    %v3833 = vpack.c.b16 %v2749, %v2745
    %v3834 = vpack.c.b16 %v2750, %v2746
    %v3835 = vpack.c.b16 %v2751, %v2747
    %v3836 = vpack.c.b16 %v2752, %v2748
    %v3837 = vpack.c.b16 %v2757, %v2753
    %v3838 = vpack.c.b16 %v2758, %v2754
    %v3839 = vpack.c.b16 %v2759, %v2755
    %v3840 = vpack.c.b16 %v2760, %v2756
    %v3841 = vpack.c.b16 %v2765, %v2761
    %v3842 = vpack.c.b16 %v2766, %v2762
    %v3843 = vpack.c.b16 %v2767, %v2763
    %v3844 = vpack.c.b16 %v2768, %v2764
    %v3845 = vpack.c.b16 %v2773, %v2769
    %v3846 = vpack.c.b16 %v2774, %v2770
    %v3847 = vpack.c.b16 %v2775, %v2771
    %v3848 = vpack.c.b16 %v2776, %v2772
    %v3849 = vpack.c.b16 %v2781, %v2777
    %v3850 = vpack.c.b16 %v2782, %v2778
    %v3851 = vpack.c.b16 %v2783, %v2779
    %v3852 = vpack.c.b16 %v2784, %v2780
    %v3853 = vpack.c.b16 %v2789, %v2785
    %v3854 = vpack.c.b16 %v2790, %v2786
    %v3855 = vpack.c.b16 %v2791, %v2787
    %v3856 = vpack.c.b16 %v2792, %v2788
    %v3857 = vpack.c.b16 %v2797, %v2793
    %v3858 = vpack.c.b16 %v2798, %v2794
    %v3859 = vpack.c.b16 %v2799, %v2795
    %v3860 = vpack.c.b16 %v2800, %v2796
    %v3861 = vpack.c.b16 %v2805, %v2801
    %v3862 = vpack.c.b16 %v2806, %v2802
    %v3863 = vpack.c.b16 %v2807, %v2803
    %v3864 = vpack.c.b16 %v2808, %v2804
    %v3865 = vpack.c.b16 %v2813, %v2809
    %v3866 = vpack.c.b16 %v2814, %v2810
    %v3867 = vpack.c.b16 %v2815, %v2811
    %v3868 = vpack.c.b16 %v2816, %v2812
    %v3869 = vpack.c.b16 %v2821, %v2817
    %v3870 = vpack.c.b16 %v2822, %v2818
    %v3871 = vpack.c.b16 %v2823, %v2819
    %v3872 = vpack.c.b16 %v2824, %v2820
    %v3873 = vpack.c.b16 %v2829, %v2825
    %v3874 = vpack.c.b16 %v2830, %v2826
    %v3875 = vpack.c.b16 %v2831, %v2827
    %v3876 = vpack.c.b16 %v2832, %v2828
    %v3877 = vpack.c.b16 %v2837, %v2833
    %v3878 = vpack.c.b16 %v2838, %v2834
    %v3879 = vpack.c.b16 %v2839, %v2835
    %v3880 = vpack.c.b16 %v2840, %v2836
    %v3881 = vpack.c.b16 %v2845, %v2841
    %v3882 = vpack.c.b16 %v2846, %v2842
    %v3883 = vpack.c.b16 %v2847, %v2843
    %v3884 = vpack.c.b16 %v2848, %v2844
    %v3885 = vpack.c.b16 %v2853, %v2849
    %v3886 = vpack.c.b16 %v2854, %v2850
    %v3887 = vpack.c.b16 %v2855, %v2851
    %v3888 = vpack.c.b16 %v2856, %v2852
    %v3889 = vpack.c.b16 %v2861, %v2857
    %v3890 = vpack.c.b16 %v2862, %v2858
    %v3891 = vpack.c.b16 %v2863, %v2859
    %v3892 = vpack.c.b16 %v2864, %v2860
    %v3893 = vpack.c.b16 %v2869, %v2865
    %v3894 = vpack.c.b16 %v2870, %v2866
    %v3895 = vpack.c.b16 %v2871, %v2867
    %v3896 = vpack.c.b16 %v2872, %v2868
    %v3897 = vpack.c.b16 %v2877, %v2873
    %v3898 = vpack.c.b16 %v2878, %v2874
    %v3899 = vpack.c.b16 %v2879, %v2875
    %v3900 = vpack.c.b16 %v2880, %v2876
    %v3901 = vpack.c.b16 %v2885, %v2881
    %v3902 = vpack.c.b16 %v2886, %v2882
    %v3903 = vpack.c.b16 %v2887, %v2883
    %v3904 = vpack.c.b16 %v2888, %v2884
    %v3905 = vpack.c.b16 %v2893, %v2889
    %v3906 = vpack.c.b16 %v2894, %v2890
    %v3907 = vpack.c.b16 %v2895, %v2891
    %v3908 = vpack.c.b16 %v2896, %v2892
    %v3909 = vpack.c.b16 %v2901, %v2897
    %v3910 = vpack.c.b16 %v2902, %v2898
    %v3911 = vpack.c.b16 %v2903, %v2899
    %v3912 = vpack.c.b16 %v2904, %v2900
    %v3913 = vpack.c.b16 %v2909, %v2905
    %v3914 = vpack.c.b16 %v2910, %v2906
    %v3915 = vpack.c.b16 %v2911, %v2907
    %v3916 = vpack.c.b16 %v2912, %v2908
    %v3917 = vpack.c.b16 %v2917, %v2913
    %v3918 = vpack.c.b16 %v2918, %v2914
    %v3919 = vpack.c.b16 %v2919, %v2915
    %v3920 = vpack.c.b16 %v2920, %v2916
    %v3921 = vpack.c.b16 %v2925, %v2921
    %v3922 = vpack.c.b16 %v2926, %v2922
    %v3923 = vpack.c.b16 %v2927, %v2923
    %v3924 = vpack.c.b16 %v2928, %v2924
    %v3925 = vpack.c.b16 %v2933, %v2929
    %v3926 = vpack.c.b16 %v2934, %v2930
    %v3927 = vpack.c.b16 %v2935, %v2931
    %v3928 = vpack.c.b16 %v2936, %v2932
    %v3929 = vpack.c.b16 %v2941, %v2937
    %v3930 = vpack.c.b16 %v2942, %v2938
    %v3931 = vpack.c.b16 %v2943, %v2939
    %v3932 = vpack.c.b16 %v2944, %v2940
    %v3933 = vpack.c.b16 %v2949, %v2945
    %v3934 = vpack.c.b16 %v2950, %v2946
    %v3935 = vpack.c.b16 %v2951, %v2947
    %v3936 = vpack.c.b16 %v2952, %v2948
    %v3937 = vpack.c.b16 %v2957, %v2953
    %v3938 = vpack.c.b16 %v2958, %v2954
    %v3939 = vpack.c.b16 %v2959, %v2955
    %v3940 = vpack.c.b16 %v2960, %v2956
    %v3941 = vpack.c.b16 %v2965, %v2961
    %v3942 = vpack.c.b16 %v2966, %v2962
    %v3943 = vpack.c.b16 %v2967, %v2963
    %v3944 = vpack.c.b16 %v2968, %v2964
    %v3945 = vpack.c.b16 %v2973, %v2969
    %v3946 = vpack.c.b16 %v2974, %v2970
    %v3947 = vpack.c.b16 %v2975, %v2971
    %v3948 = vpack.c.b16 %v2976, %v2972
    %v3949 = vpack.c.b16 %v2981, %v2977
    %v3950 = vpack.c.b16 %v2982, %v2978
    %v3951 = vpack.c.b16 %v2983, %v2979
    %v3952 = vpack.c.b16 %v2984, %v2980
    %v3953 = vpack.c.b16 %v2989, %v2985
    %v3954 = vpack.c.b16 %v2990, %v2986
    %v3955 = vpack.c.b16 %v2991, %v2987
    %v3956 = vpack.c.b16 %v2992, %v2988
    %v3957 = vpack.c.b16 %v2997, %v2993
    %v3958 = vpack.c.b16 %v2998, %v2994
    %v3959 = vpack.c.b16 %v2999, %v2995
    %v3960 = vpack.c.b16 %v3000, %v2996
    %v3961 = vpack.c.b16 %v3005, %v3001
    %v3962 = vpack.c.b16 %v3006, %v3002
    %v3963 = vpack.c.b16 %v3007, %v3003
    %v3964 = vpack.c.b16 %v3008, %v3004
    %v3965 = vpack.c.b16 %v3013, %v3009
    %v3966 = vpack.c.b16 %v3014, %v3010
    %v3967 = vpack.c.b16 %v3015, %v3011
    %v3968 = vpack.c.b16 %v3016, %v3012
    %v3969 = vpack.c.b16 %v3021, %v3017
    %v3970 = vpack.c.b16 %v3022, %v3018
    %v3971 = vpack.c.b16 %v3023, %v3019
    %v3972 = vpack.c.b16 %v3024, %v3020
    %v3973 = vpack.c.b16 %v3029, %v3025
    %v3974 = vpack.c.b16 %v3030, %v3026
    %v3975 = vpack.c.b16 %v3031, %v3027
    %v3976 = vpack.c.b16 %v3032, %v3028
    %v3977 = vpack.c.b16 %v3037, %v3033
    %v3978 = vpack.c.b16 %v3038, %v3034
    %v3979 = vpack.c.b16 %v3039, %v3035
    %v3980 = vpack.c.b16 %v3040, %v3036
    %v3981 = vpack.c.b16 %v3045, %v3041
    %v3982 = vpack.c.b16 %v3046, %v3042
    %v3983 = vpack.c.b16 %v3047, %v3043
    %v3984 = vpack.c.b16 %v3048, %v3044
    %v3985 = vpack.c.b16 %v3053, %v3049
    %v3986 = vpack.c.b16 %v3054, %v3050
    %v3987 = vpack.c.b16 %v3055, %v3051
    %v3988 = vpack.c.b16 %v3056, %v3052
    %v3989 = vpack.c.b16 %v3061, %v3057
    %v3990 = vpack.c.b16 %v3062, %v3058
    %v3991 = vpack.c.b16 %v3063, %v3059
    %v3992 = vpack.c.b16 %v3064, %v3060
    %v3993 = vpack.c.b16 %v3069, %v3065
    %v3994 = vpack.c.b16 %v3070, %v3066
    %v3995 = vpack.c.b16 %v3071, %v3067
    %v3996 = vpack.c.b16 %v3072, %v3068
    %v3997 = vpack.c.b16 %v3077, %v3073
    %v3998 = vpack.c.b16 %v3078, %v3074
    %v3999 = vpack.c.b16 %v3079, %v3075
    %v4000 = vpack.c.b16 %v3080, %v3076
    %v4001 = vpack.c.b16 %v3085, %v3081
    %v4002 = vpack.c.b16 %v3086, %v3082
    %v4003 = vpack.c.b16 %v3087, %v3083
    %v4004 = vpack.c.b16 %v3088, %v3084
    %v4005 = vpack.c.b16 %v3093, %v3089
    %v4006 = vpack.c.b16 %v3094, %v3090
    %v4007 = vpack.c.b16 %v3095, %v3091
    %v4008 = vpack.c.b16 %v3096, %v3092
    %v4009 = vpack.c.b16 %v3101, %v3097
    %v4010 = vpack.c.b16 %v3102, %v3098
    %v4011 = vpack.c.b16 %v3103, %v3099
    %v4012 = vpack.c.b16 %v3104, %v3100
    %v4013 = vpack.c.b16 %v3109, %v3105
    %v4014 = vpack.c.b16 %v3110, %v3106
    %v4015 = vpack.c.b16 %v3111, %v3107
    %v4016 = vpack.c.b16 %v3112, %v3108
    %v4017 = vpack.c.b16 %v3117, %v3113
    %v4018 = vpack.c.b16 %v3118, %v3114
    %v4019 = vpack.c.b16 %v3119, %v3115
    %v4020 = vpack.c.b16 %v3120, %v3116
    %v4021 = vpack.c.b16 %v3125, %v3121
    %v4022 = vpack.c.b16 %v3126, %v3122
    %v4023 = vpack.c.b16 %v3127, %v3123
    %v4024 = vpack.c.b16 %v3128, %v3124
    %v4025 = vpack.c.b16 %v3133, %v3129
    %v4026 = vpack.c.b16 %v3134, %v3130
    %v4027 = vpack.c.b16 %v3135, %v3131
    %v4028 = vpack.c.b16 %v3136, %v3132
    %v4029 = vpack.c.b16 %v3141, %v3137
    %v4030 = vpack.c.b16 %v3142, %v3138
    %v4031 = vpack.c.b16 %v3143, %v3139
    %v4032 = vpack.c.b16 %v3144, %v3140
    %v4033 = vpack.c.b16 %v3149, %v3145
    %v4034 = vpack.c.b16 %v3150, %v3146
    %v4035 = vpack.c.b16 %v3151, %v3147
    %v4036 = vpack.c.b16 %v3152, %v3148
    %v4037 = vpack.c.b16 %v3157, %v3153
    %v4038 = vpack.c.b16 %v3158, %v3154
    %v4039 = vpack.c.b16 %v3159, %v3155
    %v4040 = vpack.c.b16 %v3160, %v3156
    %v4041 = vpack.c.b16 %v3165, %v3161
    %v4042 = vpack.c.b16 %v3166, %v3162
    %v4043 = vpack.c.b16 %v3167, %v3163
    %v4044 = vpack.c.b16 %v3168, %v3164
    %v4045 = vpack.c.b16 %v3173, %v3169
    %v4046 = vpack.c.b16 %v3174, %v3170
    %v4047 = vpack.c.b16 %v3175, %v3171
    %v4048 = vpack.c.b16 %v3176, %v3172
    %v4049 = vpack.c.b16 %v3181, %v3177
    %v4050 = vpack.c.b16 %v3182, %v3178
    %v4051 = vpack.c.b16 %v3183, %v3179
    %v4052 = vpack.c.b16 %v3184, %v3180
    %v4053 = vpack.c.b16 %v3189, %v3185
    %v4054 = vpack.c.b16 %v3190, %v3186
    %v4055 = vpack.c.b16 %v3191, %v3187
    %v4056 = vpack.c.b16 %v3192, %v3188
    %v4057 = vpack.c.b16 %v3197, %v3193
    %v4058 = vpack.c.b16 %v3198, %v3194
    %v4059 = vpack.c.b16 %v3199, %v3195
    %v4060 = vpack.c.b16 %v3200, %v3196
    %v4061 = vpack.c.b16 %v3205, %v3201
    %v4062 = vpack.c.b16 %v3206, %v3202
    %v4063 = vpack.c.b16 %v3207, %v3203
    %v4064 = vpack.c.b16 %v3208, %v3204
    %v4065 = vpack.c.b16 %v3213, %v3209
    %v4066 = vpack.c.b16 %v3214, %v3210
    %v4067 = vpack.c.b16 %v3215, %v3211
    %v4068 = vpack.c.b16 %v3216, %v3212
    %v4069 = vpack.c.b16 %v3221, %v3217
    %v4070 = vpack.c.b16 %v3222, %v3218
    %v4071 = vpack.c.b16 %v3223, %v3219
    %v4072 = vpack.c.b16 %v3224, %v3220
    %v4073 = vpack.c.b16 %v3229, %v3225
    %v4074 = vpack.c.b16 %v3230, %v3226
    %v4075 = vpack.c.b16 %v3231, %v3227
    %v4076 = vpack.c.b16 %v3232, %v3228
    %v4077 = vpack.c.b16 %v3237, %v3233
    %v4078 = vpack.c.b16 %v3238, %v3234
    %v4079 = vpack.c.b16 %v3239, %v3235
    %v4080 = vpack.c.b16 %v3240, %v3236
    %v4081 = vpack.c.b16 %v3245, %v3241
    %v4082 = vpack.c.b16 %v3246, %v3242
    %v4083 = vpack.c.b16 %v3247, %v3243
    %v4084 = vpack.c.b16 %v3248, %v3244
    %v4085 = vpack.c.b16 %v3253, %v3249
    %v4086 = vpack.c.b16 %v3254, %v3250
    %v4087 = vpack.c.b16 %v3255, %v3251
    %v4088 = vpack.c.b16 %v3256, %v3252
    %v4089 = vpack.c.b16 %v3261, %v3257
    %v4090 = vpack.c.b16 %v3262, %v3258
    %v4091 = vpack.c.b16 %v3263, %v3259
    %v4092 = vpack.c.b16 %v3264, %v3260
    %v4093 = vpack.c.b16 %v3269, %v3265
    %v4094 = vpack.c.b16 %v3270, %v3266
    %v4095 = vpack.c.b16 %v3271, %v3267
    %v4096 = vpack.c.b16 %v3272, %v3268
    %v4097 = vpack.c.b16 %v3277, %v3273
    %v4098 = vpack.c.b16 %v3278, %v3274
    %v4099 = vpack.c.b16 %v3279, %v3275
    %v4100 = vpack.c.b16 %v3280, %v3276
    %v4101 = vpack.c.b16 %v3285, %v3281
    %v4102 = vpack.c.b16 %v3286, %v3282
    %v4103 = vpack.c.b16 %v3287, %v3283
    %v4104 = vpack.c.b16 %v3288, %v3284
    %v4105 = vpack.c.b16 %v3293, %v3289
    %v4106 = vpack.c.b16 %v3294, %v3290
    %v4107 = vpack.c.b16 %v3295, %v3291
    %v4108 = vpack.c.b16 %v3296, %v3292
    %v4109 = vpack.c.b16 %v3301, %v3297
    %v4110 = vpack.c.b16 %v3302, %v3298
    %v4111 = vpack.c.b16 %v3303, %v3299
    %v4112 = vpack.c.b16 %v3304, %v3300
    %v4113 = vpack.c.b16 %v3309, %v3305
    %v4114 = vpack.c.b16 %v3310, %v3306
    %v4115 = vpack.c.b16 %v3311, %v3307
    %v4116 = vpack.c.b16 %v3312, %v3308
    %v4117 = vpack.c.b16 %v3317, %v3313
    %v4118 = vpack.c.b16 %v3318, %v3314
    %v4119 = vpack.c.b16 %v3319, %v3315
    %v4120 = vpack.c.b16 %v3320, %v3316
    %v4121 = vpack.c.b16 %v3325, %v3321
    %v4122 = vpack.c.b16 %v3326, %v3322
    %v4123 = vpack.c.b16 %v3327, %v3323
    %v4124 = vpack.c.b16 %v3328, %v3324
    %v4125 = vpack.c.b16 %v3333, %v3329
    %v4126 = vpack.c.b16 %v3334, %v3330
    %v4127 = vpack.c.b16 %v3335, %v3331
    %v4128 = vpack.c.b16 %v3336, %v3332
    %v4129 = vpack.c.b16 %v3341, %v3337
    %v4130 = vpack.c.b16 %v3342, %v3338
    %v4131 = vpack.c.b16 %v3343, %v3339
    %v4132 = vpack.c.b16 %v3344, %v3340
    %v4133 = vpack.c.b16 %v3349, %v3345
    %v4134 = vpack.c.b16 %v3350, %v3346
    %v4135 = vpack.c.b16 %v3351, %v3347
    %v4136 = vpack.c.b16 %v3352, %v3348
    %vm4921 = vcmask 523264
    %v4923 = vsel %vm4921, %v194, 0
    %4925 = vmatprep.subr.bf16.mxu0 %v3382
    %4926 = vmatpush1.bf16.msra.mxu0 %v3381
    %4927 = vmatprep.subr.bf16.mxu0 %v3378
    %4928 = vmatpush1.bf16.msra.mxu0 %v3377
    %4929 = vmatprep.subr.bf16.mxu0 %v3374
    %4930 = vmatpush1.bf16.msra.mxu0 %v3373
    %4931 = vmatprep.subr.bf16.mxu0 %v3370
    %4932 = vmatpush1.bf16.msra.mxu0 %v3369
    %4933 = vmatprep.subr.bf16.mxu0 %v3366
    %4934 = vmatpush1.bf16.msra.mxu0 %v3365
    %4935 = vmatprep.subr.bf16.mxu0 %v3362
    %4936 = vmatpush1.bf16.msra.mxu0 %v3361
    %4937 = vmatprep.subr.bf16.mxu0 %v3358
    %4938 = vmatpush1.bf16.msra.mxu0 %v3357
    %4939 = vmatprep.subr.bf16.mxu0 %v3354
    %4940 = vmatpush1.bf16.msra.mxu0 %v3353
    %4941 = vmatprep.subr.bf16.mxu0 %v3414
    %4942 = vmatpush2.bf16.msra.mxu0 %v3413
    %4943 = vmatprep.subr.bf16.mxu0 %v3410
    %4944 = vmatpush2.bf16.msra.mxu0 %v3409
    %4945 = vmatprep.subr.bf16.mxu0 %v3406
    %4946 = vmatpush2.bf16.msra.mxu0 %v3405
    %4947 = vmatprep.subr.bf16.mxu0 %v3402
    %4948 = vmatpush2.bf16.msra.mxu0 %v3401
    %4949 = vmatprep.subr.bf16.mxu0 %v3398
    %4950 = vmatpush2.bf16.msra.mxu0 %v3397
    %4951 = vmatprep.subr.bf16.mxu0 %v3394
    %4952 = vmatpush2.bf16.msra.mxu0 %v3393
    %4953 = vmatprep.subr.bf16.mxu0 %v3390
    %4954 = vmatpush2.bf16.msra.mxu0 %v3389
    %4955 = vmatprep.subr.bf16.mxu0 %v3386
    %4956 = vmatpush2.bf16.msra.mxu0 %v3385
    %4957 = vmatprep.mubr.bf16.mxu0 %v171
    %4958 = vmatmul.mubr.bf16.gmra.mxu0 %v170
    %v4959 = vpop.f32.mrf.mxu0
    %v4960 = vadd.f32 %v984, %v4959
    %v4961 = vpop.f32.mrf.mxu0
    %v4962 = vadd.f32 %v988, %v4961
    %v4963 = vpop.f32.mrf.mxu0
    %v4964 = vpop.f32.mrf.mxu0
    %4965 = vdwg.mxu0
    %4966 = vmatprep.subr.bf16.mxu0 %v3446
    %4967 = vmatpush1.bf16.msra.mxu0 %v3445
    %4968 = vmatprep.subr.bf16.mxu0 %v3442
    %4969 = vmatpush1.bf16.msra.mxu0 %v3441
    %4970 = vmatprep.subr.bf16.mxu0 %v3438
    %4971 = vmatpush1.bf16.msra.mxu0 %v3437
    %4972 = vmatprep.subr.bf16.mxu0 %v3434
    %4973 = vmatpush1.bf16.msra.mxu0 %v3433
    %4974 = vmatprep.subr.bf16.mxu0 %v3430
    %4975 = vmatpush1.bf16.msra.mxu0 %v3429
    %4976 = vmatprep.subr.bf16.mxu0 %v3426
    %4977 = vmatpush1.bf16.msra.mxu0 %v3425
    %4978 = vmatprep.subr.bf16.mxu0 %v3422
    %4979 = vmatpush1.bf16.msra.mxu0 %v3421
    %4980 = vmatprep.subr.bf16.mxu0 %v3418
    %4981 = vmatpush1.bf16.msra.mxu0 %v3417
    %4982 = vmatprep.subr.bf16.mxu0 %v3478
    %4983 = vmatpush2.bf16.msra.mxu0 %v3477
    %4984 = vmatprep.subr.bf16.mxu0 %v3474
    %4985 = vmatpush2.bf16.msra.mxu0 %v3473
    %4986 = vmatprep.subr.bf16.mxu0 %v3470
    %4987 = vmatpush2.bf16.msra.mxu0 %v3469
    %4988 = vmatprep.subr.bf16.mxu0 %v3466
    %4989 = vmatpush2.bf16.msra.mxu0 %v3465
    %4990 = vmatprep.subr.bf16.mxu0 %v3462
    %4991 = vmatpush2.bf16.msra.mxu0 %v3461
    %4992 = vmatprep.subr.bf16.mxu0 %v3458
    %4993 = vmatpush2.bf16.msra.mxu0 %v3457
    %4994 = vmatprep.subr.bf16.mxu0 %v3454
    %4995 = vmatpush2.bf16.msra.mxu0 %v3453
    %4996 = vmatprep.subr.bf16.mxu0 %v3450
    %4997 = vmatpush2.bf16.msra.mxu0 %v3449
    %4998 = vmatprep.mubr.bf16.mxu0 %v173
    %4999 = vmatmul.mubr.bf16.gmra.mxu0 %v172
    %v5000 = vpop.f32.mrf.mxu0
    %v5001 = vadd.f32 %v4960, %v5000
    %v5002 = vpop.f32.mrf.mxu0
    %v5003 = vadd.f32 %v4962, %v5002
    %v5004 = vpop.f32.mrf.mxu0
    %v5005 = vpop.f32.mrf.mxu0
    %5006 = vdwg.mxu0
    %5007 = vmatprep.subr.bf16.mxu0 %v3510
    %5008 = vmatpush1.bf16.msra.mxu0 %v3509
    %5009 = vmatprep.subr.bf16.mxu0 %v3506
    %5010 = vmatpush1.bf16.msra.mxu0 %v3505
    %5011 = vmatprep.subr.bf16.mxu0 %v3502
    %5012 = vmatpush1.bf16.msra.mxu0 %v3501
    %5013 = vmatprep.subr.bf16.mxu0 %v3498
    %5014 = vmatpush1.bf16.msra.mxu0 %v3497
    %5015 = vmatprep.subr.bf16.mxu0 %v3494
    %5016 = vmatpush1.bf16.msra.mxu0 %v3493
    %5017 = vmatprep.subr.bf16.mxu0 %v3490
    %5018 = vmatpush1.bf16.msra.mxu0 %v3489
    %5019 = vmatprep.subr.bf16.mxu0 %v3486
    %5020 = vmatpush1.bf16.msra.mxu0 %v3485
    %5021 = vmatprep.subr.bf16.mxu0 %v3482
    %5022 = vmatpush1.bf16.msra.mxu0 %v3481
    %5023 = vmatprep.subr.bf16.mxu0 %v3542
    %5024 = vmatpush2.bf16.msra.mxu0 %v3541
    %5025 = vmatprep.subr.bf16.mxu0 %v3538
    %5026 = vmatpush2.bf16.msra.mxu0 %v3537
    %5027 = vmatprep.subr.bf16.mxu0 %v3534
    %5028 = vmatpush2.bf16.msra.mxu0 %v3533
    %5029 = vmatprep.subr.bf16.mxu0 %v3530
    %5030 = vmatpush2.bf16.msra.mxu0 %v3529
    %5031 = vmatprep.subr.bf16.mxu0 %v3526
    %5032 = vmatpush2.bf16.msra.mxu0 %v3525
    %5033 = vmatprep.subr.bf16.mxu0 %v3522
    %5034 = vmatpush2.bf16.msra.mxu0 %v3521
    %5035 = vmatprep.subr.bf16.mxu0 %v3518
    %5036 = vmatpush2.bf16.msra.mxu0 %v3517
    %5037 = vmatprep.subr.bf16.mxu0 %v3514
    %5038 = vmatpush2.bf16.msra.mxu0 %v3513
    %5039 = vmatprep.mubr.bf16.mxu0 %v175
    %5040 = vmatmul.mubr.bf16.gmra.mxu0 %v174
    %v5041 = vpop.f32.mrf.mxu0
    %v5042 = vadd.f32 %v5001, %v5041
    %v5043 = vpop.f32.mrf.mxu0
    %v5044 = vadd.f32 %v5003, %v5043
    %v5045 = vpop.f32.mrf.mxu0
    %v5046 = vpop.f32.mrf.mxu0
    %5047 = vdwg.mxu0
    %5048 = vmatprep.subr.bf16.mxu0 %v3574
    %5049 = vmatpush1.bf16.msra.mxu0 %v3573
    %5050 = vmatprep.subr.bf16.mxu0 %v3570
    %5051 = vmatpush1.bf16.msra.mxu0 %v3569
    %5052 = vmatprep.subr.bf16.mxu0 %v3566
    %5053 = vmatpush1.bf16.msra.mxu0 %v3565
    %5054 = vmatprep.subr.bf16.mxu0 %v3562
    %5055 = vmatpush1.bf16.msra.mxu0 %v3561
    %5056 = vmatprep.subr.bf16.mxu0 %v3558
    %5057 = vmatpush1.bf16.msra.mxu0 %v3557
    %5058 = vmatprep.subr.bf16.mxu0 %v3554
    %5059 = vmatpush1.bf16.msra.mxu0 %v3553
    %5060 = vmatprep.subr.bf16.mxu0 %v3550
    %5061 = vmatpush1.bf16.msra.mxu0 %v3549
    %5062 = vmatprep.subr.bf16.mxu0 %v3546
    %5063 = vmatpush1.bf16.msra.mxu0 %v3545
    %5064 = vmatprep.subr.bf16.mxu0 %v3606
    %5065 = vmatpush2.bf16.msra.mxu0 %v3605
    %5066 = vmatprep.subr.bf16.mxu0 %v3602
    %5067 = vmatpush2.bf16.msra.mxu0 %v3601
    %5068 = vmatprep.subr.bf16.mxu0 %v3598
    %5069 = vmatpush2.bf16.msra.mxu0 %v3597
    %5070 = vmatprep.subr.bf16.mxu0 %v3594
    %5071 = vmatpush2.bf16.msra.mxu0 %v3593
    %5072 = vmatprep.subr.bf16.mxu0 %v3590
    %5073 = vmatpush2.bf16.msra.mxu0 %v3589
    %5074 = vmatprep.subr.bf16.mxu0 %v3586
    %5075 = vmatpush2.bf16.msra.mxu0 %v3585
    %5076 = vmatprep.subr.bf16.mxu0 %v3582
    %5077 = vmatpush2.bf16.msra.mxu0 %v3581
    %5078 = vmatprep.subr.bf16.mxu0 %v3578
    %5079 = vmatpush2.bf16.msra.mxu0 %v3577
    %5080 = vmatprep.mubr.bf16.mxu0 %v177
    %5081 = vmatmul.mubr.bf16.gmra.mxu0 %v176
    %v5082 = vpop.f32.mrf.mxu0
    %v5083 = vadd.f32 %v5042, %v5082
    %v5084 = vpop.f32.mrf.mxu0
    %v5085 = vadd.f32 %v5044, %v5084
    %v5086 = vpop.f32.mrf.mxu0
    %v5087 = vpop.f32.mrf.mxu0
    %5088 = vdwg.mxu0
    %5089 = vmatprep.subr.bf16.mxu0 %v3638
    %5090 = vmatpush1.bf16.msra.mxu0 %v3637
    %5091 = vmatprep.subr.bf16.mxu0 %v3634
    %5092 = vmatpush1.bf16.msra.mxu0 %v3633
    %5093 = vmatprep.subr.bf16.mxu0 %v3630
    %5094 = vmatpush1.bf16.msra.mxu0 %v3629
    %5095 = vmatprep.subr.bf16.mxu0 %v3626
    %5096 = vmatpush1.bf16.msra.mxu0 %v3625
    %5097 = vmatprep.subr.bf16.mxu0 %v3622
    %5098 = vmatpush1.bf16.msra.mxu0 %v3621
    %5099 = vmatprep.subr.bf16.mxu0 %v3618
    %5100 = vmatpush1.bf16.msra.mxu0 %v3617
    %5101 = vmatprep.subr.bf16.mxu0 %v3614
    %5102 = vmatpush1.bf16.msra.mxu0 %v3613
    %5103 = vmatprep.subr.bf16.mxu0 %v3610
    %5104 = vmatpush1.bf16.msra.mxu0 %v3609
    %5105 = vmatprep.subr.bf16.mxu0 %v3670
    %5106 = vmatpush2.bf16.msra.mxu0 %v3669
    %5107 = vmatprep.subr.bf16.mxu0 %v3666
    %5108 = vmatpush2.bf16.msra.mxu0 %v3665
    %5109 = vmatprep.subr.bf16.mxu0 %v3662
    %5110 = vmatpush2.bf16.msra.mxu0 %v3661
    %5111 = vmatprep.subr.bf16.mxu0 %v3658
    %5112 = vmatpush2.bf16.msra.mxu0 %v3657
    %5113 = vmatprep.subr.bf16.mxu0 %v3654
    %5114 = vmatpush2.bf16.msra.mxu0 %v3653
    %5115 = vmatprep.subr.bf16.mxu0 %v3650
    %5116 = vmatpush2.bf16.msra.mxu0 %v3649
    %5117 = vmatprep.subr.bf16.mxu0 %v3646
    %5118 = vmatpush2.bf16.msra.mxu0 %v3645
    %5119 = vmatprep.subr.bf16.mxu0 %v3642
    %5120 = vmatpush2.bf16.msra.mxu0 %v3641
    %5121 = vmatprep.mubr.bf16.mxu0 %v179
    %5122 = vmatmul.mubr.bf16.gmra.mxu0 %v178
    %v5123 = vpop.f32.mrf.mxu0
    %v5124 = vadd.f32 %v5083, %v5123
    %v5125 = vpop.f32.mrf.mxu0
    %v5126 = vadd.f32 %v5085, %v5125
    %v5127 = vpop.f32.mrf.mxu0
    %v5128 = vpop.f32.mrf.mxu0
    %5129 = vdwg.mxu0
    %5130 = vmatprep.subr.bf16.mxu0 %v3702
    %5131 = vmatpush1.bf16.msra.mxu0 %v3701
    %5132 = vmatprep.subr.bf16.mxu0 %v3698
    %5133 = vmatpush1.bf16.msra.mxu0 %v3697
    %5134 = vmatprep.subr.bf16.mxu0 %v3694
    %5135 = vmatpush1.bf16.msra.mxu0 %v3693
    %5136 = vmatprep.subr.bf16.mxu0 %v3690
    %5137 = vmatpush1.bf16.msra.mxu0 %v3689
    %5138 = vmatprep.subr.bf16.mxu0 %v3686
    %5139 = vmatpush1.bf16.msra.mxu0 %v3685
    %5140 = vmatprep.subr.bf16.mxu0 %v3682
    %5141 = vmatpush1.bf16.msra.mxu0 %v3681
    %5142 = vmatprep.subr.bf16.mxu0 %v3678
    %5143 = vmatpush1.bf16.msra.mxu0 %v3677
    %5144 = vmatprep.subr.bf16.mxu0 %v3674
    %5145 = vmatpush1.bf16.msra.mxu0 %v3673
    %5146 = vmatprep.subr.bf16.mxu0 %v3734
    %5147 = vmatpush2.bf16.msra.mxu0 %v3733
    %5148 = vmatprep.subr.bf16.mxu0 %v3730
    %5149 = vmatpush2.bf16.msra.mxu0 %v3729
    %5150 = vmatprep.subr.bf16.mxu0 %v3726
    %5151 = vmatpush2.bf16.msra.mxu0 %v3725
    %5152 = vmatprep.subr.bf16.mxu0 %v3722
    %5153 = vmatpush2.bf16.msra.mxu0 %v3721
    %5154 = vmatprep.subr.bf16.mxu0 %v3718
    %5155 = vmatpush2.bf16.msra.mxu0 %v3717
    %5156 = vmatprep.subr.bf16.mxu0 %v3714
    %5157 = vmatpush2.bf16.msra.mxu0 %v3713
    %5158 = vmatprep.subr.bf16.mxu0 %v3710
    %5159 = vmatpush2.bf16.msra.mxu0 %v3709
    %5160 = vmatprep.subr.bf16.mxu0 %v3706
    %5161 = vmatpush2.bf16.msra.mxu0 %v3705
    %5162 = vmatprep.mubr.bf16.mxu0 %v181
    %5163 = vmatmul.mubr.bf16.gmra.mxu0 %v180
    %v5164 = vpop.f32.mrf.mxu0
    %v5165 = vadd.f32 %v5124, %v5164
    %v5166 = vpop.f32.mrf.mxu0
    %v5167 = vadd.f32 %v5126, %v5166
    %v5168 = vpop.f32.mrf.mxu0
    %v5169 = vpop.f32.mrf.mxu0
    %5170 = vdwg.mxu0
    %5171 = vmatprep.subr.bf16.mxu0 %v3766
    %5172 = vmatpush1.bf16.msra.mxu0 %v3765
    %5173 = vmatprep.subr.bf16.mxu0 %v3762
    %5174 = vmatpush1.bf16.msra.mxu0 %v3761
    %5175 = vmatprep.subr.bf16.mxu0 %v3758
    %5176 = vmatpush1.bf16.msra.mxu0 %v3757
    %5177 = vmatprep.subr.bf16.mxu0 %v3754
    %5178 = vmatpush1.bf16.msra.mxu0 %v3753
    %5179 = vmatprep.subr.bf16.mxu0 %v3750
    %5180 = vmatpush1.bf16.msra.mxu0 %v3749
    %5181 = vmatprep.subr.bf16.mxu0 %v3746
    %5182 = vmatpush1.bf16.msra.mxu0 %v3745
    %5183 = vmatprep.subr.bf16.mxu0 %v3742
    %5184 = vmatpush1.bf16.msra.mxu0 %v3741
    %5185 = vmatprep.subr.bf16.mxu0 %v3738
    %5186 = vmatpush1.bf16.msra.mxu0 %v3737
    %5187 = vmatprep.subr.bf16.mxu0 %v3798
    %5188 = vmatpush2.bf16.msra.mxu0 %v3797
    %5189 = vmatprep.subr.bf16.mxu0 %v3794
    %5190 = vmatpush2.bf16.msra.mxu0 %v3793
    %5191 = vmatprep.subr.bf16.mxu0 %v3790
    %5192 = vmatpush2.bf16.msra.mxu0 %v3789
    %5193 = vmatprep.subr.bf16.mxu0 %v3786
    %5194 = vmatpush2.bf16.msra.mxu0 %v3785
    %5195 = vmatprep.subr.bf16.mxu0 %v3782
    %5196 = vmatpush2.bf16.msra.mxu0 %v3781
    %5197 = vmatprep.subr.bf16.mxu0 %v3778
    %5198 = vmatpush2.bf16.msra.mxu0 %v3777
    %5199 = vmatprep.subr.bf16.mxu0 %v3774
    %5200 = vmatpush2.bf16.msra.mxu0 %v3773
    %5201 = vmatprep.subr.bf16.mxu0 %v3770
    %5202 = vmatpush2.bf16.msra.mxu0 %v3769
    %5203 = vmatprep.mubr.bf16.mxu0 %v183
    %5204 = vmatmul.mubr.bf16.gmra.mxu0 %v182
    %v5205 = vpop.f32.mrf.mxu0
    %v5206 = vadd.f32 %v5165, %v5205
    %v5207 = vpop.f32.mrf.mxu0
    %v5208 = vadd.f32 %v5167, %v5207
    %v5209 = vpop.f32.mrf.mxu0
    %v5210 = vpop.f32.mrf.mxu0
    %5211 = vdwg.mxu0
    %5212 = vmatprep.subr.bf16.mxu0 %v3830
    %5213 = vmatpush1.bf16.msra.mxu0 %v3829
    %5214 = vmatprep.subr.bf16.mxu0 %v3826
    %5215 = vmatpush1.bf16.msra.mxu0 %v3825
    %5216 = vmatprep.subr.bf16.mxu0 %v3822
    %5217 = vmatpush1.bf16.msra.mxu0 %v3821
    %5218 = vmatprep.subr.bf16.mxu0 %v3818
    %5219 = vmatpush1.bf16.msra.mxu0 %v3817
    %5220 = vmatprep.subr.bf16.mxu0 %v3814
    %5221 = vmatpush1.bf16.msra.mxu0 %v3813
    %5222 = vmatprep.subr.bf16.mxu0 %v3810
    %5223 = vmatpush1.bf16.msra.mxu0 %v3809
    %5224 = vmatprep.subr.bf16.mxu0 %v3806
    %5225 = vmatpush1.bf16.msra.mxu0 %v3805
    %5226 = vmatprep.subr.bf16.mxu0 %v3802
    %5227 = vmatpush1.bf16.msra.mxu0 %v3801
    %5228 = vmatprep.subr.bf16.mxu0 %v3862
    %5229 = vmatpush2.bf16.msra.mxu0 %v3861
    %5230 = vmatprep.subr.bf16.mxu0 %v3858
    %5231 = vmatpush2.bf16.msra.mxu0 %v3857
    %5232 = vmatprep.subr.bf16.mxu0 %v3854
    %5233 = vmatpush2.bf16.msra.mxu0 %v3853
    %5234 = vmatprep.subr.bf16.mxu0 %v3850
    %5235 = vmatpush2.bf16.msra.mxu0 %v3849
    %5236 = vmatprep.subr.bf16.mxu0 %v3846
    %5237 = vmatpush2.bf16.msra.mxu0 %v3845
    %5238 = vmatprep.subr.bf16.mxu0 %v3842
    %5239 = vmatpush2.bf16.msra.mxu0 %v3841
    %5240 = vmatprep.subr.bf16.mxu0 %v3838
    %5241 = vmatpush2.bf16.msra.mxu0 %v3837
    %5242 = vmatprep.subr.bf16.mxu0 %v3834
    %5243 = vmatpush2.bf16.msra.mxu0 %v3833
    %5244 = vmatprep.mubr.bf16.mxu0 %v185
    %5245 = vmatmul.mubr.bf16.gmra.mxu0 %v184
    %v5246 = vpop.f32.mrf.mxu0
    %v5247 = vadd.f32 %v5206, %v5246
    %v5248 = vpop.f32.mrf.mxu0
    %v5249 = vadd.f32 %v5208, %v5248
    %v5250 = vpop.f32.mrf.mxu0
    %v5251 = vpop.f32.mrf.mxu0
    %5252 = vdwg.mxu0
    %5253 = vmatprep.subr.bf16.mxu0 %v3894
    %5254 = vmatpush1.bf16.msra.mxu0 %v3893
    %5255 = vmatprep.subr.bf16.mxu0 %v3890
    %5256 = vmatpush1.bf16.msra.mxu0 %v3889
    %5257 = vmatprep.subr.bf16.mxu0 %v3886
    %5258 = vmatpush1.bf16.msra.mxu0 %v3885
    %5259 = vmatprep.subr.bf16.mxu0 %v3882
    %5260 = vmatpush1.bf16.msra.mxu0 %v3881
    %5261 = vmatprep.subr.bf16.mxu0 %v3878
    %5262 = vmatpush1.bf16.msra.mxu0 %v3877
    %5263 = vmatprep.subr.bf16.mxu0 %v3874
    %5264 = vmatpush1.bf16.msra.mxu0 %v3873
    %5265 = vmatprep.subr.bf16.mxu0 %v3870
    %5266 = vmatpush1.bf16.msra.mxu0 %v3869
    %5267 = vmatprep.subr.bf16.mxu0 %v3866
    %5268 = vmatpush1.bf16.msra.mxu0 %v3865
    %5269 = vmatprep.subr.bf16.mxu0 %v3926
    %5270 = vmatpush2.bf16.msra.mxu0 %v3925
    %5271 = vmatprep.subr.bf16.mxu0 %v3922
    %5272 = vmatpush2.bf16.msra.mxu0 %v3921
    %5273 = vmatprep.subr.bf16.mxu0 %v3918
    %5274 = vmatpush2.bf16.msra.mxu0 %v3917
    %5275 = vmatprep.subr.bf16.mxu0 %v3914
    %5276 = vmatpush2.bf16.msra.mxu0 %v3913
    %5277 = vmatprep.subr.bf16.mxu0 %v3910
    %5278 = vmatpush2.bf16.msra.mxu0 %v3909
    %5279 = vmatprep.subr.bf16.mxu0 %v3906
    %5280 = vmatpush2.bf16.msra.mxu0 %v3905
    %5281 = vmatprep.subr.bf16.mxu0 %v3902
    %5282 = vmatpush2.bf16.msra.mxu0 %v3901
    %5283 = vmatprep.subr.bf16.mxu0 %v3898
    %5284 = vmatpush2.bf16.msra.mxu0 %v3897
    %5285 = vmatprep.mubr.bf16.mxu0 %v187
    %5286 = vmatmul.mubr.bf16.gmra.mxu0 %v186
    %v5287 = vpop.f32.mrf.mxu0
    %v5288 = vadd.f32 %v5247, %v5287
    %v5289 = vpop.f32.mrf.mxu0
    %v5290 = vadd.f32 %v5249, %v5289
    %v5291 = vpop.f32.mrf.mxu0
    %v5292 = vpop.f32.mrf.mxu0
    %5293 = vdwg.mxu0
    %5294 = vmatprep.subr.bf16.mxu0 %v3958
    %5295 = vmatpush1.bf16.msra.mxu0 %v3957
    %5296 = vmatprep.subr.bf16.mxu0 %v3954
    %5297 = vmatpush1.bf16.msra.mxu0 %v3953
    %5298 = vmatprep.subr.bf16.mxu0 %v3950
    %5299 = vmatpush1.bf16.msra.mxu0 %v3949
    %5300 = vmatprep.subr.bf16.mxu0 %v3946
    %5301 = vmatpush1.bf16.msra.mxu0 %v3945
    %5302 = vmatprep.subr.bf16.mxu0 %v3942
    %5303 = vmatpush1.bf16.msra.mxu0 %v3941
    %5304 = vmatprep.subr.bf16.mxu0 %v3938
    %5305 = vmatpush1.bf16.msra.mxu0 %v3937
    %5306 = vmatprep.subr.bf16.mxu0 %v3934
    %5307 = vmatpush1.bf16.msra.mxu0 %v3933
    %5308 = vmatprep.subr.bf16.mxu0 %v3930
    %5309 = vmatpush1.bf16.msra.mxu0 %v3929
    %5310 = vmatprep.subr.bf16.mxu0 %v3990
    %5311 = vmatpush2.bf16.msra.mxu0 %v3989
    %5312 = vmatprep.subr.bf16.mxu0 %v3986
    %5313 = vmatpush2.bf16.msra.mxu0 %v3985
    %5314 = vmatprep.subr.bf16.mxu0 %v3982
    %5315 = vmatpush2.bf16.msra.mxu0 %v3981
    %5316 = vmatprep.subr.bf16.mxu0 %v3978
    %5317 = vmatpush2.bf16.msra.mxu0 %v3977
    %5318 = vmatprep.subr.bf16.mxu0 %v3974
    %5319 = vmatpush2.bf16.msra.mxu0 %v3973
    %5320 = vmatprep.subr.bf16.mxu0 %v3970
    %5321 = vmatpush2.bf16.msra.mxu0 %v3969
    %5322 = vmatprep.subr.bf16.mxu0 %v3966
    %5323 = vmatpush2.bf16.msra.mxu0 %v3965
    %5324 = vmatprep.subr.bf16.mxu0 %v3962
    %5325 = vmatpush2.bf16.msra.mxu0 %v3961
    %5326 = vmatprep.mubr.bf16.mxu0 %v189
    %5327 = vmatmul.mubr.bf16.gmra.mxu0 %v188
    %v5328 = vpop.f32.mrf.mxu0
    %v5329 = vadd.f32 %v5288, %v5328
    %v5330 = vpop.f32.mrf.mxu0
    %v5331 = vadd.f32 %v5290, %v5330
    %v5332 = vpop.f32.mrf.mxu0
    %v5333 = vpop.f32.mrf.mxu0
    %5334 = vdwg.mxu0
    %5335 = vmatprep.subr.bf16.mxu0 %v4022
    %5336 = vmatpush1.bf16.msra.mxu0 %v4021
    %5337 = vmatprep.subr.bf16.mxu0 %v4018
    %5338 = vmatpush1.bf16.msra.mxu0 %v4017
    %5339 = vmatprep.subr.bf16.mxu0 %v4014
    %5340 = vmatpush1.bf16.msra.mxu0 %v4013
    %5341 = vmatprep.subr.bf16.mxu0 %v4010
    %5342 = vmatpush1.bf16.msra.mxu0 %v4009
    %5343 = vmatprep.subr.bf16.mxu0 %v4006
    %5344 = vmatpush1.bf16.msra.mxu0 %v4005
    %5345 = vmatprep.subr.bf16.mxu0 %v4002
    %5346 = vmatpush1.bf16.msra.mxu0 %v4001
    %5347 = vmatprep.subr.bf16.mxu0 %v3998
    %5348 = vmatpush1.bf16.msra.mxu0 %v3997
    %5349 = vmatprep.subr.bf16.mxu0 %v3994
    %5350 = vmatpush1.bf16.msra.mxu0 %v3993
    %5351 = vmatprep.subr.bf16.mxu0 %v4054
    %5352 = vmatpush2.bf16.msra.mxu0 %v4053
    %5353 = vmatprep.subr.bf16.mxu0 %v4050
    %5354 = vmatpush2.bf16.msra.mxu0 %v4049
    %5355 = vmatprep.subr.bf16.mxu0 %v4046
    %5356 = vmatpush2.bf16.msra.mxu0 %v4045
    %5357 = vmatprep.subr.bf16.mxu0 %v4042
    %5358 = vmatpush2.bf16.msra.mxu0 %v4041
    %5359 = vmatprep.subr.bf16.mxu0 %v4038
    %5360 = vmatpush2.bf16.msra.mxu0 %v4037
    %5361 = vmatprep.subr.bf16.mxu0 %v4034
    %5362 = vmatpush2.bf16.msra.mxu0 %v4033
    %5363 = vmatprep.subr.bf16.mxu0 %v4030
    %5364 = vmatpush2.bf16.msra.mxu0 %v4029
    %5365 = vmatprep.subr.bf16.mxu0 %v4026
    %5366 = vmatpush2.bf16.msra.mxu0 %v4025
    %5367 = vmatprep.mubr.bf16.mxu0 %v191
    %5368 = vmatmul.mubr.bf16.gmra.mxu0 %v190
    %v5369 = vpop.f32.mrf.mxu0
    %v5370 = vadd.f32 %v5329, %v5369
    %v5371 = vpop.f32.mrf.mxu0
    %v5372 = vadd.f32 %v5331, %v5371
    %v5373 = vpop.f32.mrf.mxu0
    %v5374 = vpop.f32.mrf.mxu0
    %5375 = vdwg.mxu0
    %5376 = vmatprep.subr.bf16.mxu0 %v4086
    %5377 = vmatpush1.bf16.msra.mxu0 %v4085
    %5378 = vmatprep.subr.bf16.mxu0 %v4082
    %5379 = vmatpush1.bf16.msra.mxu0 %v4081
    %5380 = vmatprep.subr.bf16.mxu0 %v4078
    %5381 = vmatpush1.bf16.msra.mxu0 %v4077
    %5382 = vmatprep.subr.bf16.mxu0 %v4074
    %5383 = vmatpush1.bf16.msra.mxu0 %v4073
    %5384 = vmatprep.subr.bf16.mxu0 %v4070
    %5385 = vmatpush1.bf16.msra.mxu0 %v4069
    %5386 = vmatprep.subr.bf16.mxu0 %v4066
    %5387 = vmatpush1.bf16.msra.mxu0 %v4065
    %5388 = vmatprep.subr.bf16.mxu0 %v4062
    %5389 = vmatpush1.bf16.msra.mxu0 %v4061
    %5390 = vmatprep.subr.bf16.mxu0 %v4058
    %5391 = vmatpush1.bf16.msra.mxu0 %v4057
    %5392 = vmatprep.subr.bf16.mxu0 %v4118
    %5393 = vmatpush2.bf16.msra.mxu0 %v4117
    %5394 = vmatprep.subr.bf16.mxu0 %v4114
    %5395 = vmatpush2.bf16.msra.mxu0 %v4113
    %5396 = vmatprep.subr.bf16.mxu0 %v4110
    %5397 = vmatpush2.bf16.msra.mxu0 %v4109
    %5398 = vmatprep.subr.bf16.mxu0 %v4106
    %5399 = vmatpush2.bf16.msra.mxu0 %v4105
    %5400 = vmatprep.subr.bf16.mxu0 %v4102
    %5401 = vmatpush2.bf16.msra.mxu0 %v4101
    %5402 = vmatprep.subr.bf16.mxu0 %v4098
    %5403 = vmatpush2.bf16.msra.mxu0 %v4097
    %5404 = vmatprep.subr.bf16.mxu0 %v4094
    %5405 = vmatpush2.bf16.msra.mxu0 %v4093
    %5406 = vmatprep.subr.bf16.mxu0 %v4090
    %5407 = vmatpush2.bf16.msra.mxu0 %v4089
    %5408 = vmatprep.mubr.bf16.mxu0 %v193
    %5409 = vmatmul.mubr.bf16.gmra.mxu0 %v192
    %v5410 = vpop.f32.mrf.mxu0
    %v5411 = vadd.f32 %v5370, %v5410
    %v5412 = vpop.f32.mrf.mxu0
    %v5413 = vadd.f32 %v5372, %v5412
    %v5414 = vpop.f32.mrf.mxu0
    %v5415 = vpop.f32.mrf.mxu0
    %5416 = vdwg.mxu0
    %5417 = vmatprep.subr.bf16.mxu0 0
    %5418 = vmatpush1.bf16.msra.mxu0 0
    %5419 = vmatprep.subr.bf16.mxu0 0
    %5420 = vmatpush1.bf16.msra.mxu0 0
    %5421 = vmatprep.subr.bf16.mxu0 0
    %5422 = vmatpush1.bf16.msra.mxu0 0
    %5423 = vmatprep.subr.bf16.mxu0 0
    %5424 = vmatpush1.bf16.msra.mxu0 0
    %5425 = vmatprep.subr.bf16.mxu0 %v4134
    %5426 = vmatpush1.bf16.msra.mxu0 %v4133
    %5427 = vmatprep.subr.bf16.mxu0 %v4130
    %5428 = vmatpush1.bf16.msra.mxu0 %v4129
    %5429 = vmatprep.subr.bf16.mxu0 %v4126
    %5430 = vmatpush1.bf16.msra.mxu0 %v4125
    %5431 = vmatprep.subr.bf16.mxu0 %v4122
    %5432 = vmatpush1.bf16.msra.mxu0 %v4121
    %5433 = vmatprep.subr.bf16.mxu0 0
    %5434 = vmatpush2.bf16.msra.mxu0 0
    %5435 = vmatprep.subr.bf16.mxu0 0
    %5436 = vmatpush2.bf16.msra.mxu0 0
    %5437 = vmatprep.subr.bf16.mxu0 0
    %5438 = vmatpush2.bf16.msra.mxu0 0
    %5439 = vmatprep.subr.bf16.mxu0 0
    %5440 = vmatpush2.bf16.msra.mxu0 0
    %5441 = vmatprep.subr.bf16.mxu0 0
    %5442 = vmatpush2.bf16.msra.mxu0 0
    %5443 = vmatprep.subr.bf16.mxu0 0
    %5444 = vmatpush2.bf16.msra.mxu0 0
    %5445 = vmatprep.subr.bf16.mxu0 0
    %5446 = vmatpush2.bf16.msra.mxu0 0
    %5447 = vmatprep.subr.bf16.mxu0 0
    %5448 = vmatpush2.bf16.msra.mxu0 0
    %5449 = vmatprep.mubr.bf16.mxu0 0
    %5450 = vmatmul.mubr.bf16.gmra.mxu0 %v4923
    %v5451 = vpop.f32.mrf.mxu0
    %v5452 = vadd.f32 %v5411, %v5451
    %v5453 = vpop.f32.mrf.mxu0
    %v5454 = vadd.f32 %v5413, %v5453
    %v5455 = vpop.f32.mrf.mxu0
    %v5456 = vpop.f32.mrf.mxu0
    %5457 = vdwg.mxu0
    %5458 = vmatprep.subr.bf16.mxu0 %v3384
    %5459 = vmatpush1.bf16.msra.mxu0 %v3383
    %5460 = vmatprep.subr.bf16.mxu0 %v3380
    %5461 = vmatpush1.bf16.msra.mxu0 %v3379
    %5462 = vmatprep.subr.bf16.mxu0 %v3376
    %5463 = vmatpush1.bf16.msra.mxu0 %v3375
    %5464 = vmatprep.subr.bf16.mxu0 %v3372
    %5465 = vmatpush1.bf16.msra.mxu0 %v3371
    %5466 = vmatprep.subr.bf16.mxu0 %v3368
    %5467 = vmatpush1.bf16.msra.mxu0 %v3367
    %5468 = vmatprep.subr.bf16.mxu0 %v3364
    %5469 = vmatpush1.bf16.msra.mxu0 %v3363
    %5470 = vmatprep.subr.bf16.mxu0 %v3360
    %5471 = vmatpush1.bf16.msra.mxu0 %v3359
    %5472 = vmatprep.subr.bf16.mxu0 %v3356
    %5473 = vmatpush1.bf16.msra.mxu0 %v3355
    %5474 = vmatprep.subr.bf16.mxu0 %v3416
    %5475 = vmatpush2.bf16.msra.mxu0 %v3415
    %5476 = vmatprep.subr.bf16.mxu0 %v3412
    %5477 = vmatpush2.bf16.msra.mxu0 %v3411
    %5478 = vmatprep.subr.bf16.mxu0 %v3408
    %5479 = vmatpush2.bf16.msra.mxu0 %v3407
    %5480 = vmatprep.subr.bf16.mxu0 %v3404
    %5481 = vmatpush2.bf16.msra.mxu0 %v3403
    %5482 = vmatprep.subr.bf16.mxu0 %v3400
    %5483 = vmatpush2.bf16.msra.mxu0 %v3399
    %5484 = vmatprep.subr.bf16.mxu0 %v3396
    %5485 = vmatpush2.bf16.msra.mxu0 %v3395
    %5486 = vmatprep.subr.bf16.mxu0 %v3392
    %5487 = vmatpush2.bf16.msra.mxu0 %v3391
    %5488 = vmatprep.subr.bf16.mxu0 %v3388
    %5489 = vmatpush2.bf16.msra.mxu0 %v3387
    %5490 = vmatprep.mubr.bf16.mxu0 %v171
    %5491 = vmatmul.mubr.bf16.gmra.mxu0 %v170
    %v5492 = vpop.f32.mrf.mxu0
    %v5493 = vadd.f32 %v992, %v5492
    %v5494 = vpop.f32.mrf.mxu0
    %v5495 = vadd.f32 %v996, %v5494
    %v5496 = vpop.f32.mrf.mxu0
    %v5497 = vpop.f32.mrf.mxu0
    %5498 = vdwg.mxu0
    %5499 = vmatprep.subr.bf16.mxu0 %v3448
    %5500 = vmatpush1.bf16.msra.mxu0 %v3447
    %5501 = vmatprep.subr.bf16.mxu0 %v3444
    %5502 = vmatpush1.bf16.msra.mxu0 %v3443
    %5503 = vmatprep.subr.bf16.mxu0 %v3440
    %5504 = vmatpush1.bf16.msra.mxu0 %v3439
    %5505 = vmatprep.subr.bf16.mxu0 %v3436
    %5506 = vmatpush1.bf16.msra.mxu0 %v3435
    %5507 = vmatprep.subr.bf16.mxu0 %v3432
    %5508 = vmatpush1.bf16.msra.mxu0 %v3431
    %5509 = vmatprep.subr.bf16.mxu0 %v3428
    %5510 = vmatpush1.bf16.msra.mxu0 %v3427
    %5511 = vmatprep.subr.bf16.mxu0 %v3424
    %5512 = vmatpush1.bf16.msra.mxu0 %v3423
    %5513 = vmatprep.subr.bf16.mxu0 %v3420
    %5514 = vmatpush1.bf16.msra.mxu0 %v3419
    %5515 = vmatprep.subr.bf16.mxu0 %v3480
    %5516 = vmatpush2.bf16.msra.mxu0 %v3479
    %5517 = vmatprep.subr.bf16.mxu0 %v3476
    %5518 = vmatpush2.bf16.msra.mxu0 %v3475
    %5519 = vmatprep.subr.bf16.mxu0 %v3472
    %5520 = vmatpush2.bf16.msra.mxu0 %v3471
    %5521 = vmatprep.subr.bf16.mxu0 %v3468
    %5522 = vmatpush2.bf16.msra.mxu0 %v3467
    %5523 = vmatprep.subr.bf16.mxu0 %v3464
    %5524 = vmatpush2.bf16.msra.mxu0 %v3463
    %5525 = vmatprep.subr.bf16.mxu0 %v3460
    %5526 = vmatpush2.bf16.msra.mxu0 %v3459
    %5527 = vmatprep.subr.bf16.mxu0 %v3456
    %5528 = vmatpush2.bf16.msra.mxu0 %v3455
    %5529 = vmatprep.subr.bf16.mxu0 %v3452
    %5530 = vmatpush2.bf16.msra.mxu0 %v3451
    %5531 = vmatprep.mubr.bf16.mxu0 %v173
    %5532 = vmatmul.mubr.bf16.gmra.mxu0 %v172
    %v5533 = vpop.f32.mrf.mxu0
    %v5534 = vadd.f32 %v5493, %v5533
    %v5535 = vpop.f32.mrf.mxu0
    %v5536 = vadd.f32 %v5495, %v5535
    %v5537 = vpop.f32.mrf.mxu0
    %v5538 = vpop.f32.mrf.mxu0
    %5539 = vdwg.mxu0
    %5540 = vmatprep.subr.bf16.mxu0 %v3512
    %5541 = vmatpush1.bf16.msra.mxu0 %v3511
    %5542 = vmatprep.subr.bf16.mxu0 %v3508
    %5543 = vmatpush1.bf16.msra.mxu0 %v3507
    %5544 = vmatprep.subr.bf16.mxu0 %v3504
    %5545 = vmatpush1.bf16.msra.mxu0 %v3503
    %5546 = vmatprep.subr.bf16.mxu0 %v3500
    %5547 = vmatpush1.bf16.msra.mxu0 %v3499
    %5548 = vmatprep.subr.bf16.mxu0 %v3496
    %5549 = vmatpush1.bf16.msra.mxu0 %v3495
    %5550 = vmatprep.subr.bf16.mxu0 %v3492
    %5551 = vmatpush1.bf16.msra.mxu0 %v3491
    %5552 = vmatprep.subr.bf16.mxu0 %v3488
    %5553 = vmatpush1.bf16.msra.mxu0 %v3487
    %5554 = vmatprep.subr.bf16.mxu0 %v3484
    %5555 = vmatpush1.bf16.msra.mxu0 %v3483
    %5556 = vmatprep.subr.bf16.mxu0 %v3544
    %5557 = vmatpush2.bf16.msra.mxu0 %v3543
    %5558 = vmatprep.subr.bf16.mxu0 %v3540
    %5559 = vmatpush2.bf16.msra.mxu0 %v3539
    %5560 = vmatprep.subr.bf16.mxu0 %v3536
    %5561 = vmatpush2.bf16.msra.mxu0 %v3535
    %5562 = vmatprep.subr.bf16.mxu0 %v3532
    %5563 = vmatpush2.bf16.msra.mxu0 %v3531
    %5564 = vmatprep.subr.bf16.mxu0 %v3528
    %5565 = vmatpush2.bf16.msra.mxu0 %v3527
    %5566 = vmatprep.subr.bf16.mxu0 %v3524
    %5567 = vmatpush2.bf16.msra.mxu0 %v3523
    %5568 = vmatprep.subr.bf16.mxu0 %v3520
    %5569 = vmatpush2.bf16.msra.mxu0 %v3519
    %5570 = vmatprep.subr.bf16.mxu0 %v3516
    %5571 = vmatpush2.bf16.msra.mxu0 %v3515
    %5572 = vmatprep.mubr.bf16.mxu0 %v175
    %5573 = vmatmul.mubr.bf16.gmra.mxu0 %v174
    %v5574 = vpop.f32.mrf.mxu0
    %v5575 = vadd.f32 %v5534, %v5574
    %v5576 = vpop.f32.mrf.mxu0
    %v5577 = vadd.f32 %v5536, %v5576
    %v5578 = vpop.f32.mrf.mxu0
    %v5579 = vpop.f32.mrf.mxu0
    %5580 = vdwg.mxu0
    %5581 = vmatprep.subr.bf16.mxu0 %v3576
    %5582 = vmatpush1.bf16.msra.mxu0 %v3575
    %5583 = vmatprep.subr.bf16.mxu0 %v3572
    %5584 = vmatpush1.bf16.msra.mxu0 %v3571
    %5585 = vmatprep.subr.bf16.mxu0 %v3568
    %5586 = vmatpush1.bf16.msra.mxu0 %v3567
    %5587 = vmatprep.subr.bf16.mxu0 %v3564
    %5588 = vmatpush1.bf16.msra.mxu0 %v3563
    %5589 = vmatprep.subr.bf16.mxu0 %v3560
    %5590 = vmatpush1.bf16.msra.mxu0 %v3559
    %5591 = vmatprep.subr.bf16.mxu0 %v3556
    %5592 = vmatpush1.bf16.msra.mxu0 %v3555
    %5593 = vmatprep.subr.bf16.mxu0 %v3552
    %5594 = vmatpush1.bf16.msra.mxu0 %v3551
    %5595 = vmatprep.subr.bf16.mxu0 %v3548
    %5596 = vmatpush1.bf16.msra.mxu0 %v3547
    %5597 = vmatprep.subr.bf16.mxu0 %v3608
    %5598 = vmatpush2.bf16.msra.mxu0 %v3607
    %5599 = vmatprep.subr.bf16.mxu0 %v3604
    %5600 = vmatpush2.bf16.msra.mxu0 %v3603
    %5601 = vmatprep.subr.bf16.mxu0 %v3600
    %5602 = vmatpush2.bf16.msra.mxu0 %v3599
    %5603 = vmatprep.subr.bf16.mxu0 %v3596
    %5604 = vmatpush2.bf16.msra.mxu0 %v3595
    %5605 = vmatprep.subr.bf16.mxu0 %v3592
    %5606 = vmatpush2.bf16.msra.mxu0 %v3591
    %5607 = vmatprep.subr.bf16.mxu0 %v3588
    %5608 = vmatpush2.bf16.msra.mxu0 %v3587
    %5609 = vmatprep.subr.bf16.mxu0 %v3584
    %5610 = vmatpush2.bf16.msra.mxu0 %v3583
    %5611 = vmatprep.subr.bf16.mxu0 %v3580
    %5612 = vmatpush2.bf16.msra.mxu0 %v3579
    %5613 = vmatprep.mubr.bf16.mxu0 %v177
    %5614 = vmatmul.mubr.bf16.gmra.mxu0 %v176
    %v5615 = vpop.f32.mrf.mxu0
    %v5616 = vadd.f32 %v5575, %v5615
    %v5617 = vpop.f32.mrf.mxu0
    %v5618 = vadd.f32 %v5577, %v5617
    %v5619 = vpop.f32.mrf.mxu0
    %v5620 = vpop.f32.mrf.mxu0
    %5621 = vdwg.mxu0
    %5622 = vmatprep.subr.bf16.mxu0 %v3640
    %5623 = vmatpush1.bf16.msra.mxu0 %v3639
    %5624 = vmatprep.subr.bf16.mxu0 %v3636
    %5625 = vmatpush1.bf16.msra.mxu0 %v3635
    %5626 = vmatprep.subr.bf16.mxu0 %v3632
    %5627 = vmatpush1.bf16.msra.mxu0 %v3631
    %5628 = vmatprep.subr.bf16.mxu0 %v3628
    %5629 = vmatpush1.bf16.msra.mxu0 %v3627
    %5630 = vmatprep.subr.bf16.mxu0 %v3624
    %5631 = vmatpush1.bf16.msra.mxu0 %v3623
    %5632 = vmatprep.subr.bf16.mxu0 %v3620
    %5633 = vmatpush1.bf16.msra.mxu0 %v3619
    %5634 = vmatprep.subr.bf16.mxu0 %v3616
    %5635 = vmatpush1.bf16.msra.mxu0 %v3615
    %5636 = vmatprep.subr.bf16.mxu0 %v3612
    %5637 = vmatpush1.bf16.msra.mxu0 %v3611
    %5638 = vmatprep.subr.bf16.mxu0 %v3672
    %5639 = vmatpush2.bf16.msra.mxu0 %v3671
    %5640 = vmatprep.subr.bf16.mxu0 %v3668
    %5641 = vmatpush2.bf16.msra.mxu0 %v3667
    %5642 = vmatprep.subr.bf16.mxu0 %v3664
    %5643 = vmatpush2.bf16.msra.mxu0 %v3663
    %5644 = vmatprep.subr.bf16.mxu0 %v3660
    %5645 = vmatpush2.bf16.msra.mxu0 %v3659
    %5646 = vmatprep.subr.bf16.mxu0 %v3656
    %5647 = vmatpush2.bf16.msra.mxu0 %v3655
    %5648 = vmatprep.subr.bf16.mxu0 %v3652
    %5649 = vmatpush2.bf16.msra.mxu0 %v3651
    %5650 = vmatprep.subr.bf16.mxu0 %v3648
    %5651 = vmatpush2.bf16.msra.mxu0 %v3647
    %5652 = vmatprep.subr.bf16.mxu0 %v3644
    %5653 = vmatpush2.bf16.msra.mxu0 %v3643
    %5654 = vmatprep.mubr.bf16.mxu0 %v179
    %5655 = vmatmul.mubr.bf16.gmra.mxu0 %v178
    %v5656 = vpop.f32.mrf.mxu0
    %v5657 = vadd.f32 %v5616, %v5656
    %v5658 = vpop.f32.mrf.mxu0
    %v5659 = vadd.f32 %v5618, %v5658
    %v5660 = vpop.f32.mrf.mxu0
    %v5661 = vpop.f32.mrf.mxu0
    %5662 = vdwg.mxu0
    %5663 = vmatprep.subr.bf16.mxu0 %v3704
    %5664 = vmatpush1.bf16.msra.mxu0 %v3703
    %5665 = vmatprep.subr.bf16.mxu0 %v3700
    %5666 = vmatpush1.bf16.msra.mxu0 %v3699
    %5667 = vmatprep.subr.bf16.mxu0 %v3696
    %5668 = vmatpush1.bf16.msra.mxu0 %v3695
    %5669 = vmatprep.subr.bf16.mxu0 %v3692
    %5670 = vmatpush1.bf16.msra.mxu0 %v3691
    %5671 = vmatprep.subr.bf16.mxu0 %v3688
    %5672 = vmatpush1.bf16.msra.mxu0 %v3687
    %5673 = vmatprep.subr.bf16.mxu0 %v3684
    %5674 = vmatpush1.bf16.msra.mxu0 %v3683
    %5675 = vmatprep.subr.bf16.mxu0 %v3680
    %5676 = vmatpush1.bf16.msra.mxu0 %v3679
    %5677 = vmatprep.subr.bf16.mxu0 %v3676
    %5678 = vmatpush1.bf16.msra.mxu0 %v3675
    %5679 = vmatprep.subr.bf16.mxu0 %v3736
    %5680 = vmatpush2.bf16.msra.mxu0 %v3735
    %5681 = vmatprep.subr.bf16.mxu0 %v3732
    %5682 = vmatpush2.bf16.msra.mxu0 %v3731
    %5683 = vmatprep.subr.bf16.mxu0 %v3728
    %5684 = vmatpush2.bf16.msra.mxu0 %v3727
    %5685 = vmatprep.subr.bf16.mxu0 %v3724
    %5686 = vmatpush2.bf16.msra.mxu0 %v3723
    %5687 = vmatprep.subr.bf16.mxu0 %v3720
    %5688 = vmatpush2.bf16.msra.mxu0 %v3719
    %5689 = vmatprep.subr.bf16.mxu0 %v3716
    %5690 = vmatpush2.bf16.msra.mxu0 %v3715
    %5691 = vmatprep.subr.bf16.mxu0 %v3712
    %5692 = vmatpush2.bf16.msra.mxu0 %v3711
    %5693 = vmatprep.subr.bf16.mxu0 %v3708
    %5694 = vmatpush2.bf16.msra.mxu0 %v3707
    %5695 = vmatprep.mubr.bf16.mxu0 %v181
    %5696 = vmatmul.mubr.bf16.gmra.mxu0 %v180
    %v5697 = vpop.f32.mrf.mxu0
    %v5698 = vadd.f32 %v5657, %v5697
    %v5699 = vpop.f32.mrf.mxu0
    %v5700 = vadd.f32 %v5659, %v5699
    %v5701 = vpop.f32.mrf.mxu0
    %v5702 = vpop.f32.mrf.mxu0
    %5703 = vdwg.mxu0
    %5704 = vmatprep.subr.bf16.mxu0 %v3768
    %5705 = vmatpush1.bf16.msra.mxu0 %v3767
    %5706 = vmatprep.subr.bf16.mxu0 %v3764
    %5707 = vmatpush1.bf16.msra.mxu0 %v3763
    %5708 = vmatprep.subr.bf16.mxu0 %v3760
    %5709 = vmatpush1.bf16.msra.mxu0 %v3759
    %5710 = vmatprep.subr.bf16.mxu0 %v3756
    %5711 = vmatpush1.bf16.msra.mxu0 %v3755
    %5712 = vmatprep.subr.bf16.mxu0 %v3752
    %5713 = vmatpush1.bf16.msra.mxu0 %v3751
    %5714 = vmatprep.subr.bf16.mxu0 %v3748
    %5715 = vmatpush1.bf16.msra.mxu0 %v3747
    %5716 = vmatprep.subr.bf16.mxu0 %v3744
    %5717 = vmatpush1.bf16.msra.mxu0 %v3743
    %5718 = vmatprep.subr.bf16.mxu0 %v3740
    %5719 = vmatpush1.bf16.msra.mxu0 %v3739
    %5720 = vmatprep.subr.bf16.mxu0 %v3800
    %5721 = vmatpush2.bf16.msra.mxu0 %v3799
    %5722 = vmatprep.subr.bf16.mxu0 %v3796
    %5723 = vmatpush2.bf16.msra.mxu0 %v3795
    %5724 = vmatprep.subr.bf16.mxu0 %v3792
    %5725 = vmatpush2.bf16.msra.mxu0 %v3791
    %5726 = vmatprep.subr.bf16.mxu0 %v3788
    %5727 = vmatpush2.bf16.msra.mxu0 %v3787
    %5728 = vmatprep.subr.bf16.mxu0 %v3784
    %5729 = vmatpush2.bf16.msra.mxu0 %v3783
    %5730 = vmatprep.subr.bf16.mxu0 %v3780
    %5731 = vmatpush2.bf16.msra.mxu0 %v3779
    %5732 = vmatprep.subr.bf16.mxu0 %v3776
    %5733 = vmatpush2.bf16.msra.mxu0 %v3775
    %5734 = vmatprep.subr.bf16.mxu0 %v3772
    %5735 = vmatpush2.bf16.msra.mxu0 %v3771
    %5736 = vmatprep.mubr.bf16.mxu0 %v183
    %5737 = vmatmul.mubr.bf16.gmra.mxu0 %v182
    %v5738 = vpop.f32.mrf.mxu0
    %v5739 = vadd.f32 %v5698, %v5738
    %v5740 = vpop.f32.mrf.mxu0
    %v5741 = vadd.f32 %v5700, %v5740
    %v5742 = vpop.f32.mrf.mxu0
    %v5743 = vpop.f32.mrf.mxu0
    %5744 = vdwg.mxu0
    %5745 = vmatprep.subr.bf16.mxu0 %v3832
    %5746 = vmatpush1.bf16.msra.mxu0 %v3831
    %5747 = vmatprep.subr.bf16.mxu0 %v3828
    %5748 = vmatpush1.bf16.msra.mxu0 %v3827
    %5749 = vmatprep.subr.bf16.mxu0 %v3824
    %5750 = vmatpush1.bf16.msra.mxu0 %v3823
    %5751 = vmatprep.subr.bf16.mxu0 %v3820
    %5752 = vmatpush1.bf16.msra.mxu0 %v3819
    %5753 = vmatprep.subr.bf16.mxu0 %v3816
    %5754 = vmatpush1.bf16.msra.mxu0 %v3815
    %5755 = vmatprep.subr.bf16.mxu0 %v3812
    %5756 = vmatpush1.bf16.msra.mxu0 %v3811
    %5757 = vmatprep.subr.bf16.mxu0 %v3808
    %5758 = vmatpush1.bf16.msra.mxu0 %v3807
    %5759 = vmatprep.subr.bf16.mxu0 %v3804
    %5760 = vmatpush1.bf16.msra.mxu0 %v3803
    %5761 = vmatprep.subr.bf16.mxu0 %v3864
    %5762 = vmatpush2.bf16.msra.mxu0 %v3863
    %5763 = vmatprep.subr.bf16.mxu0 %v3860
    %5764 = vmatpush2.bf16.msra.mxu0 %v3859
    %5765 = vmatprep.subr.bf16.mxu0 %v3856
    %5766 = vmatpush2.bf16.msra.mxu0 %v3855
    %5767 = vmatprep.subr.bf16.mxu0 %v3852
    %5768 = vmatpush2.bf16.msra.mxu0 %v3851
    %5769 = vmatprep.subr.bf16.mxu0 %v3848
    %5770 = vmatpush2.bf16.msra.mxu0 %v3847
    %5771 = vmatprep.subr.bf16.mxu0 %v3844
    %5772 = vmatpush2.bf16.msra.mxu0 %v3843
    %5773 = vmatprep.subr.bf16.mxu0 %v3840
    %5774 = vmatpush2.bf16.msra.mxu0 %v3839
    %5775 = vmatprep.subr.bf16.mxu0 %v3836
    %5776 = vmatpush2.bf16.msra.mxu0 %v3835
    %5777 = vmatprep.mubr.bf16.mxu0 %v185
    %5778 = vmatmul.mubr.bf16.gmra.mxu0 %v184
    %v5779 = vpop.f32.mrf.mxu0
    %v5780 = vadd.f32 %v5739, %v5779
    %v5781 = vpop.f32.mrf.mxu0
    %v5782 = vadd.f32 %v5741, %v5781
    %v5783 = vpop.f32.mrf.mxu0
    %v5784 = vpop.f32.mrf.mxu0
    %5785 = vdwg.mxu0
    %5786 = vmatprep.subr.bf16.mxu0 %v3896
    %5787 = vmatpush1.bf16.msra.mxu0 %v3895
    %5788 = vmatprep.subr.bf16.mxu0 %v3892
    %5789 = vmatpush1.bf16.msra.mxu0 %v3891
    %5790 = vmatprep.subr.bf16.mxu0 %v3888
    %5791 = vmatpush1.bf16.msra.mxu0 %v3887
    %5792 = vmatprep.subr.bf16.mxu0 %v3884
    %5793 = vmatpush1.bf16.msra.mxu0 %v3883
    %5794 = vmatprep.subr.bf16.mxu0 %v3880
    %5795 = vmatpush1.bf16.msra.mxu0 %v3879
    %5796 = vmatprep.subr.bf16.mxu0 %v3876
    %5797 = vmatpush1.bf16.msra.mxu0 %v3875
    %5798 = vmatprep.subr.bf16.mxu0 %v3872
    %5799 = vmatpush1.bf16.msra.mxu0 %v3871
    %5800 = vmatprep.subr.bf16.mxu0 %v3868
    %5801 = vmatpush1.bf16.msra.mxu0 %v3867
    %5802 = vmatprep.subr.bf16.mxu0 %v3928
    %5803 = vmatpush2.bf16.msra.mxu0 %v3927
    %5804 = vmatprep.subr.bf16.mxu0 %v3924
    %5805 = vmatpush2.bf16.msra.mxu0 %v3923
    %5806 = vmatprep.subr.bf16.mxu0 %v3920
    %5807 = vmatpush2.bf16.msra.mxu0 %v3919
    %5808 = vmatprep.subr.bf16.mxu0 %v3916
    %5809 = vmatpush2.bf16.msra.mxu0 %v3915
    %5810 = vmatprep.subr.bf16.mxu0 %v3912
    %5811 = vmatpush2.bf16.msra.mxu0 %v3911
    %5812 = vmatprep.subr.bf16.mxu0 %v3908
    %5813 = vmatpush2.bf16.msra.mxu0 %v3907
    %5814 = vmatprep.subr.bf16.mxu0 %v3904
    %5815 = vmatpush2.bf16.msra.mxu0 %v3903
    %5816 = vmatprep.subr.bf16.mxu0 %v3900
    %5817 = vmatpush2.bf16.msra.mxu0 %v3899
    %5818 = vmatprep.mubr.bf16.mxu0 %v187
    %5819 = vmatmul.mubr.bf16.gmra.mxu0 %v186
    %v5820 = vpop.f32.mrf.mxu0
    %v5821 = vadd.f32 %v5780, %v5820
    %v5822 = vpop.f32.mrf.mxu0
    %v5823 = vadd.f32 %v5782, %v5822
    %v5824 = vpop.f32.mrf.mxu0
    %v5825 = vpop.f32.mrf.mxu0
    %5826 = vdwg.mxu0
    %5827 = vmatprep.subr.bf16.mxu0 %v3960
    %5828 = vmatpush1.bf16.msra.mxu0 %v3959
    %5829 = vmatprep.subr.bf16.mxu0 %v3956
    %5830 = vmatpush1.bf16.msra.mxu0 %v3955
    %5831 = vmatprep.subr.bf16.mxu0 %v3952
    %5832 = vmatpush1.bf16.msra.mxu0 %v3951
    %5833 = vmatprep.subr.bf16.mxu0 %v3948
    %5834 = vmatpush1.bf16.msra.mxu0 %v3947
    %5835 = vmatprep.subr.bf16.mxu0 %v3944
    %5836 = vmatpush1.bf16.msra.mxu0 %v3943
    %5837 = vmatprep.subr.bf16.mxu0 %v3940
    %5838 = vmatpush1.bf16.msra.mxu0 %v3939
    %5839 = vmatprep.subr.bf16.mxu0 %v3936
    %5840 = vmatpush1.bf16.msra.mxu0 %v3935
    %5841 = vmatprep.subr.bf16.mxu0 %v3932
    %5842 = vmatpush1.bf16.msra.mxu0 %v3931
    %5843 = vmatprep.subr.bf16.mxu0 %v3992
    %5844 = vmatpush2.bf16.msra.mxu0 %v3991
    %5845 = vmatprep.subr.bf16.mxu0 %v3988
    %5846 = vmatpush2.bf16.msra.mxu0 %v3987
    %5847 = vmatprep.subr.bf16.mxu0 %v3984
    %5848 = vmatpush2.bf16.msra.mxu0 %v3983
    %5849 = vmatprep.subr.bf16.mxu0 %v3980
    %5850 = vmatpush2.bf16.msra.mxu0 %v3979
    %5851 = vmatprep.subr.bf16.mxu0 %v3976
    %5852 = vmatpush2.bf16.msra.mxu0 %v3975
    %5853 = vmatprep.subr.bf16.mxu0 %v3972
    %5854 = vmatpush2.bf16.msra.mxu0 %v3971
    %5855 = vmatprep.subr.bf16.mxu0 %v3968
    %5856 = vmatpush2.bf16.msra.mxu0 %v3967
    %5857 = vmatprep.subr.bf16.mxu0 %v3964
    %5858 = vmatpush2.bf16.msra.mxu0 %v3963
    %5859 = vmatprep.mubr.bf16.mxu0 %v189
    %5860 = vmatmul.mubr.bf16.gmra.mxu0 %v188
    %v5861 = vpop.f32.mrf.mxu0
    %v5862 = vadd.f32 %v5821, %v5861
    %v5863 = vpop.f32.mrf.mxu0
    %v5864 = vadd.f32 %v5823, %v5863
    %v5865 = vpop.f32.mrf.mxu0
    %v5866 = vpop.f32.mrf.mxu0
    %5867 = vdwg.mxu0
    %5868 = vmatprep.subr.bf16.mxu0 %v4024
    %5869 = vmatpush1.bf16.msra.mxu0 %v4023
    %5870 = vmatprep.subr.bf16.mxu0 %v4020
    %5871 = vmatpush1.bf16.msra.mxu0 %v4019
    %5872 = vmatprep.subr.bf16.mxu0 %v4016
    %5873 = vmatpush1.bf16.msra.mxu0 %v4015
    %5874 = vmatprep.subr.bf16.mxu0 %v4012
    %5875 = vmatpush1.bf16.msra.mxu0 %v4011
    %5876 = vmatprep.subr.bf16.mxu0 %v4008
    %5877 = vmatpush1.bf16.msra.mxu0 %v4007
    %5878 = vmatprep.subr.bf16.mxu0 %v4004
    %5879 = vmatpush1.bf16.msra.mxu0 %v4003
    %5880 = vmatprep.subr.bf16.mxu0 %v4000
    %5881 = vmatpush1.bf16.msra.mxu0 %v3999
    %5882 = vmatprep.subr.bf16.mxu0 %v3996
    %5883 = vmatpush1.bf16.msra.mxu0 %v3995
    %5884 = vmatprep.subr.bf16.mxu0 %v4056
    %5885 = vmatpush2.bf16.msra.mxu0 %v4055
    %5886 = vmatprep.subr.bf16.mxu0 %v4052
    %5887 = vmatpush2.bf16.msra.mxu0 %v4051
    %5888 = vmatprep.subr.bf16.mxu0 %v4048
    %5889 = vmatpush2.bf16.msra.mxu0 %v4047
    %5890 = vmatprep.subr.bf16.mxu0 %v4044
    %5891 = vmatpush2.bf16.msra.mxu0 %v4043
    %5892 = vmatprep.subr.bf16.mxu0 %v4040
    %5893 = vmatpush2.bf16.msra.mxu0 %v4039
    %5894 = vmatprep.subr.bf16.mxu0 %v4036
    %5895 = vmatpush2.bf16.msra.mxu0 %v4035
    %5896 = vmatprep.subr.bf16.mxu0 %v4032
    %5897 = vmatpush2.bf16.msra.mxu0 %v4031
    %5898 = vmatprep.subr.bf16.mxu0 %v4028
    %5899 = vmatpush2.bf16.msra.mxu0 %v4027
    %5900 = vmatprep.mubr.bf16.mxu0 %v191
    %5901 = vmatmul.mubr.bf16.gmra.mxu0 %v190
    %v5902 = vpop.f32.mrf.mxu0
    %v5903 = vadd.f32 %v5862, %v5902
    %v5904 = vpop.f32.mrf.mxu0
    %v5905 = vadd.f32 %v5864, %v5904
    %v5906 = vpop.f32.mrf.mxu0
    %v5907 = vpop.f32.mrf.mxu0
    %5908 = vdwg.mxu0
    %5909 = vmatprep.subr.bf16.mxu0 %v4088
    %5910 = vmatpush1.bf16.msra.mxu0 %v4087
    %5911 = vmatprep.subr.bf16.mxu0 %v4084
    %5912 = vmatpush1.bf16.msra.mxu0 %v4083
    %5913 = vmatprep.subr.bf16.mxu0 %v4080
    %5914 = vmatpush1.bf16.msra.mxu0 %v4079
    %5915 = vmatprep.subr.bf16.mxu0 %v4076
    %5916 = vmatpush1.bf16.msra.mxu0 %v4075
    %5917 = vmatprep.subr.bf16.mxu0 %v4072
    %5918 = vmatpush1.bf16.msra.mxu0 %v4071
    %5919 = vmatprep.subr.bf16.mxu0 %v4068
    %5920 = vmatpush1.bf16.msra.mxu0 %v4067
    %5921 = vmatprep.subr.bf16.mxu0 %v4064
    %5922 = vmatpush1.bf16.msra.mxu0 %v4063
    %5923 = vmatprep.subr.bf16.mxu0 %v4060
    %5924 = vmatpush1.bf16.msra.mxu0 %v4059
    %5925 = vmatprep.subr.bf16.mxu0 %v4120
    %5926 = vmatpush2.bf16.msra.mxu0 %v4119
    %5927 = vmatprep.subr.bf16.mxu0 %v4116
    %5928 = vmatpush2.bf16.msra.mxu0 %v4115
    %5929 = vmatprep.subr.bf16.mxu0 %v4112
    %5930 = vmatpush2.bf16.msra.mxu0 %v4111
    %5931 = vmatprep.subr.bf16.mxu0 %v4108
    %5932 = vmatpush2.bf16.msra.mxu0 %v4107
    %5933 = vmatprep.subr.bf16.mxu0 %v4104
    %5934 = vmatpush2.bf16.msra.mxu0 %v4103
    %5935 = vmatprep.subr.bf16.mxu0 %v4100
    %5936 = vmatpush2.bf16.msra.mxu0 %v4099
    %5937 = vmatprep.subr.bf16.mxu0 %v4096
    %5938 = vmatpush2.bf16.msra.mxu0 %v4095
    %5939 = vmatprep.subr.bf16.mxu0 %v4092
    %5940 = vmatpush2.bf16.msra.mxu0 %v4091
    %5941 = vmatprep.mubr.bf16.mxu0 %v193
    %5942 = vmatmul.mubr.bf16.gmra.mxu0 %v192
    %v5943 = vpop.f32.mrf.mxu0
    %v5944 = vadd.f32 %v5903, %v5943
    %v5945 = vpop.f32.mrf.mxu0
    %v5946 = vadd.f32 %v5905, %v5945
    %v5947 = vpop.f32.mrf.mxu0
    %v5948 = vpop.f32.mrf.mxu0
    %5949 = vdwg.mxu0
    %5950 = vmatprep.subr.bf16.mxu0 0
    %5951 = vmatpush1.bf16.msra.mxu0 0
    %5952 = vmatprep.subr.bf16.mxu0 0
    %5953 = vmatpush1.bf16.msra.mxu0 0
    %5954 = vmatprep.subr.bf16.mxu0 0
    %5955 = vmatpush1.bf16.msra.mxu0 0
    %5956 = vmatprep.subr.bf16.mxu0 0
    %5957 = vmatpush1.bf16.msra.mxu0 0
    %5958 = vmatprep.subr.bf16.mxu0 %v4136
    %5959 = vmatpush1.bf16.msra.mxu0 %v4135
    %5960 = vmatprep.subr.bf16.mxu0 %v4132
    %5961 = vmatpush1.bf16.msra.mxu0 %v4131
    %5962 = vmatprep.subr.bf16.mxu0 %v4128
    %5963 = vmatpush1.bf16.msra.mxu0 %v4127
    %5964 = vmatprep.subr.bf16.mxu0 %v4124
    %5965 = vmatpush1.bf16.msra.mxu0 %v4123
    %5966 = vmatprep.subr.bf16.mxu0 0
    %5967 = vmatpush2.bf16.msra.mxu0 0
    %5968 = vmatprep.subr.bf16.mxu0 0
    %5969 = vmatpush2.bf16.msra.mxu0 0
    %5970 = vmatprep.subr.bf16.mxu0 0
    %5971 = vmatpush2.bf16.msra.mxu0 0
    %5972 = vmatprep.subr.bf16.mxu0 0
    %5973 = vmatpush2.bf16.msra.mxu0 0
    %5974 = vmatprep.subr.bf16.mxu0 0
    %5975 = vmatpush2.bf16.msra.mxu0 0
    %5976 = vmatprep.subr.bf16.mxu0 0
    %5977 = vmatpush2.bf16.msra.mxu0 0
    %5978 = vmatprep.subr.bf16.mxu0 0
    %5979 = vmatpush2.bf16.msra.mxu0 0
    %5980 = vmatprep.subr.bf16.mxu0 0
    %5981 = vmatpush2.bf16.msra.mxu0 0
    %5982 = vmatprep.mubr.bf16.mxu0 0
    %5983 = vmatmul.mubr.bf16.gmra.mxu0 %v4923
    %v5984 = vpop.f32.mrf.mxu0
    %v5985 = vadd.f32 %v5944, %v5984
    %v5986 = vpop.f32.mrf.mxu0
    %v5987 = vadd.f32 %v5946, %v5986
    %v5988 = vpop.f32.mrf.mxu0
    %v5989 = vpop.f32.mrf.mxu0
    %5990 = vdwg.mxu0
    %v5991 = vmax.f32 %v5452, 0.0
    %v5992 = vmax.f32 %v5454, 0.0
    %v5993 = vmax.f32 %v5985, 0.0
    %v5994 = vmax.f32 %v5987, 0.0
    %v5995 = vpack.c.bf16 %v5991, %v5991
    %v5996 = vpack.c.bf16 %v5992, %v5992
    %v5997 = vpack.c.bf16 %v5993, %v5993
    %v5998 = vpack.c.bf16 %v5994, %v5994
    %v5999 = vld [vmem:[%s3] sm:$0xf]
    %v6000 = vld [vmem:[%s3 + $0x4] sm:$0xf]
    %v6001 = vld [vmem:[%s3 + $0x8] sm:$0xf]
    %v6002 = vld [vmem:[%s3 + $0xc] sm:$0xf]
    %v6003 = vld [vmem:[%s3 + $0x10] sm:$0xf]
    %v6004 = vld [vmem:[%s3 + $0x14] sm:$0xf]
    %v6005 = vld [vmem:[%s3 + $0x18] sm:$0xf]
    %v6006 = vld [vmem:[%s3 + $0x1c] sm:$0xf]
    %v6007 = vld [vmem:[%s3 + $0x20] sm:$0xf]
    %v6008 = vld [vmem:[%s3 + $0x24] sm:$0xf]
    %v6009 = vld [vmem:[%s3 + $0x28] sm:$0xf]
    %v6010 = vld [vmem:[%s3 + $0x2c] sm:$0xf]
    %v6011 = vld [vmem:[%s3 + $0x30] sm:$0xf]
    %v6012 = vld [vmem:[%s3 + $0x34] sm:$0xf]
    %v6013 = vld [vmem:[%s3 + $0x38] sm:$0xf]
    %v6014 = vld [vmem:[%s3 + $0x3c] sm:$0xf]
    %v6015 = vld [vmem:[%s3 + $0x40] sm:$0xf]
    %v6016 = vld [vmem:[%s3 + $0x44] sm:$0xf]
    %v6017 = vld [vmem:[%s3 + $0x48] sm:$0xf]
    %v6018 = vld [vmem:[%s3 + $0x4c] sm:$0xf]
    %v6019 = vld [vmem:[%s3 + $0x50] sm:$0xf]
    %v6020 = vld [vmem:[%s3 + $0x54] sm:$0xf]
    %v6021 = vld [vmem:[%s3 + $0x58] sm:$0xf]
    %v6022 = vld [vmem:[%s3 + $0x5c] sm:$0xf]
    %v6023 = vld [vmem:[%s3 + $0x60] sm:$0xf]
    %v6024 = vld [vmem:[%s3 + $0x64] sm:$0xf]
    %v6025 = vld [vmem:[%s3 + $0x68] sm:$0xf]
    %v6026 = vld [vmem:[%s3 + $0x6c] sm:$0xf]
    %v6027 = vld [vmem:[%s3 + $0x70] sm:$0xf]
    %v6028 = vld [vmem:[%s3 + $0x74] sm:$0xf]
    %v6029 = vld [vmem:[%s3 + $0x78] sm:$0xf]
    %v6030 = vld [vmem:[%s3 + $0x7c] sm:$0xf]
    %v6031 = vld [vmem:[%s3 + $0x80] sm:$0xf]
    %v6032 = vld [vmem:[%s3 + $0x84] sm:$0xf]
    %v6033 = vld [vmem:[%s3 + $0x88] sm:$0xf]
    %v6034 = vld [vmem:[%s3 + $0x8c] sm:$0xf]
    %v6035 = vld [vmem:[%s3 + $0x90] sm:$0xf]
    %v6036 = vld [vmem:[%s3 + $0x94] sm:$0xf]
    %v6037 = vld [vmem:[%s3 + $0x98] sm:$0xf]
    %v6038 = vld [vmem:[%s3 + $0x9c] sm:$0xf]
    %v6039 = vld [vmem:[%s3 + $0xa0] sm:$0xf]
    %v6040 = vld [vmem:[%s3 + $0xa4] sm:$0xf]
    %v6041 = vld [vmem:[%s3 + $0xa8] sm:$0xf]
    %v6042 = vld [vmem:[%s3 + $0xac] sm:$0xf]
    %v6043 = vld [vmem:[%s3 + $0xb0] sm:$0xf]
    %v6044 = vld [vmem:[%s3 + $0xb4] sm:$0xf]
    %v6045 = vld [vmem:[%s3 + $0xb8] sm:$0xf]
    %v6046 = vld [vmem:[%s3 + $0xbc] sm:$0xf]
    %v6047 = vld [vmem:[%s3 + $0xc0] sm:$0xf]
    %v6048 = vld [vmem:[%s3 + $0xc4] sm:$0xf]
    %v6049 = vld [vmem:[%s3 + $0xc8] sm:$0xf]
    %v6050 = vld [vmem:[%s3 + $0xcc] sm:$0xf]
    %v6051 = vld [vmem:[%s3 + $0xd0] sm:$0xf]
    %v6052 = vld [vmem:[%s3 + $0xd4] sm:$0xf]
    %v6053 = vld [vmem:[%s3 + $0xd8] sm:$0xf]
    %v6054 = vld [vmem:[%s3 + $0xdc] sm:$0xf]
    %v6055 = vld [vmem:[%s3 + $0xe0] sm:$0xf]
    %v6056 = vld [vmem:[%s3 + $0xe4] sm:$0xf]
    %v6057 = vld [vmem:[%s3 + $0xe8] sm:$0xf]
    %v6058 = vld [vmem:[%s3 + $0xec] sm:$0xf]
    %v6059 = vld [vmem:[%s3 + $0xf0] sm:$0xf]
    %v6060 = vld [vmem:[%s3 + $0xf4] sm:$0xf]
    %v6061 = vld [vmem:[%s3 + $0xf8] sm:$0xf]
    %v6062 = vld [vmem:[%s3 + $0xfc] sm:$0xf]
    %v6063 = vld [vmem:[%s4] sm:$0x1]
    %v6065 = vlaneseq
    %v6066 = vshrl.u32 %v6065, 7
    %v6067 = vsub.s32 0, %v6066
    %v6068 = vrot.slane %v6063, %v6067
    %v6134 = vunpack.c.l.b16 %v5999
    %v6135 = vunpack.c.l.b16 %v6000
    %v6136 = vunpack.c.l.b16 %v6001
    %v6137 = vunpack.c.l.b16 %v6002
    %v6138 = vunpack.c.l.b16 %v6003
    %v6139 = vunpack.c.l.b16 %v6004
    %v6140 = vunpack.c.l.b16 %v6005
    %v6141 = vunpack.c.l.b16 %v6006
    %v6142 = vunpack.c.l.b16 %v6007
    %v6143 = vunpack.c.l.b16 %v6008
    %v6144 = vunpack.c.l.b16 %v6009
    %v6145 = vunpack.c.l.b16 %v6010
    %v6146 = vunpack.c.l.b16 %v6011
    %v6147 = vunpack.c.l.b16 %v6012
    %v6148 = vunpack.c.l.b16 %v6013
    %v6149 = vunpack.c.l.b16 %v6014
    %v6150 = vunpack.c.l.b16 %v6015
    %v6151 = vunpack.c.l.b16 %v6016
    %v6152 = vunpack.c.l.b16 %v6017
    %v6153 = vunpack.c.l.b16 %v6018
    %v6154 = vunpack.c.l.b16 %v6019
    %v6155 = vunpack.c.l.b16 %v6020
    %v6156 = vunpack.c.l.b16 %v6021
    %v6157 = vunpack.c.l.b16 %v6022
    %v6158 = vunpack.c.l.b16 %v6023
    %v6159 = vunpack.c.l.b16 %v6024
    %v6160 = vunpack.c.l.b16 %v6025
    %v6161 = vunpack.c.l.b16 %v6026
    %v6162 = vunpack.c.l.b16 %v6027
    %v6163 = vunpack.c.l.b16 %v6028
    %v6164 = vunpack.c.l.b16 %v6029
    %v6165 = vunpack.c.l.b16 %v6030
    %v6166 = vunpack.c.l.b16 %v6031
    %v6167 = vunpack.c.l.b16 %v6032
    %v6168 = vunpack.c.l.b16 %v6033
    %v6169 = vunpack.c.l.b16 %v6034
    %v6170 = vunpack.c.l.b16 %v6035
    %v6171 = vunpack.c.l.b16 %v6036
    %v6172 = vunpack.c.l.b16 %v6037
    %v6173 = vunpack.c.l.b16 %v6038
    %v6174 = vunpack.c.l.b16 %v6039
    %v6175 = vunpack.c.l.b16 %v6040
    %v6176 = vunpack.c.l.b16 %v6041
    %v6177 = vunpack.c.l.b16 %v6042
    %v6178 = vunpack.c.l.b16 %v6043
    %v6179 = vunpack.c.l.b16 %v6044
    %v6180 = vunpack.c.l.b16 %v6045
    %v6181 = vunpack.c.l.b16 %v6046
    %v6182 = vunpack.c.l.b16 %v6047
    %v6183 = vunpack.c.l.b16 %v6048
    %v6184 = vunpack.c.l.b16 %v6049
    %v6185 = vunpack.c.l.b16 %v6050
    %v6186 = vunpack.c.l.b16 %v6051
    %v6187 = vunpack.c.l.b16 %v6052
    %v6188 = vunpack.c.l.b16 %v6053
    %v6189 = vunpack.c.l.b16 %v6054
    %v6190 = vunpack.c.l.b16 %v6055
    %v6191 = vunpack.c.l.b16 %v6056
    %v6192 = vunpack.c.l.b16 %v6057
    %v6193 = vunpack.c.l.b16 %v6058
    %v6194 = vunpack.c.l.b16 %v6059
    %v6195 = vunpack.c.l.b16 %v6060
    %v6196 = vunpack.c.l.b16 %v6061
    %v6197 = vunpack.c.l.b16 %v6062
    %v6198 = vpack.c.b16 %v6135, %v6134
    %v6199 = vpack.c.b16 %v6137, %v6136
    %v6200 = vpack.c.b16 %v6139, %v6138
    %v6201 = vpack.c.b16 %v6141, %v6140
    %v6202 = vpack.c.b16 %v6143, %v6142
    %v6203 = vpack.c.b16 %v6145, %v6144
    %v6204 = vpack.c.b16 %v6147, %v6146
    %v6205 = vpack.c.b16 %v6149, %v6148
    %v6206 = vpack.c.b16 %v6151, %v6150
    %v6207 = vpack.c.b16 %v6153, %v6152
    %v6208 = vpack.c.b16 %v6155, %v6154
    %v6209 = vpack.c.b16 %v6157, %v6156
    %v6210 = vpack.c.b16 %v6159, %v6158
    %v6211 = vpack.c.b16 %v6161, %v6160
    %v6212 = vpack.c.b16 %v6163, %v6162
    %v6213 = vpack.c.b16 %v6165, %v6164
    %v6214 = vpack.c.b16 %v6167, %v6166
    %v6215 = vpack.c.b16 %v6169, %v6168
    %v6216 = vpack.c.b16 %v6171, %v6170
    %v6217 = vpack.c.b16 %v6173, %v6172
    %v6218 = vpack.c.b16 %v6175, %v6174
    %v6219 = vpack.c.b16 %v6177, %v6176
    %v6220 = vpack.c.b16 %v6179, %v6178
    %v6221 = vpack.c.b16 %v6181, %v6180
    %v6222 = vpack.c.b16 %v6183, %v6182
    %v6223 = vpack.c.b16 %v6185, %v6184
    %v6224 = vpack.c.b16 %v6187, %v6186
    %v6225 = vpack.c.b16 %v6189, %v6188
    %v6226 = vpack.c.b16 %v6191, %v6190
    %v6227 = vpack.c.b16 %v6193, %v6192
    %v6228 = vpack.c.b16 %v6195, %v6194
    %v6229 = vpack.c.b16 %v6197, %v6196
    %6262 = vmatprep.subr.bf16.mxu0 0
    %6263 = vmatpush1.bf16.msra.mxu0 %v6205
    %6264 = vmatprep.subr.bf16.mxu0 0
    %6265 = vmatpush1.bf16.msra.mxu0 %v6204
    %6266 = vmatprep.subr.bf16.mxu0 0
    %6267 = vmatpush1.bf16.msra.mxu0 %v6203
    %6268 = vmatprep.subr.bf16.mxu0 0
    %6269 = vmatpush1.bf16.msra.mxu0 %v6202
    %6270 = vmatprep.subr.bf16.mxu0 0
    %6271 = vmatpush1.bf16.msra.mxu0 %v6201
    %6272 = vmatprep.subr.bf16.mxu0 0
    %6273 = vmatpush1.bf16.msra.mxu0 %v6200
    %6274 = vmatprep.subr.bf16.mxu0 0
    %6275 = vmatpush1.bf16.msra.mxu0 %v6199
    %6276 = vmatprep.subr.bf16.mxu0 0
    %6277 = vmatpush1.bf16.msra.mxu0 %v6198
    %6278 = vmatprep.subr.bf16.mxu0 0
    %6279 = vmatpush2.bf16.msra.mxu0 %v6213
    %6280 = vmatprep.subr.bf16.mxu0 0
    %6281 = vmatpush2.bf16.msra.mxu0 %v6212
    %6282 = vmatprep.subr.bf16.mxu0 0
    %6283 = vmatpush2.bf16.msra.mxu0 %v6211
    %6284 = vmatprep.subr.bf16.mxu0 0
    %6285 = vmatpush2.bf16.msra.mxu0 %v6210
    %6286 = vmatprep.subr.bf16.mxu0 0
    %6287 = vmatpush2.bf16.msra.mxu0 %v6209
    %6288 = vmatprep.subr.bf16.mxu0 0
    %6289 = vmatpush2.bf16.msra.mxu0 %v6208
    %6290 = vmatprep.subr.bf16.mxu0 0
    %6291 = vmatpush2.bf16.msra.mxu0 %v6207
    %6292 = vmatprep.subr.bf16.mxu0 0
    %6293 = vmatpush2.bf16.msra.mxu0 %v6206
    %6294 = vmatprep.mubr.bf16.mxu0 %v5996
    %6295 = vmatmul.mubr.bf16.gmra.mxu0 %v5995
    %v6296 = vpop.f32.mrf.mxu0
    %v6297 = vadd.f32 %v6068, %v6296
    %v6298 = vpop.f32.mrf.mxu0
    %v6299 = vpop.f32.mrf.mxu0
    %v6300 = vpop.f32.mrf.mxu0
    %6301 = vdwg.mxu0
    %6302 = vmatprep.subr.bf16.mxu0 0
    %6303 = vmatpush1.bf16.msra.mxu0 %v6221
    %6304 = vmatprep.subr.bf16.mxu0 0
    %6305 = vmatpush1.bf16.msra.mxu0 %v6220
    %6306 = vmatprep.subr.bf16.mxu0 0
    %6307 = vmatpush1.bf16.msra.mxu0 %v6219
    %6308 = vmatprep.subr.bf16.mxu0 0
    %6309 = vmatpush1.bf16.msra.mxu0 %v6218
    %6310 = vmatprep.subr.bf16.mxu0 0
    %6311 = vmatpush1.bf16.msra.mxu0 %v6217
    %6312 = vmatprep.subr.bf16.mxu0 0
    %6313 = vmatpush1.bf16.msra.mxu0 %v6216
    %6314 = vmatprep.subr.bf16.mxu0 0
    %6315 = vmatpush1.bf16.msra.mxu0 %v6215
    %6316 = vmatprep.subr.bf16.mxu0 0
    %6317 = vmatpush1.bf16.msra.mxu0 %v6214
    %6318 = vmatprep.subr.bf16.mxu0 0
    %6319 = vmatpush2.bf16.msra.mxu0 %v6229
    %6320 = vmatprep.subr.bf16.mxu0 0
    %6321 = vmatpush2.bf16.msra.mxu0 %v6228
    %6322 = vmatprep.subr.bf16.mxu0 0
    %6323 = vmatpush2.bf16.msra.mxu0 %v6227
    %6324 = vmatprep.subr.bf16.mxu0 0
    %6325 = vmatpush2.bf16.msra.mxu0 %v6226
    %6326 = vmatprep.subr.bf16.mxu0 0
    %6327 = vmatpush2.bf16.msra.mxu0 %v6225
    %6328 = vmatprep.subr.bf16.mxu0 0
    %6329 = vmatpush2.bf16.msra.mxu0 %v6224
    %6330 = vmatprep.subr.bf16.mxu0 0
    %6331 = vmatpush2.bf16.msra.mxu0 %v6223
    %6332 = vmatprep.subr.bf16.mxu0 0
    %6333 = vmatpush2.bf16.msra.mxu0 %v6222
    %6334 = vmatprep.mubr.bf16.mxu0 %v5998
    %6335 = vmatmul.mubr.bf16.gmra.mxu0 %v5997
    %v6336 = vpop.f32.mrf.mxu0
    %v6337 = vadd.f32 %v6297, %v6336
    %v6338 = vpop.f32.mrf.mxu0
    %v6339 = vpop.f32.mrf.mxu0
    %v6340 = vpop.f32.mrf.mxu0
    %6341 = vdwg.mxu0
    %vm6342 = vcmask 74752
    %6343 = vst.msk [vmem:[#allocation2] sm:$0x3] %vm6342, %v6337
    // Predicated region
    $region22: #{dqn_cnn_forward.7} parent=1 // pred_check
      _
    $region23: #{dqn_cnn_forward.7} parent=1 // pred_check_branch
      %6345 = sbr.rel (0) target = $region25
    $region24: #{dqn_cnn_forward.7} parent=1 // pred_region
      %s6347 = ssub.s32 32, 32
      %6348 = vsyncadd [#allocation3], %s6347
      %s6350 = sshll.u32 [#allocation2], 4
      %s6351 = int_to_ptr.vmem [resolvable:$true] %s6350
      %6353 = dma.vmem_to_hbm [thread:$0]  %s6351, 32, %s5, [#allocation3]
    $region25: #{dqn_cnn_forward.7} parent=1 // pred_fallthru
      _
    // Predicated region
    $region26: #{dqn_cnn_forward.7} parent=1 // pred_check
      _
    $region27: #{dqn_cnn_forward.7} parent=1 // pred_check_branch
      %6355 = sbr.rel (0) target = $region29
    $region28: #{dqn_cnn_forward.7} parent=1 // pred_region
      %6356 = dma.done [#allocation3], 32
    $region29: #{dqn_cnn_forward.7} parent=1 // pred_fallthru
      _
    %6357 = vsyncpa [#allocation3], 1

</llo_original>
